<compile_context>
chip_gen: v6e
topology: v6e:2x2x1
jax: 0.10.0
libtpu: 0.0.40
codegen_flags: <defaults>
</compile_context>

<pallas_src>
import numpy as np
import jax
import jax.numpy as jnp
from jax import lax
from jax.experimental import pallas as pl
from jax.experimental.pallas import tpu as pltpu

SEQ = 16
FEAT = 16
NUM_HEADS = 4          # reshape (-1, num_heads, 4, 4); 4 makes matmul(q, k) well-posed
LN_EPS = 1e-5
F32 = jnp.float32


# ---------------------------------------------------------------------------
# Constant helper matrices (built once with numpy, passed to the kernel).
# ---------------------------------------------------------------------------
def _build_constants():
    # A_m : (X @ A_m)[r, c] = X[r, 4*(c//4) + m]   (column-m-of-group broadcast)
    selc = np.zeros((4, 16, 16), np.float32)
    for m in range(4):
        for c in range(16):
            selc[m, 4 * (c // 4) + m, c] = 1.0
    # A_m^T : (A_m^T @ X)[r, c] = X[4*(r//4) + m, c]  (row-m-of-group broadcast)
    selr = np.ascontiguousarray(np.transpose(selc, (0, 2, 1)))
    # group-sum matrix: (E @ G)[r, c] = sum over the 4-column group containing c
    gsum = selc.sum(axis=0)                                    # (16, 16)
    # group-mean matrix for the fused LayerNorm over each 16-column segment
    gmean = np.kron(np.eye(3, dtype=np.float32),
                    np.full((16, 16), 1.0 / 16.0, np.float32))  # (48, 48)
    return selc, selr, gsum, gmean


_SELC, _SELR, _GSUM, _GMEAN = _build_constants()


# ---------------------------------------------------------------------------
# Kernel: everything stays in lane-dense 2D layouts; no in-kernel reshapes.
# ---------------------------------------------------------------------------
def _fused_attention_kernel(x_ref, w1_ref, b1_ref, g_ref, be_ref, w2_ref, b2_ref,
                            gmean_ref, selc_ref, selr_ref, gsum_ref,
                            scale_ref, drop_ref, out_ref):
    # ---- fused q/k/v projections: Linear -> LayerNorm -> Linear ------------
    x = x_ref[...]                                                       # (16, 48)
    h = jnp.dot(x, w1_ref[...], preferred_element_type=F32) + b1_ref[...]
    mu = jnp.dot(h, gmean_ref[...], preferred_element_type=F32)          # per-branch mean
    hc = h - mu
    var = jnp.dot(hc * hc, gmean_ref[...], preferred_element_type=F32)   # per-branch var
    hn = hc * lax.rsqrt(var + LN_EPS) * g_ref[...] + be_ref[...]
    y = jnp.dot(hn, w2_ref[...], preferred_element_type=F32) + b2_ref[...]  # (16, 48)

    q_proj = y[:, 0:16]
    k_proj = y[:, 16:32]
    v_proj = y[:, 32:48]

    # ---- batched 4x4 matmuls, flat (16,16) layout ---------------------------
    # qk_flat[4b+i, 4x+j] = sum_m q_proj[4b+i, 4x+m] * k_proj[4b+m, 4x+j]
    qk = jnp.zeros((16, 16), F32)
    for m in range(4):
        qsel = jnp.dot(q_proj, selc_ref[m], preferred_element_type=F32)
        ksel = jnp.dot(selr_ref[m], k_proj, preferred_element_type=F32)
        qk = qk + qsel * ksel

    # scaled_qk = qk / inv_shiftscale_factor  (reciprocal pre-folded, lane-dense)
    scaled = qk * scale_ref[...]

    # softmax over each 4-column group; subtracting the full-row max is
    # equivalent (shift invariance) and avoids a segmented max.
    rowmax = jnp.max(scaled, axis=-1, keepdims=True)
    e = jnp.exp(scaled - rowmax)
    denom = jnp.dot(e, gsum_ref[...], preferred_element_type=F32)        # group sums
    sm = e / denom

    # dropout: mask*scale precomputed host-side (static p).
    dropped = sm * drop_ref[...]

    # out_flat[4b+i, 4x+n] = sum_j dropped[4b+i, 4x+j] * v_proj[4b+j, 4x+n]
    out = jnp.zeros((16, 16), F32)
    for j in range(4):
        dsel = jnp.dot(dropped, selc_ref[j], preferred_element_type=F32)
        vsel = jnp.dot(selr_ref[j], v_proj, preferred_element_type=F32)
        out = out + dsel * vsel

    out_ref[...] = out                                                   # lane-dense (16,16)


# ---------------------------------------------------------------------------
# Parameters
# ---------------------------------------------------------------------------
def init_params(key):
    ks = jax.random.split(key, 6)
    w1 = jax.random.normal(ks[0], (3, FEAT, FEAT), F32) * (1.0 / jnp.sqrt(FEAT))
    b1 = jax.random.normal(ks[1], (3, 1, FEAT), F32) * 0.02
    g  = 1.0 + 0.05 * jax.random.normal(ks[2], (3, 1, FEAT), F32)
    be = 0.02 * jax.random.normal(ks[3], (3, 1, FEAT), F32)
    w2 = jax.random.normal(ks[4], (3, FEAT, FEAT), F32) * (1.0 / jnp.sqrt(FEAT))
    b2 = jax.random.normal(ks[5], (3, 1, FEAT), F32) * 0.02
    return (w1, b1, g, be, w2, b2)


# ---------------------------------------------------------------------------
# Wrapper: host-side layout plumbing + single gridless pallas_call
# ---------------------------------------------------------------------------
def model_forward(query, key, value, inv_shiftscale_factor, dropout_p, params, seed=0):
    w1, b1, g, be, w2, b2 = params

    x_cat = jnp.concatenate([query, key, value], axis=1).astype(F32)        # (16, 48)
    w1_bd = jax.scipy.linalg.block_diag(w1[0], w1[1], w1[2]).astype(F32)    # (48, 48)
    w2_bd = jax.scipy.linalg.block_diag(w2[0], w2[1], w2[2]).astype(F32)
    b1_cat = jnp.concatenate([b1[0], b1[1], b1[2]], axis=1).astype(F32)     # (1, 48)
    g_cat  = jnp.concatenate([g[0],  g[1],  g[2]],  axis=1).astype(F32)
    be_cat = jnp.concatenate([be[0], be[1], be[2]], axis=1).astype(F32)
    b2_cat = jnp.concatenate([b2[0], b2[1], b2[2]], axis=1).astype(F32)

    # 1/inv_shiftscale_factor, pre-broadcast to the flat (16,16) layout:
    # scale_mat[4b+i, 4x+j] = 1 / inv[i, 0]
    inv_rcp = 1.0 / inv_shiftscale_factor.astype(F32).reshape(NUM_HEADS)
    scale_mat = jnp.broadcast_to(jnp.tile(inv_rcp, SEQ // NUM_HEADS)[:, None], (16, 16))

    # dropout mask*scale, resolved statically from the Python float dropout_p.
    # TODO(synk): torch's dropout RNG stream is not reproducible here; exact
    #             match with torch only for p == 0 or p >= 1.
    p = float(dropout_p)
    if p >= 1.0:
        drop_mat = jnp.zeros((16, 16), F32)
    elif p <= 0.0:
        drop_mat = jnp.ones((16, 16), F32)
    else:
        keep = 1.0 - p
        drop_mat = (jax.random.bernoulli(jax.random.PRNGKey(seed), keep, (16, 16))
                    .astype(F32) / keep)

    vmem = pl.BlockSpec(memory_space=pltpu.MemorySpace.VMEM)

    out_flat = pl.pallas_call(
        _fused_attention_kernel,
        out_shape=jax.ShapeDtypeStruct((16, 16), F32),
        in_specs=[vmem] * 13,
        out_specs=vmem,
    )(x_cat, w1_bd, b1_cat, g_cat, be_cat, w2_bd, b2_cat,
      jnp.asarray(_GMEAN), jnp.asarray(_SELC), jnp.asarray(_SELR),
      jnp.asarray(_GSUM), scale_mat, drop_mat)

    # logical (4,4,4,4) view is reconstructed outside the kernel (pure layout).
    return out_flat.reshape(SEQ // NUM_HEADS, NUM_HEADS, 4, 4).transpose(0, 2, 1, 3)


# ---------------------------------------------------------------------------
# Pure-JAX reference (dropout disabled) mirroring the torch op sequence.
# ---------------------------------------------------------------------------
def ref_forward(query, key, value, inv, params):
    w1, b1, g, be, w2, b2 = params

    def branch(x, i):
        h = x @ w1[i] + b1[i]
        mu = h.mean(-1, keepdims=True)
        var = ((h - mu) ** 2).mean(-1, keepdims=True)
        hn = (h - mu) / jnp.sqrt(var + LN_EPS) * g[i] + be[i]
        return hn @ w2[i] + b2[i]

    def split(y):  # reshape(-1, num_heads, 4, 4).transpose(-2, -3)
        return jnp.swapaxes(y.reshape(-1, NUM_HEADS, 4, 4), 1, 2)

    q = split(branch(query, 0))
    k = split(branch(key, 1))
    v = split(branch(value, 2))
    qk = q @ k
    scaled = qk / inv
    sm = jax.nn.softmax(scaled, axis=-1)
    return sm @ v


if __name__ == "__main__":
    jax.config.update("jax_default_matmul_precision", "highest")

    root = jax.random.PRNGKey(0)
    k_params, k_q, k_k, k_v, k_inv = jax.random.split(root, 5)
    params = init_params(k_params)

    query = jax.random.normal(k_q, (SEQ, FEAT), F32)
    key_in = jax.random.normal(k_k, (SEQ, FEAT), F32)
    value = jax.random.normal(k_v, (SEQ, FEAT), F32)
    inv_shiftscale_factor = jax.random.uniform(k_inv, (NUM_HEADS, 1), F32, 0.5, 1.5)

    dropout_p = 1.0   # as in the reference module (p=1 -> attention weights all zeroed)

    out = model_forward(query, key_in, value, inv_shiftscale_factor, dropout_p, params)
    out = jax.block_until_ready(out)
    assert out.shape == (SEQ // NUM_HEADS, 4, NUM_HEADS, 4)
    assert bool(jnp.all(out == 0.0))  # dropout(p=1) zeroes everything, matching torch

    # Cross-check the full attention path (dropout disabled) against pure JAX.
    out_nodrop = jax.block_until_ready(
        model_forward(query, key_in, value, inv_shiftscale_factor, 0.0, params))
    ref = ref_forward(query, key_in, value, inv_shiftscale_factor, params)
    assert jnp.allclose(out_nodrop, ref, atol=2e-3, rtol=2e-3), \
        float(jnp.max(jnp.abs(out_nodrop - ref)))

    print("KERNEL_OK")
</pallas_src>

<mosaic_0001>
module attributes {stable_mosaic.version = 11 : i64} {
  func.func @_fused_attention_kernel(%arg0: memref<16x48xf32, #tpu.memory_space<vmem>>, %arg1: memref<48x48xf32, #tpu.memory_space<vmem>>, %arg2: memref<1x48xf32, #tpu.memory_space<vmem>>, %arg3: memref<1x48xf32, #tpu.memory_space<vmem>>, %arg4: memref<1x48xf32, #tpu.memory_space<vmem>>, %arg5: memref<48x48xf32, #tpu.memory_space<vmem>>, %arg6: memref<1x48xf32, #tpu.memory_space<vmem>>, %arg7: memref<48x48xf32, #tpu.memory_space<vmem>>, %arg8: memref<4x16x16xf32, #tpu.memory_space<vmem>>, %arg9: memref<4x16x16xf32, #tpu.memory_space<vmem>>, %arg10: memref<16x16xf32, #tpu.memory_space<vmem>>, %arg11: memref<16x16xf32, #tpu.memory_space<vmem>>, %arg12: memref<16x16xf32, #tpu.memory_space<vmem>>, %arg13: memref<16x16xf32, #tpu.memory_space<vmem>>) attributes {dimension_semantics = [], scalar_prefetch = 0 : i64, scratch_operands = 0 : i64, tpu.core_type = #tpu.core_type<tc>} {
    %c0 = arith.constant 0 : index
    %c0_0 = arith.constant 0 : index
    %0 = vector.load %arg0[%c0, %c0_0] : memref<16x48xf32, #tpu.memory_space<vmem>>, vector<16x48xf32>
    %c0_1 = arith.constant 0 : index
    %c0_2 = arith.constant 0 : index
    %1 = vector.load %arg1[%c0_1, %c0_2] : memref<48x48xf32, #tpu.memory_space<vmem>>, vector<48x48xf32>
    %cst = arith.constant dense<0.000000e+00> : vector<16x48xf32>
    %2 = tpu.matmul %0, %1, %cst {dimension_numbers = #tpu.dot_dimension_numbers<[1], [0], [0], [1], [0, 0, 1, 1], [], []>, precision = #tpu.contract_precision<fp32>} : vector<16x48xf32>, vector<48x48xf32>, vector<16x48xf32> -> vector<16x48xf32>
    %c0_3 = arith.constant 0 : index
    %c0_4 = arith.constant 0 : index
    %3 = vector.load %arg2[%c0_3, %c0_4] : memref<1x48xf32, #tpu.memory_space<vmem>>, vector<1x48xf32>
    %4 = vector.broadcast %3 : vector<1x48xf32> to vector<16x48xf32>
    %5 = arith.addf %2, %4 : vector<16x48xf32>
    %c0_5 = arith.constant 0 : index
    %c0_6 = arith.constant 0 : index
    %6 = vector.load %arg7[%c0_5, %c0_6] : memref<48x48xf32, #tpu.memory_space<vmem>>, vector<48x48xf32>
    %cst_7 = arith.constant dense<0.000000e+00> : vector<16x48xf32>
    %7 = tpu.matmul %5, %6, %cst_7 {dimension_numbers = #tpu.dot_dimension_numbers<[1], [0], [0], [1], [0, 0, 1, 1], [], []>, precision = #tpu.contract_precision<fp32>} : vector<16x48xf32>, vector<48x48xf32>, vector<16x48xf32> -> vector<16x48xf32>
    %8 = arith.subf %5, %7 : vector<16x48xf32>
    %9 = arith.mulf %8, %8 : vector<16x48xf32>
    %c0_8 = arith.constant 0 : index
    %c0_9 = arith.constant 0 : index
    %10 = vector.load %arg7[%c0_8, %c0_9] : memref<48x48xf32, #tpu.memory_space<vmem>>, vector<48x48xf32>
    %cst_10 = arith.constant dense<0.000000e+00> : vector<16x48xf32>
    %11 = tpu.matmul %9, %10, %cst_10 {dimension_numbers = #tpu.dot_dimension_numbers<[1], [0], [0], [1], [0, 0, 1, 1], [], []>, precision = #tpu.contract_precision<fp32>} : vector<16x48xf32>, vector<48x48xf32>, vector<16x48xf32> -> vector<16x48xf32>
    %cst_11 = arith.constant 9.99999974E-6 : f32
    %12 = vector.broadcast %cst_11 : f32 to vector<16x48xf32>
    %13 = arith.addf %11, %12 : vector<16x48xf32>
    %14 = math.rsqrt %13 : vector<16x48xf32>
    %15 = arith.mulf %8, %14 : vector<16x48xf32>
    %c0_12 = arith.constant 0 : index
    %c0_13 = arith.constant 0 : index
    %16 = vector.load %arg3[%c0_12, %c0_13] : memref<1x48xf32, #tpu.memory_space<vmem>>, vector<1x48xf32>
    %17 = vector.broadcast %16 : vector<1x48xf32> to vector<16x48xf32>
    %18 = arith.mulf %15, %17 : vector<16x48xf32>
    %c0_14 = arith.constant 0 : index
    %c0_15 = arith.constant 0 : index
    %19 = vector.load %arg4[%c0_14, %c0_15] : memref<1x48xf32, #tpu.memory_space<vmem>>, vector<1x48xf32>
    %20 = vector.broadcast %19 : vector<1x48xf32> to vector<16x48xf32>
    %21 = arith.addf %18, %20 : vector<16x48xf32>
    %c0_16 = arith.constant 0 : index
    %c0_17 = arith.constant 0 : index
    %22 = vector.load %arg5[%c0_16, %c0_17] : memref<48x48xf32, #tpu.memory_space<vmem>>, vector<48x48xf32>
    %cst_18 = arith.constant dense<0.000000e+00> : vector<16x48xf32>
    %23 = tpu.matmul %21, %22, %cst_18 {dimension_numbers = #tpu.dot_dimension_numbers<[1], [0], [0], [1], [0, 0, 1, 1], [], []>, precision = #tpu.contract_precision<fp32>} : vector<16x48xf32>, vector<48x48xf32>, vector<16x48xf32> -> vector<16x48xf32>
    %c0_19 = arith.constant 0 : index
    %c0_20 = arith.constant 0 : index
    %24 = vector.load %arg6[%c0_19, %c0_20] : memref<1x48xf32, #tpu.memory_space<vmem>>, vector<1x48xf32>
    %25 = vector.broadcast %24 : vector<1x48xf32> to vector<16x48xf32>
    %26 = arith.addf %23, %25 : vector<16x48xf32>
    %27 = vector.extract_strided_slice %26 {offsets = [0, 0], sizes = [16, 16], strides = [1, 1]} : vector<16x48xf32> to vector<16x16xf32>
    %28 = vector.extract_strided_slice %26 {offsets = [0, 16], sizes = [16, 16], strides = [1, 1]} : vector<16x48xf32> to vector<16x16xf32>
    %29 = vector.extract_strided_slice %26 {offsets = [0, 32], sizes = [16, 16], strides = [1, 1]} : vector<16x48xf32> to vector<16x16xf32>
    %cst_21 = arith.constant 0.000000e+00 : f32
    %30 = vector.broadcast %cst_21 : f32 to vector<16x16xf32>
    %c0_22 = arith.constant 0 : index
    %c0_23 = arith.constant 0 : index
    %c0_24 = arith.constant 0 : index
    %31 = vector.load %arg8[%c0_22, %c0_23, %c0_24] : memref<4x16x16xf32, #tpu.memory_space<vmem>>, vector<1x16x16xf32>
    %32 = vector.shape_cast %31 : vector<1x16x16xf32> to vector<16x16xf32>
    %cst_25 = arith.constant dense<0.000000e+00> : vector<16x16xf32>
    %33 = tpu.matmul %27, %32, %cst_25 {dimension_numbers = #tpu.dot_dimension_numbers<[1], [0], [0], [1], [0, 0, 1, 1], [], []>, precision = #tpu.contract_precision<fp32>} : vector<16x16xf32>, vector<16x16xf32>, vector<16x16xf32> -> vector<16x16xf32>
    %c0_26 = arith.constant 0 : index
    %c0_27 = arith.constant 0 : index
    %c0_28 = arith.constant 0 : index
    %34 = vector.load %arg9[%c0_26, %c0_27, %c0_28] : memref<4x16x16xf32, #tpu.memory_space<vmem>>, vector<1x16x16xf32>
    %35 = vector.shape_cast %34 : vector<1x16x16xf32> to vector<16x16xf32>
    %cst_29 = arith.constant dense<0.000000e+00> : vector<16x16xf32>
    %36 = tpu.matmul %35, %28, %cst_29 {dimension_numbers = #tpu.dot_dimension_numbers<[1], [0], [0], [1], [0, 0, 1, 1], [], []>, precision = #tpu.contract_precision<fp32>} : vector<16x16xf32>, vector<16x16xf32>, vector<16x16xf32> -> vector<16x16xf32>
    %37 = arith.mulf %33, %36 : vector<16x16xf32>
    %38 = arith.addf %30, %37 : vector<16x16xf32>
    %c1 = arith.constant 1 : index
    %c0_30 = arith.constant 0 : index
    %c0_31 = arith.constant 0 : index
    %39 = vector.load %arg8[%c1, %c0_30, %c0_31] : memref<4x16x16xf32, #tpu.memory_space<vmem>>, vector<1x16x16xf32>
    %40 = vector.shape_cast %39 : vector<1x16x16xf32> to vector<16x16xf32>
    %cst_32 = arith.constant dense<0.000000e+00> : vector<16x16xf32>
    %41 = tpu.matmul %27, %40, %cst_32 {dimension_numbers = #tpu.dot_dimension_numbers<[1], [0], [0], [1], [0, 0, 1, 1], [], []>, precision = #tpu.contract_precision<fp32>} : vector<16x16xf32>, vector<16x16xf32>, vector<16x16xf32> -> vector<16x16xf32>
    %c1_33 = arith.constant 1 : index
    %c0_34 = arith.constant 0 : index
    %c0_35 = arith.constant 0 : index
    %42 = vector.load %arg9[%c1_33, %c0_34, %c0_35] : memref<4x16x16xf32, #tpu.memory_space<vmem>>, vector<1x16x16xf32>
    %43 = vector.shape_cast %42 : vector<1x16x16xf32> to vector<16x16xf32>
    %cst_36 = arith.constant dense<0.000000e+00> : vector<16x16xf32>
    %44 = tpu.matmul %43, %28, %cst_36 {dimension_numbers = #tpu.dot_dimension_numbers<[1], [0], [0], [1], [0, 0, 1, 1], [], []>, precision = #tpu.contract_precision<fp32>} : vector<16x16xf32>, vector<16x16xf32>, vector<16x16xf32> -> vector<16x16xf32>
    %45 = arith.mulf %41, %44 : vector<16x16xf32>
    %46 = arith.addf %38, %45 : vector<16x16xf32>
    %c2 = arith.constant 2 : index
    %c0_37 = arith.constant 0 : index
    %c0_38 = arith.constant 0 : index
    %47 = vector.load %arg8[%c2, %c0_37, %c0_38] : memref<4x16x16xf32, #tpu.memory_space<vmem>>, vector<1x16x16xf32>
    %48 = vector.shape_cast %47 : vector<1x16x16xf32> to vector<16x16xf32>
    %cst_39 = arith.constant dense<0.000000e+00> : vector<16x16xf32>
    %49 = tpu.matmul %27, %48, %cst_39 {dimension_numbers = #tpu.dot_dimension_numbers<[1], [0], [0], [1], [0, 0, 1, 1], [], []>, precision = #tpu.contract_precision<fp32>} : vector<16x16xf32>, vector<16x16xf32>, vector<16x16xf32> -> vector<16x16xf32>
    %c2_40 = arith.constant 2 : index
    %c0_41 = arith.constant 0 : index
    %c0_42 = arith.constant 0 : index
    %50 = vector.load %arg9[%c2_40, %c0_41, %c0_42] : memref<4x16x16xf32, #tpu.memory_space<vmem>>, vector<1x16x16xf32>
    %51 = vector.shape_cast %50 : vector<1x16x16xf32> to vector<16x16xf32>
    %cst_43 = arith.constant dense<0.000000e+00> : vector<16x16xf32>
    %52 = tpu.matmul %51, %28, %cst_43 {dimension_numbers = #tpu.dot_dimension_numbers<[1], [0], [0], [1], [0, 0, 1, 1], [], []>, precision = #tpu.contract_precision<fp32>} : vector<16x16xf32>, vector<16x16xf32>, vector<16x16xf32> -> vector<16x16xf32>
    %53 = arith.mulf %49, %52 : vector<16x16xf32>
    %54 = arith.addf %46, %53 : vector<16x16xf32>
    %c3 = arith.constant 3 : index
    %c0_44 = arith.constant 0 : index
    %c0_45 = arith.constant 0 : index
    %55 = vector.load %arg8[%c3, %c0_44, %c0_45] : memref<4x16x16xf32, #tpu.memory_space<vmem>>, vector<1x16x16xf32>
    %56 = vector.shape_cast %55 : vector<1x16x16xf32> to vector<16x16xf32>
    %cst_46 = arith.constant dense<0.000000e+00> : vector<16x16xf32>
    %57 = tpu.matmul %27, %56, %cst_46 {dimension_numbers = #tpu.dot_dimension_numbers<[1], [0], [0], [1], [0, 0, 1, 1], [], []>, precision = #tpu.contract_precision<fp32>} : vector<16x16xf32>, vector<16x16xf32>, vector<16x16xf32> -> vector<16x16xf32>
    %c3_47 = arith.constant 3 : index
    %c0_48 = arith.constant 0 : index
    %c0_49 = arith.constant 0 : index
    %58 = vector.load %arg9[%c3_47, %c0_48, %c0_49] : memref<4x16x16xf32, #tpu.memory_space<vmem>>, vector<1x16x16xf32>
    %59 = vector.shape_cast %58 : vector<1x16x16xf32> to vector<16x16xf32>
    %cst_50 = arith.constant dense<0.000000e+00> : vector<16x16xf32>
    %60 = tpu.matmul %59, %28, %cst_50 {dimension_numbers = #tpu.dot_dimension_numbers<[1], [0], [0], [1], [0, 0, 1, 1], [], []>, precision = #tpu.contract_precision<fp32>} : vector<16x16xf32>, vector<16x16xf32>, vector<16x16xf32> -> vector<16x16xf32>
    %61 = arith.mulf %57, %60 : vector<16x16xf32>
    %62 = arith.addf %54, %61 : vector<16x16xf32>
    %c0_51 = arith.constant 0 : index
    %c0_52 = arith.constant 0 : index
    %63 = vector.load %arg11[%c0_51, %c0_52] : memref<16x16xf32, #tpu.memory_space<vmem>>, vector<16x16xf32>
    %64 = arith.mulf %62, %63 : vector<16x16xf32>
    %cst_53 = arith.constant dense<0xFF800000> : vector<16xf32>
    %65 = vector.multi_reduction <maximumf>, %64, %cst_53 [1] : vector<16x16xf32> to vector<16xf32>
    %66 = vector.shape_cast %65 : vector<16xf32> to vector<16x1xf32>
    %67 = vector.broadcast %66 : vector<16x1xf32> to vector<16x16xf32>
    %68 = arith.subf %64, %67 : vector<16x16xf32>
    %69 = math.exp %68 : vector<16x16xf32>
    %c0_54 = arith.constant 0 : index
    %c0_55 = arith.constant 0 : index
    %70 = vector.load %arg10[%c0_54, %c0_55] : memref<16x16xf32, #tpu.memory_space<vmem>>, vector<16x16xf32>
    %cst_56 = arith.constant dense<0.000000e+00> : vector<16x16xf32>
    %71 = tpu.matmul %69, %70, %cst_56 {dimension_numbers = #tpu.dot_dimension_numbers<[1], [0], [0], [1], [0, 0, 1, 1], [], []>, precision = #tpu.contract_precision<fp32>} : vector<16x16xf32>, vector<16x16xf32>, vector<16x16xf32> -> vector<16x16xf32>
    %72 = arith.divf %69, %71 : vector<16x16xf32>
    %c0_57 = arith.constant 0 : index
    %c0_58 = arith.constant 0 : index
    %73 = vector.load %arg12[%c0_57, %c0_58] : memref<16x16xf32, #tpu.memory_space<vmem>>, vector<16x16xf32>
    %74 = arith.mulf %72, %73 : vector<16x16xf32>
    %cst_59 = arith.constant 0.000000e+00 : f32
    %75 = vector.broadcast %cst_59 : f32 to vector<16x16xf32>
    %c0_60 = arith.constant 0 : index
    %c0_61 = arith.constant 0 : index
    %c0_62 = arith.constant 0 : index
    %76 = vector.load %arg8[%c0_60, %c0_61, %c0_62] : memref<4x16x16xf32, #tpu.memory_space<vmem>>, vector<1x16x16xf32>
    %77 = vector.shape_cast %76 : vector<1x16x16xf32> to vector<16x16xf32>
    %cst_63 = arith.constant dense<0.000000e+00> : vector<16x16xf32>
    %78 = tpu.matmul %74, %77, %cst_63 {dimension_numbers = #tpu.dot_dimension_numbers<[1], [0], [0], [1], [0, 0, 1, 1], [], []>, precision = #tpu.contract_precision<fp32>} : vector<16x16xf32>, vector<16x16xf32>, vector<16x16xf32> -> vector<16x16xf32>
    %c0_64 = arith.constant 0 : index
    %c0_65 = arith.constant 0 : index
    %c0_66 = arith.constant 0 : index
    %79 = vector.load %arg9[%c0_64, %c0_65, %c0_66] : memref<4x16x16xf32, #tpu.memory_space<vmem>>, vector<1x16x16xf32>
    %80 = vector.shape_cast %79 : vector<1x16x16xf32> to vector<16x16xf32>
    %cst_67 = arith.constant dense<0.000000e+00> : vector<16x16xf32>
    %81 = tpu.matmul %80, %29, %cst_67 {dimension_numbers = #tpu.dot_dimension_numbers<[1], [0], [0], [1], [0, 0, 1, 1], [], []>, precision = #tpu.contract_precision<fp32>} : vector<16x16xf32>, vector<16x16xf32>, vector<16x16xf32> -> vector<16x16xf32>
    %82 = arith.mulf %78, %81 : vector<16x16xf32>
    %83 = arith.addf %75, %82 : vector<16x16xf32>
    %c1_68 = arith.constant 1 : index
    %c0_69 = arith.constant 0 : index
    %c0_70 = arith.constant 0 : index
    %84 = vector.load %arg8[%c1_68, %c0_69, %c0_70] : memref<4x16x16xf32, #tpu.memory_space<vmem>>, vector<1x16x16xf32>
    %85 = vector.shape_cast %84 : vector<1x16x16xf32> to vector<16x16xf32>
    %cst_71 = arith.constant dense<0.000000e+00> : vector<16x16xf32>
    %86 = tpu.matmul %74, %85, %cst_71 {dimension_numbers = #tpu.dot_dimension_numbers<[1], [0], [0], [1], [0, 0, 1, 1], [], []>, precision = #tpu.contract_precision<fp32>} : vector<16x16xf32>, vector<16x16xf32>, vector<16x16xf32> -> vector<16x16xf32>
    %c1_72 = arith.constant 1 : index
    %c0_73 = arith.constant 0 : index
    %c0_74 = arith.constant 0 : index
    %87 = vector.load %arg9[%c1_72, %c0_73, %c0_74] : memref<4x16x16xf32, #tpu.memory_space<vmem>>, vector<1x16x16xf32>
    %88 = vector.shape_cast %87 : vector<1x16x16xf32> to vector<16x16xf32>
    %cst_75 = arith.constant dense<0.000000e+00> : vector<16x16xf32>
    %89 = tpu.matmul %88, %29, %cst_75 {dimension_numbers = #tpu.dot_dimension_numbers<[1], [0], [0], [1], [0, 0, 1, 1], [], []>, precision = #tpu.contract_precision<fp32>} : vector<16x16xf32>, vector<16x16xf32>, vector<16x16xf32> -> vector<16x16xf32>
    %90 = arith.mulf %86, %89 : vector<16x16xf32>
    %91 = arith.addf %83, %90 : vector<16x16xf32>
    %c2_76 = arith.constant 2 : index
    %c0_77 = arith.constant 0 : index
    %c0_78 = arith.constant 0 : index
    %92 = vector.load %arg8[%c2_76, %c0_77, %c0_78] : memref<4x16x16xf32, #tpu.memory_space<vmem>>, vector<1x16x16xf32>
    %93 = vector.shape_cast %92 : vector<1x16x16xf32> to vector<16x16xf32>
    %cst_79 = arith.constant dense<0.000000e+00> : vector<16x16xf32>
    %94 = tpu.matmul %74, %93, %cst_79 {dimension_numbers = #tpu.dot_dimension_numbers<[1], [0], [0], [1], [0, 0, 1, 1], [], []>, precision = #tpu.contract_precision<fp32>} : vector<16x16xf32>, vector<16x16xf32>, vector<16x16xf32> -> vector<16x16xf32>
    %c2_80 = arith.constant 2 : index
    %c0_81 = arith.constant 0 : index
    %c0_82 = arith.constant 0 : index
    %95 = vector.load %arg9[%c2_80, %c0_81, %c0_82] : memref<4x16x16xf32, #tpu.memory_space<vmem>>, vector<1x16x16xf32>
    %96 = vector.shape_cast %95 : vector<1x16x16xf32> to vector<16x16xf32>
    %cst_83 = arith.constant dense<0.000000e+00> : vector<16x16xf32>
    %97 = tpu.matmul %96, %29, %cst_83 {dimension_numbers = #tpu.dot_dimension_numbers<[1], [0], [0], [1], [0, 0, 1, 1], [], []>, precision = #tpu.contract_precision<fp32>} : vector<16x16xf32>, vector<16x16xf32>, vector<16x16xf32> -> vector<16x16xf32>
    %98 = arith.mulf %94, %97 : vector<16x16xf32>
    %99 = arith.addf %91, %98 : vector<16x16xf32>
    %c3_84 = arith.constant 3 : index
    %c0_85 = arith.constant 0 : index
    %c0_86 = arith.constant 0 : index
    %100 = vector.load %arg8[%c3_84, %c0_85, %c0_86] : memref<4x16x16xf32, #tpu.memory_space<vmem>>, vector<1x16x16xf32>
    %101 = vector.shape_cast %100 : vector<1x16x16xf32> to vector<16x16xf32>
    %cst_87 = arith.constant dense<0.000000e+00> : vector<16x16xf32>
    %102 = tpu.matmul %74, %101, %cst_87 {dimension_numbers = #tpu.dot_dimension_numbers<[1], [0], [0], [1], [0, 0, 1, 1], [], []>, precision = #tpu.contract_precision<fp32>} : vector<16x16xf32>, vector<16x16xf32>, vector<16x16xf32> -> vector<16x16xf32>
    %c3_88 = arith.constant 3 : index
    %c0_89 = arith.constant 0 : index
    %c0_90 = arith.constant 0 : index
    %103 = vector.load %arg9[%c3_88, %c0_89, %c0_90] : memref<4x16x16xf32, #tpu.memory_space<vmem>>, vector<1x16x16xf32>
    %104 = vector.shape_cast %103 : vector<1x16x16xf32> to vector<16x16xf32>
    %cst_91 = arith.constant dense<0.000000e+00> : vector<16x16xf32>
    %105 = tpu.matmul %104, %29, %cst_91 {dimension_numbers = #tpu.dot_dimension_numbers<[1], [0], [0], [1], [0, 0, 1, 1], [], []>, precision = #tpu.contract_precision<fp32>} : vector<16x16xf32>, vector<16x16xf32>, vector<16x16xf32> -> vector<16x16xf32>
    %106 = arith.mulf %102, %105 : vector<16x16xf32>
    %107 = arith.addf %99, %106 : vector<16x16xf32>
    %c0_92 = arith.constant 0 : index
    %c0_93 = arith.constant 0 : index
    %108 = vector.load %arg13[%c0_92, %c0_93] : memref<16x16xf32, #tpu.memory_space<vmem>>, vector<16x16xf32>
    tpu.vector_store %arg13[%c0_92, %c0_93], %107 {strides = array<i32>} : memref<16x16xf32, #tpu.memory_space<vmem>>, vector<16x16xf32>,
    return
  }
}

</mosaic_0001>

<llo_original>
// kernel: tpu_custom_call.1
$region0: #{tpu_custom_call.1}
  #allocation0 [shape = 'u32[]', space=smem, size = 0x4, offset = 0x4, fixed_abs, tag = 'smem constant byte address 0x4 - core index']
  #allocation1 [shape = 'u32[144,128]{1,0:T(1,128)}', space=vmem, size = 0x12000, scoped, tag = 'internal scratch']
  %s0 = inlined_call_operand.hbm [shape: f32[16,48], index: 0, kind: input, shape index: {}]
  %s1 = inlined_call_operand.hbm [shape: f32[48,48], index: 1, kind: input, shape index: {}]
  %s2 = inlined_call_operand.vmem [shape: f32[1,48], index: 2, kind: input, shape index: {}]
  %s3 = inlined_call_operand.vmem [shape: f32[1,48], index: 3, kind: input, shape index: {}]
  %s4 = inlined_call_operand.hbm [shape: f32[1,48], index: 4, kind: input, shape index: {}]
  %s5 = inlined_call_operand.hbm [shape: f32[48,48], index: 5, kind: input, shape index: {}]
  %s6 = inlined_call_operand.hbm [shape: f32[1,48], index: 6, kind: input, shape index: {}]
  %s7 = inlined_call_operand.hbm [shape: f32[48,48], index: 7, kind: input, shape index: {}]
  %s8 = inlined_call_operand.hbm [shape: f32[4,16,16], index: 8, kind: input, shape index: {}]
  %s9 = inlined_call_operand.hbm [shape: f32[4,16,16], index: 9, kind: input, shape index: {}]
  %s10 = inlined_call_operand.vmem [shape: f32[16,16], index: 10, kind: input, shape index: {}]
  %s11 = inlined_call_operand.hbm [shape: f32[16,16], index: 11, kind: input, shape index: {}]
  %s12 = inlined_call_operand.hbm [shape: f32[16,16], index: 12, kind: input, shape index: {}]
  %s13 = inlined_call_operand.hbm [shape: f32[16,16], index: 13, kind: output, shape index: {}]
  %s14 = sld [smem:[#allocation0]]
  $region102: #{tpu_custom_call.1} parent=0
    _
  %s16 = ssub.s32 1, %s14
  %s17 = scalar_select 0, %s16, %s14
  $region1: #{tpu_custom_call.1} parent=0
    #allocation2 [shape = 'u8[8192]{0}', space=vmem, size = 0x2000, scoped, tag = 'input window, operand 0, single buffered']
    #allocation3 [shape = 's32[1]{0}', space=sflag, size = 0x4, scoped, tag = 'scoped memory for tpu_custom_call.1']
    #allocation4 [shape = 's32[1]{0}', space=sflag, size = 0x4, scoped, tag = 'scoped memory for tpu_custom_call.1']
    #allocation5 [shape = 'u8[24576]{0}', space=vmem, size = 0x6000, scoped, tag = 'input window, operand 1, single buffered']
    #allocation6 [shape = 's32[1]{0}', space=sflag, size = 0x4, scoped, tag = 'scoped memory for tpu_custom_call.1']
    #allocation7 [shape = 'u8[512]{0}', space=vmem, size = 0x400, scoped, tag = 'input window, operand 4, single buffered']
    #allocation8 [shape = 'u8[24576]{0}', space=vmem, size = 0x6000, scoped, tag = 'input window, operand 5, single buffered']
    #allocation9 [shape = 's32[1]{0}', space=sflag, size = 0x4, scoped, tag = 'scoped memory for tpu_custom_call.1']
    #allocation10 [shape = 'u8[512]{0}', space=vmem, size = 0x400, scoped, tag = 'input window, operand 6, single buffered']
    #allocation11 [shape = 'u8[24576]{0}', space=vmem, size = 0x6000, scoped, tag = 'input window, operand 7, single buffered']
    #allocation12 [shape = 's32[1]{0}', space=sflag, size = 0x4, scoped, tag = 'scoped memory for tpu_custom_call.1']
    #allocation13 [shape = 'u8[32768]{0}', space=vmem, size = 0x8000, scoped, tag = 'input window, operand 8, single buffered']
    #allocation14 [shape = 'u8[32768]{0}', space=vmem, size = 0x8000, scoped, tag = 'input window, operand 9, single buffered']
    #allocation15 [shape = 's32[1]{0}', space=sflag, size = 0x4, scoped, tag = 'scoped memory for tpu_custom_call.1']
    #allocation16 [shape = 'u8[8192]{0}', space=vmem, size = 0x2000, scoped, tag = 'input window, operand 11, single buffered']
    #allocation17 [shape = 'u8[8192]{0}', space=vmem, size = 0x2000, scoped, tag = 'input window, operand 12, single buffered']
    #allocation18 [shape = 's32[1]{0}', space=sflag, size = 0x4, scoped, tag = 'scoped memory for tpu_custom_call.1']
    #allocation19 [shape = 'u8[8192]{0}', space=vmem, size = 0x2000, scoped, tag = 'output window, operand 0, single buffered']
    %18 = vsyncpa [#allocation3], 0
    %19 = vsyncpa [#allocation6], 0
    %20 = vsyncpa [#allocation9], 0
    %21 = vsyncpa [#allocation12], 0
    %22 = vsyncpa [#allocation15], 0
    %23 = vsyncpa [#allocation18], 0
    %24 = vsyncpa [#allocation4], 0
    // Predicated region
    $region2: #{tpu_custom_call.1} parent=1 // pred_check
      _
    $region3: #{tpu_custom_call.1} parent=1 // pred_check_branch
      %26 = sbr.rel (0) target = $region5
    $region4: #{tpu_custom_call.1} parent=1 // pred_region
      %s28 = ssub.s32 256, 256
      %29 = vsyncadd [#allocation3], %s28
      %s30 = sshll.u32 [#allocation2], 4
      %s31 = int_to_ptr.vmem [resolvable:$true] %s30
      %36 = dma.hbm_to_vmem [thread:$0]  %s0, 256, %s31, [#allocation3], 128, 128, 8
    $region5: #{tpu_custom_call.1} parent=1 // pred_fallthru
      _
    // Predicated region
    $region6: #{tpu_custom_call.1} parent=1 // pred_check
      _
    $region7: #{tpu_custom_call.1} parent=1 // pred_check_branch
      %38 = sbr.rel (0) target = $region9
    $region8: #{tpu_custom_call.1} parent=1 // pred_region
      %s40 = ssub.s32 768, 768
      %41 = vsyncadd [#allocation6], %s40
      %s42 = sshll.u32 [#allocation5], 4
      %s43 = int_to_ptr.vmem [resolvable:$true] %s42
      %48 = dma.hbm_to_vmem [thread:$0]  %s1, 768, %s43, [#allocation6], 128, 128, 8
    $region9: #{tpu_custom_call.1} parent=1 // pred_fallthru
      _
    // Predicated region
    $region10: #{tpu_custom_call.1} parent=1 // pred_check
      _
    $region11: #{tpu_custom_call.1} parent=1 // pred_check_branch
      %50 = sbr.rel (0) target = $region13
    $region12: #{tpu_custom_call.1} parent=1 // pred_region
      _
    $region13: #{tpu_custom_call.1} parent=1 // pred_fallthru
      _
    // Predicated region
    $region14: #{tpu_custom_call.1} parent=1 // pred_check
      _
    $region15: #{tpu_custom_call.1} parent=1 // pred_check_branch
      %52 = sbr.rel (0) target = $region17
    $region16: #{tpu_custom_call.1} parent=1 // pred_region
      _
    $region17: #{tpu_custom_call.1} parent=1 // pred_fallthru
      _
    // Predicated region
    $region18: #{tpu_custom_call.1} parent=1 // pred_check
      _
    $region19: #{tpu_custom_call.1} parent=1 // pred_check_branch
      %54 = sbr.rel (0) target = $region21
    $region20: #{tpu_custom_call.1} parent=1 // pred_region
      %s56 = ssub.s32 16, 16
      %57 = vsyncadd [#allocation6], %s56
      %s59 = sshll.u32 [#allocation7], 4
      %s60 = int_to_ptr.vmem [resolvable:$true] %s59
      %62 = dma.hbm_to_vmem [thread:$0]  %s4, 16, %s60, [#allocation6]
    $region21: #{tpu_custom_call.1} parent=1 // pred_fallthru
      _
    // Predicated region
    $region22: #{tpu_custom_call.1} parent=1 // pred_check
      _
    $region23: #{tpu_custom_call.1} parent=1 // pred_check_branch
      %64 = sbr.rel (0) target = $region25
    $region24: #{tpu_custom_call.1} parent=1 // pred_region
      %s66 = ssub.s32 768, 768
      %67 = vsyncadd [#allocation9], %s66
      %s68 = sshll.u32 [#allocation8], 4
      %s69 = int_to_ptr.vmem [resolvable:$true] %s68
      %74 = dma.hbm_to_vmem [thread:$0]  %s5, 768, %s69, [#allocation9], 128, 128, 8
    $region25: #{tpu_custom_call.1} parent=1 // pred_fallthru
      _
    // Predicated region
    $region26: #{tpu_custom_call.1} parent=1 // pred_check
      _
    $region27: #{tpu_custom_call.1} parent=1 // pred_check_branch
      %76 = sbr.rel (0) target = $region29
    $region28: #{tpu_custom_call.1} parent=1 // pred_region
      %s78 = ssub.s32 16, 16
      %79 = vsyncadd [#allocation9], %s78
      %s81 = sshll.u32 [#allocation10], 4
      %s82 = int_to_ptr.vmem [resolvable:$true] %s81
      %84 = dma.hbm_to_vmem [thread:$0]  %s6, 16, %s82, [#allocation9]
    $region29: #{tpu_custom_call.1} parent=1 // pred_fallthru
      _
    // Predicated region
    $region30: #{tpu_custom_call.1} parent=1 // pred_check
      _
    $region31: #{tpu_custom_call.1} parent=1 // pred_check_branch
      %86 = sbr.rel (0) target = $region33
    $region32: #{tpu_custom_call.1} parent=1 // pred_region
      %s88 = ssub.s32 768, 768
      %89 = vsyncadd [#allocation12], %s88
      %s90 = sshll.u32 [#allocation11], 4
      %s91 = int_to_ptr.vmem [resolvable:$true] %s90
      %96 = dma.hbm_to_vmem [thread:$0]  %s7, 768, %s91, [#allocation12], 128, 128, 8
    $region33: #{tpu_custom_call.1} parent=1 // pred_fallthru
      _
    // Predicated region
    $region34: #{tpu_custom_call.1} parent=1 // pred_check
      _
    $region35: #{tpu_custom_call.1} parent=1 // pred_check_branch
      %98 = sbr.rel (0) target = $region37
    $region36: #{tpu_custom_call.1} parent=1 // pred_region
      %s100 = ssub.s32 1024, 1024
      %101 = vsyncadd [#allocation12], %s100
      %s102 = sshll.u32 [#allocation13], 4
      %s103 = int_to_ptr.vmem [resolvable:$true] %s102
      %108 = dma.hbm_to_vmem [thread:$0]  %s8, 1024, %s103, [#allocation12], 128, 128, 8
    $region37: #{tpu_custom_call.1} parent=1 // pred_fallthru
      _
    // Predicated region
    $region38: #{tpu_custom_call.1} parent=1 // pred_check
      _
    $region39: #{tpu_custom_call.1} parent=1 // pred_check_branch
      %110 = sbr.rel (0) target = $region41
    $region40: #{tpu_custom_call.1} parent=1 // pred_region
      %s112 = ssub.s32 1024, 1024
      %113 = vsyncadd [#allocation15], %s112
      %s114 = sshll.u32 [#allocation14], 4
      %s115 = int_to_ptr.vmem [resolvable:$true] %s114
      %120 = dma.hbm_to_vmem [thread:$0]  %s9, 1024, %s115, [#allocation15], 128, 128, 8
    $region41: #{tpu_custom_call.1} parent=1 // pred_fallthru
      _
    // Predicated region
    $region42: #{tpu_custom_call.1} parent=1 // pred_check
      _
    $region43: #{tpu_custom_call.1} parent=1 // pred_check_branch
      %122 = sbr.rel (0) target = $region45
    $region44: #{tpu_custom_call.1} parent=1 // pred_region
      _
    $region45: #{tpu_custom_call.1} parent=1 // pred_fallthru
      _
    // Predicated region
    $region46: #{tpu_custom_call.1} parent=1 // pred_check
      _
    $region47: #{tpu_custom_call.1} parent=1 // pred_check_branch
      %124 = sbr.rel (0) target = $region49
    $region48: #{tpu_custom_call.1} parent=1 // pred_region
      %s126 = ssub.s32 256, 256
      %127 = vsyncadd [#allocation15], %s126
      %s128 = sshll.u32 [#allocation16], 4
      %s129 = int_to_ptr.vmem [resolvable:$true] %s128
      %134 = dma.hbm_to_vmem [thread:$0]  %s11, 256, %s129, [#allocation15], 128, 128, 8
    $region49: #{tpu_custom_call.1} parent=1 // pred_fallthru
      _
    // Predicated region
    $region50: #{tpu_custom_call.1} parent=1 // pred_check
      _
    $region51: #{tpu_custom_call.1} parent=1 // pred_check_branch
      %136 = sbr.rel (0) target = $region53
    $region52: #{tpu_custom_call.1} parent=1 // pred_region
      %s138 = ssub.s32 256, 256
      %139 = vsyncadd [#allocation18], %s138
      %s140 = sshll.u32 [#allocation17], 4
      %s141 = int_to_ptr.vmem [resolvable:$true] %s140
      %146 = dma.hbm_to_vmem [thread:$0]  %s12, 256, %s141, [#allocation18], 128, 128, 8
    $region53: #{tpu_custom_call.1} parent=1 // pred_fallthru
      _
    // Predicated region
    $region54: #{tpu_custom_call.1} parent=1 // pred_check
      _
    $region55: #{tpu_custom_call.1} parent=1 // pred_check_branch
      %148 = sbr.rel (0) target = $region57
    $region56: #{tpu_custom_call.1} parent=1 // pred_region
      %149 = dma.done [#allocation3], 256
    $region57: #{tpu_custom_call.1} parent=1 // pred_fallthru
      _
    // Predicated region
    $region58: #{tpu_custom_call.1} parent=1 // pred_check
      _
    $region59: #{tpu_custom_call.1} parent=1 // pred_check_branch
      %151 = sbr.rel (0) target = $region61
    $region60: #{tpu_custom_call.1} parent=1 // pred_region
      %152 = dma.done [#allocation6], 768
    $region61: #{tpu_custom_call.1} parent=1 // pred_fallthru
      _
    // Predicated region
    $region62: #{tpu_custom_call.1} parent=1 // pred_check
      _
    $region63: #{tpu_custom_call.1} parent=1 // pred_check_branch
      %154 = sbr.rel (0) target = $region65
    $region64: #{tpu_custom_call.1} parent=1 // pred_region
      %155 = dma.done [#allocation6], 16
    $region65: #{tpu_custom_call.1} parent=1 // pred_fallthru
      _
    // Predicated region
    $region66: #{tpu_custom_call.1} parent=1 // pred_check
      _
    $region67: #{tpu_custom_call.1} parent=1 // pred_check_branch
      %157 = sbr.rel (0) target = $region69
    $region68: #{tpu_custom_call.1} parent=1 // pred_region
      %158 = dma.done [#allocation9], 768
    $region69: #{tpu_custom_call.1} parent=1 // pred_fallthru
      _
    // Predicated region
    $region70: #{tpu_custom_call.1} parent=1 // pred_check
      _
    $region71: #{tpu_custom_call.1} parent=1 // pred_check_branch
      %160 = sbr.rel (0) target = $region73
    $region72: #{tpu_custom_call.1} parent=1 // pred_region
      %161 = dma.done [#allocation9], 16
    $region73: #{tpu_custom_call.1} parent=1 // pred_fallthru
      _
    // Predicated region
    $region74: #{tpu_custom_call.1} parent=1 // pred_check
      _
    $region75: #{tpu_custom_call.1} parent=1 // pred_check_branch
      %163 = sbr.rel (0) target = $region77
    $region76: #{tpu_custom_call.1} parent=1 // pred_region
      %164 = dma.done [#allocation12], 768
    $region77: #{tpu_custom_call.1} parent=1 // pred_fallthru
      _
    // Predicated region
    $region78: #{tpu_custom_call.1} parent=1 // pred_check
      _
    $region79: #{tpu_custom_call.1} parent=1 // pred_check_branch
      %166 = sbr.rel (0) target = $region81
    $region80: #{tpu_custom_call.1} parent=1 // pred_region
      %167 = dma.done [#allocation12], 1024
    $region81: #{tpu_custom_call.1} parent=1 // pred_fallthru
      _
    // Predicated region
    $region82: #{tpu_custom_call.1} parent=1 // pred_check
      _
    $region83: #{tpu_custom_call.1} parent=1 // pred_check_branch
      %169 = sbr.rel (0) target = $region85
    $region84: #{tpu_custom_call.1} parent=1 // pred_region
      %170 = dma.done [#allocation15], 1024
    $region85: #{tpu_custom_call.1} parent=1 // pred_fallthru
      _
    // Predicated region
    $region86: #{tpu_custom_call.1} parent=1 // pred_check
      _
    $region87: #{tpu_custom_call.1} parent=1 // pred_check_branch
      %172 = sbr.rel (0) target = $region89
    $region88: #{tpu_custom_call.1} parent=1 // pred_region
      %173 = dma.done [#allocation15], 256
    $region89: #{tpu_custom_call.1} parent=1 // pred_fallthru
      _
    // Predicated region
    $region90: #{tpu_custom_call.1} parent=1 // pred_check
      _
    $region91: #{tpu_custom_call.1} parent=1 // pred_check_branch
      %175 = sbr.rel (0) target = $region93
    $region92: #{tpu_custom_call.1} parent=1 // pred_region
      %176 = dma.done [#allocation18], 256
    $region93: #{tpu_custom_call.1} parent=1 // pred_fallthru
      _
    %v177 = vld [vmem:[#allocation2] sm:$0xff]
    %v178 = vld [vmem:[#allocation2 + $0x8] sm:$0xff]
    %v179 = vld [vmem:[#allocation5] sm:$0xff]
    %v180 = vld [vmem:[#allocation5 + $0x8] sm:$0xff]
    %v181 = vld [vmem:[#allocation5 + $0x10] sm:$0xff]
    %v182 = vld [vmem:[#allocation5 + $0x18] sm:$0xff]
    %v183 = vld [vmem:[#allocation5 + $0x20] sm:$0xff]
    %v184 = vld [vmem:[#allocation5 + $0x28] sm:$0xff]
    %v185 = vld [vmem:[%s2] sm:$0x1]
    %v187 = vlaneseq
    %v188 = vshrl.u32 %v187, 7
    %v189 = vsub.s32 0, %v188
    %v190 = vrot.slane %v185, %v189
    %vm192 = vcmask 392192
    %v194 = vsel %vm192, %v177, 0
    %v197 = vsel %vm192, %v178, 0
    %199 = vmatprep.subr.mxu0 0.0
    %200 = vmatpush1.msra.mxu0 0.0
    %201 = vmatprep.subr.mxu0 0.0
    %202 = vmatpush1.msra.mxu0 0.0
    %203 = vmatprep.subr.mxu0 0.0
    %204 = vmatpush1.msra.mxu0 0.0
    %205 = vmatprep.subr.mxu0 0.0
    %206 = vmatpush1.msra.mxu0 0.0
    %207 = vmatprep.subr.mxu0 0.0
    %208 = vmatpush1.msra.mxu0 0.0
    %209 = vmatprep.subr.mxu0 0.0
    %210 = vmatpush1.msra.mxu0 0.0
    %211 = vmatprep.subr.mxu0 0.0
    %212 = vmatpush1.msra.mxu0 0.0
    %213 = vmatprep.subr.mxu0 0.0
    %214 = vmatpush1.msra.mxu0 0.0
    %215 = vmatprep.subr.mxu0 0.0
    %216 = vmatpush1.msra.mxu0 0.0
    %217 = vmatprep.subr.mxu0 0.0
    %218 = vmatpush1.msra.mxu0 0.0
    %219 = vmatprep.subr.mxu0 0.0
    %v220 = vand.u32 %v184, 4294901760
    %221 = vmatpush1.msra.mxu0 %v220
    %222 = vmatprep.subr.mxu0 0.0
    %v223 = vand.u32 %v183, 4294901760
    %224 = vmatpush1.msra.mxu0 %v223
    %225 = vmatprep.subr.mxu0 0.0
    %v226 = vand.u32 %v182, 4294901760
    %227 = vmatpush1.msra.mxu0 %v226
    %228 = vmatprep.subr.mxu0 0.0
    %v229 = vand.u32 %v181, 4294901760
    %230 = vmatpush1.msra.mxu0 %v229
    %231 = vmatprep.subr.mxu0 0.0
    %v232 = vand.u32 %v180, 4294901760
    %233 = vmatpush1.msra.mxu0 %v232
    %234 = vmatprep.subr.mxu0 0.0
    %v235 = vand.u32 %v179, 4294901760
    %236 = vmatpush1.msra.mxu0 %v235
    %237 = vmatprep.subr.mxu0 0.0
    %238 = vmatpush2.msra.mxu0 0.0
    %239 = vmatprep.subr.mxu0 0.0
    %240 = vmatpush2.msra.mxu0 0.0
    %241 = vmatprep.subr.mxu0 0.0
    %242 = vmatpush2.msra.mxu0 0.0
    %243 = vmatprep.subr.mxu0 0.0
    %244 = vmatpush2.msra.mxu0 0.0
    %245 = vmatprep.subr.mxu0 0.0
    %246 = vmatpush2.msra.mxu0 0.0
    %247 = vmatprep.subr.mxu0 0.0
    %248 = vmatpush2.msra.mxu0 0.0
    %249 = vmatprep.subr.mxu0 0.0
    %250 = vmatpush2.msra.mxu0 0.0
    %251 = vmatprep.subr.mxu0 0.0
    %252 = vmatpush2.msra.mxu0 0.0
    %253 = vmatprep.subr.mxu0 0.0
    %254 = vmatpush2.msra.mxu0 0.0
    %255 = vmatprep.subr.mxu0 0.0
    %256 = vmatpush2.msra.mxu0 0.0
    %257 = vmatprep.subr.mxu0 0.0
    %258 = vmatpush2.msra.mxu0 0.0
    %259 = vmatprep.subr.mxu0 0.0
    %260 = vmatpush2.msra.mxu0 0.0
    %261 = vmatprep.subr.mxu0 0.0
    %262 = vmatpush2.msra.mxu0 0.0
    %263 = vmatprep.subr.mxu0 0.0
    %264 = vmatpush2.msra.mxu0 0.0
    %265 = vmatprep.subr.mxu0 0.0
    %266 = vmatpush2.msra.mxu0 0.0
    %267 = vmatprep.subr.mxu0 0.0
    %268 = vmatpush2.msra.mxu0 0.0
    %269 = vmatprep.mubr.f32.mxu0 0.0
    %v270 = vand.u32 %v194, 4294901760
    %v271 = vsub.f32 %v194, %v270
    %v272 = vand.u32 %v271, 4294901760
    %v273 = vsub.f32 %v271, %v272
    %v274 = vand.u32 %v273, 4294901760
    %275 = vmatmul.mubr.f32.gmra.mxu0 %v274
    %v276 = vpop.f32.mrf.mxu0
    %v277 = vadd.f32 %v190, %v276
    %v278 = vpop.f32.mrf.mxu0
    %279 = vmatprep.mubr.f32.mxu0 0.0
    %v280 = vand.u32 %v197, 4294901760
    %v281 = vsub.f32 %v197, %v280
    %v282 = vand.u32 %v281, 4294901760
    %v283 = vsub.f32 %v281, %v282
    %v284 = vand.u32 %v283, 4294901760
    %285 = vmatmul.mubr.f32.gmra.mxu0 %v284
    %v286 = vpop.f32.mrf.mxu0
    %v287 = vadd.f32 %v190, %v286
    %v288 = vpop.f32.mrf.mxu0
    %289 = vdwg.mxu0
    %290 = vmatprep.subr.mxu0 0.0
    %291 = vmatpush1.msra.mxu0 0.0
    %292 = vmatprep.subr.mxu0 0.0
    %293 = vmatpush1.msra.mxu0 0.0
    %294 = vmatprep.subr.mxu0 0.0
    %295 = vmatpush1.msra.mxu0 0.0
    %296 = vmatprep.subr.mxu0 0.0
    %297 = vmatpush1.msra.mxu0 0.0
    %298 = vmatprep.subr.mxu0 0.0
    %299 = vmatpush1.msra.mxu0 0.0
    %300 = vmatprep.subr.mxu0 0.0
    %301 = vmatpush1.msra.mxu0 0.0
    %302 = vmatprep.subr.mxu0 0.0
    %303 = vmatpush1.msra.mxu0 0.0
    %304 = vmatprep.subr.mxu0 0.0
    %305 = vmatpush1.msra.mxu0 0.0
    %306 = vmatprep.subr.mxu0 0.0
    %307 = vmatpush1.msra.mxu0 0.0
    %308 = vmatprep.subr.mxu0 0.0
    %309 = vmatpush1.msra.mxu0 0.0
    %310 = vmatprep.subr.mxu0 0.0
    %v311 = vand.u32 %v184, 4294901760
    %v312 = vsub.f32 %v184, %v311
    %v313 = vand.u32 %v312, 4294901760
    %v314 = vsub.f32 %v312, %v313
    %v315 = vand.u32 %v314, 4294901760
    %316 = vmatpush1.msra.mxu0 %v315
    %317 = vmatprep.subr.mxu0 0.0
    %v318 = vand.u32 %v183, 4294901760
    %v319 = vsub.f32 %v183, %v318
    %v320 = vand.u32 %v319, 4294901760
    %v321 = vsub.f32 %v319, %v320
    %v322 = vand.u32 %v321, 4294901760
    %323 = vmatpush1.msra.mxu0 %v322
    %324 = vmatprep.subr.mxu0 0.0
    %v325 = vand.u32 %v182, 4294901760
    %v326 = vsub.f32 %v182, %v325
    %v327 = vand.u32 %v326, 4294901760
    %v328 = vsub.f32 %v326, %v327
    %v329 = vand.u32 %v328, 4294901760
    %330 = vmatpush1.msra.mxu0 %v329
    %331 = vmatprep.subr.mxu0 0.0
    %v332 = vand.u32 %v181, 4294901760
    %v333 = vsub.f32 %v181, %v332
    %v334 = vand.u32 %v333, 4294901760
    %v335 = vsub.f32 %v333, %v334
    %v336 = vand.u32 %v335, 4294901760
    %337 = vmatpush1.msra.mxu0 %v336
    %338 = vmatprep.subr.mxu0 0.0
    %v339 = vand.u32 %v180, 4294901760
    %v340 = vsub.f32 %v180, %v339
    %v341 = vand.u32 %v340, 4294901760
    %v342 = vsub.f32 %v340, %v341
    %v343 = vand.u32 %v342, 4294901760
    %344 = vmatpush1.msra.mxu0 %v343
    %345 = vmatprep.subr.mxu0 0.0
    %v346 = vand.u32 %v179, 4294901760
    %v347 = vsub.f32 %v179, %v346
    %v348 = vand.u32 %v347, 4294901760
    %v349 = vsub.f32 %v347, %v348
    %v350 = vand.u32 %v349, 4294901760
    %351 = vmatpush1.msra.mxu0 %v350
    %352 = vmatprep.subr.mxu0 0.0
    %353 = vmatpush2.msra.mxu0 0.0
    %354 = vmatprep.subr.mxu0 0.0
    %355 = vmatpush2.msra.mxu0 0.0
    %356 = vmatprep.subr.mxu0 0.0
    %357 = vmatpush2.msra.mxu0 0.0
    %358 = vmatprep.subr.mxu0 0.0
    %359 = vmatpush2.msra.mxu0 0.0
    %360 = vmatprep.subr.mxu0 0.0
    %361 = vmatpush2.msra.mxu0 0.0
    %362 = vmatprep.subr.mxu0 0.0
    %363 = vmatpush2.msra.mxu0 0.0
    %364 = vmatprep.subr.mxu0 0.0
    %365 = vmatpush2.msra.mxu0 0.0
    %366 = vmatprep.subr.mxu0 0.0
    %367 = vmatpush2.msra.mxu0 0.0
    %368 = vmatprep.subr.mxu0 0.0
    %369 = vmatpush2.msra.mxu0 0.0
    %370 = vmatprep.subr.mxu0 0.0
    %371 = vmatpush2.msra.mxu0 0.0
    %372 = vmatprep.subr.mxu0 0.0
    %373 = vmatpush2.msra.mxu0 0.0
    %374 = vmatprep.subr.mxu0 0.0
    %375 = vmatpush2.msra.mxu0 0.0
    %376 = vmatprep.subr.mxu0 0.0
    %377 = vmatpush2.msra.mxu0 0.0
    %378 = vmatprep.subr.mxu0 0.0
    %379 = vmatpush2.msra.mxu0 0.0
    %380 = vmatprep.subr.mxu0 0.0
    %381 = vmatpush2.msra.mxu0 0.0
    %382 = vmatprep.subr.mxu0 0.0
    %383 = vmatpush2.msra.mxu0 0.0
    %384 = vmatprep.mubr.f32.mxu0 0.0
    %v385 = vand.u32 %v194, 4294901760
    %386 = vmatmul.mubr.f32.gmra.mxu0 %v385
    %v387 = vpop.f32.mrf.mxu0
    %v388 = vadd.f32 %v277, %v387
    %v389 = vpop.f32.mrf.mxu0
    %390 = vmatprep.mubr.f32.mxu0 0.0
    %v391 = vand.u32 %v197, 4294901760
    %392 = vmatmul.mubr.f32.gmra.mxu0 %v391
    %v393 = vpop.f32.mrf.mxu0
    %v394 = vadd.f32 %v287, %v393
    %v395 = vpop.f32.mrf.mxu0
    %396 = vdwg.mxu0
    %397 = vmatprep.subr.mxu0 0.0
    %398 = vmatpush1.msra.mxu0 0.0
    %399 = vmatprep.subr.mxu0 0.0
    %400 = vmatpush1.msra.mxu0 0.0
    %401 = vmatprep.subr.mxu0 0.0
    %402 = vmatpush1.msra.mxu0 0.0
    %403 = vmatprep.subr.mxu0 0.0
    %404 = vmatpush1.msra.mxu0 0.0
    %405 = vmatprep.subr.mxu0 0.0
    %406 = vmatpush1.msra.mxu0 0.0
    %407 = vmatprep.subr.mxu0 0.0
    %408 = vmatpush1.msra.mxu0 0.0
    %409 = vmatprep.subr.mxu0 0.0
    %410 = vmatpush1.msra.mxu0 0.0
    %411 = vmatprep.subr.mxu0 0.0
    %412 = vmatpush1.msra.mxu0 0.0
    %413 = vmatprep.subr.mxu0 0.0
    %414 = vmatpush1.msra.mxu0 0.0
    %415 = vmatprep.subr.mxu0 0.0
    %416 = vmatpush1.msra.mxu0 0.0
    %417 = vmatprep.subr.mxu0 0.0
    %v418 = vand.u32 %v184, 4294901760
    %v419 = vsub.f32 %v184, %v418
    %420 = vmatpush1.msra.mxu0 %v419
    %421 = vmatprep.subr.mxu0 0.0
    %v422 = vand.u32 %v183, 4294901760
    %v423 = vsub.f32 %v183, %v422
    %424 = vmatpush1.msra.mxu0 %v423
    %425 = vmatprep.subr.mxu0 0.0
    %v426 = vand.u32 %v182, 4294901760
    %v427 = vsub.f32 %v182, %v426
    %428 = vmatpush1.msra.mxu0 %v427
    %429 = vmatprep.subr.mxu0 0.0
    %v430 = vand.u32 %v181, 4294901760
    %v431 = vsub.f32 %v181, %v430
    %432 = vmatpush1.msra.mxu0 %v431
    %433 = vmatprep.subr.mxu0 0.0
    %v434 = vand.u32 %v180, 4294901760
    %v435 = vsub.f32 %v180, %v434
    %436 = vmatpush1.msra.mxu0 %v435
    %437 = vmatprep.subr.mxu0 0.0
    %v438 = vand.u32 %v179, 4294901760
    %v439 = vsub.f32 %v179, %v438
    %440 = vmatpush1.msra.mxu0 %v439
    %441 = vmatprep.subr.mxu0 0.0
    %442 = vmatpush2.msra.mxu0 0.0
    %443 = vmatprep.subr.mxu0 0.0
    %444 = vmatpush2.msra.mxu0 0.0
    %445 = vmatprep.subr.mxu0 0.0
    %446 = vmatpush2.msra.mxu0 0.0
    %447 = vmatprep.subr.mxu0 0.0
    %448 = vmatpush2.msra.mxu0 0.0
    %449 = vmatprep.subr.mxu0 0.0
    %450 = vmatpush2.msra.mxu0 0.0
    %451 = vmatprep.subr.mxu0 0.0
    %452 = vmatpush2.msra.mxu0 0.0
    %453 = vmatprep.subr.mxu0 0.0
    %454 = vmatpush2.msra.mxu0 0.0
    %455 = vmatprep.subr.mxu0 0.0
    %456 = vmatpush2.msra.mxu0 0.0
    %457 = vmatprep.subr.mxu0 0.0
    %458 = vmatpush2.msra.mxu0 0.0
    %459 = vmatprep.subr.mxu0 0.0
    %460 = vmatpush2.msra.mxu0 0.0
    %461 = vmatprep.subr.mxu0 0.0
    %462 = vmatpush2.msra.mxu0 0.0
    %463 = vmatprep.subr.mxu0 0.0
    %464 = vmatpush2.msra.mxu0 0.0
    %465 = vmatprep.subr.mxu0 0.0
    %466 = vmatpush2.msra.mxu0 0.0
    %467 = vmatprep.subr.mxu0 0.0
    %468 = vmatpush2.msra.mxu0 0.0
    %469 = vmatprep.subr.mxu0 0.0
    %470 = vmatpush2.msra.mxu0 0.0
    %471 = vmatprep.subr.mxu0 0.0
    %472 = vmatpush2.msra.mxu0 0.0
    %473 = vmatprep.mubr.f32.mxu0 0.0
    %v474 = vand.u32 %v194, 4294901760
    %v475 = vsub.f32 %v194, %v474
    %476 = vmatmul.mubr.f32.gmra.mxu0 %v475
    %v477 = vpop.f32.mrf.mxu0
    %v478 = vadd.f32 %v388, %v477
    %v479 = vpop.f32.mrf.mxu0
    %480 = vmatprep.mubr.f32.mxu0 0.0
    %v481 = vand.u32 %v197, 4294901760
    %v482 = vsub.f32 %v197, %v481
    %483 = vmatmul.mubr.f32.gmra.mxu0 %v482
    %v484 = vpop.f32.mrf.mxu0
    %v485 = vadd.f32 %v394, %v484
    %v486 = vpop.f32.mrf.mxu0
    %487 = vdwg.mxu0
    %488 = vmatprep.subr.mxu0 0.0
    %489 = vmatpush1.msra.mxu0 0.0
    %490 = vmatprep.subr.mxu0 0.0
    %491 = vmatpush1.msra.mxu0 0.0
    %492 = vmatprep.subr.mxu0 0.0
    %493 = vmatpush1.msra.mxu0 0.0
    %494 = vmatprep.subr.mxu0 0.0
    %495 = vmatpush1.msra.mxu0 0.0
    %496 = vmatprep.subr.mxu0 0.0
    %497 = vmatpush1.msra.mxu0 0.0
    %498 = vmatprep.subr.mxu0 0.0
    %499 = vmatpush1.msra.mxu0 0.0
    %500 = vmatprep.subr.mxu0 0.0
    %501 = vmatpush1.msra.mxu0 0.0
    %502 = vmatprep.subr.mxu0 0.0
    %503 = vmatpush1.msra.mxu0 0.0
    %504 = vmatprep.subr.mxu0 0.0
    %505 = vmatpush1.msra.mxu0 0.0
    %506 = vmatprep.subr.mxu0 0.0
    %507 = vmatpush1.msra.mxu0 0.0
    %508 = vmatprep.subr.mxu0 0.0
    %v509 = vand.u32 %v184, 4294901760
    %510 = vmatpush1.msra.mxu0 %v509
    %511 = vmatprep.subr.mxu0 0.0
    %v512 = vand.u32 %v183, 4294901760
    %513 = vmatpush1.msra.mxu0 %v512
    %514 = vmatprep.subr.mxu0 0.0
    %v515 = vand.u32 %v182, 4294901760
    %516 = vmatpush1.msra.mxu0 %v515
    %517 = vmatprep.subr.mxu0 0.0
    %v518 = vand.u32 %v181, 4294901760
    %519 = vmatpush1.msra.mxu0 %v518
    %520 = vmatprep.subr.mxu0 0.0
    %v521 = vand.u32 %v180, 4294901760
    %522 = vmatpush1.msra.mxu0 %v521
    %523 = vmatprep.subr.mxu0 0.0
    %v524 = vand.u32 %v179, 4294901760
    %525 = vmatpush1.msra.mxu0 %v524
    %526 = vmatprep.subr.mxu0 0.0
    %527 = vmatpush2.msra.mxu0 0.0
    %528 = vmatprep.subr.mxu0 0.0
    %529 = vmatpush2.msra.mxu0 0.0
    %530 = vmatprep.subr.mxu0 0.0
    %531 = vmatpush2.msra.mxu0 0.0
    %532 = vmatprep.subr.mxu0 0.0
    %533 = vmatpush2.msra.mxu0 0.0
    %534 = vmatprep.subr.mxu0 0.0
    %535 = vmatpush2.msra.mxu0 0.0
    %536 = vmatprep.subr.mxu0 0.0
    %537 = vmatpush2.msra.mxu0 0.0
    %538 = vmatprep.subr.mxu0 0.0
    %539 = vmatpush2.msra.mxu0 0.0
    %540 = vmatprep.subr.mxu0 0.0
    %541 = vmatpush2.msra.mxu0 0.0
    %542 = vmatprep.subr.mxu0 0.0
    %543 = vmatpush2.msra.mxu0 0.0
    %544 = vmatprep.subr.mxu0 0.0
    %545 = vmatpush2.msra.mxu0 0.0
    %546 = vmatprep.subr.mxu0 0.0
    %547 = vmatpush2.msra.mxu0 0.0
    %548 = vmatprep.subr.mxu0 0.0
    %549 = vmatpush2.msra.mxu0 0.0
    %550 = vmatprep.subr.mxu0 0.0
    %551 = vmatpush2.msra.mxu0 0.0
    %552 = vmatprep.subr.mxu0 0.0
    %553 = vmatpush2.msra.mxu0 0.0
    %554 = vmatprep.subr.mxu0 0.0
    %555 = vmatpush2.msra.mxu0 0.0
    %556 = vmatprep.subr.mxu0 0.0
    %557 = vmatpush2.msra.mxu0 0.0
    %558 = vmatprep.mubr.f32.mxu0 0.0
    %v559 = vand.u32 %v194, 4294901760
    %v560 = vsub.f32 %v194, %v559
    %v561 = vand.u32 %v560, 4294901760
    %562 = vmatmul.mubr.f32.gmra.mxu0 %v561
    %v563 = vpop.f32.mrf.mxu0
    %v564 = vadd.f32 %v478, %v563
    %v565 = vpop.f32.mrf.mxu0
    %566 = vmatprep.mubr.f32.mxu0 0.0
    %v567 = vand.u32 %v197, 4294901760
    %v568 = vsub.f32 %v197, %v567
    %v569 = vand.u32 %v568, 4294901760
    %570 = vmatmul.mubr.f32.gmra.mxu0 %v569
    %v571 = vpop.f32.mrf.mxu0
    %v572 = vadd.f32 %v485, %v571
    %v573 = vpop.f32.mrf.mxu0
    %574 = vdwg.mxu0
    %575 = vmatprep.subr.mxu0 0.0
    %576 = vmatpush1.msra.mxu0 0.0
    %577 = vmatprep.subr.mxu0 0.0
    %578 = vmatpush1.msra.mxu0 0.0
    %579 = vmatprep.subr.mxu0 0.0
    %580 = vmatpush1.msra.mxu0 0.0
    %581 = vmatprep.subr.mxu0 0.0
    %582 = vmatpush1.msra.mxu0 0.0
    %583 = vmatprep.subr.mxu0 0.0
    %584 = vmatpush1.msra.mxu0 0.0
    %585 = vmatprep.subr.mxu0 0.0
    %586 = vmatpush1.msra.mxu0 0.0
    %587 = vmatprep.subr.mxu0 0.0
    %588 = vmatpush1.msra.mxu0 0.0
    %589 = vmatprep.subr.mxu0 0.0
    %590 = vmatpush1.msra.mxu0 0.0
    %591 = vmatprep.subr.mxu0 0.0
    %592 = vmatpush1.msra.mxu0 0.0
    %593 = vmatprep.subr.mxu0 0.0
    %594 = vmatpush1.msra.mxu0 0.0
    %595 = vmatprep.subr.mxu0 0.0
    %v596 = vand.u32 %v184, 4294901760
    %v597 = vsub.f32 %v184, %v596
    %v598 = vand.u32 %v597, 4294901760
    %599 = vmatpush1.msra.mxu0 %v598
    %600 = vmatprep.subr.mxu0 0.0
    %v601 = vand.u32 %v183, 4294901760
    %v602 = vsub.f32 %v183, %v601
    %v603 = vand.u32 %v602, 4294901760
    %604 = vmatpush1.msra.mxu0 %v603
    %605 = vmatprep.subr.mxu0 0.0
    %v606 = vand.u32 %v182, 4294901760
    %v607 = vsub.f32 %v182, %v606
    %v608 = vand.u32 %v607, 4294901760
    %609 = vmatpush1.msra.mxu0 %v608
    %610 = vmatprep.subr.mxu0 0.0
    %v611 = vand.u32 %v181, 4294901760
    %v612 = vsub.f32 %v181, %v611
    %v613 = vand.u32 %v612, 4294901760
    %614 = vmatpush1.msra.mxu0 %v613
    %615 = vmatprep.subr.mxu0 0.0
    %v616 = vand.u32 %v180, 4294901760
    %v617 = vsub.f32 %v180, %v616
    %v618 = vand.u32 %v617, 4294901760
    %619 = vmatpush1.msra.mxu0 %v618
    %620 = vmatprep.subr.mxu0 0.0
    %v621 = vand.u32 %v179, 4294901760
    %v622 = vsub.f32 %v179, %v621
    %v623 = vand.u32 %v622, 4294901760
    %624 = vmatpush1.msra.mxu0 %v623
    %625 = vmatprep.subr.mxu0 0.0
    %626 = vmatpush2.msra.mxu0 0.0
    %627 = vmatprep.subr.mxu0 0.0
    %628 = vmatpush2.msra.mxu0 0.0
    %629 = vmatprep.subr.mxu0 0.0
    %630 = vmatpush2.msra.mxu0 0.0
    %631 = vmatprep.subr.mxu0 0.0
    %632 = vmatpush2.msra.mxu0 0.0
    %633 = vmatprep.subr.mxu0 0.0
    %634 = vmatpush2.msra.mxu0 0.0
    %635 = vmatprep.subr.mxu0 0.0
    %636 = vmatpush2.msra.mxu0 0.0
    %637 = vmatprep.subr.mxu0 0.0
    %638 = vmatpush2.msra.mxu0 0.0
    %639 = vmatprep.subr.mxu0 0.0
    %640 = vmatpush2.msra.mxu0 0.0
    %641 = vmatprep.subr.mxu0 0.0
    %642 = vmatpush2.msra.mxu0 0.0
    %643 = vmatprep.subr.mxu0 0.0
    %644 = vmatpush2.msra.mxu0 0.0
    %645 = vmatprep.subr.mxu0 0.0
    %646 = vmatpush2.msra.mxu0 0.0
    %647 = vmatprep.subr.mxu0 0.0
    %648 = vmatpush2.msra.mxu0 0.0
    %649 = vmatprep.subr.mxu0 0.0
    %650 = vmatpush2.msra.mxu0 0.0
    %651 = vmatprep.subr.mxu0 0.0
    %652 = vmatpush2.msra.mxu0 0.0
    %653 = vmatprep.subr.mxu0 0.0
    %654 = vmatpush2.msra.mxu0 0.0
    %655 = vmatprep.subr.mxu0 0.0
    %656 = vmatpush2.msra.mxu0 0.0
    %657 = vmatprep.mubr.f32.mxu0 0.0
    %v658 = vand.u32 %v194, 4294901760
    %659 = vmatmul.mubr.f32.gmra.mxu0 %v658
    %v660 = vpop.f32.mrf.mxu0
    %v661 = vadd.f32 %v564, %v660
    %v662 = vpop.f32.mrf.mxu0
    %663 = vmatprep.mubr.f32.mxu0 0.0
    %v664 = vand.u32 %v197, 4294901760
    %665 = vmatmul.mubr.f32.gmra.mxu0 %v664
    %v666 = vpop.f32.mrf.mxu0
    %v667 = vadd.f32 %v572, %v666
    %v668 = vpop.f32.mrf.mxu0
    %669 = vdwg.mxu0
    %670 = vmatprep.subr.mxu0 0.0
    %671 = vmatpush1.msra.mxu0 0.0
    %672 = vmatprep.subr.mxu0 0.0
    %673 = vmatpush1.msra.mxu0 0.0
    %674 = vmatprep.subr.mxu0 0.0
    %675 = vmatpush1.msra.mxu0 0.0
    %676 = vmatprep.subr.mxu0 0.0
    %677 = vmatpush1.msra.mxu0 0.0
    %678 = vmatprep.subr.mxu0 0.0
    %679 = vmatpush1.msra.mxu0 0.0
    %680 = vmatprep.subr.mxu0 0.0
    %681 = vmatpush1.msra.mxu0 0.0
    %682 = vmatprep.subr.mxu0 0.0
    %683 = vmatpush1.msra.mxu0 0.0
    %684 = vmatprep.subr.mxu0 0.0
    %685 = vmatpush1.msra.mxu0 0.0
    %686 = vmatprep.subr.mxu0 0.0
    %687 = vmatpush1.msra.mxu0 0.0
    %688 = vmatprep.subr.mxu0 0.0
    %689 = vmatpush1.msra.mxu0 0.0
    %690 = vmatprep.subr.mxu0 0.0
    %v691 = vand.u32 %v184, 4294901760
    %692 = vmatpush1.msra.mxu0 %v691
    %693 = vmatprep.subr.mxu0 0.0
    %v694 = vand.u32 %v183, 4294901760
    %695 = vmatpush1.msra.mxu0 %v694
    %696 = vmatprep.subr.mxu0 0.0
    %v697 = vand.u32 %v182, 4294901760
    %698 = vmatpush1.msra.mxu0 %v697
    %699 = vmatprep.subr.mxu0 0.0
    %v700 = vand.u32 %v181, 4294901760
    %701 = vmatpush1.msra.mxu0 %v700
    %702 = vmatprep.subr.mxu0 0.0
    %v703 = vand.u32 %v180, 4294901760
    %704 = vmatpush1.msra.mxu0 %v703
    %705 = vmatprep.subr.mxu0 0.0
    %v706 = vand.u32 %v179, 4294901760
    %707 = vmatpush1.msra.mxu0 %v706
    %708 = vmatprep.subr.mxu0 0.0
    %709 = vmatpush2.msra.mxu0 0.0
    %710 = vmatprep.subr.mxu0 0.0
    %711 = vmatpush2.msra.mxu0 0.0
    %712 = vmatprep.subr.mxu0 0.0
    %713 = vmatpush2.msra.mxu0 0.0
    %714 = vmatprep.subr.mxu0 0.0
    %715 = vmatpush2.msra.mxu0 0.0
    %716 = vmatprep.subr.mxu0 0.0
    %717 = vmatpush2.msra.mxu0 0.0
    %718 = vmatprep.subr.mxu0 0.0
    %719 = vmatpush2.msra.mxu0 0.0
    %720 = vmatprep.subr.mxu0 0.0
    %721 = vmatpush2.msra.mxu0 0.0
    %722 = vmatprep.subr.mxu0 0.0
    %723 = vmatpush2.msra.mxu0 0.0
    %724 = vmatprep.subr.mxu0 0.0
    %725 = vmatpush2.msra.mxu0 0.0
    %726 = vmatprep.subr.mxu0 0.0
    %727 = vmatpush2.msra.mxu0 0.0
    %728 = vmatprep.subr.mxu0 0.0
    %729 = vmatpush2.msra.mxu0 0.0
    %730 = vmatprep.subr.mxu0 0.0
    %731 = vmatpush2.msra.mxu0 0.0
    %732 = vmatprep.subr.mxu0 0.0
    %733 = vmatpush2.msra.mxu0 0.0
    %734 = vmatprep.subr.mxu0 0.0
    %735 = vmatpush2.msra.mxu0 0.0
    %736 = vmatprep.subr.mxu0 0.0
    %737 = vmatpush2.msra.mxu0 0.0
    %738 = vmatprep.subr.mxu0 0.0
    %739 = vmatpush2.msra.mxu0 0.0
    %740 = vmatprep.mubr.f32.mxu0 0.0
    %v741 = vand.u32 %v194, 4294901760
    %742 = vmatmul.mubr.f32.gmra.mxu0 %v741
    %v743 = vpop.f32.mrf.mxu0
    %v744 = vadd.f32 %v661, %v743
    %v745 = vpop.f32.mrf.mxu0
    %746 = vmatprep.mubr.f32.mxu0 0.0
    %v747 = vand.u32 %v197, 4294901760
    %748 = vmatmul.mubr.f32.gmra.mxu0 %v747
    %v749 = vpop.f32.mrf.mxu0
    %v750 = vadd.f32 %v667, %v749
    %v751 = vpop.f32.mrf.mxu0
    %752 = vdwg.mxu0
    %v753 = vld [vmem:[#allocation11] sm:$0xff]
    %v754 = vld [vmem:[#allocation11 + $0x8] sm:$0xff]
    %v755 = vld [vmem:[#allocation11 + $0x10] sm:$0xff]
    %v756 = vld [vmem:[#allocation11 + $0x18] sm:$0xff]
    %v757 = vld [vmem:[#allocation11 + $0x20] sm:$0xff]
    %v758 = vld [vmem:[#allocation11 + $0x28] sm:$0xff]
    %v760 = vsel %vm192, %v744, 0
    %v763 = vsel %vm192, %v750, 0
    %765 = vmatprep.subr.mxu0 0.0
    %766 = vmatpush1.msra.mxu0 0.0
    %767 = vmatprep.subr.mxu0 0.0
    %768 = vmatpush1.msra.mxu0 0.0
    %769 = vmatprep.subr.mxu0 0.0
    %770 = vmatpush1.msra.mxu0 0.0
    %771 = vmatprep.subr.mxu0 0.0
    %772 = vmatpush1.msra.mxu0 0.0
    %773 = vmatprep.subr.mxu0 0.0
    %774 = vmatpush1.msra.mxu0 0.0
    %775 = vmatprep.subr.mxu0 0.0
    %776 = vmatpush1.msra.mxu0 0.0
    %777 = vmatprep.subr.mxu0 0.0
    %778 = vmatpush1.msra.mxu0 0.0
    %779 = vmatprep.subr.mxu0 0.0
    %780 = vmatpush1.msra.mxu0 0.0
    %781 = vmatprep.subr.mxu0 0.0
    %782 = vmatpush1.msra.mxu0 0.0
    %783 = vmatprep.subr.mxu0 0.0
    %784 = vmatpush1.msra.mxu0 0.0
    %785 = vmatprep.subr.mxu0 0.0
    %v786 = vand.u32 %v758, 4294901760
    %787 = vmatpush1.msra.mxu0 %v786
    %788 = vmatprep.subr.mxu0 0.0
    %v789 = vand.u32 %v757, 4294901760
    %790 = vmatpush1.msra.mxu0 %v789
    %791 = vmatprep.subr.mxu0 0.0
    %v792 = vand.u32 %v756, 4294901760
    %793 = vmatpush1.msra.mxu0 %v792
    %794 = vmatprep.subr.mxu0 0.0
    %v795 = vand.u32 %v755, 4294901760
    %796 = vmatpush1.msra.mxu0 %v795
    %797 = vmatprep.subr.mxu0 0.0
    %v798 = vand.u32 %v754, 4294901760
    %799 = vmatpush1.msra.mxu0 %v798
    %800 = vmatprep.subr.mxu0 0.0
    %v801 = vand.u32 %v753, 4294901760
    %802 = vmatpush1.msra.mxu0 %v801
    %803 = vmatprep.subr.mxu0 0.0
    %804 = vmatpush2.msra.mxu0 0.0
    %805 = vmatprep.subr.mxu0 0.0
    %806 = vmatpush2.msra.mxu0 0.0
    %807 = vmatprep.subr.mxu0 0.0
    %808 = vmatpush2.msra.mxu0 0.0
    %809 = vmatprep.subr.mxu0 0.0
    %810 = vmatpush2.msra.mxu0 0.0
    %811 = vmatprep.subr.mxu0 0.0
    %812 = vmatpush2.msra.mxu0 0.0
    %813 = vmatprep.subr.mxu0 0.0
    %814 = vmatpush2.msra.mxu0 0.0
    %815 = vmatprep.subr.mxu0 0.0
    %816 = vmatpush2.msra.mxu0 0.0
    %817 = vmatprep.subr.mxu0 0.0
    %818 = vmatpush2.msra.mxu0 0.0
    %819 = vmatprep.subr.mxu0 0.0
    %820 = vmatpush2.msra.mxu0 0.0
    %821 = vmatprep.subr.mxu0 0.0
    %822 = vmatpush2.msra.mxu0 0.0
    %823 = vmatprep.subr.mxu0 0.0
    %824 = vmatpush2.msra.mxu0 0.0
    %825 = vmatprep.subr.mxu0 0.0
    %826 = vmatpush2.msra.mxu0 0.0
    %827 = vmatprep.subr.mxu0 0.0
    %828 = vmatpush2.msra.mxu0 0.0
    %829 = vmatprep.subr.mxu0 0.0
    %830 = vmatpush2.msra.mxu0 0.0
    %831 = vmatprep.subr.mxu0 0.0
    %832 = vmatpush2.msra.mxu0 0.0
    %833 = vmatprep.subr.mxu0 0.0
    %834 = vmatpush2.msra.mxu0 0.0
    %835 = vmatprep.mubr.f32.mxu0 0.0
    %v836 = vand.u32 %v760, 4294901760
    %v837 = vsub.f32 %v760, %v836
    %v838 = vand.u32 %v837, 4294901760
    %v839 = vsub.f32 %v837, %v838
    %v840 = vand.u32 %v839, 4294901760
    %841 = vmatmul.mubr.f32.gmra.mxu0 %v840
    %v842 = vpop.f32.mrf.mxu0
    %v843 = vadd.f32 0.0, %v842
    %v844 = vpop.f32.mrf.mxu0
    %845 = vmatprep.mubr.f32.mxu0 0.0
    %v846 = vand.u32 %v763, 4294901760
    %v847 = vsub.f32 %v763, %v846
    %v848 = vand.u32 %v847, 4294901760
    %v849 = vsub.f32 %v847, %v848
    %v850 = vand.u32 %v849, 4294901760
    %851 = vmatmul.mubr.f32.gmra.mxu0 %v850
    %v852 = vpop.f32.mrf.mxu0
    %v853 = vadd.f32 0.0, %v852
    %v854 = vpop.f32.mrf.mxu0
    %855 = vdwg.mxu0
    %856 = vmatprep.subr.mxu0 0.0
    %857 = vmatpush1.msra.mxu0 0.0
    %858 = vmatprep.subr.mxu0 0.0
    %859 = vmatpush1.msra.mxu0 0.0
    %860 = vmatprep.subr.mxu0 0.0
    %861 = vmatpush1.msra.mxu0 0.0
    %862 = vmatprep.subr.mxu0 0.0
    %863 = vmatpush1.msra.mxu0 0.0
    %864 = vmatprep.subr.mxu0 0.0
    %865 = vmatpush1.msra.mxu0 0.0
    %866 = vmatprep.subr.mxu0 0.0
    %867 = vmatpush1.msra.mxu0 0.0
    %868 = vmatprep.subr.mxu0 0.0
    %869 = vmatpush1.msra.mxu0 0.0
    %870 = vmatprep.subr.mxu0 0.0
    %871 = vmatpush1.msra.mxu0 0.0
    %872 = vmatprep.subr.mxu0 0.0
    %873 = vmatpush1.msra.mxu0 0.0
    %874 = vmatprep.subr.mxu0 0.0
    %875 = vmatpush1.msra.mxu0 0.0
    %876 = vmatprep.subr.mxu0 0.0
    %v877 = vand.u32 %v758, 4294901760
    %v878 = vsub.f32 %v758, %v877
    %v879 = vand.u32 %v878, 4294901760
    %v880 = vsub.f32 %v878, %v879
    %v881 = vand.u32 %v880, 4294901760
    %882 = vmatpush1.msra.mxu0 %v881
    %883 = vmatprep.subr.mxu0 0.0
    %v884 = vand.u32 %v757, 4294901760
    %v885 = vsub.f32 %v757, %v884
    %v886 = vand.u32 %v885, 4294901760
    %v887 = vsub.f32 %v885, %v886
    %v888 = vand.u32 %v887, 4294901760
    %889 = vmatpush1.msra.mxu0 %v888
    %890 = vmatprep.subr.mxu0 0.0
    %v891 = vand.u32 %v756, 4294901760
    %v892 = vsub.f32 %v756, %v891
    %v893 = vand.u32 %v892, 4294901760
    %v894 = vsub.f32 %v892, %v893
    %v895 = vand.u32 %v894, 4294901760
    %896 = vmatpush1.msra.mxu0 %v895
    %897 = vmatprep.subr.mxu0 0.0
    %v898 = vand.u32 %v755, 4294901760
    %v899 = vsub.f32 %v755, %v898
    %v900 = vand.u32 %v899, 4294901760
    %v901 = vsub.f32 %v899, %v900
    %v902 = vand.u32 %v901, 4294901760
    %903 = vmatpush1.msra.mxu0 %v902
    %904 = vmatprep.subr.mxu0 0.0
    %v905 = vand.u32 %v754, 4294901760
    %v906 = vsub.f32 %v754, %v905
    %v907 = vand.u32 %v906, 4294901760
    %v908 = vsub.f32 %v906, %v907
    %v909 = vand.u32 %v908, 4294901760
    %910 = vmatpush1.msra.mxu0 %v909
    %911 = vmatprep.subr.mxu0 0.0
    %v912 = vand.u32 %v753, 4294901760
    %v913 = vsub.f32 %v753, %v912
    %v914 = vand.u32 %v913, 4294901760
    %v915 = vsub.f32 %v913, %v914
    %v916 = vand.u32 %v915, 4294901760
    %917 = vmatpush1.msra.mxu0 %v916
    %918 = vmatprep.subr.mxu0 0.0
    %919 = vmatpush2.msra.mxu0 0.0
    %920 = vmatprep.subr.mxu0 0.0
    %921 = vmatpush2.msra.mxu0 0.0
    %922 = vmatprep.subr.mxu0 0.0
    %923 = vmatpush2.msra.mxu0 0.0
    %924 = vmatprep.subr.mxu0 0.0
    %925 = vmatpush2.msra.mxu0 0.0
    %926 = vmatprep.subr.mxu0 0.0
    %927 = vmatpush2.msra.mxu0 0.0
    %928 = vmatprep.subr.mxu0 0.0
    %929 = vmatpush2.msra.mxu0 0.0
    %930 = vmatprep.subr.mxu0 0.0
    %931 = vmatpush2.msra.mxu0 0.0
    %932 = vmatprep.subr.mxu0 0.0
    %933 = vmatpush2.msra.mxu0 0.0
    %934 = vmatprep.subr.mxu0 0.0
    %935 = vmatpush2.msra.mxu0 0.0
    %936 = vmatprep.subr.mxu0 0.0
    %937 = vmatpush2.msra.mxu0 0.0
    %938 = vmatprep.subr.mxu0 0.0
    %939 = vmatpush2.msra.mxu0 0.0
    %940 = vmatprep.subr.mxu0 0.0
    %941 = vmatpush2.msra.mxu0 0.0
    %942 = vmatprep.subr.mxu0 0.0
    %943 = vmatpush2.msra.mxu0 0.0
    %944 = vmatprep.subr.mxu0 0.0
    %945 = vmatpush2.msra.mxu0 0.0
    %946 = vmatprep.subr.mxu0 0.0
    %947 = vmatpush2.msra.mxu0 0.0
    %948 = vmatprep.subr.mxu0 0.0
    %949 = vmatpush2.msra.mxu0 0.0
    %950 = vmatprep.mubr.f32.mxu0 0.0
    %v951 = vand.u32 %v760, 4294901760
    %952 = vmatmul.mubr.f32.gmra.mxu0 %v951
    %v953 = vpop.f32.mrf.mxu0
    %v954 = vadd.f32 %v843, %v953
    %v955 = vpop.f32.mrf.mxu0
    %956 = vmatprep.mubr.f32.mxu0 0.0
    %v957 = vand.u32 %v763, 4294901760
    %958 = vmatmul.mubr.f32.gmra.mxu0 %v957
    %v959 = vpop.f32.mrf.mxu0
    %v960 = vadd.f32 %v853, %v959
    %v961 = vpop.f32.mrf.mxu0
    %962 = vdwg.mxu0
    %963 = vmatprep.subr.mxu0 0.0
    %964 = vmatpush1.msra.mxu0 0.0
    %965 = vmatprep.subr.mxu0 0.0
    %966 = vmatpush1.msra.mxu0 0.0
    %967 = vmatprep.subr.mxu0 0.0
    %968 = vmatpush1.msra.mxu0 0.0
    %969 = vmatprep.subr.mxu0 0.0
    %970 = vmatpush1.msra.mxu0 0.0
    %971 = vmatprep.subr.mxu0 0.0
    %972 = vmatpush1.msra.mxu0 0.0
    %973 = vmatprep.subr.mxu0 0.0
    %974 = vmatpush1.msra.mxu0 0.0
    %975 = vmatprep.subr.mxu0 0.0
    %976 = vmatpush1.msra.mxu0 0.0
    %977 = vmatprep.subr.mxu0 0.0
    %978 = vmatpush1.msra.mxu0 0.0
    %979 = vmatprep.subr.mxu0 0.0
    %980 = vmatpush1.msra.mxu0 0.0
    %981 = vmatprep.subr.mxu0 0.0
    %982 = vmatpush1.msra.mxu0 0.0
    %983 = vmatprep.subr.mxu0 0.0
    %v984 = vand.u32 %v758, 4294901760
    %v985 = vsub.f32 %v758, %v984
    %986 = vmatpush1.msra.mxu0 %v985
    %987 = vmatprep.subr.mxu0 0.0
    %v988 = vand.u32 %v757, 4294901760
    %v989 = vsub.f32 %v757, %v988
    %990 = vmatpush1.msra.mxu0 %v989
    %991 = vmatprep.subr.mxu0 0.0
    %v992 = vand.u32 %v756, 4294901760
    %v993 = vsub.f32 %v756, %v992
    %994 = vmatpush1.msra.mxu0 %v993
    %995 = vmatprep.subr.mxu0 0.0
    %v996 = vand.u32 %v755, 4294901760
    %v997 = vsub.f32 %v755, %v996
    %998 = vmatpush1.msra.mxu0 %v997
    %999 = vmatprep.subr.mxu0 0.0
    %v1000 = vand.u32 %v754, 4294901760
    %v1001 = vsub.f32 %v754, %v1000
    %1002 = vmatpush1.msra.mxu0 %v1001
    %1003 = vmatprep.subr.mxu0 0.0
    %v1004 = vand.u32 %v753, 4294901760
    %v1005 = vsub.f32 %v753, %v1004
    %1006 = vmatpush1.msra.mxu0 %v1005
    %1007 = vmatprep.subr.mxu0 0.0
    %1008 = vmatpush2.msra.mxu0 0.0
    %1009 = vmatprep.subr.mxu0 0.0
    %1010 = vmatpush2.msra.mxu0 0.0
    %1011 = vmatprep.subr.mxu0 0.0
    %1012 = vmatpush2.msra.mxu0 0.0
    %1013 = vmatprep.subr.mxu0 0.0
    %1014 = vmatpush2.msra.mxu0 0.0
    %1015 = vmatprep.subr.mxu0 0.0
    %1016 = vmatpush2.msra.mxu0 0.0
    %1017 = vmatprep.subr.mxu0 0.0
    %1018 = vmatpush2.msra.mxu0 0.0
    %1019 = vmatprep.subr.mxu0 0.0
    %1020 = vmatpush2.msra.mxu0 0.0
    %1021 = vmatprep.subr.mxu0 0.0
    %1022 = vmatpush2.msra.mxu0 0.0
    %1023 = vmatprep.subr.mxu0 0.0
    %1024 = vmatpush2.msra.mxu0 0.0
    %1025 = vmatprep.subr.mxu0 0.0
    %1026 = vmatpush2.msra.mxu0 0.0
    %1027 = vmatprep.subr.mxu0 0.0
    %1028 = vmatpush2.msra.mxu0 0.0
    %1029 = vmatprep.subr.mxu0 0.0
    %1030 = vmatpush2.msra.mxu0 0.0
    %1031 = vmatprep.subr.mxu0 0.0
    %1032 = vmatpush2.msra.mxu0 0.0
    %1033 = vmatprep.subr.mxu0 0.0
    %1034 = vmatpush2.msra.mxu0 0.0
    %1035 = vmatprep.subr.mxu0 0.0
    %1036 = vmatpush2.msra.mxu0 0.0
    %1037 = vmatprep.subr.mxu0 0.0
    %1038 = vmatpush2.msra.mxu0 0.0
    %1039 = vmatprep.mubr.f32.mxu0 0.0
    %v1040 = vand.u32 %v760, 4294901760
    %v1041 = vsub.f32 %v760, %v1040
    %1042 = vmatmul.mubr.f32.gmra.mxu0 %v1041
    %v1043 = vpop.f32.mrf.mxu0
    %v1044 = vadd.f32 %v954, %v1043
    %v1045 = vpop.f32.mrf.mxu0
    %1046 = vmatprep.mubr.f32.mxu0 0.0
    %v1047 = vand.u32 %v763, 4294901760
    %v1048 = vsub.f32 %v763, %v1047
    %1049 = vmatmul.mubr.f32.gmra.mxu0 %v1048
    %v1050 = vpop.f32.mrf.mxu0
    %v1051 = vadd.f32 %v960, %v1050
    %v1052 = vpop.f32.mrf.mxu0
    %1053 = vdwg.mxu0
    %1054 = vmatprep.subr.mxu0 0.0
    %1055 = vmatpush1.msra.mxu0 0.0
    %1056 = vmatprep.subr.mxu0 0.0
    %1057 = vmatpush1.msra.mxu0 0.0
    %1058 = vmatprep.subr.mxu0 0.0
    %1059 = vmatpush1.msra.mxu0 0.0
    %1060 = vmatprep.subr.mxu0 0.0
    %1061 = vmatpush1.msra.mxu0 0.0
    %1062 = vmatprep.subr.mxu0 0.0
    %1063 = vmatpush1.msra.mxu0 0.0
    %1064 = vmatprep.subr.mxu0 0.0
    %1065 = vmatpush1.msra.mxu0 0.0
    %1066 = vmatprep.subr.mxu0 0.0
    %1067 = vmatpush1.msra.mxu0 0.0
    %1068 = vmatprep.subr.mxu0 0.0
    %1069 = vmatpush1.msra.mxu0 0.0
    %1070 = vmatprep.subr.mxu0 0.0
    %1071 = vmatpush1.msra.mxu0 0.0
    %1072 = vmatprep.subr.mxu0 0.0
    %1073 = vmatpush1.msra.mxu0 0.0
    %1074 = vmatprep.subr.mxu0 0.0
    %v1075 = vand.u32 %v758, 4294901760
    %1076 = vmatpush1.msra.mxu0 %v1075
    %1077 = vmatprep.subr.mxu0 0.0
    %v1078 = vand.u32 %v757, 4294901760
    %1079 = vmatpush1.msra.mxu0 %v1078
    %1080 = vmatprep.subr.mxu0 0.0
    %v1081 = vand.u32 %v756, 4294901760
    %1082 = vmatpush1.msra.mxu0 %v1081
    %1083 = vmatprep.subr.mxu0 0.0
    %v1084 = vand.u32 %v755, 4294901760
    %1085 = vmatpush1.msra.mxu0 %v1084
    %1086 = vmatprep.subr.mxu0 0.0
    %v1087 = vand.u32 %v754, 4294901760
    %1088 = vmatpush1.msra.mxu0 %v1087
    %1089 = vmatprep.subr.mxu0 0.0
    %v1090 = vand.u32 %v753, 4294901760
    %1091 = vmatpush1.msra.mxu0 %v1090
    %1092 = vmatprep.subr.mxu0 0.0
    %1093 = vmatpush2.msra.mxu0 0.0
    %1094 = vmatprep.subr.mxu0 0.0
    %1095 = vmatpush2.msra.mxu0 0.0
    %1096 = vmatprep.subr.mxu0 0.0
    %1097 = vmatpush2.msra.mxu0 0.0
    %1098 = vmatprep.subr.mxu0 0.0
    %1099 = vmatpush2.msra.mxu0 0.0
    %1100 = vmatprep.subr.mxu0 0.0
    %1101 = vmatpush2.msra.mxu0 0.0
    %1102 = vmatprep.subr.mxu0 0.0
    %1103 = vmatpush2.msra.mxu0 0.0
    %1104 = vmatprep.subr.mxu0 0.0
    %1105 = vmatpush2.msra.mxu0 0.0
    %1106 = vmatprep.subr.mxu0 0.0
    %1107 = vmatpush2.msra.mxu0 0.0
    %1108 = vmatprep.subr.mxu0 0.0
    %1109 = vmatpush2.msra.mxu0 0.0
    %1110 = vmatprep.subr.mxu0 0.0
    %1111 = vmatpush2.msra.mxu0 0.0
    %1112 = vmatprep.subr.mxu0 0.0
    %1113 = vmatpush2.msra.mxu0 0.0
    %1114 = vmatprep.subr.mxu0 0.0
    %1115 = vmatpush2.msra.mxu0 0.0
    %1116 = vmatprep.subr.mxu0 0.0
    %1117 = vmatpush2.msra.mxu0 0.0
    %1118 = vmatprep.subr.mxu0 0.0
    %1119 = vmatpush2.msra.mxu0 0.0
    %1120 = vmatprep.subr.mxu0 0.0
    %1121 = vmatpush2.msra.mxu0 0.0
    %1122 = vmatprep.subr.mxu0 0.0
    %1123 = vmatpush2.msra.mxu0 0.0
    %1124 = vmatprep.mubr.f32.mxu0 0.0
    %v1125 = vand.u32 %v760, 4294901760
    %v1126 = vsub.f32 %v760, %v1125
    %v1127 = vand.u32 %v1126, 4294901760
    %1128 = vmatmul.mubr.f32.gmra.mxu0 %v1127
    %v1129 = vpop.f32.mrf.mxu0
    %v1130 = vadd.f32 %v1044, %v1129
    %v1131 = vpop.f32.mrf.mxu0
    %1132 = vmatprep.mubr.f32.mxu0 0.0
    %v1133 = vand.u32 %v763, 4294901760
    %v1134 = vsub.f32 %v763, %v1133
    %v1135 = vand.u32 %v1134, 4294901760
    %1136 = vmatmul.mubr.f32.gmra.mxu0 %v1135
    %v1137 = vpop.f32.mrf.mxu0
    %v1138 = vadd.f32 %v1051, %v1137
    %v1139 = vpop.f32.mrf.mxu0
    %1140 = vdwg.mxu0
    %1141 = vmatprep.subr.mxu0 0.0
    %1142 = vmatpush1.msra.mxu0 0.0
    %1143 = vmatprep.subr.mxu0 0.0
    %1144 = vmatpush1.msra.mxu0 0.0
    %1145 = vmatprep.subr.mxu0 0.0
    %1146 = vmatpush1.msra.mxu0 0.0
    %1147 = vmatprep.subr.mxu0 0.0
    %1148 = vmatpush1.msra.mxu0 0.0
    %1149 = vmatprep.subr.mxu0 0.0
    %1150 = vmatpush1.msra.mxu0 0.0
    %1151 = vmatprep.subr.mxu0 0.0
    %1152 = vmatpush1.msra.mxu0 0.0
    %1153 = vmatprep.subr.mxu0 0.0
    %1154 = vmatpush1.msra.mxu0 0.0
    %1155 = vmatprep.subr.mxu0 0.0
    %1156 = vmatpush1.msra.mxu0 0.0
    %1157 = vmatprep.subr.mxu0 0.0
    %1158 = vmatpush1.msra.mxu0 0.0
    %1159 = vmatprep.subr.mxu0 0.0
    %1160 = vmatpush1.msra.mxu0 0.0
    %1161 = vmatprep.subr.mxu0 0.0
    %v1162 = vand.u32 %v758, 4294901760
    %v1163 = vsub.f32 %v758, %v1162
    %v1164 = vand.u32 %v1163, 4294901760
    %1165 = vmatpush1.msra.mxu0 %v1164
    %1166 = vmatprep.subr.mxu0 0.0
    %v1167 = vand.u32 %v757, 4294901760
    %v1168 = vsub.f32 %v757, %v1167
    %v1169 = vand.u32 %v1168, 4294901760
    %1170 = vmatpush1.msra.mxu0 %v1169
    %1171 = vmatprep.subr.mxu0 0.0
    %v1172 = vand.u32 %v756, 4294901760
    %v1173 = vsub.f32 %v756, %v1172
    %v1174 = vand.u32 %v1173, 4294901760
    %1175 = vmatpush1.msra.mxu0 %v1174
    %1176 = vmatprep.subr.mxu0 0.0
    %v1177 = vand.u32 %v755, 4294901760
    %v1178 = vsub.f32 %v755, %v1177
    %v1179 = vand.u32 %v1178, 4294901760
    %1180 = vmatpush1.msra.mxu0 %v1179
    %1181 = vmatprep.subr.mxu0 0.0
    %v1182 = vand.u32 %v754, 4294901760
    %v1183 = vsub.f32 %v754, %v1182
    %v1184 = vand.u32 %v1183, 4294901760
    %1185 = vmatpush1.msra.mxu0 %v1184
    %1186 = vmatprep.subr.mxu0 0.0
    %v1187 = vand.u32 %v753, 4294901760
    %v1188 = vsub.f32 %v753, %v1187
    %v1189 = vand.u32 %v1188, 4294901760
    %1190 = vmatpush1.msra.mxu0 %v1189
    %1191 = vmatprep.subr.mxu0 0.0
    %1192 = vmatpush2.msra.mxu0 0.0
    %1193 = vmatprep.subr.mxu0 0.0
    %1194 = vmatpush2.msra.mxu0 0.0
    %1195 = vmatprep.subr.mxu0 0.0
    %1196 = vmatpush2.msra.mxu0 0.0
    %1197 = vmatprep.subr.mxu0 0.0
    %1198 = vmatpush2.msra.mxu0 0.0
    %1199 = vmatprep.subr.mxu0 0.0
    %1200 = vmatpush2.msra.mxu0 0.0
    %1201 = vmatprep.subr.mxu0 0.0
    %1202 = vmatpush2.msra.mxu0 0.0
    %1203 = vmatprep.subr.mxu0 0.0
    %1204 = vmatpush2.msra.mxu0 0.0
    %1205 = vmatprep.subr.mxu0 0.0
    %1206 = vmatpush2.msra.mxu0 0.0
    %1207 = vmatprep.subr.mxu0 0.0
    %1208 = vmatpush2.msra.mxu0 0.0
    %1209 = vmatprep.subr.mxu0 0.0
    %1210 = vmatpush2.msra.mxu0 0.0
    %1211 = vmatprep.subr.mxu0 0.0
    %1212 = vmatpush2.msra.mxu0 0.0
    %1213 = vmatprep.subr.mxu0 0.0
    %1214 = vmatpush2.msra.mxu0 0.0
    %1215 = vmatprep.subr.mxu0 0.0
    %1216 = vmatpush2.msra.mxu0 0.0
    %1217 = vmatprep.subr.mxu0 0.0
    %1218 = vmatpush2.msra.mxu0 0.0
    %1219 = vmatprep.subr.mxu0 0.0
    %1220 = vmatpush2.msra.mxu0 0.0
    %1221 = vmatprep.subr.mxu0 0.0
    %1222 = vmatpush2.msra.mxu0 0.0
    %1223 = vmatprep.mubr.f32.mxu0 0.0
    %v1224 = vand.u32 %v760, 4294901760
    %1225 = vmatmul.mubr.f32.gmra.mxu0 %v1224
    %v1226 = vpop.f32.mrf.mxu0
    %v1227 = vadd.f32 %v1130, %v1226
    %v1228 = vpop.f32.mrf.mxu0
    %1229 = vmatprep.mubr.f32.mxu0 0.0
    %v1230 = vand.u32 %v763, 4294901760
    %1231 = vmatmul.mubr.f32.gmra.mxu0 %v1230
    %v1232 = vpop.f32.mrf.mxu0
    %v1233 = vadd.f32 %v1138, %v1232
    %v1234 = vpop.f32.mrf.mxu0
    %1235 = vdwg.mxu0
    %1236 = vmatprep.subr.mxu0 0.0
    %1237 = vmatpush1.msra.mxu0 0.0
    %1238 = vmatprep.subr.mxu0 0.0
    %1239 = vmatpush1.msra.mxu0 0.0
    %1240 = vmatprep.subr.mxu0 0.0
    %1241 = vmatpush1.msra.mxu0 0.0
    %1242 = vmatprep.subr.mxu0 0.0
    %1243 = vmatpush1.msra.mxu0 0.0
    %1244 = vmatprep.subr.mxu0 0.0
    %1245 = vmatpush1.msra.mxu0 0.0
    %1246 = vmatprep.subr.mxu0 0.0
    %1247 = vmatpush1.msra.mxu0 0.0
    %1248 = vmatprep.subr.mxu0 0.0
    %1249 = vmatpush1.msra.mxu0 0.0
    %1250 = vmatprep.subr.mxu0 0.0
    %1251 = vmatpush1.msra.mxu0 0.0
    %1252 = vmatprep.subr.mxu0 0.0
    %1253 = vmatpush1.msra.mxu0 0.0
    %1254 = vmatprep.subr.mxu0 0.0
    %1255 = vmatpush1.msra.mxu0 0.0
    %1256 = vmatprep.subr.mxu0 0.0
    %v1257 = vand.u32 %v758, 4294901760
    %1258 = vmatpush1.msra.mxu0 %v1257
    %1259 = vmatprep.subr.mxu0 0.0
    %v1260 = vand.u32 %v757, 4294901760
    %1261 = vmatpush1.msra.mxu0 %v1260
    %1262 = vmatprep.subr.mxu0 0.0
    %v1263 = vand.u32 %v756, 4294901760
    %1264 = vmatpush1.msra.mxu0 %v1263
    %1265 = vmatprep.subr.mxu0 0.0
    %v1266 = vand.u32 %v755, 4294901760
    %1267 = vmatpush1.msra.mxu0 %v1266
    %1268 = vmatprep.subr.mxu0 0.0
    %v1269 = vand.u32 %v754, 4294901760
    %1270 = vmatpush1.msra.mxu0 %v1269
    %1271 = vmatprep.subr.mxu0 0.0
    %v1272 = vand.u32 %v753, 4294901760
    %1273 = vmatpush1.msra.mxu0 %v1272
    %1274 = vmatprep.subr.mxu0 0.0
    %1275 = vmatpush2.msra.mxu0 0.0
    %1276 = vmatprep.subr.mxu0 0.0
    %1277 = vmatpush2.msra.mxu0 0.0
    %1278 = vmatprep.subr.mxu0 0.0
    %1279 = vmatpush2.msra.mxu0 0.0
    %1280 = vmatprep.subr.mxu0 0.0
    %1281 = vmatpush2.msra.mxu0 0.0
    %1282 = vmatprep.subr.mxu0 0.0
    %1283 = vmatpush2.msra.mxu0 0.0
    %1284 = vmatprep.subr.mxu0 0.0
    %1285 = vmatpush2.msra.mxu0 0.0
    %1286 = vmatprep.subr.mxu0 0.0
    %1287 = vmatpush2.msra.mxu0 0.0
    %1288 = vmatprep.subr.mxu0 0.0
    %1289 = vmatpush2.msra.mxu0 0.0
    %1290 = vmatprep.subr.mxu0 0.0
    %1291 = vmatpush2.msra.mxu0 0.0
    %1292 = vmatprep.subr.mxu0 0.0
    %1293 = vmatpush2.msra.mxu0 0.0
    %1294 = vmatprep.subr.mxu0 0.0
    %1295 = vmatpush2.msra.mxu0 0.0
    %1296 = vmatprep.subr.mxu0 0.0
    %1297 = vmatpush2.msra.mxu0 0.0
    %1298 = vmatprep.subr.mxu0 0.0
    %1299 = vmatpush2.msra.mxu0 0.0
    %1300 = vmatprep.subr.mxu0 0.0
    %1301 = vmatpush2.msra.mxu0 0.0
    %1302 = vmatprep.subr.mxu0 0.0
    %1303 = vmatpush2.msra.mxu0 0.0
    %1304 = vmatprep.subr.mxu0 0.0
    %1305 = vmatpush2.msra.mxu0 0.0
    %1306 = vmatprep.mubr.f32.mxu0 0.0
    %v1307 = vand.u32 %v760, 4294901760
    %1308 = vmatmul.mubr.f32.gmra.mxu0 %v1307
    %v1309 = vpop.f32.mrf.mxu0
    %v1310 = vadd.f32 %v1227, %v1309
    %v1311 = vpop.f32.mrf.mxu0
    %1312 = vmatprep.mubr.f32.mxu0 0.0
    %v1313 = vand.u32 %v763, 4294901760
    %1314 = vmatmul.mubr.f32.gmra.mxu0 %v1313
    %v1315 = vpop.f32.mrf.mxu0
    %v1316 = vadd.f32 %v1233, %v1315
    %v1317 = vpop.f32.mrf.mxu0
    %1318 = vdwg.mxu0
    %v1319 = vsub.f32 %v744, %v1310
    %v1320 = vsub.f32 %v750, %v1316
    %v1321 = vmul.f32 %v1319, %v1319
    %v1322 = vmul.f32 %v1320, %v1320
    %v1324 = vsel %vm192, %v1321, 0
    %v1327 = vsel %vm192, %v1322, 0
    %1329 = vmatprep.subr.mxu0 0.0
    %1330 = vmatpush1.msra.mxu0 0.0
    %1331 = vmatprep.subr.mxu0 0.0
    %1332 = vmatpush1.msra.mxu0 0.0
    %1333 = vmatprep.subr.mxu0 0.0
    %1334 = vmatpush1.msra.mxu0 0.0
    %1335 = vmatprep.subr.mxu0 0.0
    %1336 = vmatpush1.msra.mxu0 0.0
    %1337 = vmatprep.subr.mxu0 0.0
    %1338 = vmatpush1.msra.mxu0 0.0
    %1339 = vmatprep.subr.mxu0 0.0
    %1340 = vmatpush1.msra.mxu0 0.0
    %1341 = vmatprep.subr.mxu0 0.0
    %1342 = vmatpush1.msra.mxu0 0.0
    %1343 = vmatprep.subr.mxu0 0.0
    %1344 = vmatpush1.msra.mxu0 0.0
    %1345 = vmatprep.subr.mxu0 0.0
    %1346 = vmatpush1.msra.mxu0 0.0
    %1347 = vmatprep.subr.mxu0 0.0
    %1348 = vmatpush1.msra.mxu0 0.0
    %1349 = vmatprep.subr.mxu0 0.0
    %v1350 = vand.u32 %v758, 4294901760
    %1351 = vmatpush1.msra.mxu0 %v1350
    %1352 = vmatprep.subr.mxu0 0.0
    %v1353 = vand.u32 %v757, 4294901760
    %1354 = vmatpush1.msra.mxu0 %v1353
    %1355 = vmatprep.subr.mxu0 0.0
    %v1356 = vand.u32 %v756, 4294901760
    %1357 = vmatpush1.msra.mxu0 %v1356
    %1358 = vmatprep.subr.mxu0 0.0
    %v1359 = vand.u32 %v755, 4294901760
    %1360 = vmatpush1.msra.mxu0 %v1359
    %1361 = vmatprep.subr.mxu0 0.0
    %v1362 = vand.u32 %v754, 4294901760
    %1363 = vmatpush1.msra.mxu0 %v1362
    %1364 = vmatprep.subr.mxu0 0.0
    %v1365 = vand.u32 %v753, 4294901760
    %1366 = vmatpush1.msra.mxu0 %v1365
    %1367 = vmatprep.subr.mxu0 0.0
    %1368 = vmatpush2.msra.mxu0 0.0
    %1369 = vmatprep.subr.mxu0 0.0
    %1370 = vmatpush2.msra.mxu0 0.0
    %1371 = vmatprep.subr.mxu0 0.0
    %1372 = vmatpush2.msra.mxu0 0.0
    %1373 = vmatprep.subr.mxu0 0.0
    %1374 = vmatpush2.msra.mxu0 0.0
    %1375 = vmatprep.subr.mxu0 0.0
    %1376 = vmatpush2.msra.mxu0 0.0
    %1377 = vmatprep.subr.mxu0 0.0
    %1378 = vmatpush2.msra.mxu0 0.0
    %1379 = vmatprep.subr.mxu0 0.0
    %1380 = vmatpush2.msra.mxu0 0.0
    %1381 = vmatprep.subr.mxu0 0.0
    %1382 = vmatpush2.msra.mxu0 0.0
    %1383 = vmatprep.subr.mxu0 0.0
    %1384 = vmatpush2.msra.mxu0 0.0
    %1385 = vmatprep.subr.mxu0 0.0
    %1386 = vmatpush2.msra.mxu0 0.0
    %1387 = vmatprep.subr.mxu0 0.0
    %1388 = vmatpush2.msra.mxu0 0.0
    %1389 = vmatprep.subr.mxu0 0.0
    %1390 = vmatpush2.msra.mxu0 0.0
    %1391 = vmatprep.subr.mxu0 0.0
    %1392 = vmatpush2.msra.mxu0 0.0
    %1393 = vmatprep.subr.mxu0 0.0
    %1394 = vmatpush2.msra.mxu0 0.0
    %1395 = vmatprep.subr.mxu0 0.0
    %1396 = vmatpush2.msra.mxu0 0.0
    %1397 = vmatprep.subr.mxu0 0.0
    %1398 = vmatpush2.msra.mxu0 0.0
    %1399 = vmatprep.mubr.f32.mxu0 0.0
    %v1400 = vand.u32 %v1324, 4294901760
    %v1401 = vsub.f32 %v1324, %v1400
    %v1402 = vand.u32 %v1401, 4294901760
    %v1403 = vsub.f32 %v1401, %v1402
    %v1404 = vand.u32 %v1403, 4294901760
    %1405 = vmatmul.mubr.f32.gmra.mxu0 %v1404
    %v1406 = vpop.f32.mrf.mxu0
    %v1407 = vadd.f32 1e-05, %v1406
    %v1408 = vpop.f32.mrf.mxu0
    %1409 = vmatprep.mubr.f32.mxu0 0.0
    %v1410 = vand.u32 %v1327, 4294901760
    %v1411 = vsub.f32 %v1327, %v1410
    %v1412 = vand.u32 %v1411, 4294901760
    %v1413 = vsub.f32 %v1411, %v1412
    %v1414 = vand.u32 %v1413, 4294901760
    %1415 = vmatmul.mubr.f32.gmra.mxu0 %v1414
    %v1416 = vpop.f32.mrf.mxu0
    %v1417 = vadd.f32 1e-05, %v1416
    %v1418 = vpop.f32.mrf.mxu0
    %1419 = vdwg.mxu0
    %1420 = vmatprep.subr.mxu0 0.0
    %1421 = vmatpush1.msra.mxu0 0.0
    %1422 = vmatprep.subr.mxu0 0.0
    %1423 = vmatpush1.msra.mxu0 0.0
    %1424 = vmatprep.subr.mxu0 0.0
    %1425 = vmatpush1.msra.mxu0 0.0
    %1426 = vmatprep.subr.mxu0 0.0
    %1427 = vmatpush1.msra.mxu0 0.0
    %1428 = vmatprep.subr.mxu0 0.0
    %1429 = vmatpush1.msra.mxu0 0.0
    %1430 = vmatprep.subr.mxu0 0.0
    %1431 = vmatpush1.msra.mxu0 0.0
    %1432 = vmatprep.subr.mxu0 0.0
    %1433 = vmatpush1.msra.mxu0 0.0
    %1434 = vmatprep.subr.mxu0 0.0
    %1435 = vmatpush1.msra.mxu0 0.0
    %1436 = vmatprep.subr.mxu0 0.0
    %1437 = vmatpush1.msra.mxu0 0.0
    %1438 = vmatprep.subr.mxu0 0.0
    %1439 = vmatpush1.msra.mxu0 0.0
    %1440 = vmatprep.subr.mxu0 0.0
    %v1441 = vand.u32 %v758, 4294901760
    %v1442 = vsub.f32 %v758, %v1441
    %v1443 = vand.u32 %v1442, 4294901760
    %v1444 = vsub.f32 %v1442, %v1443
    %v1445 = vand.u32 %v1444, 4294901760
    %1446 = vmatpush1.msra.mxu0 %v1445
    %1447 = vmatprep.subr.mxu0 0.0
    %v1448 = vand.u32 %v757, 4294901760
    %v1449 = vsub.f32 %v757, %v1448
    %v1450 = vand.u32 %v1449, 4294901760
    %v1451 = vsub.f32 %v1449, %v1450
    %v1452 = vand.u32 %v1451, 4294901760
    %1453 = vmatpush1.msra.mxu0 %v1452
    %1454 = vmatprep.subr.mxu0 0.0
    %v1455 = vand.u32 %v756, 4294901760
    %v1456 = vsub.f32 %v756, %v1455
    %v1457 = vand.u32 %v1456, 4294901760
    %v1458 = vsub.f32 %v1456, %v1457
    %v1459 = vand.u32 %v1458, 4294901760
    %1460 = vmatpush1.msra.mxu0 %v1459
    %1461 = vmatprep.subr.mxu0 0.0
    %v1462 = vand.u32 %v755, 4294901760
    %v1463 = vsub.f32 %v755, %v1462
    %v1464 = vand.u32 %v1463, 4294901760
    %v1465 = vsub.f32 %v1463, %v1464
    %v1466 = vand.u32 %v1465, 4294901760
    %1467 = vmatpush1.msra.mxu0 %v1466
    %1468 = vmatprep.subr.mxu0 0.0
    %v1469 = vand.u32 %v754, 4294901760
    %v1470 = vsub.f32 %v754, %v1469
    %v1471 = vand.u32 %v1470, 4294901760
    %v1472 = vsub.f32 %v1470, %v1471
    %v1473 = vand.u32 %v1472, 4294901760
    %1474 = vmatpush1.msra.mxu0 %v1473
    %1475 = vmatprep.subr.mxu0 0.0
    %v1476 = vand.u32 %v753, 4294901760
    %v1477 = vsub.f32 %v753, %v1476
    %v1478 = vand.u32 %v1477, 4294901760
    %v1479 = vsub.f32 %v1477, %v1478
    %v1480 = vand.u32 %v1479, 4294901760
    %1481 = vmatpush1.msra.mxu0 %v1480
    %1482 = vmatprep.subr.mxu0 0.0
    %1483 = vmatpush2.msra.mxu0 0.0
    %1484 = vmatprep.subr.mxu0 0.0
    %1485 = vmatpush2.msra.mxu0 0.0
    %1486 = vmatprep.subr.mxu0 0.0
    %1487 = vmatpush2.msra.mxu0 0.0
    %1488 = vmatprep.subr.mxu0 0.0
    %1489 = vmatpush2.msra.mxu0 0.0
    %1490 = vmatprep.subr.mxu0 0.0
    %1491 = vmatpush2.msra.mxu0 0.0
    %1492 = vmatprep.subr.mxu0 0.0
    %1493 = vmatpush2.msra.mxu0 0.0
    %1494 = vmatprep.subr.mxu0 0.0
    %1495 = vmatpush2.msra.mxu0 0.0
    %1496 = vmatprep.subr.mxu0 0.0
    %1497 = vmatpush2.msra.mxu0 0.0
    %1498 = vmatprep.subr.mxu0 0.0
    %1499 = vmatpush2.msra.mxu0 0.0
    %1500 = vmatprep.subr.mxu0 0.0
    %1501 = vmatpush2.msra.mxu0 0.0
    %1502 = vmatprep.subr.mxu0 0.0
    %1503 = vmatpush2.msra.mxu0 0.0
    %1504 = vmatprep.subr.mxu0 0.0
    %1505 = vmatpush2.msra.mxu0 0.0
    %1506 = vmatprep.subr.mxu0 0.0
    %1507 = vmatpush2.msra.mxu0 0.0
    %1508 = vmatprep.subr.mxu0 0.0
    %1509 = vmatpush2.msra.mxu0 0.0
    %1510 = vmatprep.subr.mxu0 0.0
    %1511 = vmatpush2.msra.mxu0 0.0
    %1512 = vmatprep.subr.mxu0 0.0
    %1513 = vmatpush2.msra.mxu0 0.0
    %1514 = vmatprep.mubr.f32.mxu0 0.0
    %v1515 = vand.u32 %v1324, 4294901760
    %1516 = vmatmul.mubr.f32.gmra.mxu0 %v1515
    %v1517 = vpop.f32.mrf.mxu0
    %v1518 = vadd.f32 %v1407, %v1517
    %v1519 = vpop.f32.mrf.mxu0
    %1520 = vmatprep.mubr.f32.mxu0 0.0
    %v1521 = vand.u32 %v1327, 4294901760
    %1522 = vmatmul.mubr.f32.gmra.mxu0 %v1521
    %v1523 = vpop.f32.mrf.mxu0
    %v1524 = vadd.f32 %v1417, %v1523
    %v1525 = vpop.f32.mrf.mxu0
    %1526 = vdwg.mxu0
    %1527 = vmatprep.subr.mxu0 0.0
    %1528 = vmatpush1.msra.mxu0 0.0
    %1529 = vmatprep.subr.mxu0 0.0
    %1530 = vmatpush1.msra.mxu0 0.0
    %1531 = vmatprep.subr.mxu0 0.0
    %1532 = vmatpush1.msra.mxu0 0.0
    %1533 = vmatprep.subr.mxu0 0.0
    %1534 = vmatpush1.msra.mxu0 0.0
    %1535 = vmatprep.subr.mxu0 0.0
    %1536 = vmatpush1.msra.mxu0 0.0
    %1537 = vmatprep.subr.mxu0 0.0
    %1538 = vmatpush1.msra.mxu0 0.0
    %1539 = vmatprep.subr.mxu0 0.0
    %1540 = vmatpush1.msra.mxu0 0.0
    %1541 = vmatprep.subr.mxu0 0.0
    %1542 = vmatpush1.msra.mxu0 0.0
    %1543 = vmatprep.subr.mxu0 0.0
    %1544 = vmatpush1.msra.mxu0 0.0
    %1545 = vmatprep.subr.mxu0 0.0
    %1546 = vmatpush1.msra.mxu0 0.0
    %1547 = vmatprep.subr.mxu0 0.0
    %v1548 = vand.u32 %v758, 4294901760
    %v1549 = vsub.f32 %v758, %v1548
    %1550 = vmatpush1.msra.mxu0 %v1549
    %1551 = vmatprep.subr.mxu0 0.0
    %v1552 = vand.u32 %v757, 4294901760
    %v1553 = vsub.f32 %v757, %v1552
    %1554 = vmatpush1.msra.mxu0 %v1553
    %1555 = vmatprep.subr.mxu0 0.0
    %v1556 = vand.u32 %v756, 4294901760
    %v1557 = vsub.f32 %v756, %v1556
    %1558 = vmatpush1.msra.mxu0 %v1557
    %1559 = vmatprep.subr.mxu0 0.0
    %v1560 = vand.u32 %v755, 4294901760
    %v1561 = vsub.f32 %v755, %v1560
    %1562 = vmatpush1.msra.mxu0 %v1561
    %1563 = vmatprep.subr.mxu0 0.0
    %v1564 = vand.u32 %v754, 4294901760
    %v1565 = vsub.f32 %v754, %v1564
    %1566 = vmatpush1.msra.mxu0 %v1565
    %1567 = vmatprep.subr.mxu0 0.0
    %v1568 = vand.u32 %v753, 4294901760
    %v1569 = vsub.f32 %v753, %v1568
    %1570 = vmatpush1.msra.mxu0 %v1569
    %1571 = vmatprep.subr.mxu0 0.0
    %1572 = vmatpush2.msra.mxu0 0.0
    %1573 = vmatprep.subr.mxu0 0.0
    %1574 = vmatpush2.msra.mxu0 0.0
    %1575 = vmatprep.subr.mxu0 0.0
    %1576 = vmatpush2.msra.mxu0 0.0
    %1577 = vmatprep.subr.mxu0 0.0
    %1578 = vmatpush2.msra.mxu0 0.0
    %1579 = vmatprep.subr.mxu0 0.0
    %1580 = vmatpush2.msra.mxu0 0.0
    %1581 = vmatprep.subr.mxu0 0.0
    %1582 = vmatpush2.msra.mxu0 0.0
    %1583 = vmatprep.subr.mxu0 0.0
    %1584 = vmatpush2.msra.mxu0 0.0
    %1585 = vmatprep.subr.mxu0 0.0
    %1586 = vmatpush2.msra.mxu0 0.0
    %1587 = vmatprep.subr.mxu0 0.0
    %1588 = vmatpush2.msra.mxu0 0.0
    %1589 = vmatprep.subr.mxu0 0.0
    %1590 = vmatpush2.msra.mxu0 0.0
    %1591 = vmatprep.subr.mxu0 0.0
    %1592 = vmatpush2.msra.mxu0 0.0
    %1593 = vmatprep.subr.mxu0 0.0
    %1594 = vmatpush2.msra.mxu0 0.0
    %1595 = vmatprep.subr.mxu0 0.0
    %1596 = vmatpush2.msra.mxu0 0.0
    %1597 = vmatprep.subr.mxu0 0.0
    %1598 = vmatpush2.msra.mxu0 0.0
    %1599 = vmatprep.subr.mxu0 0.0
    %1600 = vmatpush2.msra.mxu0 0.0
    %1601 = vmatprep.subr.mxu0 0.0
    %1602 = vmatpush2.msra.mxu0 0.0
    %1603 = vmatprep.mubr.f32.mxu0 0.0
    %v1604 = vand.u32 %v1324, 4294901760
    %v1605 = vsub.f32 %v1324, %v1604
    %1606 = vmatmul.mubr.f32.gmra.mxu0 %v1605
    %v1607 = vpop.f32.mrf.mxu0
    %v1608 = vadd.f32 %v1518, %v1607
    %v1609 = vpop.f32.mrf.mxu0
    %1610 = vmatprep.mubr.f32.mxu0 0.0
    %v1611 = vand.u32 %v1327, 4294901760
    %v1612 = vsub.f32 %v1327, %v1611
    %1613 = vmatmul.mubr.f32.gmra.mxu0 %v1612
    %v1614 = vpop.f32.mrf.mxu0
    %v1615 = vadd.f32 %v1524, %v1614
    %v1616 = vpop.f32.mrf.mxu0
    %1617 = vdwg.mxu0
    %1618 = vmatprep.subr.mxu0 0.0
    %1619 = vmatpush1.msra.mxu0 0.0
    %1620 = vmatprep.subr.mxu0 0.0
    %1621 = vmatpush1.msra.mxu0 0.0
    %1622 = vmatprep.subr.mxu0 0.0
    %1623 = vmatpush1.msra.mxu0 0.0
    %1624 = vmatprep.subr.mxu0 0.0
    %1625 = vmatpush1.msra.mxu0 0.0
    %1626 = vmatprep.subr.mxu0 0.0
    %1627 = vmatpush1.msra.mxu0 0.0
    %1628 = vmatprep.subr.mxu0 0.0
    %1629 = vmatpush1.msra.mxu0 0.0
    %1630 = vmatprep.subr.mxu0 0.0
    %1631 = vmatpush1.msra.mxu0 0.0
    %1632 = vmatprep.subr.mxu0 0.0
    %1633 = vmatpush1.msra.mxu0 0.0
    %1634 = vmatprep.subr.mxu0 0.0
    %1635 = vmatpush1.msra.mxu0 0.0
    %1636 = vmatprep.subr.mxu0 0.0
    %1637 = vmatpush1.msra.mxu0 0.0
    %1638 = vmatprep.subr.mxu0 0.0
    %v1639 = vand.u32 %v758, 4294901760
    %1640 = vmatpush1.msra.mxu0 %v1639
    %1641 = vmatprep.subr.mxu0 0.0
    %v1642 = vand.u32 %v757, 4294901760
    %1643 = vmatpush1.msra.mxu0 %v1642
    %1644 = vmatprep.subr.mxu0 0.0
    %v1645 = vand.u32 %v756, 4294901760
    %1646 = vmatpush1.msra.mxu0 %v1645
    %1647 = vmatprep.subr.mxu0 0.0
    %v1648 = vand.u32 %v755, 4294901760
    %1649 = vmatpush1.msra.mxu0 %v1648
    %1650 = vmatprep.subr.mxu0 0.0
    %v1651 = vand.u32 %v754, 4294901760
    %1652 = vmatpush1.msra.mxu0 %v1651
    %1653 = vmatprep.subr.mxu0 0.0
    %v1654 = vand.u32 %v753, 4294901760
    %1655 = vmatpush1.msra.mxu0 %v1654
    %1656 = vmatprep.subr.mxu0 0.0
    %1657 = vmatpush2.msra.mxu0 0.0
    %1658 = vmatprep.subr.mxu0 0.0
    %1659 = vmatpush2.msra.mxu0 0.0
    %1660 = vmatprep.subr.mxu0 0.0
    %1661 = vmatpush2.msra.mxu0 0.0
    %1662 = vmatprep.subr.mxu0 0.0
    %1663 = vmatpush2.msra.mxu0 0.0
    %1664 = vmatprep.subr.mxu0 0.0
    %1665 = vmatpush2.msra.mxu0 0.0
    %1666 = vmatprep.subr.mxu0 0.0
    %1667 = vmatpush2.msra.mxu0 0.0
    %1668 = vmatprep.subr.mxu0 0.0
    %1669 = vmatpush2.msra.mxu0 0.0
    %1670 = vmatprep.subr.mxu0 0.0
    %1671 = vmatpush2.msra.mxu0 0.0
    %1672 = vmatprep.subr.mxu0 0.0
    %1673 = vmatpush2.msra.mxu0 0.0
    %1674 = vmatprep.subr.mxu0 0.0
    %1675 = vmatpush2.msra.mxu0 0.0
    %1676 = vmatprep.subr.mxu0 0.0
    %1677 = vmatpush2.msra.mxu0 0.0
    %1678 = vmatprep.subr.mxu0 0.0
    %1679 = vmatpush2.msra.mxu0 0.0
    %1680 = vmatprep.subr.mxu0 0.0
    %1681 = vmatpush2.msra.mxu0 0.0
    %1682 = vmatprep.subr.mxu0 0.0
    %1683 = vmatpush2.msra.mxu0 0.0
    %1684 = vmatprep.subr.mxu0 0.0
    %1685 = vmatpush2.msra.mxu0 0.0
    %1686 = vmatprep.subr.mxu0 0.0
    %1687 = vmatpush2.msra.mxu0 0.0
    %1688 = vmatprep.mubr.f32.mxu0 0.0
    %v1689 = vand.u32 %v1324, 4294901760
    %v1690 = vsub.f32 %v1324, %v1689
    %v1691 = vand.u32 %v1690, 4294901760
    %1692 = vmatmul.mubr.f32.gmra.mxu0 %v1691
    %v1693 = vpop.f32.mrf.mxu0
    %v1694 = vadd.f32 %v1608, %v1693
    %v1695 = vpop.f32.mrf.mxu0
    %1696 = vmatprep.mubr.f32.mxu0 0.0
    %v1697 = vand.u32 %v1327, 4294901760
    %v1698 = vsub.f32 %v1327, %v1697
    %v1699 = vand.u32 %v1698, 4294901760
    %1700 = vmatmul.mubr.f32.gmra.mxu0 %v1699
    %v1701 = vpop.f32.mrf.mxu0
    %v1702 = vadd.f32 %v1615, %v1701
    %v1703 = vpop.f32.mrf.mxu0
    %1704 = vdwg.mxu0
    %1705 = vmatprep.subr.mxu0 0.0
    %1706 = vmatpush1.msra.mxu0 0.0
    %1707 = vmatprep.subr.mxu0 0.0
    %1708 = vmatpush1.msra.mxu0 0.0
    %1709 = vmatprep.subr.mxu0 0.0
    %1710 = vmatpush1.msra.mxu0 0.0
    %1711 = vmatprep.subr.mxu0 0.0
    %1712 = vmatpush1.msra.mxu0 0.0
    %1713 = vmatprep.subr.mxu0 0.0
    %1714 = vmatpush1.msra.mxu0 0.0
    %1715 = vmatprep.subr.mxu0 0.0
    %1716 = vmatpush1.msra.mxu0 0.0
    %1717 = vmatprep.subr.mxu0 0.0
    %1718 = vmatpush1.msra.mxu0 0.0
    %1719 = vmatprep.subr.mxu0 0.0
    %1720 = vmatpush1.msra.mxu0 0.0
    %1721 = vmatprep.subr.mxu0 0.0
    %1722 = vmatpush1.msra.mxu0 0.0
    %1723 = vmatprep.subr.mxu0 0.0
    %1724 = vmatpush1.msra.mxu0 0.0
    %1725 = vmatprep.subr.mxu0 0.0
    %v1726 = vand.u32 %v758, 4294901760
    %v1727 = vsub.f32 %v758, %v1726
    %v1728 = vand.u32 %v1727, 4294901760
    %1729 = vmatpush1.msra.mxu0 %v1728
    %1730 = vmatprep.subr.mxu0 0.0
    %v1731 = vand.u32 %v757, 4294901760
    %v1732 = vsub.f32 %v757, %v1731
    %v1733 = vand.u32 %v1732, 4294901760
    %1734 = vmatpush1.msra.mxu0 %v1733
    %1735 = vmatprep.subr.mxu0 0.0
    %v1736 = vand.u32 %v756, 4294901760
    %v1737 = vsub.f32 %v756, %v1736
    %v1738 = vand.u32 %v1737, 4294901760
    %1739 = vmatpush1.msra.mxu0 %v1738
    %1740 = vmatprep.subr.mxu0 0.0
    %v1741 = vand.u32 %v755, 4294901760
    %v1742 = vsub.f32 %v755, %v1741
    %v1743 = vand.u32 %v1742, 4294901760
    %1744 = vmatpush1.msra.mxu0 %v1743
    %1745 = vmatprep.subr.mxu0 0.0
    %v1746 = vand.u32 %v754, 4294901760
    %v1747 = vsub.f32 %v754, %v1746
    %v1748 = vand.u32 %v1747, 4294901760
    %1749 = vmatpush1.msra.mxu0 %v1748
    %1750 = vmatprep.subr.mxu0 0.0
    %v1751 = vand.u32 %v753, 4294901760
    %v1752 = vsub.f32 %v753, %v1751
    %v1753 = vand.u32 %v1752, 4294901760
    %1754 = vmatpush1.msra.mxu0 %v1753
    %1755 = vmatprep.subr.mxu0 0.0
    %1756 = vmatpush2.msra.mxu0 0.0
    %1757 = vmatprep.subr.mxu0 0.0
    %1758 = vmatpush2.msra.mxu0 0.0
    %1759 = vmatprep.subr.mxu0 0.0
    %1760 = vmatpush2.msra.mxu0 0.0
    %1761 = vmatprep.subr.mxu0 0.0
    %1762 = vmatpush2.msra.mxu0 0.0
    %1763 = vmatprep.subr.mxu0 0.0
    %1764 = vmatpush2.msra.mxu0 0.0
    %1765 = vmatprep.subr.mxu0 0.0
    %1766 = vmatpush2.msra.mxu0 0.0
    %1767 = vmatprep.subr.mxu0 0.0
    %1768 = vmatpush2.msra.mxu0 0.0
    %1769 = vmatprep.subr.mxu0 0.0
    %1770 = vmatpush2.msra.mxu0 0.0
    %1771 = vmatprep.subr.mxu0 0.0
    %1772 = vmatpush2.msra.mxu0 0.0
    %1773 = vmatprep.subr.mxu0 0.0
    %1774 = vmatpush2.msra.mxu0 0.0
    %1775 = vmatprep.subr.mxu0 0.0
    %1776 = vmatpush2.msra.mxu0 0.0
    %1777 = vmatprep.subr.mxu0 0.0
    %1778 = vmatpush2.msra.mxu0 0.0
    %1779 = vmatprep.subr.mxu0 0.0
    %1780 = vmatpush2.msra.mxu0 0.0
    %1781 = vmatprep.subr.mxu0 0.0
    %1782 = vmatpush2.msra.mxu0 0.0
    %1783 = vmatprep.subr.mxu0 0.0
    %1784 = vmatpush2.msra.mxu0 0.0
    %1785 = vmatprep.subr.mxu0 0.0
    %1786 = vmatpush2.msra.mxu0 0.0
    %1787 = vmatprep.mubr.f32.mxu0 0.0
    %v1788 = vand.u32 %v1324, 4294901760
    %1789 = vmatmul.mubr.f32.gmra.mxu0 %v1788
    %v1790 = vpop.f32.mrf.mxu0
    %v1791 = vadd.f32 %v1694, %v1790
    %v1792 = vpop.f32.mrf.mxu0
    %1793 = vmatprep.mubr.f32.mxu0 0.0
    %v1794 = vand.u32 %v1327, 4294901760
    %1795 = vmatmul.mubr.f32.gmra.mxu0 %v1794
    %v1796 = vpop.f32.mrf.mxu0
    %v1797 = vadd.f32 %v1702, %v1796
    %v1798 = vpop.f32.mrf.mxu0
    %1799 = vdwg.mxu0
    %1800 = vmatprep.subr.mxu0 0.0
    %1801 = vmatpush1.msra.mxu0 0.0
    %1802 = vmatprep.subr.mxu0 0.0
    %1803 = vmatpush1.msra.mxu0 0.0
    %1804 = vmatprep.subr.mxu0 0.0
    %1805 = vmatpush1.msra.mxu0 0.0
    %1806 = vmatprep.subr.mxu0 0.0
    %1807 = vmatpush1.msra.mxu0 0.0
    %1808 = vmatprep.subr.mxu0 0.0
    %1809 = vmatpush1.msra.mxu0 0.0
    %1810 = vmatprep.subr.mxu0 0.0
    %1811 = vmatpush1.msra.mxu0 0.0
    %1812 = vmatprep.subr.mxu0 0.0
    %1813 = vmatpush1.msra.mxu0 0.0
    %1814 = vmatprep.subr.mxu0 0.0
    %1815 = vmatpush1.msra.mxu0 0.0
    %1816 = vmatprep.subr.mxu0 0.0
    %1817 = vmatpush1.msra.mxu0 0.0
    %1818 = vmatprep.subr.mxu0 0.0
    %1819 = vmatpush1.msra.mxu0 0.0
    %1820 = vmatprep.subr.mxu0 0.0
    %v1821 = vand.u32 %v758, 4294901760
    %1822 = vmatpush1.msra.mxu0 %v1821
    %1823 = vmatprep.subr.mxu0 0.0
    %v1824 = vand.u32 %v757, 4294901760
    %1825 = vmatpush1.msra.mxu0 %v1824
    %1826 = vmatprep.subr.mxu0 0.0
    %v1827 = vand.u32 %v756, 4294901760
    %1828 = vmatpush1.msra.mxu0 %v1827
    %1829 = vmatprep.subr.mxu0 0.0
    %v1830 = vand.u32 %v755, 4294901760
    %1831 = vmatpush1.msra.mxu0 %v1830
    %1832 = vmatprep.subr.mxu0 0.0
    %v1833 = vand.u32 %v754, 4294901760
    %1834 = vmatpush1.msra.mxu0 %v1833
    %1835 = vmatprep.subr.mxu0 0.0
    %v1836 = vand.u32 %v753, 4294901760
    %1837 = vmatpush1.msra.mxu0 %v1836
    %1838 = vmatprep.subr.mxu0 0.0
    %1839 = vmatpush2.msra.mxu0 0.0
    %1840 = vmatprep.subr.mxu0 0.0
    %1841 = vmatpush2.msra.mxu0 0.0
    %1842 = vmatprep.subr.mxu0 0.0
    %1843 = vmatpush2.msra.mxu0 0.0
    %1844 = vmatprep.subr.mxu0 0.0
    %1845 = vmatpush2.msra.mxu0 0.0
    %1846 = vmatprep.subr.mxu0 0.0
    %1847 = vmatpush2.msra.mxu0 0.0
    %1848 = vmatprep.subr.mxu0 0.0
    %1849 = vmatpush2.msra.mxu0 0.0
    %1850 = vmatprep.subr.mxu0 0.0
    %1851 = vmatpush2.msra.mxu0 0.0
    %1852 = vmatprep.subr.mxu0 0.0
    %1853 = vmatpush2.msra.mxu0 0.0
    %1854 = vmatprep.subr.mxu0 0.0
    %1855 = vmatpush2.msra.mxu0 0.0
    %1856 = vmatprep.subr.mxu0 0.0
    %1857 = vmatpush2.msra.mxu0 0.0
    %1858 = vmatprep.subr.mxu0 0.0
    %1859 = vmatpush2.msra.mxu0 0.0
    %1860 = vmatprep.subr.mxu0 0.0
    %1861 = vmatpush2.msra.mxu0 0.0
    %1862 = vmatprep.subr.mxu0 0.0
    %1863 = vmatpush2.msra.mxu0 0.0
    %1864 = vmatprep.subr.mxu0 0.0
    %1865 = vmatpush2.msra.mxu0 0.0
    %1866 = vmatprep.subr.mxu0 0.0
    %1867 = vmatpush2.msra.mxu0 0.0
    %1868 = vmatprep.subr.mxu0 0.0
    %1869 = vmatpush2.msra.mxu0 0.0
    %1870 = vmatprep.mubr.f32.mxu0 0.0
    %v1871 = vand.u32 %v1324, 4294901760
    %1872 = vmatmul.mubr.f32.gmra.mxu0 %v1871
    %v1873 = vpop.f32.mrf.mxu0
    %v1874 = vadd.f32 %v1791, %v1873
    %v1875 = vpop.f32.mrf.mxu0
    %1876 = vmatprep.mubr.f32.mxu0 0.0
    %v1877 = vand.u32 %v1327, 4294901760
    %1878 = vmatmul.mubr.f32.gmra.mxu0 %v1877
    %v1879 = vpop.f32.mrf.mxu0
    %v1880 = vadd.f32 %v1797, %v1879
    %v1881 = vpop.f32.mrf.mxu0
    %1882 = vdwg.mxu0
    %v1883 = vrsqrt.pop %v1874
    %v1884 = vrsqrt.pop %v1880
    %v1885 = vmul.f32 %v1319, %v1883
    %v1886 = vmul.f32 %v1320, %v1884
    %v1887 = vld [vmem:[%s3] sm:$0x1]
    %v1889 = vlaneseq
    %v1890 = vshrl.u32 %v1889, 7
    %v1891 = vsub.s32 0, %v1890
    %v1892 = vrot.slane %v1887, %v1891
    %v1894 = vmul.f32 %v1885, %v1892
    %v1895 = vmul.f32 %v1886, %v1892
    %v1896 = vld [vmem:[#allocation7] sm:$0x1]
    %v1898 = vlaneseq
    %v1899 = vshrl.u32 %v1898, 7
    %v1900 = vsub.s32 0, %v1899
    %v1901 = vrot.slane %v1896, %v1900
    %v1903 = vadd.f32 %v1894, %v1901
    %v1904 = vadd.f32 %v1895, %v1901
    %v1905 = vld [vmem:[#allocation8] sm:$0xff]
    %v1906 = vld [vmem:[#allocation8 + $0x8] sm:$0xff]
    %v1907 = vld [vmem:[#allocation8 + $0x10] sm:$0xff]
    %v1908 = vld [vmem:[#allocation8 + $0x18] sm:$0xff]
    %v1909 = vld [vmem:[#allocation8 + $0x20] sm:$0xff]
    %v1910 = vld [vmem:[#allocation8 + $0x28] sm:$0xff]
    %v1911 = vld [vmem:[#allocation10] sm:$0x1]
    %v1913 = vlaneseq
    %v1914 = vshrl.u32 %v1913, 7
    %v1915 = vsub.s32 0, %v1914
    %v1916 = vrot.slane %v1911, %v1915
    %v1919 = vsel %vm192, %v1903, 0
    %v1922 = vsel %vm192, %v1904, 0
    %1924 = vmatprep.subr.mxu0 0.0
    %1925 = vmatpush1.msra.mxu0 0.0
    %1926 = vmatprep.subr.mxu0 0.0
    %1927 = vmatpush1.msra.mxu0 0.0
    %1928 = vmatprep.subr.mxu0 0.0
    %1929 = vmatpush1.msra.mxu0 0.0
    %1930 = vmatprep.subr.mxu0 0.0
    %1931 = vmatpush1.msra.mxu0 0.0
    %1932 = vmatprep.subr.mxu0 0.0
    %1933 = vmatpush1.msra.mxu0 0.0
    %1934 = vmatprep.subr.mxu0 0.0
    %1935 = vmatpush1.msra.mxu0 0.0
    %1936 = vmatprep.subr.mxu0 0.0
    %1937 = vmatpush1.msra.mxu0 0.0
    %1938 = vmatprep.subr.mxu0 0.0
    %1939 = vmatpush1.msra.mxu0 0.0
    %1940 = vmatprep.subr.mxu0 0.0
    %1941 = vmatpush1.msra.mxu0 0.0
    %1942 = vmatprep.subr.mxu0 0.0
    %1943 = vmatpush1.msra.mxu0 0.0
    %1944 = vmatprep.subr.mxu0 0.0
    %v1945 = vand.u32 %v1910, 4294901760
    %1946 = vmatpush1.msra.mxu0 %v1945
    %1947 = vmatprep.subr.mxu0 0.0
    %v1948 = vand.u32 %v1909, 4294901760
    %1949 = vmatpush1.msra.mxu0 %v1948
    %1950 = vmatprep.subr.mxu0 0.0
    %v1951 = vand.u32 %v1908, 4294901760
    %1952 = vmatpush1.msra.mxu0 %v1951
    %1953 = vmatprep.subr.mxu0 0.0
    %v1954 = vand.u32 %v1907, 4294901760
    %1955 = vmatpush1.msra.mxu0 %v1954
    %1956 = vmatprep.subr.mxu0 0.0
    %v1957 = vand.u32 %v1906, 4294901760
    %1958 = vmatpush1.msra.mxu0 %v1957
    %1959 = vmatprep.subr.mxu0 0.0
    %v1960 = vand.u32 %v1905, 4294901760
    %1961 = vmatpush1.msra.mxu0 %v1960
    %1962 = vmatprep.subr.mxu0 0.0
    %1963 = vmatpush2.msra.mxu0 0.0
    %1964 = vmatprep.subr.mxu0 0.0
    %1965 = vmatpush2.msra.mxu0 0.0
    %1966 = vmatprep.subr.mxu0 0.0
    %1967 = vmatpush2.msra.mxu0 0.0
    %1968 = vmatprep.subr.mxu0 0.0
    %1969 = vmatpush2.msra.mxu0 0.0
    %1970 = vmatprep.subr.mxu0 0.0
    %1971 = vmatpush2.msra.mxu0 0.0
    %1972 = vmatprep.subr.mxu0 0.0
    %1973 = vmatpush2.msra.mxu0 0.0
    %1974 = vmatprep.subr.mxu0 0.0
    %1975 = vmatpush2.msra.mxu0 0.0
    %1976 = vmatprep.subr.mxu0 0.0
    %1977 = vmatpush2.msra.mxu0 0.0
    %1978 = vmatprep.subr.mxu0 0.0
    %1979 = vmatpush2.msra.mxu0 0.0
    %1980 = vmatprep.subr.mxu0 0.0
    %1981 = vmatpush2.msra.mxu0 0.0
    %1982 = vmatprep.subr.mxu0 0.0
    %1983 = vmatpush2.msra.mxu0 0.0
    %1984 = vmatprep.subr.mxu0 0.0
    %1985 = vmatpush2.msra.mxu0 0.0
    %1986 = vmatprep.subr.mxu0 0.0
    %1987 = vmatpush2.msra.mxu0 0.0
    %1988 = vmatprep.subr.mxu0 0.0
    %1989 = vmatpush2.msra.mxu0 0.0
    %1990 = vmatprep.subr.mxu0 0.0
    %1991 = vmatpush2.msra.mxu0 0.0
    %1992 = vmatprep.subr.mxu0 0.0
    %1993 = vmatpush2.msra.mxu0 0.0
    %1994 = vmatprep.mubr.f32.mxu0 0.0
    %v1995 = vand.u32 %v1919, 4294901760
    %v1996 = vsub.f32 %v1919, %v1995
    %v1997 = vand.u32 %v1996, 4294901760
    %v1998 = vsub.f32 %v1996, %v1997
    %v1999 = vand.u32 %v1998, 4294901760
    %2000 = vmatmul.mubr.f32.gmra.mxu0 %v1999
    %v2001 = vpop.f32.mrf.mxu0
    %v2002 = vadd.f32 %v1916, %v2001
    %v2003 = vpop.f32.mrf.mxu0
    %2004 = vmatprep.mubr.f32.mxu0 0.0
    %v2005 = vand.u32 %v1922, 4294901760
    %v2006 = vsub.f32 %v1922, %v2005
    %v2007 = vand.u32 %v2006, 4294901760
    %v2008 = vsub.f32 %v2006, %v2007
    %v2009 = vand.u32 %v2008, 4294901760
    %2010 = vmatmul.mubr.f32.gmra.mxu0 %v2009
    %v2011 = vpop.f32.mrf.mxu0
    %v2012 = vadd.f32 %v1916, %v2011
    %v2013 = vpop.f32.mrf.mxu0
    %2014 = vdwg.mxu0
    %2015 = vmatprep.subr.mxu0 0.0
    %2016 = vmatpush1.msra.mxu0 0.0
    %2017 = vmatprep.subr.mxu0 0.0
    %2018 = vmatpush1.msra.mxu0 0.0
    %2019 = vmatprep.subr.mxu0 0.0
    %2020 = vmatpush1.msra.mxu0 0.0
    %2021 = vmatprep.subr.mxu0 0.0
    %2022 = vmatpush1.msra.mxu0 0.0
    %2023 = vmatprep.subr.mxu0 0.0
    %2024 = vmatpush1.msra.mxu0 0.0
    %2025 = vmatprep.subr.mxu0 0.0
    %2026 = vmatpush1.msra.mxu0 0.0
    %2027 = vmatprep.subr.mxu0 0.0
    %2028 = vmatpush1.msra.mxu0 0.0
    %2029 = vmatprep.subr.mxu0 0.0
    %2030 = vmatpush1.msra.mxu0 0.0
    %2031 = vmatprep.subr.mxu0 0.0
    %2032 = vmatpush1.msra.mxu0 0.0
    %2033 = vmatprep.subr.mxu0 0.0
    %2034 = vmatpush1.msra.mxu0 0.0
    %2035 = vmatprep.subr.mxu0 0.0
    %v2036 = vand.u32 %v1910, 4294901760
    %v2037 = vsub.f32 %v1910, %v2036
    %v2038 = vand.u32 %v2037, 4294901760
    %v2039 = vsub.f32 %v2037, %v2038
    %v2040 = vand.u32 %v2039, 4294901760
    %2041 = vmatpush1.msra.mxu0 %v2040
    %2042 = vmatprep.subr.mxu0 0.0
    %v2043 = vand.u32 %v1909, 4294901760
    %v2044 = vsub.f32 %v1909, %v2043
    %v2045 = vand.u32 %v2044, 4294901760
    %v2046 = vsub.f32 %v2044, %v2045
    %v2047 = vand.u32 %v2046, 4294901760
    %2048 = vmatpush1.msra.mxu0 %v2047
    %2049 = vmatprep.subr.mxu0 0.0
    %v2050 = vand.u32 %v1908, 4294901760
    %v2051 = vsub.f32 %v1908, %v2050
    %v2052 = vand.u32 %v2051, 4294901760
    %v2053 = vsub.f32 %v2051, %v2052
    %v2054 = vand.u32 %v2053, 4294901760
    %2055 = vmatpush1.msra.mxu0 %v2054
    %2056 = vmatprep.subr.mxu0 0.0
    %v2057 = vand.u32 %v1907, 4294901760
    %v2058 = vsub.f32 %v1907, %v2057
    %v2059 = vand.u32 %v2058, 4294901760
    %v2060 = vsub.f32 %v2058, %v2059
    %v2061 = vand.u32 %v2060, 4294901760
    %2062 = vmatpush1.msra.mxu0 %v2061
    %2063 = vmatprep.subr.mxu0 0.0
    %v2064 = vand.u32 %v1906, 4294901760
    %v2065 = vsub.f32 %v1906, %v2064
    %v2066 = vand.u32 %v2065, 4294901760
    %v2067 = vsub.f32 %v2065, %v2066
    %v2068 = vand.u32 %v2067, 4294901760
    %2069 = vmatpush1.msra.mxu0 %v2068
    %2070 = vmatprep.subr.mxu0 0.0
    %v2071 = vand.u32 %v1905, 4294901760
    %v2072 = vsub.f32 %v1905, %v2071
    %v2073 = vand.u32 %v2072, 4294901760
    %v2074 = vsub.f32 %v2072, %v2073
    %v2075 = vand.u32 %v2074, 4294901760
    %2076 = vmatpush1.msra.mxu0 %v2075
    %2077 = vmatprep.subr.mxu0 0.0
    %2078 = vmatpush2.msra.mxu0 0.0
    %2079 = vmatprep.subr.mxu0 0.0
    %2080 = vmatpush2.msra.mxu0 0.0
    %2081 = vmatprep.subr.mxu0 0.0
    %2082 = vmatpush2.msra.mxu0 0.0
    %2083 = vmatprep.subr.mxu0 0.0
    %2084 = vmatpush2.msra.mxu0 0.0
    %2085 = vmatprep.subr.mxu0 0.0
    %2086 = vmatpush2.msra.mxu0 0.0
    %2087 = vmatprep.subr.mxu0 0.0
    %2088 = vmatpush2.msra.mxu0 0.0
    %2089 = vmatprep.subr.mxu0 0.0
    %2090 = vmatpush2.msra.mxu0 0.0
    %2091 = vmatprep.subr.mxu0 0.0
    %2092 = vmatpush2.msra.mxu0 0.0
    %2093 = vmatprep.subr.mxu0 0.0
    %2094 = vmatpush2.msra.mxu0 0.0
    %2095 = vmatprep.subr.mxu0 0.0
    %2096 = vmatpush2.msra.mxu0 0.0
    %2097 = vmatprep.subr.mxu0 0.0
    %2098 = vmatpush2.msra.mxu0 0.0
    %2099 = vmatprep.subr.mxu0 0.0
    %2100 = vmatpush2.msra.mxu0 0.0
    %2101 = vmatprep.subr.mxu0 0.0
    %2102 = vmatpush2.msra.mxu0 0.0
    %2103 = vmatprep.subr.mxu0 0.0
    %2104 = vmatpush2.msra.mxu0 0.0
    %2105 = vmatprep.subr.mxu0 0.0
    %2106 = vmatpush2.msra.mxu0 0.0
    %2107 = vmatprep.subr.mxu0 0.0
    %2108 = vmatpush2.msra.mxu0 0.0
    %2109 = vmatprep.mubr.f32.mxu0 0.0
    %v2110 = vand.u32 %v1919, 4294901760
    %2111 = vmatmul.mubr.f32.gmra.mxu0 %v2110
    %v2112 = vpop.f32.mrf.mxu0
    %v2113 = vadd.f32 %v2002, %v2112
    %v2114 = vpop.f32.mrf.mxu0
    %2115 = vmatprep.mubr.f32.mxu0 0.0
    %v2116 = vand.u32 %v1922, 4294901760
    %2117 = vmatmul.mubr.f32.gmra.mxu0 %v2116
    %v2118 = vpop.f32.mrf.mxu0
    %v2119 = vadd.f32 %v2012, %v2118
    %v2120 = vpop.f32.mrf.mxu0
    %2121 = vdwg.mxu0
    %2122 = vmatprep.subr.mxu0 0.0
    %2123 = vmatpush1.msra.mxu0 0.0
    %2124 = vmatprep.subr.mxu0 0.0
    %2125 = vmatpush1.msra.mxu0 0.0
    %2126 = vmatprep.subr.mxu0 0.0
    %2127 = vmatpush1.msra.mxu0 0.0
    %2128 = vmatprep.subr.mxu0 0.0
    %2129 = vmatpush1.msra.mxu0 0.0
    %2130 = vmatprep.subr.mxu0 0.0
    %2131 = vmatpush1.msra.mxu0 0.0
    %2132 = vmatprep.subr.mxu0 0.0
    %2133 = vmatpush1.msra.mxu0 0.0
    %2134 = vmatprep.subr.mxu0 0.0
    %2135 = vmatpush1.msra.mxu0 0.0
    %2136 = vmatprep.subr.mxu0 0.0
    %2137 = vmatpush1.msra.mxu0 0.0
    %2138 = vmatprep.subr.mxu0 0.0
    %2139 = vmatpush1.msra.mxu0 0.0
    %2140 = vmatprep.subr.mxu0 0.0
    %2141 = vmatpush1.msra.mxu0 0.0
    %2142 = vmatprep.subr.mxu0 0.0
    %v2143 = vand.u32 %v1910, 4294901760
    %v2144 = vsub.f32 %v1910, %v2143
    %2145 = vmatpush1.msra.mxu0 %v2144
    %2146 = vmatprep.subr.mxu0 0.0
    %v2147 = vand.u32 %v1909, 4294901760
    %v2148 = vsub.f32 %v1909, %v2147
    %2149 = vmatpush1.msra.mxu0 %v2148
    %2150 = vmatprep.subr.mxu0 0.0
    %v2151 = vand.u32 %v1908, 4294901760
    %v2152 = vsub.f32 %v1908, %v2151
    %2153 = vmatpush1.msra.mxu0 %v2152
    %2154 = vmatprep.subr.mxu0 0.0
    %v2155 = vand.u32 %v1907, 4294901760
    %v2156 = vsub.f32 %v1907, %v2155
    %2157 = vmatpush1.msra.mxu0 %v2156
    %2158 = vmatprep.subr.mxu0 0.0
    %v2159 = vand.u32 %v1906, 4294901760
    %v2160 = vsub.f32 %v1906, %v2159
    %2161 = vmatpush1.msra.mxu0 %v2160
    %2162 = vmatprep.subr.mxu0 0.0
    %v2163 = vand.u32 %v1905, 4294901760
    %v2164 = vsub.f32 %v1905, %v2163
    %2165 = vmatpush1.msra.mxu0 %v2164
    %2166 = vmatprep.subr.mxu0 0.0
    %2167 = vmatpush2.msra.mxu0 0.0
    %2168 = vmatprep.subr.mxu0 0.0
    %2169 = vmatpush2.msra.mxu0 0.0
    %2170 = vmatprep.subr.mxu0 0.0
    %2171 = vmatpush2.msra.mxu0 0.0
    %2172 = vmatprep.subr.mxu0 0.0
    %2173 = vmatpush2.msra.mxu0 0.0
    %2174 = vmatprep.subr.mxu0 0.0
    %2175 = vmatpush2.msra.mxu0 0.0
    %2176 = vmatprep.subr.mxu0 0.0
    %2177 = vmatpush2.msra.mxu0 0.0
    %2178 = vmatprep.subr.mxu0 0.0
    %2179 = vmatpush2.msra.mxu0 0.0
    %2180 = vmatprep.subr.mxu0 0.0
    %2181 = vmatpush2.msra.mxu0 0.0
    %2182 = vmatprep.subr.mxu0 0.0
    %2183 = vmatpush2.msra.mxu0 0.0
    %2184 = vmatprep.subr.mxu0 0.0
    %2185 = vmatpush2.msra.mxu0 0.0
    %2186 = vmatprep.subr.mxu0 0.0
    %2187 = vmatpush2.msra.mxu0 0.0
    %2188 = vmatprep.subr.mxu0 0.0
    %2189 = vmatpush2.msra.mxu0 0.0
    %2190 = vmatprep.subr.mxu0 0.0
    %2191 = vmatpush2.msra.mxu0 0.0
    %2192 = vmatprep.subr.mxu0 0.0
    %2193 = vmatpush2.msra.mxu0 0.0
    %2194 = vmatprep.subr.mxu0 0.0
    %2195 = vmatpush2.msra.mxu0 0.0
    %2196 = vmatprep.subr.mxu0 0.0
    %2197 = vmatpush2.msra.mxu0 0.0
    %2198 = vmatprep.mubr.f32.mxu0 0.0
    %v2199 = vand.u32 %v1919, 4294901760
    %v2200 = vsub.f32 %v1919, %v2199
    %2201 = vmatmul.mubr.f32.gmra.mxu0 %v2200
    %v2202 = vpop.f32.mrf.mxu0
    %v2203 = vadd.f32 %v2113, %v2202
    %v2204 = vpop.f32.mrf.mxu0
    %2205 = vmatprep.mubr.f32.mxu0 0.0
    %v2206 = vand.u32 %v1922, 4294901760
    %v2207 = vsub.f32 %v1922, %v2206
    %2208 = vmatmul.mubr.f32.gmra.mxu0 %v2207
    %v2209 = vpop.f32.mrf.mxu0
    %v2210 = vadd.f32 %v2119, %v2209
    %v2211 = vpop.f32.mrf.mxu0
    %2212 = vdwg.mxu0
    %2213 = vmatprep.subr.mxu0 0.0
    %2214 = vmatpush1.msra.mxu0 0.0
    %2215 = vmatprep.subr.mxu0 0.0
    %2216 = vmatpush1.msra.mxu0 0.0
    %2217 = vmatprep.subr.mxu0 0.0
    %2218 = vmatpush1.msra.mxu0 0.0
    %2219 = vmatprep.subr.mxu0 0.0
    %2220 = vmatpush1.msra.mxu0 0.0
    %2221 = vmatprep.subr.mxu0 0.0
    %2222 = vmatpush1.msra.mxu0 0.0
    %2223 = vmatprep.subr.mxu0 0.0
    %2224 = vmatpush1.msra.mxu0 0.0
    %2225 = vmatprep.subr.mxu0 0.0
    %2226 = vmatpush1.msra.mxu0 0.0
    %2227 = vmatprep.subr.mxu0 0.0
    %2228 = vmatpush1.msra.mxu0 0.0
    %2229 = vmatprep.subr.mxu0 0.0
    %2230 = vmatpush1.msra.mxu0 0.0
    %2231 = vmatprep.subr.mxu0 0.0
    %2232 = vmatpush1.msra.mxu0 0.0
    %2233 = vmatprep.subr.mxu0 0.0
    %v2234 = vand.u32 %v1910, 4294901760
    %2235 = vmatpush1.msra.mxu0 %v2234
    %2236 = vmatprep.subr.mxu0 0.0
    %v2237 = vand.u32 %v1909, 4294901760
    %2238 = vmatpush1.msra.mxu0 %v2237
    %2239 = vmatprep.subr.mxu0 0.0
    %v2240 = vand.u32 %v1908, 4294901760
    %2241 = vmatpush1.msra.mxu0 %v2240
    %2242 = vmatprep.subr.mxu0 0.0
    %v2243 = vand.u32 %v1907, 4294901760
    %2244 = vmatpush1.msra.mxu0 %v2243
    %2245 = vmatprep.subr.mxu0 0.0
    %v2246 = vand.u32 %v1906, 4294901760
    %2247 = vmatpush1.msra.mxu0 %v2246
    %2248 = vmatprep.subr.mxu0 0.0
    %v2249 = vand.u32 %v1905, 4294901760
    %2250 = vmatpush1.msra.mxu0 %v2249
    %2251 = vmatprep.subr.mxu0 0.0
    %2252 = vmatpush2.msra.mxu0 0.0
    %2253 = vmatprep.subr.mxu0 0.0
    %2254 = vmatpush2.msra.mxu0 0.0
    %2255 = vmatprep.subr.mxu0 0.0
    %2256 = vmatpush2.msra.mxu0 0.0
    %2257 = vmatprep.subr.mxu0 0.0
    %2258 = vmatpush2.msra.mxu0 0.0
    %2259 = vmatprep.subr.mxu0 0.0
    %2260 = vmatpush2.msra.mxu0 0.0
    %2261 = vmatprep.subr.mxu0 0.0
    %2262 = vmatpush2.msra.mxu0 0.0
    %2263 = vmatprep.subr.mxu0 0.0
    %2264 = vmatpush2.msra.mxu0 0.0
    %2265 = vmatprep.subr.mxu0 0.0
    %2266 = vmatpush2.msra.mxu0 0.0
    %2267 = vmatprep.subr.mxu0 0.0
    %2268 = vmatpush2.msra.mxu0 0.0
    %2269 = vmatprep.subr.mxu0 0.0
    %2270 = vmatpush2.msra.mxu0 0.0
    %2271 = vmatprep.subr.mxu0 0.0
    %2272 = vmatpush2.msra.mxu0 0.0
    %2273 = vmatprep.subr.mxu0 0.0
    %2274 = vmatpush2.msra.mxu0 0.0
    %2275 = vmatprep.subr.mxu0 0.0
    %2276 = vmatpush2.msra.mxu0 0.0
    %2277 = vmatprep.subr.mxu0 0.0
    %2278 = vmatpush2.msra.mxu0 0.0
    %2279 = vmatprep.subr.mxu0 0.0
    %2280 = vmatpush2.msra.mxu0 0.0
    %2281 = vmatprep.subr.mxu0 0.0
    %2282 = vmatpush2.msra.mxu0 0.0
    %2283 = vmatprep.mubr.f32.mxu0 0.0
    %v2284 = vand.u32 %v1919, 4294901760
    %v2285 = vsub.f32 %v1919, %v2284
    %v2286 = vand.u32 %v2285, 4294901760
    %2287 = vmatmul.mubr.f32.gmra.mxu0 %v2286
    %v2288 = vpop.f32.mrf.mxu0
    %v2289 = vadd.f32 %v2203, %v2288
    %v2290 = vpop.f32.mrf.mxu0
    %2291 = vmatprep.mubr.f32.mxu0 0.0
    %v2292 = vand.u32 %v1922, 4294901760
    %v2293 = vsub.f32 %v1922, %v2292
    %v2294 = vand.u32 %v2293, 4294901760
    %2295 = vmatmul.mubr.f32.gmra.mxu0 %v2294
    %v2296 = vpop.f32.mrf.mxu0
    %v2297 = vadd.f32 %v2210, %v2296
    %v2298 = vpop.f32.mrf.mxu0
    %2299 = vdwg.mxu0
    %2300 = vmatprep.subr.mxu0 0.0
    %2301 = vmatpush1.msra.mxu0 0.0
    %2302 = vmatprep.subr.mxu0 0.0
    %2303 = vmatpush1.msra.mxu0 0.0
    %2304 = vmatprep.subr.mxu0 0.0
    %2305 = vmatpush1.msra.mxu0 0.0
    %2306 = vmatprep.subr.mxu0 0.0
    %2307 = vmatpush1.msra.mxu0 0.0
    %2308 = vmatprep.subr.mxu0 0.0
    %2309 = vmatpush1.msra.mxu0 0.0
    %2310 = vmatprep.subr.mxu0 0.0
    %2311 = vmatpush1.msra.mxu0 0.0
    %2312 = vmatprep.subr.mxu0 0.0
    %2313 = vmatpush1.msra.mxu0 0.0
    %2314 = vmatprep.subr.mxu0 0.0
    %2315 = vmatpush1.msra.mxu0 0.0
    %2316 = vmatprep.subr.mxu0 0.0
    %2317 = vmatpush1.msra.mxu0 0.0
    %2318 = vmatprep.subr.mxu0 0.0
    %2319 = vmatpush1.msra.mxu0 0.0
    %2320 = vmatprep.subr.mxu0 0.0
    %v2321 = vand.u32 %v1910, 4294901760
    %v2322 = vsub.f32 %v1910, %v2321
    %v2323 = vand.u32 %v2322, 4294901760
    %2324 = vmatpush1.msra.mxu0 %v2323
    %2325 = vmatprep.subr.mxu0 0.0
    %v2326 = vand.u32 %v1909, 4294901760
    %v2327 = vsub.f32 %v1909, %v2326
    %v2328 = vand.u32 %v2327, 4294901760
    %2329 = vmatpush1.msra.mxu0 %v2328
    %2330 = vmatprep.subr.mxu0 0.0
    %v2331 = vand.u32 %v1908, 4294901760
    %v2332 = vsub.f32 %v1908, %v2331
    %v2333 = vand.u32 %v2332, 4294901760
    %2334 = vmatpush1.msra.mxu0 %v2333
    %2335 = vmatprep.subr.mxu0 0.0
    %v2336 = vand.u32 %v1907, 4294901760
    %v2337 = vsub.f32 %v1907, %v2336
    %v2338 = vand.u32 %v2337, 4294901760
    %2339 = vmatpush1.msra.mxu0 %v2338
    %2340 = vmatprep.subr.mxu0 0.0
    %v2341 = vand.u32 %v1906, 4294901760
    %v2342 = vsub.f32 %v1906, %v2341
    %v2343 = vand.u32 %v2342, 4294901760
    %2344 = vmatpush1.msra.mxu0 %v2343
    %2345 = vmatprep.subr.mxu0 0.0
    %v2346 = vand.u32 %v1905, 4294901760
    %v2347 = vsub.f32 %v1905, %v2346
    %v2348 = vand.u32 %v2347, 4294901760
    %2349 = vmatpush1.msra.mxu0 %v2348
    %2350 = vmatprep.subr.mxu0 0.0
    %2351 = vmatpush2.msra.mxu0 0.0
    %2352 = vmatprep.subr.mxu0 0.0
    %2353 = vmatpush2.msra.mxu0 0.0
    %2354 = vmatprep.subr.mxu0 0.0
    %2355 = vmatpush2.msra.mxu0 0.0
    %2356 = vmatprep.subr.mxu0 0.0
    %2357 = vmatpush2.msra.mxu0 0.0
    %2358 = vmatprep.subr.mxu0 0.0
    %2359 = vmatpush2.msra.mxu0 0.0
    %2360 = vmatprep.subr.mxu0 0.0
    %2361 = vmatpush2.msra.mxu0 0.0
    %2362 = vmatprep.subr.mxu0 0.0
    %2363 = vmatpush2.msra.mxu0 0.0
    %2364 = vmatprep.subr.mxu0 0.0
    %2365 = vmatpush2.msra.mxu0 0.0
    %2366 = vmatprep.subr.mxu0 0.0
    %2367 = vmatpush2.msra.mxu0 0.0
    %2368 = vmatprep.subr.mxu0 0.0
    %2369 = vmatpush2.msra.mxu0 0.0
    %2370 = vmatprep.subr.mxu0 0.0
    %2371 = vmatpush2.msra.mxu0 0.0
    %2372 = vmatprep.subr.mxu0 0.0
    %2373 = vmatpush2.msra.mxu0 0.0
    %2374 = vmatprep.subr.mxu0 0.0
    %2375 = vmatpush2.msra.mxu0 0.0
    %2376 = vmatprep.subr.mxu0 0.0
    %2377 = vmatpush2.msra.mxu0 0.0
    %2378 = vmatprep.subr.mxu0 0.0
    %2379 = vmatpush2.msra.mxu0 0.0
    %2380 = vmatprep.subr.mxu0 0.0
    %2381 = vmatpush2.msra.mxu0 0.0
    %2382 = vmatprep.mubr.f32.mxu0 0.0
    %v2383 = vand.u32 %v1919, 4294901760
    %2384 = vmatmul.mubr.f32.gmra.mxu0 %v2383
    %v2385 = vpop.f32.mrf.mxu0
    %v2386 = vadd.f32 %v2289, %v2385
    %v2387 = vpop.f32.mrf.mxu0
    %2388 = vmatprep.mubr.f32.mxu0 0.0
    %v2389 = vand.u32 %v1922, 4294901760
    %2390 = vmatmul.mubr.f32.gmra.mxu0 %v2389
    %v2391 = vpop.f32.mrf.mxu0
    %v2392 = vadd.f32 %v2297, %v2391
    %v2393 = vpop.f32.mrf.mxu0
    %2394 = vdwg.mxu0
    %2395 = vmatprep.subr.mxu0 0.0
    %2396 = vmatpush1.msra.mxu0 0.0
    %2397 = vmatprep.subr.mxu0 0.0
    %2398 = vmatpush1.msra.mxu0 0.0
    %2399 = vmatprep.subr.mxu0 0.0
    %2400 = vmatpush1.msra.mxu0 0.0
    %2401 = vmatprep.subr.mxu0 0.0
    %2402 = vmatpush1.msra.mxu0 0.0
    %2403 = vmatprep.subr.mxu0 0.0
    %2404 = vmatpush1.msra.mxu0 0.0
    %2405 = vmatprep.subr.mxu0 0.0
    %2406 = vmatpush1.msra.mxu0 0.0
    %2407 = vmatprep.subr.mxu0 0.0
    %2408 = vmatpush1.msra.mxu0 0.0
    %2409 = vmatprep.subr.mxu0 0.0
    %2410 = vmatpush1.msra.mxu0 0.0
    %2411 = vmatprep.subr.mxu0 0.0
    %2412 = vmatpush1.msra.mxu0 0.0
    %2413 = vmatprep.subr.mxu0 0.0
    %2414 = vmatpush1.msra.mxu0 0.0
    %2415 = vmatprep.subr.mxu0 0.0
    %v2416 = vand.u32 %v1910, 4294901760
    %2417 = vmatpush1.msra.mxu0 %v2416
    %2418 = vmatprep.subr.mxu0 0.0
    %v2419 = vand.u32 %v1909, 4294901760
    %2420 = vmatpush1.msra.mxu0 %v2419
    %2421 = vmatprep.subr.mxu0 0.0
    %v2422 = vand.u32 %v1908, 4294901760
    %2423 = vmatpush1.msra.mxu0 %v2422
    %2424 = vmatprep.subr.mxu0 0.0
    %v2425 = vand.u32 %v1907, 4294901760
    %2426 = vmatpush1.msra.mxu0 %v2425
    %2427 = vmatprep.subr.mxu0 0.0
    %v2428 = vand.u32 %v1906, 4294901760
    %2429 = vmatpush1.msra.mxu0 %v2428
    %2430 = vmatprep.subr.mxu0 0.0
    %v2431 = vand.u32 %v1905, 4294901760
    %2432 = vmatpush1.msra.mxu0 %v2431
    %2433 = vmatprep.subr.mxu0 0.0
    %2434 = vmatpush2.msra.mxu0 0.0
    %2435 = vmatprep.subr.mxu0 0.0
    %2436 = vmatpush2.msra.mxu0 0.0
    %2437 = vmatprep.subr.mxu0 0.0
    %2438 = vmatpush2.msra.mxu0 0.0
    %2439 = vmatprep.subr.mxu0 0.0
    %2440 = vmatpush2.msra.mxu0 0.0
    %2441 = vmatprep.subr.mxu0 0.0
    %2442 = vmatpush2.msra.mxu0 0.0
    %2443 = vmatprep.subr.mxu0 0.0
    %2444 = vmatpush2.msra.mxu0 0.0
    %2445 = vmatprep.subr.mxu0 0.0
    %2446 = vmatpush2.msra.mxu0 0.0
    %2447 = vmatprep.subr.mxu0 0.0
    %2448 = vmatpush2.msra.mxu0 0.0
    %2449 = vmatprep.subr.mxu0 0.0
    %2450 = vmatpush2.msra.mxu0 0.0
    %2451 = vmatprep.subr.mxu0 0.0
    %2452 = vmatpush2.msra.mxu0 0.0
    %2453 = vmatprep.subr.mxu0 0.0
    %2454 = vmatpush2.msra.mxu0 0.0
    %2455 = vmatprep.subr.mxu0 0.0
    %2456 = vmatpush2.msra.mxu0 0.0
    %2457 = vmatprep.subr.mxu0 0.0
    %2458 = vmatpush2.msra.mxu0 0.0
    %2459 = vmatprep.subr.mxu0 0.0
    %2460 = vmatpush2.msra.mxu0 0.0
    %2461 = vmatprep.subr.mxu0 0.0
    %2462 = vmatpush2.msra.mxu0 0.0
    %2463 = vmatprep.subr.mxu0 0.0
    %2464 = vmatpush2.msra.mxu0 0.0
    %2465 = vmatprep.mubr.f32.mxu0 0.0
    %v2466 = vand.u32 %v1919, 4294901760
    %2467 = vmatmul.mubr.f32.gmra.mxu0 %v2466
    %v2468 = vpop.f32.mrf.mxu0
    %v2469 = vadd.f32 %v2386, %v2468
    %v2470 = vpop.f32.mrf.mxu0
    %2471 = vmatprep.mubr.f32.mxu0 0.0
    %v2472 = vand.u32 %v1922, 4294901760
    %2473 = vmatmul.mubr.f32.gmra.mxu0 %v2472
    %v2474 = vpop.f32.mrf.mxu0
    %v2475 = vadd.f32 %v2392, %v2474
    %v2476 = vpop.f32.mrf.mxu0
    %2477 = vdwg.mxu0
    %v2478 = vld [vmem:[#allocation13] sm:$0xff]
    %v2479 = vld [vmem:[#allocation13 + $0x8] sm:$0xff]
    %vm2480 = vcmask 130048
    %v2482 = vsel %vm2480, %v2469, 0
    %v2485 = vsel %vm2480, %v2475, 0
    %2487 = vmatprep.subr.mxu0 0.0
    %2488 = vmatpush1.msra.mxu0 0.0
    %2489 = vmatprep.subr.mxu0 0.0
    %2490 = vmatpush1.msra.mxu0 0.0
    %2491 = vmatprep.subr.mxu0 0.0
    %2492 = vmatpush1.msra.mxu0 0.0
    %2493 = vmatprep.subr.mxu0 0.0
    %2494 = vmatpush1.msra.mxu0 0.0
    %2495 = vmatprep.subr.mxu0 0.0
    %2496 = vmatpush1.msra.mxu0 0.0
    %2497 = vmatprep.subr.mxu0 0.0
    %2498 = vmatpush1.msra.mxu0 0.0
    %2499 = vmatprep.subr.mxu0 0.0
    %2500 = vmatpush1.msra.mxu0 0.0
    %2501 = vmatprep.subr.mxu0 0.0
    %2502 = vmatpush1.msra.mxu0 0.0
    %2503 = vmatprep.subr.mxu0 0.0
    %2504 = vmatpush1.msra.mxu0 0.0
    %2505 = vmatprep.subr.mxu0 0.0
    %2506 = vmatpush1.msra.mxu0 0.0
    %2507 = vmatprep.subr.mxu0 0.0
    %2508 = vmatpush1.msra.mxu0 0.0
    %2509 = vmatprep.subr.mxu0 0.0
    %2510 = vmatpush1.msra.mxu0 0.0
    %2511 = vmatprep.subr.mxu0 0.0
    %2512 = vmatpush1.msra.mxu0 0.0
    %2513 = vmatprep.subr.mxu0 0.0
    %2514 = vmatpush1.msra.mxu0 0.0
    %2515 = vmatprep.subr.mxu0 0.0
    %v2516 = vand.u32 %v2479, 4294901760
    %2517 = vmatpush1.msra.mxu0 %v2516
    %2518 = vmatprep.subr.mxu0 0.0
    %v2519 = vand.u32 %v2478, 4294901760
    %2520 = vmatpush1.msra.mxu0 %v2519
    %2521 = vmatprep.subr.mxu0 0.0
    %2522 = vmatpush2.msra.mxu0 0.0
    %2523 = vmatprep.subr.mxu0 0.0
    %2524 = vmatpush2.msra.mxu0 0.0
    %2525 = vmatprep.subr.mxu0 0.0
    %2526 = vmatpush2.msra.mxu0 0.0
    %2527 = vmatprep.subr.mxu0 0.0
    %2528 = vmatpush2.msra.mxu0 0.0
    %2529 = vmatprep.subr.mxu0 0.0
    %2530 = vmatpush2.msra.mxu0 0.0
    %2531 = vmatprep.subr.mxu0 0.0
    %2532 = vmatpush2.msra.mxu0 0.0
    %2533 = vmatprep.subr.mxu0 0.0
    %2534 = vmatpush2.msra.mxu0 0.0
    %2535 = vmatprep.subr.mxu0 0.0
    %2536 = vmatpush2.msra.mxu0 0.0
    %2537 = vmatprep.subr.mxu0 0.0
    %2538 = vmatpush2.msra.mxu0 0.0
    %2539 = vmatprep.subr.mxu0 0.0
    %2540 = vmatpush2.msra.mxu0 0.0
    %2541 = vmatprep.subr.mxu0 0.0
    %2542 = vmatpush2.msra.mxu0 0.0
    %2543 = vmatprep.subr.mxu0 0.0
    %2544 = vmatpush2.msra.mxu0 0.0
    %2545 = vmatprep.subr.mxu0 0.0
    %2546 = vmatpush2.msra.mxu0 0.0
    %2547 = vmatprep.subr.mxu0 0.0
    %2548 = vmatpush2.msra.mxu0 0.0
    %2549 = vmatprep.subr.mxu0 0.0
    %2550 = vmatpush2.msra.mxu0 0.0
    %2551 = vmatprep.subr.mxu0 0.0
    %2552 = vmatpush2.msra.mxu0 0.0
    %2553 = vmatprep.mubr.f32.mxu0 0.0
    %v2554 = vand.u32 %v2482, 4294901760
    %v2555 = vsub.f32 %v2482, %v2554
    %v2556 = vand.u32 %v2555, 4294901760
    %v2557 = vsub.f32 %v2555, %v2556
    %v2558 = vand.u32 %v2557, 4294901760
    %2559 = vmatmul.mubr.f32.gmra.mxu0 %v2558
    %v2560 = vpop.f32.mrf.mxu0
    %v2561 = vadd.f32 0.0, %v2560
    %v2562 = vpop.f32.mrf.mxu0
    %2563 = vmatprep.mubr.f32.mxu0 0.0
    %v2564 = vand.u32 %v2485, 4294901760
    %v2565 = vsub.f32 %v2485, %v2564
    %v2566 = vand.u32 %v2565, 4294901760
    %v2567 = vsub.f32 %v2565, %v2566
    %v2568 = vand.u32 %v2567, 4294901760
    %2569 = vmatmul.mubr.f32.gmra.mxu0 %v2568
    %v2570 = vpop.f32.mrf.mxu0
    %v2571 = vadd.f32 0.0, %v2570
    %v2572 = vpop.f32.mrf.mxu0
    %2573 = vdwg.mxu0
    %2574 = vmatprep.subr.mxu0 0.0
    %2575 = vmatpush1.msra.mxu0 0.0
    %2576 = vmatprep.subr.mxu0 0.0
    %2577 = vmatpush1.msra.mxu0 0.0
    %2578 = vmatprep.subr.mxu0 0.0
    %2579 = vmatpush1.msra.mxu0 0.0
    %2580 = vmatprep.subr.mxu0 0.0
    %2581 = vmatpush1.msra.mxu0 0.0
    %2582 = vmatprep.subr.mxu0 0.0
    %2583 = vmatpush1.msra.mxu0 0.0
    %2584 = vmatprep.subr.mxu0 0.0
    %2585 = vmatpush1.msra.mxu0 0.0
    %2586 = vmatprep.subr.mxu0 0.0
    %2587 = vmatpush1.msra.mxu0 0.0
    %2588 = vmatprep.subr.mxu0 0.0
    %2589 = vmatpush1.msra.mxu0 0.0
    %2590 = vmatprep.subr.mxu0 0.0
    %2591 = vmatpush1.msra.mxu0 0.0
    %2592 = vmatprep.subr.mxu0 0.0
    %2593 = vmatpush1.msra.mxu0 0.0
    %2594 = vmatprep.subr.mxu0 0.0
    %2595 = vmatpush1.msra.mxu0 0.0
    %2596 = vmatprep.subr.mxu0 0.0
    %2597 = vmatpush1.msra.mxu0 0.0
    %2598 = vmatprep.subr.mxu0 0.0
    %2599 = vmatpush1.msra.mxu0 0.0
    %2600 = vmatprep.subr.mxu0 0.0
    %2601 = vmatpush1.msra.mxu0 0.0
    %2602 = vmatprep.subr.mxu0 0.0
    %v2603 = vand.u32 %v2479, 4294901760
    %v2604 = vsub.f32 %v2479, %v2603
    %v2605 = vand.u32 %v2604, 4294901760
    %v2606 = vsub.f32 %v2604, %v2605
    %v2607 = vand.u32 %v2606, 4294901760
    %2608 = vmatpush1.msra.mxu0 %v2607
    %2609 = vmatprep.subr.mxu0 0.0
    %v2610 = vand.u32 %v2478, 4294901760
    %v2611 = vsub.f32 %v2478, %v2610
    %v2612 = vand.u32 %v2611, 4294901760
    %v2613 = vsub.f32 %v2611, %v2612
    %v2614 = vand.u32 %v2613, 4294901760
    %2615 = vmatpush1.msra.mxu0 %v2614
    %2616 = vmatprep.subr.mxu0 0.0
    %2617 = vmatpush2.msra.mxu0 0.0
    %2618 = vmatprep.subr.mxu0 0.0
    %2619 = vmatpush2.msra.mxu0 0.0
    %2620 = vmatprep.subr.mxu0 0.0
    %2621 = vmatpush2.msra.mxu0 0.0
    %2622 = vmatprep.subr.mxu0 0.0
    %2623 = vmatpush2.msra.mxu0 0.0
    %2624 = vmatprep.subr.mxu0 0.0
    %2625 = vmatpush2.msra.mxu0 0.0
    %2626 = vmatprep.subr.mxu0 0.0
    %2627 = vmatpush2.msra.mxu0 0.0
    %2628 = vmatprep.subr.mxu0 0.0
    %2629 = vmatpush2.msra.mxu0 0.0
    %2630 = vmatprep.subr.mxu0 0.0
    %2631 = vmatpush2.msra.mxu0 0.0
    %2632 = vmatprep.subr.mxu0 0.0
    %2633 = vmatpush2.msra.mxu0 0.0
    %2634 = vmatprep.subr.mxu0 0.0
    %2635 = vmatpush2.msra.mxu0 0.0
    %2636 = vmatprep.subr.mxu0 0.0
    %2637 = vmatpush2.msra.mxu0 0.0
    %2638 = vmatprep.subr.mxu0 0.0
    %2639 = vmatpush2.msra.mxu0 0.0
    %2640 = vmatprep.subr.mxu0 0.0
    %2641 = vmatpush2.msra.mxu0 0.0
    %2642 = vmatprep.subr.mxu0 0.0
    %2643 = vmatpush2.msra.mxu0 0.0
    %2644 = vmatprep.subr.mxu0 0.0
    %2645 = vmatpush2.msra.mxu0 0.0
    %2646 = vmatprep.subr.mxu0 0.0
    %2647 = vmatpush2.msra.mxu0 0.0
    %2648 = vmatprep.mubr.f32.mxu0 0.0
    %v2649 = vand.u32 %v2482, 4294901760
    %2650 = vmatmul.mubr.f32.gmra.mxu0 %v2649
    %v2651 = vpop.f32.mrf.mxu0
    %v2652 = vadd.f32 %v2561, %v2651
    %v2653 = vpop.f32.mrf.mxu0
    %2654 = vmatprep.mubr.f32.mxu0 0.0
    %v2655 = vand.u32 %v2485, 4294901760
    %2656 = vmatmul.mubr.f32.gmra.mxu0 %v2655
    %v2657 = vpop.f32.mrf.mxu0
    %v2658 = vadd.f32 %v2571, %v2657
    %v2659 = vpop.f32.mrf.mxu0
    %2660 = vdwg.mxu0
    %2661 = vmatprep.subr.mxu0 0.0
    %2662 = vmatpush1.msra.mxu0 0.0
    %2663 = vmatprep.subr.mxu0 0.0
    %2664 = vmatpush1.msra.mxu0 0.0
    %2665 = vmatprep.subr.mxu0 0.0
    %2666 = vmatpush1.msra.mxu0 0.0
    %2667 = vmatprep.subr.mxu0 0.0
    %2668 = vmatpush1.msra.mxu0 0.0
    %2669 = vmatprep.subr.mxu0 0.0
    %2670 = vmatpush1.msra.mxu0 0.0
    %2671 = vmatprep.subr.mxu0 0.0
    %2672 = vmatpush1.msra.mxu0 0.0
    %2673 = vmatprep.subr.mxu0 0.0
    %2674 = vmatpush1.msra.mxu0 0.0
    %2675 = vmatprep.subr.mxu0 0.0
    %2676 = vmatpush1.msra.mxu0 0.0
    %2677 = vmatprep.subr.mxu0 0.0
    %2678 = vmatpush1.msra.mxu0 0.0
    %2679 = vmatprep.subr.mxu0 0.0
    %2680 = vmatpush1.msra.mxu0 0.0
    %2681 = vmatprep.subr.mxu0 0.0
    %2682 = vmatpush1.msra.mxu0 0.0
    %2683 = vmatprep.subr.mxu0 0.0
    %2684 = vmatpush1.msra.mxu0 0.0
    %2685 = vmatprep.subr.mxu0 0.0
    %2686 = vmatpush1.msra.mxu0 0.0
    %2687 = vmatprep.subr.mxu0 0.0
    %2688 = vmatpush1.msra.mxu0 0.0
    %2689 = vmatprep.subr.mxu0 0.0
    %v2690 = vand.u32 %v2479, 4294901760
    %v2691 = vsub.f32 %v2479, %v2690
    %2692 = vmatpush1.msra.mxu0 %v2691
    %2693 = vmatprep.subr.mxu0 0.0
    %v2694 = vand.u32 %v2478, 4294901760
    %v2695 = vsub.f32 %v2478, %v2694
    %2696 = vmatpush1.msra.mxu0 %v2695
    %2697 = vmatprep.subr.mxu0 0.0
    %2698 = vmatpush2.msra.mxu0 0.0
    %2699 = vmatprep.subr.mxu0 0.0
    %2700 = vmatpush2.msra.mxu0 0.0
    %2701 = vmatprep.subr.mxu0 0.0
    %2702 = vmatpush2.msra.mxu0 0.0
    %2703 = vmatprep.subr.mxu0 0.0
    %2704 = vmatpush2.msra.mxu0 0.0
    %2705 = vmatprep.subr.mxu0 0.0
    %2706 = vmatpush2.msra.mxu0 0.0
    %2707 = vmatprep.subr.mxu0 0.0
    %2708 = vmatpush2.msra.mxu0 0.0
    %2709 = vmatprep.subr.mxu0 0.0
    %2710 = vmatpush2.msra.mxu0 0.0
    %2711 = vmatprep.subr.mxu0 0.0
    %2712 = vmatpush2.msra.mxu0 0.0
    %2713 = vmatprep.subr.mxu0 0.0
    %2714 = vmatpush2.msra.mxu0 0.0
    %2715 = vmatprep.subr.mxu0 0.0
    %2716 = vmatpush2.msra.mxu0 0.0
    %2717 = vmatprep.subr.mxu0 0.0
    %2718 = vmatpush2.msra.mxu0 0.0
    %2719 = vmatprep.subr.mxu0 0.0
    %2720 = vmatpush2.msra.mxu0 0.0
    %2721 = vmatprep.subr.mxu0 0.0
    %2722 = vmatpush2.msra.mxu0 0.0
    %2723 = vmatprep.subr.mxu0 0.0
    %2724 = vmatpush2.msra.mxu0 0.0
    %2725 = vmatprep.subr.mxu0 0.0
    %2726 = vmatpush2.msra.mxu0 0.0
    %2727 = vmatprep.subr.mxu0 0.0
    %2728 = vmatpush2.msra.mxu0 0.0
    %2729 = vmatprep.mubr.f32.mxu0 0.0
    %v2730 = vand.u32 %v2482, 4294901760
    %v2731 = vsub.f32 %v2482, %v2730
    %2732 = vmatmul.mubr.f32.gmra.mxu0 %v2731
    %v2733 = vpop.f32.mrf.mxu0
    %v2734 = vadd.f32 %v2652, %v2733
    %v2735 = vpop.f32.mrf.mxu0
    %2736 = vmatprep.mubr.f32.mxu0 0.0
    %v2737 = vand.u32 %v2485, 4294901760
    %v2738 = vsub.f32 %v2485, %v2737
    %2739 = vmatmul.mubr.f32.gmra.mxu0 %v2738
    %v2740 = vpop.f32.mrf.mxu0
    %v2741 = vadd.f32 %v2658, %v2740
    %v2742 = vpop.f32.mrf.mxu0
    %2743 = vdwg.mxu0
    %2744 = vmatprep.subr.mxu0 0.0
    %2745 = vmatpush1.msra.mxu0 0.0
    %2746 = vmatprep.subr.mxu0 0.0
    %2747 = vmatpush1.msra.mxu0 0.0
    %2748 = vmatprep.subr.mxu0 0.0
    %2749 = vmatpush1.msra.mxu0 0.0
    %2750 = vmatprep.subr.mxu0 0.0
    %2751 = vmatpush1.msra.mxu0 0.0
    %2752 = vmatprep.subr.mxu0 0.0
    %2753 = vmatpush1.msra.mxu0 0.0
    %2754 = vmatprep.subr.mxu0 0.0
    %2755 = vmatpush1.msra.mxu0 0.0
    %2756 = vmatprep.subr.mxu0 0.0
    %2757 = vmatpush1.msra.mxu0 0.0
    %2758 = vmatprep.subr.mxu0 0.0
    %2759 = vmatpush1.msra.mxu0 0.0
    %2760 = vmatprep.subr.mxu0 0.0
    %2761 = vmatpush1.msra.mxu0 0.0
    %2762 = vmatprep.subr.mxu0 0.0
    %2763 = vmatpush1.msra.mxu0 0.0
    %2764 = vmatprep.subr.mxu0 0.0
    %2765 = vmatpush1.msra.mxu0 0.0
    %2766 = vmatprep.subr.mxu0 0.0
    %2767 = vmatpush1.msra.mxu0 0.0
    %2768 = vmatprep.subr.mxu0 0.0
    %2769 = vmatpush1.msra.mxu0 0.0
    %2770 = vmatprep.subr.mxu0 0.0
    %2771 = vmatpush1.msra.mxu0 0.0
    %2772 = vmatprep.subr.mxu0 0.0
    %v2773 = vand.u32 %v2479, 4294901760
    %2774 = vmatpush1.msra.mxu0 %v2773
    %2775 = vmatprep.subr.mxu0 0.0
    %v2776 = vand.u32 %v2478, 4294901760
    %2777 = vmatpush1.msra.mxu0 %v2776
    %2778 = vmatprep.subr.mxu0 0.0
    %2779 = vmatpush2.msra.mxu0 0.0
    %2780 = vmatprep.subr.mxu0 0.0
    %2781 = vmatpush2.msra.mxu0 0.0
    %2782 = vmatprep.subr.mxu0 0.0
    %2783 = vmatpush2.msra.mxu0 0.0
    %2784 = vmatprep.subr.mxu0 0.0
    %2785 = vmatpush2.msra.mxu0 0.0
    %2786 = vmatprep.subr.mxu0 0.0
    %2787 = vmatpush2.msra.mxu0 0.0
    %2788 = vmatprep.subr.mxu0 0.0
    %2789 = vmatpush2.msra.mxu0 0.0
    %2790 = vmatprep.subr.mxu0 0.0
    %2791 = vmatpush2.msra.mxu0 0.0
    %2792 = vmatprep.subr.mxu0 0.0
    %2793 = vmatpush2.msra.mxu0 0.0
    %2794 = vmatprep.subr.mxu0 0.0
    %2795 = vmatpush2.msra.mxu0 0.0
    %2796 = vmatprep.subr.mxu0 0.0
    %2797 = vmatpush2.msra.mxu0 0.0
    %2798 = vmatprep.subr.mxu0 0.0
    %2799 = vmatpush2.msra.mxu0 0.0
    %2800 = vmatprep.subr.mxu0 0.0
    %2801 = vmatpush2.msra.mxu0 0.0
    %2802 = vmatprep.subr.mxu0 0.0
    %2803 = vmatpush2.msra.mxu0 0.0
    %2804 = vmatprep.subr.mxu0 0.0
    %2805 = vmatpush2.msra.mxu0 0.0
    %2806 = vmatprep.subr.mxu0 0.0
    %2807 = vmatpush2.msra.mxu0 0.0
    %2808 = vmatprep.subr.mxu0 0.0
    %2809 = vmatpush2.msra.mxu0 0.0
    %2810 = vmatprep.mubr.f32.mxu0 0.0
    %v2811 = vand.u32 %v2482, 4294901760
    %v2812 = vsub.f32 %v2482, %v2811
    %v2813 = vand.u32 %v2812, 4294901760
    %2814 = vmatmul.mubr.f32.gmra.mxu0 %v2813
    %v2815 = vpop.f32.mrf.mxu0
    %v2816 = vadd.f32 %v2734, %v2815
    %v2817 = vpop.f32.mrf.mxu0
    %2818 = vmatprep.mubr.f32.mxu0 0.0
    %v2819 = vand.u32 %v2485, 4294901760
    %v2820 = vsub.f32 %v2485, %v2819
    %v2821 = vand.u32 %v2820, 4294901760
    %2822 = vmatmul.mubr.f32.gmra.mxu0 %v2821
    %v2823 = vpop.f32.mrf.mxu0
    %v2824 = vadd.f32 %v2741, %v2823
    %v2825 = vpop.f32.mrf.mxu0
    %2826 = vdwg.mxu0
    %2827 = vmatprep.subr.mxu0 0.0
    %2828 = vmatpush1.msra.mxu0 0.0
    %2829 = vmatprep.subr.mxu0 0.0
    %2830 = vmatpush1.msra.mxu0 0.0
    %2831 = vmatprep.subr.mxu0 0.0
    %2832 = vmatpush1.msra.mxu0 0.0
    %2833 = vmatprep.subr.mxu0 0.0
    %2834 = vmatpush1.msra.mxu0 0.0
    %2835 = vmatprep.subr.mxu0 0.0
    %2836 = vmatpush1.msra.mxu0 0.0
    %2837 = vmatprep.subr.mxu0 0.0
    %2838 = vmatpush1.msra.mxu0 0.0
    %2839 = vmatprep.subr.mxu0 0.0
    %2840 = vmatpush1.msra.mxu0 0.0
    %2841 = vmatprep.subr.mxu0 0.0
    %2842 = vmatpush1.msra.mxu0 0.0
    %2843 = vmatprep.subr.mxu0 0.0
    %2844 = vmatpush1.msra.mxu0 0.0
    %2845 = vmatprep.subr.mxu0 0.0
    %2846 = vmatpush1.msra.mxu0 0.0
    %2847 = vmatprep.subr.mxu0 0.0
    %2848 = vmatpush1.msra.mxu0 0.0
    %2849 = vmatprep.subr.mxu0 0.0
    %2850 = vmatpush1.msra.mxu0 0.0
    %2851 = vmatprep.subr.mxu0 0.0
    %2852 = vmatpush1.msra.mxu0 0.0
    %2853 = vmatprep.subr.mxu0 0.0
    %2854 = vmatpush1.msra.mxu0 0.0
    %2855 = vmatprep.subr.mxu0 0.0
    %v2856 = vand.u32 %v2479, 4294901760
    %v2857 = vsub.f32 %v2479, %v2856
    %v2858 = vand.u32 %v2857, 4294901760
    %2859 = vmatpush1.msra.mxu0 %v2858
    %2860 = vmatprep.subr.mxu0 0.0
    %v2861 = vand.u32 %v2478, 4294901760
    %v2862 = vsub.f32 %v2478, %v2861
    %v2863 = vand.u32 %v2862, 4294901760
    %2864 = vmatpush1.msra.mxu0 %v2863
    %2865 = vmatprep.subr.mxu0 0.0
    %2866 = vmatpush2.msra.mxu0 0.0
    %2867 = vmatprep.subr.mxu0 0.0
    %2868 = vmatpush2.msra.mxu0 0.0
    %2869 = vmatprep.subr.mxu0 0.0
    %2870 = vmatpush2.msra.mxu0 0.0
    %2871 = vmatprep.subr.mxu0 0.0
    %2872 = vmatpush2.msra.mxu0 0.0
    %2873 = vmatprep.subr.mxu0 0.0
    %2874 = vmatpush2.msra.mxu0 0.0
    %2875 = vmatprep.subr.mxu0 0.0
    %2876 = vmatpush2.msra.mxu0 0.0
    %2877 = vmatprep.subr.mxu0 0.0
    %2878 = vmatpush2.msra.mxu0 0.0
    %2879 = vmatprep.subr.mxu0 0.0
    %2880 = vmatpush2.msra.mxu0 0.0
    %2881 = vmatprep.subr.mxu0 0.0
    %2882 = vmatpush2.msra.mxu0 0.0
    %2883 = vmatprep.subr.mxu0 0.0
    %2884 = vmatpush2.msra.mxu0 0.0
    %2885 = vmatprep.subr.mxu0 0.0
    %2886 = vmatpush2.msra.mxu0 0.0
    %2887 = vmatprep.subr.mxu0 0.0
    %2888 = vmatpush2.msra.mxu0 0.0
    %2889 = vmatprep.subr.mxu0 0.0
    %2890 = vmatpush2.msra.mxu0 0.0
    %2891 = vmatprep.subr.mxu0 0.0
    %2892 = vmatpush2.msra.mxu0 0.0
    %2893 = vmatprep.subr.mxu0 0.0
    %2894 = vmatpush2.msra.mxu0 0.0
    %2895 = vmatprep.subr.mxu0 0.0
    %2896 = vmatpush2.msra.mxu0 0.0
    %2897 = vmatprep.mubr.f32.mxu0 0.0
    %v2898 = vand.u32 %v2482, 4294901760
    %2899 = vmatmul.mubr.f32.gmra.mxu0 %v2898
    %v2900 = vpop.f32.mrf.mxu0
    %v2901 = vadd.f32 %v2816, %v2900
    %v2902 = vpop.f32.mrf.mxu0
    %2903 = vmatprep.mubr.f32.mxu0 0.0
    %v2904 = vand.u32 %v2485, 4294901760
    %2905 = vmatmul.mubr.f32.gmra.mxu0 %v2904
    %v2906 = vpop.f32.mrf.mxu0
    %v2907 = vadd.f32 %v2824, %v2906
    %v2908 = vpop.f32.mrf.mxu0
    %2909 = vdwg.mxu0
    %2910 = vmatprep.subr.mxu0 0.0
    %2911 = vmatpush1.msra.mxu0 0.0
    %2912 = vmatprep.subr.mxu0 0.0
    %2913 = vmatpush1.msra.mxu0 0.0
    %2914 = vmatprep.subr.mxu0 0.0
    %2915 = vmatpush1.msra.mxu0 0.0
    %2916 = vmatprep.subr.mxu0 0.0
    %2917 = vmatpush1.msra.mxu0 0.0
    %2918 = vmatprep.subr.mxu0 0.0
    %2919 = vmatpush1.msra.mxu0 0.0
    %2920 = vmatprep.subr.mxu0 0.0
    %2921 = vmatpush1.msra.mxu0 0.0
    %2922 = vmatprep.subr.mxu0 0.0
    %2923 = vmatpush1.msra.mxu0 0.0
    %2924 = vmatprep.subr.mxu0 0.0
    %2925 = vmatpush1.msra.mxu0 0.0
    %2926 = vmatprep.subr.mxu0 0.0
    %2927 = vmatpush1.msra.mxu0 0.0
    %2928 = vmatprep.subr.mxu0 0.0
    %2929 = vmatpush1.msra.mxu0 0.0
    %2930 = vmatprep.subr.mxu0 0.0
    %2931 = vmatpush1.msra.mxu0 0.0
    %2932 = vmatprep.subr.mxu0 0.0
    %2933 = vmatpush1.msra.mxu0 0.0
    %2934 = vmatprep.subr.mxu0 0.0
    %2935 = vmatpush1.msra.mxu0 0.0
    %2936 = vmatprep.subr.mxu0 0.0
    %2937 = vmatpush1.msra.mxu0 0.0
    %2938 = vmatprep.subr.mxu0 0.0
    %v2939 = vand.u32 %v2479, 4294901760
    %2940 = vmatpush1.msra.mxu0 %v2939
    %2941 = vmatprep.subr.mxu0 0.0
    %v2942 = vand.u32 %v2478, 4294901760
    %2943 = vmatpush1.msra.mxu0 %v2942
    %2944 = vmatprep.subr.mxu0 0.0
    %2945 = vmatpush2.msra.mxu0 0.0
    %2946 = vmatprep.subr.mxu0 0.0
    %2947 = vmatpush2.msra.mxu0 0.0
    %2948 = vmatprep.subr.mxu0 0.0
    %2949 = vmatpush2.msra.mxu0 0.0
    %2950 = vmatprep.subr.mxu0 0.0
    %2951 = vmatpush2.msra.mxu0 0.0
    %2952 = vmatprep.subr.mxu0 0.0
    %2953 = vmatpush2.msra.mxu0 0.0
    %2954 = vmatprep.subr.mxu0 0.0
    %2955 = vmatpush2.msra.mxu0 0.0
    %2956 = vmatprep.subr.mxu0 0.0
    %2957 = vmatpush2.msra.mxu0 0.0
    %2958 = vmatprep.subr.mxu0 0.0
    %2959 = vmatpush2.msra.mxu0 0.0
    %2960 = vmatprep.subr.mxu0 0.0
    %2961 = vmatpush2.msra.mxu0 0.0
    %2962 = vmatprep.subr.mxu0 0.0
    %2963 = vmatpush2.msra.mxu0 0.0
    %2964 = vmatprep.subr.mxu0 0.0
    %2965 = vmatpush2.msra.mxu0 0.0
    %2966 = vmatprep.subr.mxu0 0.0
    %2967 = vmatpush2.msra.mxu0 0.0
    %2968 = vmatprep.subr.mxu0 0.0
    %2969 = vmatpush2.msra.mxu0 0.0
    %2970 = vmatprep.subr.mxu0 0.0
    %2971 = vmatpush2.msra.mxu0 0.0
    %2972 = vmatprep.subr.mxu0 0.0
    %2973 = vmatpush2.msra.mxu0 0.0
    %2974 = vmatprep.subr.mxu0 0.0
    %2975 = vmatpush2.msra.mxu0 0.0
    %2976 = vmatprep.mubr.f32.mxu0 0.0
    %v2977 = vand.u32 %v2482, 4294901760
    %2978 = vmatmul.mubr.f32.gmra.mxu0 %v2977
    %v2979 = vpop.f32.mrf.mxu0
    %v2980 = vadd.f32 %v2901, %v2979
    %v2981 = vpop.f32.mrf.mxu0
    %2982 = vmatprep.mubr.f32.mxu0 0.0
    %v2983 = vand.u32 %v2485, 4294901760
    %2984 = vmatmul.mubr.f32.gmra.mxu0 %v2983
    %v2985 = vpop.f32.mrf.mxu0
    %v2986 = vadd.f32 %v2907, %v2985
    %v2987 = vpop.f32.mrf.mxu0
    %2988 = vdwg.mxu0
    %v2989 = vld [vmem:[#allocation14] sm:$0xff]
    %v2990 = vld [vmem:[#allocation14 + $0x8] sm:$0xff]
    %2991 = vrot.lane.b32.xlu0 %v2469, 112
    %v2992 = vpop.permute.xlu0 %2991
    %2993 = vrot.lane.b32.xlu0 %v2475, 112
    %v2994 = vpop.permute.xlu0 %2993
    %v2998 = vsel %vm2480, %v2989, 0
    %v3001 = vsel %vm2480, %v2990, 0
    %3003 = vmatprep.subr.mxu0 0.0
    %3004 = vmatpush1.msra.mxu0 0.0
    %3005 = vmatprep.subr.mxu0 0.0
    %3006 = vmatpush1.msra.mxu0 0.0
    %3007 = vmatprep.subr.mxu0 0.0
    %3008 = vmatpush1.msra.mxu0 0.0
    %3009 = vmatprep.subr.mxu0 0.0
    %3010 = vmatpush1.msra.mxu0 0.0
    %3011 = vmatprep.subr.mxu0 0.0
    %3012 = vmatpush1.msra.mxu0 0.0
    %3013 = vmatprep.subr.mxu0 0.0
    %3014 = vmatpush1.msra.mxu0 0.0
    %3015 = vmatprep.subr.mxu0 0.0
    %3016 = vmatpush1.msra.mxu0 0.0
    %3017 = vmatprep.subr.mxu0 0.0
    %3018 = vmatpush1.msra.mxu0 0.0
    %3019 = vmatprep.subr.mxu0 0.0
    %3020 = vmatpush1.msra.mxu0 0.0
    %3021 = vmatprep.subr.mxu0 0.0
    %3022 = vmatpush1.msra.mxu0 0.0
    %3023 = vmatprep.subr.mxu0 0.0
    %3024 = vmatpush1.msra.mxu0 0.0
    %3025 = vmatprep.subr.mxu0 0.0
    %3026 = vmatpush1.msra.mxu0 0.0
    %3027 = vmatprep.subr.mxu0 0.0
    %3028 = vmatpush1.msra.mxu0 0.0
    %3029 = vmatprep.subr.mxu0 0.0
    %3030 = vmatpush1.msra.mxu0 0.0
    %3031 = vmatprep.subr.mxu0 0.0
    %v3032 = vand.u32 %v2994, 4294901760
    %3033 = vmatpush1.msra.mxu0 %v3032
    %3034 = vmatprep.subr.mxu0 0.0
    %v3035 = vand.u32 %v2992, 4294901760
    %3036 = vmatpush1.msra.mxu0 %v3035
    %3037 = vmatprep.subr.mxu0 0.0
    %3038 = vmatpush2.msra.mxu0 0.0
    %3039 = vmatprep.subr.mxu0 0.0
    %3040 = vmatpush2.msra.mxu0 0.0
    %3041 = vmatprep.subr.mxu0 0.0
    %3042 = vmatpush2.msra.mxu0 0.0
    %3043 = vmatprep.subr.mxu0 0.0
    %3044 = vmatpush2.msra.mxu0 0.0
    %3045 = vmatprep.subr.mxu0 0.0
    %3046 = vmatpush2.msra.mxu0 0.0
    %3047 = vmatprep.subr.mxu0 0.0
    %3048 = vmatpush2.msra.mxu0 0.0
    %3049 = vmatprep.subr.mxu0 0.0
    %3050 = vmatpush2.msra.mxu0 0.0
    %3051 = vmatprep.subr.mxu0 0.0
    %3052 = vmatpush2.msra.mxu0 0.0
    %3053 = vmatprep.subr.mxu0 0.0
    %3054 = vmatpush2.msra.mxu0 0.0
    %3055 = vmatprep.subr.mxu0 0.0
    %3056 = vmatpush2.msra.mxu0 0.0
    %3057 = vmatprep.subr.mxu0 0.0
    %3058 = vmatpush2.msra.mxu0 0.0
    %3059 = vmatprep.subr.mxu0 0.0
    %3060 = vmatpush2.msra.mxu0 0.0
    %3061 = vmatprep.subr.mxu0 0.0
    %3062 = vmatpush2.msra.mxu0 0.0
    %3063 = vmatprep.subr.mxu0 0.0
    %3064 = vmatpush2.msra.mxu0 0.0
    %3065 = vmatprep.subr.mxu0 0.0
    %3066 = vmatpush2.msra.mxu0 0.0
    %3067 = vmatprep.subr.mxu0 0.0
    %3068 = vmatpush2.msra.mxu0 0.0
    %3069 = vmatprep.mubr.f32.mxu0 0.0
    %v3070 = vand.u32 %v2998, 4294901760
    %v3071 = vsub.f32 %v2998, %v3070
    %v3072 = vand.u32 %v3071, 4294901760
    %v3073 = vsub.f32 %v3071, %v3072
    %v3074 = vand.u32 %v3073, 4294901760
    %3075 = vmatmul.mubr.f32.gmra.mxu0 %v3074
    %v3076 = vpop.f32.mrf.mxu0
    %v3077 = vadd.f32 0.0, %v3076
    %v3078 = vpop.f32.mrf.mxu0
    %3079 = vmatprep.mubr.f32.mxu0 0.0
    %v3080 = vand.u32 %v3001, 4294901760
    %v3081 = vsub.f32 %v3001, %v3080
    %v3082 = vand.u32 %v3081, 4294901760
    %v3083 = vsub.f32 %v3081, %v3082
    %v3084 = vand.u32 %v3083, 4294901760
    %3085 = vmatmul.mubr.f32.gmra.mxu0 %v3084
    %v3086 = vpop.f32.mrf.mxu0
    %v3087 = vadd.f32 0.0, %v3086
    %v3088 = vpop.f32.mrf.mxu0
    %3089 = vdwg.mxu0
    %3090 = vmatprep.subr.mxu0 0.0
    %3091 = vmatpush1.msra.mxu0 0.0
    %3092 = vmatprep.subr.mxu0 0.0
    %3093 = vmatpush1.msra.mxu0 0.0
    %3094 = vmatprep.subr.mxu0 0.0
    %3095 = vmatpush1.msra.mxu0 0.0
    %3096 = vmatprep.subr.mxu0 0.0
    %3097 = vmatpush1.msra.mxu0 0.0
    %3098 = vmatprep.subr.mxu0 0.0
    %3099 = vmatpush1.msra.mxu0 0.0
    %3100 = vmatprep.subr.mxu0 0.0
    %3101 = vmatpush1.msra.mxu0 0.0
    %3102 = vmatprep.subr.mxu0 0.0
    %3103 = vmatpush1.msra.mxu0 0.0
    %3104 = vmatprep.subr.mxu0 0.0
    %3105 = vmatpush1.msra.mxu0 0.0
    %3106 = vmatprep.subr.mxu0 0.0
    %3107 = vmatpush1.msra.mxu0 0.0
    %3108 = vmatprep.subr.mxu0 0.0
    %3109 = vmatpush1.msra.mxu0 0.0
    %3110 = vmatprep.subr.mxu0 0.0
    %3111 = vmatpush1.msra.mxu0 0.0
    %3112 = vmatprep.subr.mxu0 0.0
    %3113 = vmatpush1.msra.mxu0 0.0
    %3114 = vmatprep.subr.mxu0 0.0
    %3115 = vmatpush1.msra.mxu0 0.0
    %3116 = vmatprep.subr.mxu0 0.0
    %3117 = vmatpush1.msra.mxu0 0.0
    %3118 = vmatprep.subr.mxu0 0.0
    %v3119 = vand.u32 %v2994, 4294901760
    %v3120 = vsub.f32 %v2994, %v3119
    %v3121 = vand.u32 %v3120, 4294901760
    %v3122 = vsub.f32 %v3120, %v3121
    %v3123 = vand.u32 %v3122, 4294901760
    %3124 = vmatpush1.msra.mxu0 %v3123
    %3125 = vmatprep.subr.mxu0 0.0
    %v3126 = vand.u32 %v2992, 4294901760
    %v3127 = vsub.f32 %v2992, %v3126
    %v3128 = vand.u32 %v3127, 4294901760
    %v3129 = vsub.f32 %v3127, %v3128
    %v3130 = vand.u32 %v3129, 4294901760
    %3131 = vmatpush1.msra.mxu0 %v3130
    %3132 = vmatprep.subr.mxu0 0.0
    %3133 = vmatpush2.msra.mxu0 0.0
    %3134 = vmatprep.subr.mxu0 0.0
    %3135 = vmatpush2.msra.mxu0 0.0
    %3136 = vmatprep.subr.mxu0 0.0
    %3137 = vmatpush2.msra.mxu0 0.0
    %3138 = vmatprep.subr.mxu0 0.0
    %3139 = vmatpush2.msra.mxu0 0.0
    %3140 = vmatprep.subr.mxu0 0.0
    %3141 = vmatpush2.msra.mxu0 0.0
    %3142 = vmatprep.subr.mxu0 0.0
    %3143 = vmatpush2.msra.mxu0 0.0
    %3144 = vmatprep.subr.mxu0 0.0
    %3145 = vmatpush2.msra.mxu0 0.0
    %3146 = vmatprep.subr.mxu0 0.0
    %3147 = vmatpush2.msra.mxu0 0.0
    %3148 = vmatprep.subr.mxu0 0.0
    %3149 = vmatpush2.msra.mxu0 0.0
    %3150 = vmatprep.subr.mxu0 0.0
    %3151 = vmatpush2.msra.mxu0 0.0
    %3152 = vmatprep.subr.mxu0 0.0
    %3153 = vmatpush2.msra.mxu0 0.0
    %3154 = vmatprep.subr.mxu0 0.0
    %3155 = vmatpush2.msra.mxu0 0.0
    %3156 = vmatprep.subr.mxu0 0.0
    %3157 = vmatpush2.msra.mxu0 0.0
    %3158 = vmatprep.subr.mxu0 0.0
    %3159 = vmatpush2.msra.mxu0 0.0
    %3160 = vmatprep.subr.mxu0 0.0
    %3161 = vmatpush2.msra.mxu0 0.0
    %3162 = vmatprep.subr.mxu0 0.0
    %3163 = vmatpush2.msra.mxu0 0.0
    %3164 = vmatprep.mubr.f32.mxu0 0.0
    %v3165 = vand.u32 %v2998, 4294901760
    %3166 = vmatmul.mubr.f32.gmra.mxu0 %v3165
    %v3167 = vpop.f32.mrf.mxu0
    %v3168 = vadd.f32 %v3077, %v3167
    %v3169 = vpop.f32.mrf.mxu0
    %3170 = vmatprep.mubr.f32.mxu0 0.0
    %v3171 = vand.u32 %v3001, 4294901760
    %3172 = vmatmul.mubr.f32.gmra.mxu0 %v3171
    %v3173 = vpop.f32.mrf.mxu0
    %v3174 = vadd.f32 %v3087, %v3173
    %v3175 = vpop.f32.mrf.mxu0
    %3176 = vdwg.mxu0
    %3177 = vmatprep.subr.mxu0 0.0
    %3178 = vmatpush1.msra.mxu0 0.0
    %3179 = vmatprep.subr.mxu0 0.0
    %3180 = vmatpush1.msra.mxu0 0.0
    %3181 = vmatprep.subr.mxu0 0.0
    %3182 = vmatpush1.msra.mxu0 0.0
    %3183 = vmatprep.subr.mxu0 0.0
    %3184 = vmatpush1.msra.mxu0 0.0
    %3185 = vmatprep.subr.mxu0 0.0
    %3186 = vmatpush1.msra.mxu0 0.0
    %3187 = vmatprep.subr.mxu0 0.0
    %3188 = vmatpush1.msra.mxu0 0.0
    %3189 = vmatprep.subr.mxu0 0.0
    %3190 = vmatpush1.msra.mxu0 0.0
    %3191 = vmatprep.subr.mxu0 0.0
    %3192 = vmatpush1.msra.mxu0 0.0
    %3193 = vmatprep.subr.mxu0 0.0
    %3194 = vmatpush1.msra.mxu0 0.0
    %3195 = vmatprep.subr.mxu0 0.0
    %3196 = vmatpush1.msra.mxu0 0.0
    %3197 = vmatprep.subr.mxu0 0.0
    %3198 = vmatpush1.msra.mxu0 0.0
    %3199 = vmatprep.subr.mxu0 0.0
    %3200 = vmatpush1.msra.mxu0 0.0
    %3201 = vmatprep.subr.mxu0 0.0
    %3202 = vmatpush1.msra.mxu0 0.0
    %3203 = vmatprep.subr.mxu0 0.0
    %3204 = vmatpush1.msra.mxu0 0.0
    %3205 = vmatprep.subr.mxu0 0.0
    %v3206 = vand.u32 %v2994, 4294901760
    %v3207 = vsub.f32 %v2994, %v3206
    %3208 = vmatpush1.msra.mxu0 %v3207
    %3209 = vmatprep.subr.mxu0 0.0
    %v3210 = vand.u32 %v2992, 4294901760
    %v3211 = vsub.f32 %v2992, %v3210
    %3212 = vmatpush1.msra.mxu0 %v3211
    %3213 = vmatprep.subr.mxu0 0.0
    %3214 = vmatpush2.msra.mxu0 0.0
    %3215 = vmatprep.subr.mxu0 0.0
    %3216 = vmatpush2.msra.mxu0 0.0
    %3217 = vmatprep.subr.mxu0 0.0
    %3218 = vmatpush2.msra.mxu0 0.0
    %3219 = vmatprep.subr.mxu0 0.0
    %3220 = vmatpush2.msra.mxu0 0.0
    %3221 = vmatprep.subr.mxu0 0.0
    %3222 = vmatpush2.msra.mxu0 0.0
    %3223 = vmatprep.subr.mxu0 0.0
    %3224 = vmatpush2.msra.mxu0 0.0
    %3225 = vmatprep.subr.mxu0 0.0
    %3226 = vmatpush2.msra.mxu0 0.0
    %3227 = vmatprep.subr.mxu0 0.0
    %3228 = vmatpush2.msra.mxu0 0.0
    %3229 = vmatprep.subr.mxu0 0.0
    %3230 = vmatpush2.msra.mxu0 0.0
    %3231 = vmatprep.subr.mxu0 0.0
    %3232 = vmatpush2.msra.mxu0 0.0
    %3233 = vmatprep.subr.mxu0 0.0
    %3234 = vmatpush2.msra.mxu0 0.0
    %3235 = vmatprep.subr.mxu0 0.0
    %3236 = vmatpush2.msra.mxu0 0.0
    %3237 = vmatprep.subr.mxu0 0.0
    %3238 = vmatpush2.msra.mxu0 0.0
    %3239 = vmatprep.subr.mxu0 0.0
    %3240 = vmatpush2.msra.mxu0 0.0
    %3241 = vmatprep.subr.mxu0 0.0
    %3242 = vmatpush2.msra.mxu0 0.0
    %3243 = vmatprep.subr.mxu0 0.0
    %3244 = vmatpush2.msra.mxu0 0.0
    %3245 = vmatprep.mubr.f32.mxu0 0.0
    %v3246 = vand.u32 %v2998, 4294901760
    %v3247 = vsub.f32 %v2998, %v3246
    %3248 = vmatmul.mubr.f32.gmra.mxu0 %v3247
    %v3249 = vpop.f32.mrf.mxu0
    %v3250 = vadd.f32 %v3168, %v3249
    %v3251 = vpop.f32.mrf.mxu0
    %3252 = vmatprep.mubr.f32.mxu0 0.0
    %v3253 = vand.u32 %v3001, 4294901760
    %v3254 = vsub.f32 %v3001, %v3253
    %3255 = vmatmul.mubr.f32.gmra.mxu0 %v3254
    %v3256 = vpop.f32.mrf.mxu0
    %v3257 = vadd.f32 %v3174, %v3256
    %v3258 = vpop.f32.mrf.mxu0
    %3259 = vdwg.mxu0
    %3260 = vmatprep.subr.mxu0 0.0
    %3261 = vmatpush1.msra.mxu0 0.0
    %3262 = vmatprep.subr.mxu0 0.0
    %3263 = vmatpush1.msra.mxu0 0.0
    %3264 = vmatprep.subr.mxu0 0.0
    %3265 = vmatpush1.msra.mxu0 0.0
    %3266 = vmatprep.subr.mxu0 0.0
    %3267 = vmatpush1.msra.mxu0 0.0
    %3268 = vmatprep.subr.mxu0 0.0
    %3269 = vmatpush1.msra.mxu0 0.0
    %3270 = vmatprep.subr.mxu0 0.0
    %3271 = vmatpush1.msra.mxu0 0.0
    %3272 = vmatprep.subr.mxu0 0.0
    %3273 = vmatpush1.msra.mxu0 0.0
    %3274 = vmatprep.subr.mxu0 0.0
    %3275 = vmatpush1.msra.mxu0 0.0
    %3276 = vmatprep.subr.mxu0 0.0
    %3277 = vmatpush1.msra.mxu0 0.0
    %3278 = vmatprep.subr.mxu0 0.0
    %3279 = vmatpush1.msra.mxu0 0.0
    %3280 = vmatprep.subr.mxu0 0.0
    %3281 = vmatpush1.msra.mxu0 0.0
    %3282 = vmatprep.subr.mxu0 0.0
    %3283 = vmatpush1.msra.mxu0 0.0
    %3284 = vmatprep.subr.mxu0 0.0
    %3285 = vmatpush1.msra.mxu0 0.0
    %3286 = vmatprep.subr.mxu0 0.0
    %3287 = vmatpush1.msra.mxu0 0.0
    %3288 = vmatprep.subr.mxu0 0.0
    %v3289 = vand.u32 %v2994, 4294901760
    %3290 = vmatpush1.msra.mxu0 %v3289
    %3291 = vmatprep.subr.mxu0 0.0
    %v3292 = vand.u32 %v2992, 4294901760
    %3293 = vmatpush1.msra.mxu0 %v3292
    %3294 = vmatprep.subr.mxu0 0.0
    %3295 = vmatpush2.msra.mxu0 0.0
    %3296 = vmatprep.subr.mxu0 0.0
    %3297 = vmatpush2.msra.mxu0 0.0
    %3298 = vmatprep.subr.mxu0 0.0
    %3299 = vmatpush2.msra.mxu0 0.0
    %3300 = vmatprep.subr.mxu0 0.0
    %3301 = vmatpush2.msra.mxu0 0.0
    %3302 = vmatprep.subr.mxu0 0.0
    %3303 = vmatpush2.msra.mxu0 0.0
    %3304 = vmatprep.subr.mxu0 0.0
    %3305 = vmatpush2.msra.mxu0 0.0
    %3306 = vmatprep.subr.mxu0 0.0
    %3307 = vmatpush2.msra.mxu0 0.0
    %3308 = vmatprep.subr.mxu0 0.0
    %3309 = vmatpush2.msra.mxu0 0.0
    %3310 = vmatprep.subr.mxu0 0.0
    %3311 = vmatpush2.msra.mxu0 0.0
    %3312 = vmatprep.subr.mxu0 0.0
    %3313 = vmatpush2.msra.mxu0 0.0
    %3314 = vmatprep.subr.mxu0 0.0
    %3315 = vmatpush2.msra.mxu0 0.0
    %3316 = vmatprep.subr.mxu0 0.0
    %3317 = vmatpush2.msra.mxu0 0.0
    %3318 = vmatprep.subr.mxu0 0.0
    %3319 = vmatpush2.msra.mxu0 0.0
    %3320 = vmatprep.subr.mxu0 0.0
    %3321 = vmatpush2.msra.mxu0 0.0
    %3322 = vmatprep.subr.mxu0 0.0
    %3323 = vmatpush2.msra.mxu0 0.0
    %3324 = vmatprep.subr.mxu0 0.0
    %3325 = vmatpush2.msra.mxu0 0.0
    %3326 = vmatprep.mubr.f32.mxu0 0.0
    %v3327 = vand.u32 %v2998, 4294901760
    %v3328 = vsub.f32 %v2998, %v3327
    %v3329 = vand.u32 %v3328, 4294901760
    %3330 = vmatmul.mubr.f32.gmra.mxu0 %v3329
    %v3331 = vpop.f32.mrf.mxu0
    %v3332 = vadd.f32 %v3250, %v3331
    %v3333 = vpop.f32.mrf.mxu0
    %3334 = vmatprep.mubr.f32.mxu0 0.0
    %v3335 = vand.u32 %v3001, 4294901760
    %v3336 = vsub.f32 %v3001, %v3335
    %v3337 = vand.u32 %v3336, 4294901760
    %3338 = vmatmul.mubr.f32.gmra.mxu0 %v3337
    %v3339 = vpop.f32.mrf.mxu0
    %v3340 = vadd.f32 %v3257, %v3339
    %v3341 = vpop.f32.mrf.mxu0
    %3342 = vdwg.mxu0
    %3343 = vmatprep.subr.mxu0 0.0
    %3344 = vmatpush1.msra.mxu0 0.0
    %3345 = vmatprep.subr.mxu0 0.0
    %3346 = vmatpush1.msra.mxu0 0.0
    %3347 = vmatprep.subr.mxu0 0.0
    %3348 = vmatpush1.msra.mxu0 0.0
    %3349 = vmatprep.subr.mxu0 0.0
    %3350 = vmatpush1.msra.mxu0 0.0
    %3351 = vmatprep.subr.mxu0 0.0
    %3352 = vmatpush1.msra.mxu0 0.0
    %3353 = vmatprep.subr.mxu0 0.0
    %3354 = vmatpush1.msra.mxu0 0.0
    %3355 = vmatprep.subr.mxu0 0.0
    %3356 = vmatpush1.msra.mxu0 0.0
    %3357 = vmatprep.subr.mxu0 0.0
    %3358 = vmatpush1.msra.mxu0 0.0
    %3359 = vmatprep.subr.mxu0 0.0
    %3360 = vmatpush1.msra.mxu0 0.0
    %3361 = vmatprep.subr.mxu0 0.0
    %3362 = vmatpush1.msra.mxu0 0.0
    %3363 = vmatprep.subr.mxu0 0.0
    %3364 = vmatpush1.msra.mxu0 0.0
    %3365 = vmatprep.subr.mxu0 0.0
    %3366 = vmatpush1.msra.mxu0 0.0
    %3367 = vmatprep.subr.mxu0 0.0
    %3368 = vmatpush1.msra.mxu0 0.0
    %3369 = vmatprep.subr.mxu0 0.0
    %3370 = vmatpush1.msra.mxu0 0.0
    %3371 = vmatprep.subr.mxu0 0.0
    %v3372 = vand.u32 %v2994, 4294901760
    %v3373 = vsub.f32 %v2994, %v3372
    %v3374 = vand.u32 %v3373, 4294901760
    %3375 = vmatpush1.msra.mxu0 %v3374
    %3376 = vmatprep.subr.mxu0 0.0
    %v3377 = vand.u32 %v2992, 4294901760
    %v3378 = vsub.f32 %v2992, %v3377
    %v3379 = vand.u32 %v3378, 4294901760
    %3380 = vmatpush1.msra.mxu0 %v3379
    %3381 = vmatprep.subr.mxu0 0.0
    %3382 = vmatpush2.msra.mxu0 0.0
    %3383 = vmatprep.subr.mxu0 0.0
    %3384 = vmatpush2.msra.mxu0 0.0
    %3385 = vmatprep.subr.mxu0 0.0
    %3386 = vmatpush2.msra.mxu0 0.0
    %3387 = vmatprep.subr.mxu0 0.0
    %3388 = vmatpush2.msra.mxu0 0.0
    %3389 = vmatprep.subr.mxu0 0.0
    %3390 = vmatpush2.msra.mxu0 0.0
    %3391 = vmatprep.subr.mxu0 0.0
    %3392 = vmatpush2.msra.mxu0 0.0
    %3393 = vmatprep.subr.mxu0 0.0
    %3394 = vmatpush2.msra.mxu0 0.0
    %3395 = vmatprep.subr.mxu0 0.0
    %3396 = vmatpush2.msra.mxu0 0.0
    %3397 = vmatprep.subr.mxu0 0.0
    %3398 = vmatpush2.msra.mxu0 0.0
    %3399 = vmatprep.subr.mxu0 0.0
    %3400 = vmatpush2.msra.mxu0 0.0
    %3401 = vmatprep.subr.mxu0 0.0
    %3402 = vmatpush2.msra.mxu0 0.0
    %3403 = vmatprep.subr.mxu0 0.0
    %3404 = vmatpush2.msra.mxu0 0.0
    %3405 = vmatprep.subr.mxu0 0.0
    %3406 = vmatpush2.msra.mxu0 0.0
    %3407 = vmatprep.subr.mxu0 0.0
    %3408 = vmatpush2.msra.mxu0 0.0
    %3409 = vmatprep.subr.mxu0 0.0
    %3410 = vmatpush2.msra.mxu0 0.0
    %3411 = vmatprep.subr.mxu0 0.0
    %3412 = vmatpush2.msra.mxu0 0.0
    %3413 = vmatprep.mubr.f32.mxu0 0.0
    %v3414 = vand.u32 %v2998, 4294901760
    %3415 = vmatmul.mubr.f32.gmra.mxu0 %v3414
    %v3416 = vpop.f32.mrf.mxu0
    %v3417 = vadd.f32 %v3332, %v3416
    %v3418 = vpop.f32.mrf.mxu0
    %3419 = vmatprep.mubr.f32.mxu0 0.0
    %v3420 = vand.u32 %v3001, 4294901760
    %3421 = vmatmul.mubr.f32.gmra.mxu0 %v3420
    %v3422 = vpop.f32.mrf.mxu0
    %v3423 = vadd.f32 %v3340, %v3422
    %v3424 = vpop.f32.mrf.mxu0
    %3425 = vdwg.mxu0
    %3426 = vmatprep.subr.mxu0 0.0
    %3427 = vmatpush1.msra.mxu0 0.0
    %3428 = vmatprep.subr.mxu0 0.0
    %3429 = vmatpush1.msra.mxu0 0.0
    %3430 = vmatprep.subr.mxu0 0.0
    %3431 = vmatpush1.msra.mxu0 0.0
    %3432 = vmatprep.subr.mxu0 0.0
    %3433 = vmatpush1.msra.mxu0 0.0
    %3434 = vmatprep.subr.mxu0 0.0
    %3435 = vmatpush1.msra.mxu0 0.0
    %3436 = vmatprep.subr.mxu0 0.0
    %3437 = vmatpush1.msra.mxu0 0.0
    %3438 = vmatprep.subr.mxu0 0.0
    %3439 = vmatpush1.msra.mxu0 0.0
    %3440 = vmatprep.subr.mxu0 0.0
    %3441 = vmatpush1.msra.mxu0 0.0
    %3442 = vmatprep.subr.mxu0 0.0
    %3443 = vmatpush1.msra.mxu0 0.0
    %3444 = vmatprep.subr.mxu0 0.0
    %3445 = vmatpush1.msra.mxu0 0.0
    %3446 = vmatprep.subr.mxu0 0.0
    %3447 = vmatpush1.msra.mxu0 0.0
    %3448 = vmatprep.subr.mxu0 0.0
    %3449 = vmatpush1.msra.mxu0 0.0
    %3450 = vmatprep.subr.mxu0 0.0
    %3451 = vmatpush1.msra.mxu0 0.0
    %3452 = vmatprep.subr.mxu0 0.0
    %3453 = vmatpush1.msra.mxu0 0.0
    %3454 = vmatprep.subr.mxu0 0.0
    %v3455 = vand.u32 %v2994, 4294901760
    %3456 = vmatpush1.msra.mxu0 %v3455
    %3457 = vmatprep.subr.mxu0 0.0
    %v3458 = vand.u32 %v2992, 4294901760
    %3459 = vmatpush1.msra.mxu0 %v3458
    %3460 = vmatprep.subr.mxu0 0.0
    %3461 = vmatpush2.msra.mxu0 0.0
    %3462 = vmatprep.subr.mxu0 0.0
    %3463 = vmatpush2.msra.mxu0 0.0
    %3464 = vmatprep.subr.mxu0 0.0
    %3465 = vmatpush2.msra.mxu0 0.0
    %3466 = vmatprep.subr.mxu0 0.0
    %3467 = vmatpush2.msra.mxu0 0.0
    %3468 = vmatprep.subr.mxu0 0.0
    %3469 = vmatpush2.msra.mxu0 0.0
    %3470 = vmatprep.subr.mxu0 0.0
    %3471 = vmatpush2.msra.mxu0 0.0
    %3472 = vmatprep.subr.mxu0 0.0
    %3473 = vmatpush2.msra.mxu0 0.0
    %3474 = vmatprep.subr.mxu0 0.0
    %3475 = vmatpush2.msra.mxu0 0.0
    %3476 = vmatprep.subr.mxu0 0.0
    %3477 = vmatpush2.msra.mxu0 0.0
    %3478 = vmatprep.subr.mxu0 0.0
    %3479 = vmatpush2.msra.mxu0 0.0
    %3480 = vmatprep.subr.mxu0 0.0
    %3481 = vmatpush2.msra.mxu0 0.0
    %3482 = vmatprep.subr.mxu0 0.0
    %3483 = vmatpush2.msra.mxu0 0.0
    %3484 = vmatprep.subr.mxu0 0.0
    %3485 = vmatpush2.msra.mxu0 0.0
    %3486 = vmatprep.subr.mxu0 0.0
    %3487 = vmatpush2.msra.mxu0 0.0
    %3488 = vmatprep.subr.mxu0 0.0
    %3489 = vmatpush2.msra.mxu0 0.0
    %3490 = vmatprep.subr.mxu0 0.0
    %3491 = vmatpush2.msra.mxu0 0.0
    %3492 = vmatprep.mubr.f32.mxu0 0.0
    %v3493 = vand.u32 %v2998, 4294901760
    %3494 = vmatmul.mubr.f32.gmra.mxu0 %v3493
    %v3495 = vpop.f32.mrf.mxu0
    %v3496 = vadd.f32 %v3417, %v3495
    %v3497 = vpop.f32.mrf.mxu0
    %3498 = vmatprep.mubr.f32.mxu0 0.0
    %v3499 = vand.u32 %v3001, 4294901760
    %3500 = vmatmul.mubr.f32.gmra.mxu0 %v3499
    %v3501 = vpop.f32.mrf.mxu0
    %v3502 = vadd.f32 %v3423, %v3501
    %v3503 = vpop.f32.mrf.mxu0
    %3504 = vdwg.mxu0
    %v3505 = vmul.f32 %v2980, %v3496
    %v3506 = vmul.f32 %v2986, %v3502
    %v3507 = vadd.f32 %v3505, 0.0
    %v3508 = vadd.f32 %v3506, 0.0
    %s3509 = scalar_lea.vmem [#allocation13], 16
    %v3510 = vld [vmem:[%s3509] sm:$0xff]
    %v3511 = vld [vmem:[%s3509 + $0x8] sm:$0xff]
    %3512 = vmatprep.subr.mxu0 0.0
    %3513 = vmatpush1.msra.mxu0 0.0
    %3514 = vmatprep.subr.mxu0 0.0
    %3515 = vmatpush1.msra.mxu0 0.0
    %3516 = vmatprep.subr.mxu0 0.0
    %3517 = vmatpush1.msra.mxu0 0.0
    %3518 = vmatprep.subr.mxu0 0.0
    %3519 = vmatpush1.msra.mxu0 0.0
    %3520 = vmatprep.subr.mxu0 0.0
    %3521 = vmatpush1.msra.mxu0 0.0
    %3522 = vmatprep.subr.mxu0 0.0
    %3523 = vmatpush1.msra.mxu0 0.0
    %3524 = vmatprep.subr.mxu0 0.0
    %3525 = vmatpush1.msra.mxu0 0.0
    %3526 = vmatprep.subr.mxu0 0.0
    %3527 = vmatpush1.msra.mxu0 0.0
    %3528 = vmatprep.subr.mxu0 0.0
    %3529 = vmatpush1.msra.mxu0 0.0
    %3530 = vmatprep.subr.mxu0 0.0
    %3531 = vmatpush1.msra.mxu0 0.0
    %3532 = vmatprep.subr.mxu0 0.0
    %3533 = vmatpush1.msra.mxu0 0.0
    %3534 = vmatprep.subr.mxu0 0.0
    %3535 = vmatpush1.msra.mxu0 0.0
    %3536 = vmatprep.subr.mxu0 0.0
    %3537 = vmatpush1.msra.mxu0 0.0
    %3538 = vmatprep.subr.mxu0 0.0
    %3539 = vmatpush1.msra.mxu0 0.0
    %3540 = vmatprep.subr.mxu0 0.0
    %v3541 = vand.u32 %v3511, 4294901760
    %3542 = vmatpush1.msra.mxu0 %v3541
    %3543 = vmatprep.subr.mxu0 0.0
    %v3544 = vand.u32 %v3510, 4294901760
    %3545 = vmatpush1.msra.mxu0 %v3544
    %3546 = vmatprep.subr.mxu0 0.0
    %3547 = vmatpush2.msra.mxu0 0.0
    %3548 = vmatprep.subr.mxu0 0.0
    %3549 = vmatpush2.msra.mxu0 0.0
    %3550 = vmatprep.subr.mxu0 0.0
    %3551 = vmatpush2.msra.mxu0 0.0
    %3552 = vmatprep.subr.mxu0 0.0
    %3553 = vmatpush2.msra.mxu0 0.0
    %3554 = vmatprep.subr.mxu0 0.0
    %3555 = vmatpush2.msra.mxu0 0.0
    %3556 = vmatprep.subr.mxu0 0.0
    %3557 = vmatpush2.msra.mxu0 0.0
    %3558 = vmatprep.subr.mxu0 0.0
    %3559 = vmatpush2.msra.mxu0 0.0
    %3560 = vmatprep.subr.mxu0 0.0
    %3561 = vmatpush2.msra.mxu0 0.0
    %3562 = vmatprep.subr.mxu0 0.0
    %3563 = vmatpush2.msra.mxu0 0.0
    %3564 = vmatprep.subr.mxu0 0.0
    %3565 = vmatpush2.msra.mxu0 0.0
    %3566 = vmatprep.subr.mxu0 0.0
    %3567 = vmatpush2.msra.mxu0 0.0
    %3568 = vmatprep.subr.mxu0 0.0
    %3569 = vmatpush2.msra.mxu0 0.0
    %3570 = vmatprep.subr.mxu0 0.0
    %3571 = vmatpush2.msra.mxu0 0.0
    %3572 = vmatprep.subr.mxu0 0.0
    %3573 = vmatpush2.msra.mxu0 0.0
    %3574 = vmatprep.subr.mxu0 0.0
    %3575 = vmatpush2.msra.mxu0 0.0
    %3576 = vmatprep.subr.mxu0 0.0
    %3577 = vmatpush2.msra.mxu0 0.0
    %3578 = vmatprep.mubr.f32.mxu0 0.0
    %v3579 = vand.u32 %v2482, 4294901760
    %v3580 = vsub.f32 %v2482, %v3579
    %v3581 = vand.u32 %v3580, 4294901760
    %v3582 = vsub.f32 %v3580, %v3581
    %v3583 = vand.u32 %v3582, 4294901760
    %3584 = vmatmul.mubr.f32.gmra.mxu0 %v3583
    %v3585 = vpop.f32.mrf.mxu0
    %v3586 = vadd.f32 0.0, %v3585
    %v3587 = vpop.f32.mrf.mxu0
    %3588 = vmatprep.mubr.f32.mxu0 0.0
    %v3589 = vand.u32 %v2485, 4294901760
    %v3590 = vsub.f32 %v2485, %v3589
    %v3591 = vand.u32 %v3590, 4294901760
    %v3592 = vsub.f32 %v3590, %v3591
    %v3593 = vand.u32 %v3592, 4294901760
    %3594 = vmatmul.mubr.f32.gmra.mxu0 %v3593
    %v3595 = vpop.f32.mrf.mxu0
    %v3596 = vadd.f32 0.0, %v3595
    %v3597 = vpop.f32.mrf.mxu0
    %3598 = vdwg.mxu0
    %3599 = vmatprep.subr.mxu0 0.0
    %3600 = vmatpush1.msra.mxu0 0.0
    %3601 = vmatprep.subr.mxu0 0.0
    %3602 = vmatpush1.msra.mxu0 0.0
    %3603 = vmatprep.subr.mxu0 0.0
    %3604 = vmatpush1.msra.mxu0 0.0
    %3605 = vmatprep.subr.mxu0 0.0
    %3606 = vmatpush1.msra.mxu0 0.0
    %3607 = vmatprep.subr.mxu0 0.0
    %3608 = vmatpush1.msra.mxu0 0.0
    %3609 = vmatprep.subr.mxu0 0.0
    %3610 = vmatpush1.msra.mxu0 0.0
    %3611 = vmatprep.subr.mxu0 0.0
    %3612 = vmatpush1.msra.mxu0 0.0
    %3613 = vmatprep.subr.mxu0 0.0
    %3614 = vmatpush1.msra.mxu0 0.0
    %3615 = vmatprep.subr.mxu0 0.0
    %3616 = vmatpush1.msra.mxu0 0.0
    %3617 = vmatprep.subr.mxu0 0.0
    %3618 = vmatpush1.msra.mxu0 0.0
    %3619 = vmatprep.subr.mxu0 0.0
    %3620 = vmatpush1.msra.mxu0 0.0
    %3621 = vmatprep.subr.mxu0 0.0
    %3622 = vmatpush1.msra.mxu0 0.0
    %3623 = vmatprep.subr.mxu0 0.0
    %3624 = vmatpush1.msra.mxu0 0.0
    %3625 = vmatprep.subr.mxu0 0.0
    %3626 = vmatpush1.msra.mxu0 0.0
    %3627 = vmatprep.subr.mxu0 0.0
    %v3628 = vand.u32 %v3511, 4294901760
    %v3629 = vsub.f32 %v3511, %v3628
    %v3630 = vand.u32 %v3629, 4294901760
    %v3631 = vsub.f32 %v3629, %v3630
    %v3632 = vand.u32 %v3631, 4294901760
    %3633 = vmatpush1.msra.mxu0 %v3632
    %3634 = vmatprep.subr.mxu0 0.0
    %v3635 = vand.u32 %v3510, 4294901760
    %v3636 = vsub.f32 %v3510, %v3635
    %v3637 = vand.u32 %v3636, 4294901760
    %v3638 = vsub.f32 %v3636, %v3637
    %v3639 = vand.u32 %v3638, 4294901760
    %3640 = vmatpush1.msra.mxu0 %v3639
    %3641 = vmatprep.subr.mxu0 0.0
    %3642 = vmatpush2.msra.mxu0 0.0
    %3643 = vmatprep.subr.mxu0 0.0
    %3644 = vmatpush2.msra.mxu0 0.0
    %3645 = vmatprep.subr.mxu0 0.0
    %3646 = vmatpush2.msra.mxu0 0.0
    %3647 = vmatprep.subr.mxu0 0.0
    %3648 = vmatpush2.msra.mxu0 0.0
    %3649 = vmatprep.subr.mxu0 0.0
    %3650 = vmatpush2.msra.mxu0 0.0
    %3651 = vmatprep.subr.mxu0 0.0
    %3652 = vmatpush2.msra.mxu0 0.0
    %3653 = vmatprep.subr.mxu0 0.0
    %3654 = vmatpush2.msra.mxu0 0.0
    %3655 = vmatprep.subr.mxu0 0.0
    %3656 = vmatpush2.msra.mxu0 0.0
    %3657 = vmatprep.subr.mxu0 0.0
    %3658 = vmatpush2.msra.mxu0 0.0
    %3659 = vmatprep.subr.mxu0 0.0
    %3660 = vmatpush2.msra.mxu0 0.0
    %3661 = vmatprep.subr.mxu0 0.0
    %3662 = vmatpush2.msra.mxu0 0.0
    %3663 = vmatprep.subr.mxu0 0.0
    %3664 = vmatpush2.msra.mxu0 0.0
    %3665 = vmatprep.subr.mxu0 0.0
    %3666 = vmatpush2.msra.mxu0 0.0
    %3667 = vmatprep.subr.mxu0 0.0
    %3668 = vmatpush2.msra.mxu0 0.0
    %3669 = vmatprep.subr.mxu0 0.0
    %3670 = vmatpush2.msra.mxu0 0.0
    %3671 = vmatprep.subr.mxu0 0.0
    %3672 = vmatpush2.msra.mxu0 0.0
    %3673 = vmatprep.mubr.f32.mxu0 0.0
    %v3674 = vand.u32 %v2482, 4294901760
    %3675 = vmatmul.mubr.f32.gmra.mxu0 %v3674
    %v3676 = vpop.f32.mrf.mxu0
    %v3677 = vadd.f32 %v3586, %v3676
    %v3678 = vpop.f32.mrf.mxu0
    %3679 = vmatprep.mubr.f32.mxu0 0.0
    %v3680 = vand.u32 %v2485, 4294901760
    %3681 = vmatmul.mubr.f32.gmra.mxu0 %v3680
    %v3682 = vpop.f32.mrf.mxu0
    %v3683 = vadd.f32 %v3596, %v3682
    %v3684 = vpop.f32.mrf.mxu0
    %3685 = vdwg.mxu0
    %3686 = vmatprep.subr.mxu0 0.0
    %3687 = vmatpush1.msra.mxu0 0.0
    %3688 = vmatprep.subr.mxu0 0.0
    %3689 = vmatpush1.msra.mxu0 0.0
    %3690 = vmatprep.subr.mxu0 0.0
    %3691 = vmatpush1.msra.mxu0 0.0
    %3692 = vmatprep.subr.mxu0 0.0
    %3693 = vmatpush1.msra.mxu0 0.0
    %3694 = vmatprep.subr.mxu0 0.0
    %3695 = vmatpush1.msra.mxu0 0.0
    %3696 = vmatprep.subr.mxu0 0.0
    %3697 = vmatpush1.msra.mxu0 0.0
    %3698 = vmatprep.subr.mxu0 0.0
    %3699 = vmatpush1.msra.mxu0 0.0
    %3700 = vmatprep.subr.mxu0 0.0
    %3701 = vmatpush1.msra.mxu0 0.0
    %3702 = vmatprep.subr.mxu0 0.0
    %3703 = vmatpush1.msra.mxu0 0.0
    %3704 = vmatprep.subr.mxu0 0.0
    %3705 = vmatpush1.msra.mxu0 0.0
    %3706 = vmatprep.subr.mxu0 0.0
    %3707 = vmatpush1.msra.mxu0 0.0
    %3708 = vmatprep.subr.mxu0 0.0
    %3709 = vmatpush1.msra.mxu0 0.0
    %3710 = vmatprep.subr.mxu0 0.0
    %3711 = vmatpush1.msra.mxu0 0.0
    %3712 = vmatprep.subr.mxu0 0.0
    %3713 = vmatpush1.msra.mxu0 0.0
    %3714 = vmatprep.subr.mxu0 0.0
    %v3715 = vand.u32 %v3511, 4294901760
    %v3716 = vsub.f32 %v3511, %v3715
    %3717 = vmatpush1.msra.mxu0 %v3716
    %3718 = vmatprep.subr.mxu0 0.0
    %v3719 = vand.u32 %v3510, 4294901760
    %v3720 = vsub.f32 %v3510, %v3719
    %3721 = vmatpush1.msra.mxu0 %v3720
    %3722 = vmatprep.subr.mxu0 0.0
    %3723 = vmatpush2.msra.mxu0 0.0
    %3724 = vmatprep.subr.mxu0 0.0
    %3725 = vmatpush2.msra.mxu0 0.0
    %3726 = vmatprep.subr.mxu0 0.0
    %3727 = vmatpush2.msra.mxu0 0.0
    %3728 = vmatprep.subr.mxu0 0.0
    %3729 = vmatpush2.msra.mxu0 0.0
    %3730 = vmatprep.subr.mxu0 0.0
    %3731 = vmatpush2.msra.mxu0 0.0
    %3732 = vmatprep.subr.mxu0 0.0
    %3733 = vmatpush2.msra.mxu0 0.0
    %3734 = vmatprep.subr.mxu0 0.0
    %3735 = vmatpush2.msra.mxu0 0.0
    %3736 = vmatprep.subr.mxu0 0.0
    %3737 = vmatpush2.msra.mxu0 0.0
    %3738 = vmatprep.subr.mxu0 0.0
    %3739 = vmatpush2.msra.mxu0 0.0
    %3740 = vmatprep.subr.mxu0 0.0
    %3741 = vmatpush2.msra.mxu0 0.0
    %3742 = vmatprep.subr.mxu0 0.0
    %3743 = vmatpush2.msra.mxu0 0.0
    %3744 = vmatprep.subr.mxu0 0.0
    %3745 = vmatpush2.msra.mxu0 0.0
    %3746 = vmatprep.subr.mxu0 0.0
    %3747 = vmatpush2.msra.mxu0 0.0
    %3748 = vmatprep.subr.mxu0 0.0
    %3749 = vmatpush2.msra.mxu0 0.0
    %3750 = vmatprep.subr.mxu0 0.0
    %3751 = vmatpush2.msra.mxu0 0.0
    %3752 = vmatprep.subr.mxu0 0.0
    %3753 = vmatpush2.msra.mxu0 0.0
    %3754 = vmatprep.mubr.f32.mxu0 0.0
    %v3755 = vand.u32 %v2482, 4294901760
    %v3756 = vsub.f32 %v2482, %v3755
    %3757 = vmatmul.mubr.f32.gmra.mxu0 %v3756
    %v3758 = vpop.f32.mrf.mxu0
    %v3759 = vadd.f32 %v3677, %v3758
    %v3760 = vpop.f32.mrf.mxu0
    %3761 = vmatprep.mubr.f32.mxu0 0.0
    %v3762 = vand.u32 %v2485, 4294901760
    %v3763 = vsub.f32 %v2485, %v3762
    %3764 = vmatmul.mubr.f32.gmra.mxu0 %v3763
    %v3765 = vpop.f32.mrf.mxu0
    %v3766 = vadd.f32 %v3683, %v3765
    %v3767 = vpop.f32.mrf.mxu0
    %3768 = vdwg.mxu0
    %3769 = vmatprep.subr.mxu0 0.0
    %3770 = vmatpush1.msra.mxu0 0.0
    %3771 = vmatprep.subr.mxu0 0.0
    %3772 = vmatpush1.msra.mxu0 0.0
    %3773 = vmatprep.subr.mxu0 0.0
    %3774 = vmatpush1.msra.mxu0 0.0
    %3775 = vmatprep.subr.mxu0 0.0
    %3776 = vmatpush1.msra.mxu0 0.0
    %3777 = vmatprep.subr.mxu0 0.0
    %3778 = vmatpush1.msra.mxu0 0.0
    %3779 = vmatprep.subr.mxu0 0.0
    %3780 = vmatpush1.msra.mxu0 0.0
    %3781 = vmatprep.subr.mxu0 0.0
    %3782 = vmatpush1.msra.mxu0 0.0
    %3783 = vmatprep.subr.mxu0 0.0
    %3784 = vmatpush1.msra.mxu0 0.0
    %3785 = vmatprep.subr.mxu0 0.0
    %3786 = vmatpush1.msra.mxu0 0.0
    %3787 = vmatprep.subr.mxu0 0.0
    %3788 = vmatpush1.msra.mxu0 0.0
    %3789 = vmatprep.subr.mxu0 0.0
    %3790 = vmatpush1.msra.mxu0 0.0
    %3791 = vmatprep.subr.mxu0 0.0
    %3792 = vmatpush1.msra.mxu0 0.0
    %3793 = vmatprep.subr.mxu0 0.0
    %3794 = vmatpush1.msra.mxu0 0.0
    %3795 = vmatprep.subr.mxu0 0.0
    %3796 = vmatpush1.msra.mxu0 0.0
    %3797 = vmatprep.subr.mxu0 0.0
    %v3798 = vand.u32 %v3511, 4294901760
    %3799 = vmatpush1.msra.mxu0 %v3798
    %3800 = vmatprep.subr.mxu0 0.0
    %v3801 = vand.u32 %v3510, 4294901760
    %3802 = vmatpush1.msra.mxu0 %v3801
    %3803 = vmatprep.subr.mxu0 0.0
    %3804 = vmatpush2.msra.mxu0 0.0
    %3805 = vmatprep.subr.mxu0 0.0
    %3806 = vmatpush2.msra.mxu0 0.0
    %3807 = vmatprep.subr.mxu0 0.0
    %3808 = vmatpush2.msra.mxu0 0.0
    %3809 = vmatprep.subr.mxu0 0.0
    %3810 = vmatpush2.msra.mxu0 0.0
    %3811 = vmatprep.subr.mxu0 0.0
    %3812 = vmatpush2.msra.mxu0 0.0
    %3813 = vmatprep.subr.mxu0 0.0
    %3814 = vmatpush2.msra.mxu0 0.0
    %3815 = vmatprep.subr.mxu0 0.0
    %3816 = vmatpush2.msra.mxu0 0.0
    %3817 = vmatprep.subr.mxu0 0.0
    %3818 = vmatpush2.msra.mxu0 0.0
    %3819 = vmatprep.subr.mxu0 0.0
    %3820 = vmatpush2.msra.mxu0 0.0
    %3821 = vmatprep.subr.mxu0 0.0
    %3822 = vmatpush2.msra.mxu0 0.0
    %3823 = vmatprep.subr.mxu0 0.0
    %3824 = vmatpush2.msra.mxu0 0.0
    %3825 = vmatprep.subr.mxu0 0.0
    %3826 = vmatpush2.msra.mxu0 0.0
    %3827 = vmatprep.subr.mxu0 0.0
    %3828 = vmatpush2.msra.mxu0 0.0
    %3829 = vmatprep.subr.mxu0 0.0
    %3830 = vmatpush2.msra.mxu0 0.0
    %3831 = vmatprep.subr.mxu0 0.0
    %3832 = vmatpush2.msra.mxu0 0.0
    %3833 = vmatprep.subr.mxu0 0.0
    %3834 = vmatpush2.msra.mxu0 0.0
    %3835 = vmatprep.mubr.f32.mxu0 0.0
    %v3836 = vand.u32 %v2482, 4294901760
    %v3837 = vsub.f32 %v2482, %v3836
    %v3838 = vand.u32 %v3837, 4294901760
    %3839 = vmatmul.mubr.f32.gmra.mxu0 %v3838
    %v3840 = vpop.f32.mrf.mxu0
    %v3841 = vadd.f32 %v3759, %v3840
    %v3842 = vpop.f32.mrf.mxu0
    %3843 = vmatprep.mubr.f32.mxu0 0.0
    %v3844 = vand.u32 %v2485, 4294901760
    %v3845 = vsub.f32 %v2485, %v3844
    %v3846 = vand.u32 %v3845, 4294901760
    %3847 = vmatmul.mubr.f32.gmra.mxu0 %v3846
    %v3848 = vpop.f32.mrf.mxu0
    %v3849 = vadd.f32 %v3766, %v3848
    %v3850 = vpop.f32.mrf.mxu0
    %3851 = vdwg.mxu0
    %3852 = vmatprep.subr.mxu0 0.0
    %3853 = vmatpush1.msra.mxu0 0.0
    %3854 = vmatprep.subr.mxu0 0.0
    %3855 = vmatpush1.msra.mxu0 0.0
    %3856 = vmatprep.subr.mxu0 0.0
    %3857 = vmatpush1.msra.mxu0 0.0
    %3858 = vmatprep.subr.mxu0 0.0
    %3859 = vmatpush1.msra.mxu0 0.0
    %3860 = vmatprep.subr.mxu0 0.0
    %3861 = vmatpush1.msra.mxu0 0.0
    %3862 = vmatprep.subr.mxu0 0.0
    %3863 = vmatpush1.msra.mxu0 0.0
    %3864 = vmatprep.subr.mxu0 0.0
    %3865 = vmatpush1.msra.mxu0 0.0
    %3866 = vmatprep.subr.mxu0 0.0
    %3867 = vmatpush1.msra.mxu0 0.0
    %3868 = vmatprep.subr.mxu0 0.0
    %3869 = vmatpush1.msra.mxu0 0.0
    %3870 = vmatprep.subr.mxu0 0.0
    %3871 = vmatpush1.msra.mxu0 0.0
    %3872 = vmatprep.subr.mxu0 0.0
    %3873 = vmatpush1.msra.mxu0 0.0
    %3874 = vmatprep.subr.mxu0 0.0
    %3875 = vmatpush1.msra.mxu0 0.0
    %3876 = vmatprep.subr.mxu0 0.0
    %3877 = vmatpush1.msra.mxu0 0.0
    %3878 = vmatprep.subr.mxu0 0.0
    %3879 = vmatpush1.msra.mxu0 0.0
    %3880 = vmatprep.subr.mxu0 0.0
    %v3881 = vand.u32 %v3511, 4294901760
    %v3882 = vsub.f32 %v3511, %v3881
    %v3883 = vand.u32 %v3882, 4294901760
    %3884 = vmatpush1.msra.mxu0 %v3883
    %3885 = vmatprep.subr.mxu0 0.0
    %v3886 = vand.u32 %v3510, 4294901760
    %v3887 = vsub.f32 %v3510, %v3886
    %v3888 = vand.u32 %v3887, 4294901760
    %3889 = vmatpush1.msra.mxu0 %v3888
    %3890 = vmatprep.subr.mxu0 0.0
    %3891 = vmatpush2.msra.mxu0 0.0
    %3892 = vmatprep.subr.mxu0 0.0
    %3893 = vmatpush2.msra.mxu0 0.0
    %3894 = vmatprep.subr.mxu0 0.0
    %3895 = vmatpush2.msra.mxu0 0.0
    %3896 = vmatprep.subr.mxu0 0.0
    %3897 = vmatpush2.msra.mxu0 0.0
    %3898 = vmatprep.subr.mxu0 0.0
    %3899 = vmatpush2.msra.mxu0 0.0
    %3900 = vmatprep.subr.mxu0 0.0
    %3901 = vmatpush2.msra.mxu0 0.0
    %3902 = vmatprep.subr.mxu0 0.0
    %3903 = vmatpush2.msra.mxu0 0.0
    %3904 = vmatprep.subr.mxu0 0.0
    %3905 = vmatpush2.msra.mxu0 0.0
    %3906 = vmatprep.subr.mxu0 0.0
    %3907 = vmatpush2.msra.mxu0 0.0
    %3908 = vmatprep.subr.mxu0 0.0
    %3909 = vmatpush2.msra.mxu0 0.0
    %3910 = vmatprep.subr.mxu0 0.0
    %3911 = vmatpush2.msra.mxu0 0.0
    %3912 = vmatprep.subr.mxu0 0.0
    %3913 = vmatpush2.msra.mxu0 0.0
    %3914 = vmatprep.subr.mxu0 0.0
    %3915 = vmatpush2.msra.mxu0 0.0
    %3916 = vmatprep.subr.mxu0 0.0
    %3917 = vmatpush2.msra.mxu0 0.0
    %3918 = vmatprep.subr.mxu0 0.0
    %3919 = vmatpush2.msra.mxu0 0.0
    %3920 = vmatprep.subr.mxu0 0.0
    %3921 = vmatpush2.msra.mxu0 0.0
    %3922 = vmatprep.mubr.f32.mxu0 0.0
    %v3923 = vand.u32 %v2482, 4294901760
    %3924 = vmatmul.mubr.f32.gmra.mxu0 %v3923
    %v3925 = vpop.f32.mrf.mxu0
    %v3926 = vadd.f32 %v3841, %v3925
    %v3927 = vpop.f32.mrf.mxu0
    %3928 = vmatprep.mubr.f32.mxu0 0.0
    %v3929 = vand.u32 %v2485, 4294901760
    %3930 = vmatmul.mubr.f32.gmra.mxu0 %v3929
    %v3931 = vpop.f32.mrf.mxu0
    %v3932 = vadd.f32 %v3849, %v3931
    %v3933 = vpop.f32.mrf.mxu0
    %3934 = vdwg.mxu0
    %3935 = vmatprep.subr.mxu0 0.0
    %3936 = vmatpush1.msra.mxu0 0.0
    %3937 = vmatprep.subr.mxu0 0.0
    %3938 = vmatpush1.msra.mxu0 0.0
    %3939 = vmatprep.subr.mxu0 0.0
    %3940 = vmatpush1.msra.mxu0 0.0
    %3941 = vmatprep.subr.mxu0 0.0
    %3942 = vmatpush1.msra.mxu0 0.0
    %3943 = vmatprep.subr.mxu0 0.0
    %3944 = vmatpush1.msra.mxu0 0.0
    %3945 = vmatprep.subr.mxu0 0.0
    %3946 = vmatpush1.msra.mxu0 0.0
    %3947 = vmatprep.subr.mxu0 0.0
    %3948 = vmatpush1.msra.mxu0 0.0
    %3949 = vmatprep.subr.mxu0 0.0
    %3950 = vmatpush1.msra.mxu0 0.0
    %3951 = vmatprep.subr.mxu0 0.0
    %3952 = vmatpush1.msra.mxu0 0.0
    %3953 = vmatprep.subr.mxu0 0.0
    %3954 = vmatpush1.msra.mxu0 0.0
    %3955 = vmatprep.subr.mxu0 0.0
    %3956 = vmatpush1.msra.mxu0 0.0
    %3957 = vmatprep.subr.mxu0 0.0
    %3958 = vmatpush1.msra.mxu0 0.0
    %3959 = vmatprep.subr.mxu0 0.0
    %3960 = vmatpush1.msra.mxu0 0.0
    %3961 = vmatprep.subr.mxu0 0.0
    %3962 = vmatpush1.msra.mxu0 0.0
    %3963 = vmatprep.subr.mxu0 0.0
    %v3964 = vand.u32 %v3511, 4294901760
    %3965 = vmatpush1.msra.mxu0 %v3964
    %3966 = vmatprep.subr.mxu0 0.0
    %v3967 = vand.u32 %v3510, 4294901760
    %3968 = vmatpush1.msra.mxu0 %v3967
    %3969 = vmatprep.subr.mxu0 0.0
    %3970 = vmatpush2.msra.mxu0 0.0
    %3971 = vmatprep.subr.mxu0 0.0
    %3972 = vmatpush2.msra.mxu0 0.0
    %3973 = vmatprep.subr.mxu0 0.0
    %3974 = vmatpush2.msra.mxu0 0.0
    %3975 = vmatprep.subr.mxu0 0.0
    %3976 = vmatpush2.msra.mxu0 0.0
    %3977 = vmatprep.subr.mxu0 0.0
    %3978 = vmatpush2.msra.mxu0 0.0
    %3979 = vmatprep.subr.mxu0 0.0
    %3980 = vmatpush2.msra.mxu0 0.0
    %3981 = vmatprep.subr.mxu0 0.0
    %3982 = vmatpush2.msra.mxu0 0.0
    %3983 = vmatprep.subr.mxu0 0.0
    %3984 = vmatpush2.msra.mxu0 0.0
    %3985 = vmatprep.subr.mxu0 0.0
    %3986 = vmatpush2.msra.mxu0 0.0
    %3987 = vmatprep.subr.mxu0 0.0
    %3988 = vmatpush2.msra.mxu0 0.0
    %3989 = vmatprep.subr.mxu0 0.0
    %3990 = vmatpush2.msra.mxu0 0.0
    %3991 = vmatprep.subr.mxu0 0.0
    %3992 = vmatpush2.msra.mxu0 0.0
    %3993 = vmatprep.subr.mxu0 0.0
    %3994 = vmatpush2.msra.mxu0 0.0
    %3995 = vmatprep.subr.mxu0 0.0
    %3996 = vmatpush2.msra.mxu0 0.0
    %3997 = vmatprep.subr.mxu0 0.0
    %3998 = vmatpush2.msra.mxu0 0.0
    %3999 = vmatprep.subr.mxu0 0.0
    %4000 = vmatpush2.msra.mxu0 0.0
    %4001 = vmatprep.mubr.f32.mxu0 0.0
    %v4002 = vand.u32 %v2482, 4294901760
    %4003 = vmatmul.mubr.f32.gmra.mxu0 %v4002
    %v4004 = vpop.f32.mrf.mxu0
    %v4005 = vadd.f32 %v3926, %v4004
    %v4006 = vpop.f32.mrf.mxu0
    %4007 = vmatprep.mubr.f32.mxu0 0.0
    %v4008 = vand.u32 %v2485, 4294901760
    %4009 = vmatmul.mubr.f32.gmra.mxu0 %v4008
    %v4010 = vpop.f32.mrf.mxu0
    %v4011 = vadd.f32 %v3932, %v4010
    %v4012 = vpop.f32.mrf.mxu0
    %4013 = vdwg.mxu0
    %s4014 = scalar_lea.vmem [#allocation14], 16
    %v4015 = vld [vmem:[%s4014] sm:$0xff]
    %v4016 = vld [vmem:[%s4014 + $0x8] sm:$0xff]
    %v4018 = vsel %vm2480, %v4015, 0
    %v4021 = vsel %vm2480, %v4016, 0
    %4023 = vmatprep.subr.mxu0 0.0
    %4024 = vmatpush1.msra.mxu0 0.0
    %4025 = vmatprep.subr.mxu0 0.0
    %4026 = vmatpush1.msra.mxu0 0.0
    %4027 = vmatprep.subr.mxu0 0.0
    %4028 = vmatpush1.msra.mxu0 0.0
    %4029 = vmatprep.subr.mxu0 0.0
    %4030 = vmatpush1.msra.mxu0 0.0
    %4031 = vmatprep.subr.mxu0 0.0
    %4032 = vmatpush1.msra.mxu0 0.0
    %4033 = vmatprep.subr.mxu0 0.0
    %4034 = vmatpush1.msra.mxu0 0.0
    %4035 = vmatprep.subr.mxu0 0.0
    %4036 = vmatpush1.msra.mxu0 0.0
    %4037 = vmatprep.subr.mxu0 0.0
    %4038 = vmatpush1.msra.mxu0 0.0
    %4039 = vmatprep.subr.mxu0 0.0
    %4040 = vmatpush1.msra.mxu0 0.0
    %4041 = vmatprep.subr.mxu0 0.0
    %4042 = vmatpush1.msra.mxu0 0.0
    %4043 = vmatprep.subr.mxu0 0.0
    %4044 = vmatpush1.msra.mxu0 0.0
    %4045 = vmatprep.subr.mxu0 0.0
    %4046 = vmatpush1.msra.mxu0 0.0
    %4047 = vmatprep.subr.mxu0 0.0
    %4048 = vmatpush1.msra.mxu0 0.0
    %4049 = vmatprep.subr.mxu0 0.0
    %4050 = vmatpush1.msra.mxu0 0.0
    %4051 = vmatprep.subr.mxu0 0.0
    %v4052 = vand.u32 %v2994, 4294901760
    %4053 = vmatpush1.msra.mxu0 %v4052
    %4054 = vmatprep.subr.mxu0 0.0
    %v4055 = vand.u32 %v2992, 4294901760
    %4056 = vmatpush1.msra.mxu0 %v4055
    %4057 = vmatprep.subr.mxu0 0.0
    %4058 = vmatpush2.msra.mxu0 0.0
    %4059 = vmatprep.subr.mxu0 0.0
    %4060 = vmatpush2.msra.mxu0 0.0
    %4061 = vmatprep.subr.mxu0 0.0
    %4062 = vmatpush2.msra.mxu0 0.0
    %4063 = vmatprep.subr.mxu0 0.0
    %4064 = vmatpush2.msra.mxu0 0.0
    %4065 = vmatprep.subr.mxu0 0.0
    %4066 = vmatpush2.msra.mxu0 0.0
    %4067 = vmatprep.subr.mxu0 0.0
    %4068 = vmatpush2.msra.mxu0 0.0
    %4069 = vmatprep.subr.mxu0 0.0
    %4070 = vmatpush2.msra.mxu0 0.0
    %4071 = vmatprep.subr.mxu0 0.0
    %4072 = vmatpush2.msra.mxu0 0.0
    %4073 = vmatprep.subr.mxu0 0.0
    %4074 = vmatpush2.msra.mxu0 0.0
    %4075 = vmatprep.subr.mxu0 0.0
    %4076 = vmatpush2.msra.mxu0 0.0
    %4077 = vmatprep.subr.mxu0 0.0
    %4078 = vmatpush2.msra.mxu0 0.0
    %4079 = vmatprep.subr.mxu0 0.0
    %4080 = vmatpush2.msra.mxu0 0.0
    %4081 = vmatprep.subr.mxu0 0.0
    %4082 = vmatpush2.msra.mxu0 0.0
    %4083 = vmatprep.subr.mxu0 0.0
    %4084 = vmatpush2.msra.mxu0 0.0
    %4085 = vmatprep.subr.mxu0 0.0
    %4086 = vmatpush2.msra.mxu0 0.0
    %4087 = vmatprep.subr.mxu0 0.0
    %4088 = vmatpush2.msra.mxu0 0.0
    %4089 = vmatprep.mubr.f32.mxu0 0.0
    %v4090 = vand.u32 %v4018, 4294901760
    %v4091 = vsub.f32 %v4018, %v4090
    %v4092 = vand.u32 %v4091, 4294901760
    %v4093 = vsub.f32 %v4091, %v4092
    %v4094 = vand.u32 %v4093, 4294901760
    %4095 = vmatmul.mubr.f32.gmra.mxu0 %v4094
    %v4096 = vpop.f32.mrf.mxu0
    %v4097 = vadd.f32 0.0, %v4096
    %v4098 = vpop.f32.mrf.mxu0
    %4099 = vmatprep.mubr.f32.mxu0 0.0
    %v4100 = vand.u32 %v4021, 4294901760
    %v4101 = vsub.f32 %v4021, %v4100
    %v4102 = vand.u32 %v4101, 4294901760
    %v4103 = vsub.f32 %v4101, %v4102
    %v4104 = vand.u32 %v4103, 4294901760
    %4105 = vmatmul.mubr.f32.gmra.mxu0 %v4104
    %v4106 = vpop.f32.mrf.mxu0
    %v4107 = vadd.f32 0.0, %v4106
    %v4108 = vpop.f32.mrf.mxu0
    %4109 = vdwg.mxu0
    %4110 = vmatprep.subr.mxu0 0.0
    %4111 = vmatpush1.msra.mxu0 0.0
    %4112 = vmatprep.subr.mxu0 0.0
    %4113 = vmatpush1.msra.mxu0 0.0
    %4114 = vmatprep.subr.mxu0 0.0
    %4115 = vmatpush1.msra.mxu0 0.0
    %4116 = vmatprep.subr.mxu0 0.0
    %4117 = vmatpush1.msra.mxu0 0.0
    %4118 = vmatprep.subr.mxu0 0.0
    %4119 = vmatpush1.msra.mxu0 0.0
    %4120 = vmatprep.subr.mxu0 0.0
    %4121 = vmatpush1.msra.mxu0 0.0
    %4122 = vmatprep.subr.mxu0 0.0
    %4123 = vmatpush1.msra.mxu0 0.0
    %4124 = vmatprep.subr.mxu0 0.0
    %4125 = vmatpush1.msra.mxu0 0.0
    %4126 = vmatprep.subr.mxu0 0.0
    %4127 = vmatpush1.msra.mxu0 0.0
    %4128 = vmatprep.subr.mxu0 0.0
    %4129 = vmatpush1.msra.mxu0 0.0
    %4130 = vmatprep.subr.mxu0 0.0
    %4131 = vmatpush1.msra.mxu0 0.0
    %4132 = vmatprep.subr.mxu0 0.0
    %4133 = vmatpush1.msra.mxu0 0.0
    %4134 = vmatprep.subr.mxu0 0.0
    %4135 = vmatpush1.msra.mxu0 0.0
    %4136 = vmatprep.subr.mxu0 0.0
    %4137 = vmatpush1.msra.mxu0 0.0
    %4138 = vmatprep.subr.mxu0 0.0
    %v4139 = vand.u32 %v2994, 4294901760
    %v4140 = vsub.f32 %v2994, %v4139
    %v4141 = vand.u32 %v4140, 4294901760
    %v4142 = vsub.f32 %v4140, %v4141
    %v4143 = vand.u32 %v4142, 4294901760
    %4144 = vmatpush1.msra.mxu0 %v4143
    %4145 = vmatprep.subr.mxu0 0.0
    %v4146 = vand.u32 %v2992, 4294901760
    %v4147 = vsub.f32 %v2992, %v4146
    %v4148 = vand.u32 %v4147, 4294901760
    %v4149 = vsub.f32 %v4147, %v4148
    %v4150 = vand.u32 %v4149, 4294901760
    %4151 = vmatpush1.msra.mxu0 %v4150
    %4152 = vmatprep.subr.mxu0 0.0
    %4153 = vmatpush2.msra.mxu0 0.0
    %4154 = vmatprep.subr.mxu0 0.0
    %4155 = vmatpush2.msra.mxu0 0.0
    %4156 = vmatprep.subr.mxu0 0.0
    %4157 = vmatpush2.msra.mxu0 0.0
    %4158 = vmatprep.subr.mxu0 0.0
    %4159 = vmatpush2.msra.mxu0 0.0
    %4160 = vmatprep.subr.mxu0 0.0
    %4161 = vmatpush2.msra.mxu0 0.0
    %4162 = vmatprep.subr.mxu0 0.0
    %4163 = vmatpush2.msra.mxu0 0.0
    %4164 = vmatprep.subr.mxu0 0.0
    %4165 = vmatpush2.msra.mxu0 0.0
    %4166 = vmatprep.subr.mxu0 0.0
    %4167 = vmatpush2.msra.mxu0 0.0
    %4168 = vmatprep.subr.mxu0 0.0
    %4169 = vmatpush2.msra.mxu0 0.0
    %4170 = vmatprep.subr.mxu0 0.0
    %4171 = vmatpush2.msra.mxu0 0.0
    %4172 = vmatprep.subr.mxu0 0.0
    %4173 = vmatpush2.msra.mxu0 0.0
    %4174 = vmatprep.subr.mxu0 0.0
    %4175 = vmatpush2.msra.mxu0 0.0
    %4176 = vmatprep.subr.mxu0 0.0
    %4177 = vmatpush2.msra.mxu0 0.0
    %4178 = vmatprep.subr.mxu0 0.0
    %4179 = vmatpush2.msra.mxu0 0.0
    %4180 = vmatprep.subr.mxu0 0.0
    %4181 = vmatpush2.msra.mxu0 0.0
    %4182 = vmatprep.subr.mxu0 0.0
    %4183 = vmatpush2.msra.mxu0 0.0
    %4184 = vmatprep.mubr.f32.mxu0 0.0
    %v4185 = vand.u32 %v4018, 4294901760
    %4186 = vmatmul.mubr.f32.gmra.mxu0 %v4185
    %v4187 = vpop.f32.mrf.mxu0
    %v4188 = vadd.f32 %v4097, %v4187
    %v4189 = vpop.f32.mrf.mxu0
    %4190 = vmatprep.mubr.f32.mxu0 0.0
    %v4191 = vand.u32 %v4021, 4294901760
    %4192 = vmatmul.mubr.f32.gmra.mxu0 %v4191
    %v4193 = vpop.f32.mrf.mxu0
    %v4194 = vadd.f32 %v4107, %v4193
    %v4195 = vpop.f32.mrf.mxu0
    %4196 = vdwg.mxu0
    %4197 = vmatprep.subr.mxu0 0.0
    %4198 = vmatpush1.msra.mxu0 0.0
    %4199 = vmatprep.subr.mxu0 0.0
    %4200 = vmatpush1.msra.mxu0 0.0
    %4201 = vmatprep.subr.mxu0 0.0
    %4202 = vmatpush1.msra.mxu0 0.0
    %4203 = vmatprep.subr.mxu0 0.0
    %4204 = vmatpush1.msra.mxu0 0.0
    %4205 = vmatprep.subr.mxu0 0.0
    %4206 = vmatpush1.msra.mxu0 0.0
    %4207 = vmatprep.subr.mxu0 0.0
    %4208 = vmatpush1.msra.mxu0 0.0
    %4209 = vmatprep.subr.mxu0 0.0
    %4210 = vmatpush1.msra.mxu0 0.0
    %4211 = vmatprep.subr.mxu0 0.0
    %4212 = vmatpush1.msra.mxu0 0.0
    %4213 = vmatprep.subr.mxu0 0.0
    %4214 = vmatpush1.msra.mxu0 0.0
    %4215 = vmatprep.subr.mxu0 0.0
    %4216 = vmatpush1.msra.mxu0 0.0
    %4217 = vmatprep.subr.mxu0 0.0
    %4218 = vmatpush1.msra.mxu0 0.0
    %4219 = vmatprep.subr.mxu0 0.0
    %4220 = vmatpush1.msra.mxu0 0.0
    %4221 = vmatprep.subr.mxu0 0.0
    %4222 = vmatpush1.msra.mxu0 0.0
    %4223 = vmatprep.subr.mxu0 0.0
    %4224 = vmatpush1.msra.mxu0 0.0
    %4225 = vmatprep.subr.mxu0 0.0
    %v4226 = vand.u32 %v2994, 4294901760
    %v4227 = vsub.f32 %v2994, %v4226
    %4228 = vmatpush1.msra.mxu0 %v4227
    %4229 = vmatprep.subr.mxu0 0.0
    %v4230 = vand.u32 %v2992, 4294901760
    %v4231 = vsub.f32 %v2992, %v4230
    %4232 = vmatpush1.msra.mxu0 %v4231
    %4233 = vmatprep.subr.mxu0 0.0
    %4234 = vmatpush2.msra.mxu0 0.0
    %4235 = vmatprep.subr.mxu0 0.0
    %4236 = vmatpush2.msra.mxu0 0.0
    %4237 = vmatprep.subr.mxu0 0.0
    %4238 = vmatpush2.msra.mxu0 0.0
    %4239 = vmatprep.subr.mxu0 0.0
    %4240 = vmatpush2.msra.mxu0 0.0
    %4241 = vmatprep.subr.mxu0 0.0
    %4242 = vmatpush2.msra.mxu0 0.0
    %4243 = vmatprep.subr.mxu0 0.0
    %4244 = vmatpush2.msra.mxu0 0.0
    %4245 = vmatprep.subr.mxu0 0.0
    %4246 = vmatpush2.msra.mxu0 0.0
    %4247 = vmatprep.subr.mxu0 0.0
    %4248 = vmatpush2.msra.mxu0 0.0
    %4249 = vmatprep.subr.mxu0 0.0
    %4250 = vmatpush2.msra.mxu0 0.0
    %4251 = vmatprep.subr.mxu0 0.0
    %4252 = vmatpush2.msra.mxu0 0.0
    %4253 = vmatprep.subr.mxu0 0.0
    %4254 = vmatpush2.msra.mxu0 0.0
    %4255 = vmatprep.subr.mxu0 0.0
    %4256 = vmatpush2.msra.mxu0 0.0
    %4257 = vmatprep.subr.mxu0 0.0
    %4258 = vmatpush2.msra.mxu0 0.0
    %4259 = vmatprep.subr.mxu0 0.0
    %4260 = vmatpush2.msra.mxu0 0.0
    %4261 = vmatprep.subr.mxu0 0.0
    %4262 = vmatpush2.msra.mxu0 0.0
    %4263 = vmatprep.subr.mxu0 0.0
    %4264 = vmatpush2.msra.mxu0 0.0
    %4265 = vmatprep.mubr.f32.mxu0 0.0
    %v4266 = vand.u32 %v4018, 4294901760
    %v4267 = vsub.f32 %v4018, %v4266
    %4268 = vmatmul.mubr.f32.gmra.mxu0 %v4267
    %v4269 = vpop.f32.mrf.mxu0
    %v4270 = vadd.f32 %v4188, %v4269
    %v4271 = vpop.f32.mrf.mxu0
    %4272 = vmatprep.mubr.f32.mxu0 0.0
    %v4273 = vand.u32 %v4021, 4294901760
    %v4274 = vsub.f32 %v4021, %v4273
    %4275 = vmatmul.mubr.f32.gmra.mxu0 %v4274
    %v4276 = vpop.f32.mrf.mxu0
    %v4277 = vadd.f32 %v4194, %v4276
    %v4278 = vpop.f32.mrf.mxu0
    %4279 = vdwg.mxu0
    %4280 = vmatprep.subr.mxu0 0.0
    %4281 = vmatpush1.msra.mxu0 0.0
    %4282 = vmatprep.subr.mxu0 0.0
    %4283 = vmatpush1.msra.mxu0 0.0
    %4284 = vmatprep.subr.mxu0 0.0
    %4285 = vmatpush1.msra.mxu0 0.0
    %4286 = vmatprep.subr.mxu0 0.0
    %4287 = vmatpush1.msra.mxu0 0.0
    %4288 = vmatprep.subr.mxu0 0.0
    %4289 = vmatpush1.msra.mxu0 0.0
    %4290 = vmatprep.subr.mxu0 0.0
    %4291 = vmatpush1.msra.mxu0 0.0
    %4292 = vmatprep.subr.mxu0 0.0
    %4293 = vmatpush1.msra.mxu0 0.0
    %4294 = vmatprep.subr.mxu0 0.0
    %4295 = vmatpush1.msra.mxu0 0.0
    %4296 = vmatprep.subr.mxu0 0.0
    %4297 = vmatpush1.msra.mxu0 0.0
    %4298 = vmatprep.subr.mxu0 0.0
    %4299 = vmatpush1.msra.mxu0 0.0
    %4300 = vmatprep.subr.mxu0 0.0
    %4301 = vmatpush1.msra.mxu0 0.0
    %4302 = vmatprep.subr.mxu0 0.0
    %4303 = vmatpush1.msra.mxu0 0.0
    %4304 = vmatprep.subr.mxu0 0.0
    %4305 = vmatpush1.msra.mxu0 0.0
    %4306 = vmatprep.subr.mxu0 0.0
    %4307 = vmatpush1.msra.mxu0 0.0
    %4308 = vmatprep.subr.mxu0 0.0
    %v4309 = vand.u32 %v2994, 4294901760
    %4310 = vmatpush1.msra.mxu0 %v4309
    %4311 = vmatprep.subr.mxu0 0.0
    %v4312 = vand.u32 %v2992, 4294901760
    %4313 = vmatpush1.msra.mxu0 %v4312
    %4314 = vmatprep.subr.mxu0 0.0
    %4315 = vmatpush2.msra.mxu0 0.0
    %4316 = vmatprep.subr.mxu0 0.0
    %4317 = vmatpush2.msra.mxu0 0.0
    %4318 = vmatprep.subr.mxu0 0.0
    %4319 = vmatpush2.msra.mxu0 0.0
    %4320 = vmatprep.subr.mxu0 0.0
    %4321 = vmatpush2.msra.mxu0 0.0
    %4322 = vmatprep.subr.mxu0 0.0
    %4323 = vmatpush2.msra.mxu0 0.0
    %4324 = vmatprep.subr.mxu0 0.0
    %4325 = vmatpush2.msra.mxu0 0.0
    %4326 = vmatprep.subr.mxu0 0.0
    %4327 = vmatpush2.msra.mxu0 0.0
    %4328 = vmatprep.subr.mxu0 0.0
    %4329 = vmatpush2.msra.mxu0 0.0
    %4330 = vmatprep.subr.mxu0 0.0
    %4331 = vmatpush2.msra.mxu0 0.0
    %4332 = vmatprep.subr.mxu0 0.0
    %4333 = vmatpush2.msra.mxu0 0.0
    %4334 = vmatprep.subr.mxu0 0.0
    %4335 = vmatpush2.msra.mxu0 0.0
    %4336 = vmatprep.subr.mxu0 0.0
    %4337 = vmatpush2.msra.mxu0 0.0
    %4338 = vmatprep.subr.mxu0 0.0
    %4339 = vmatpush2.msra.mxu0 0.0
    %4340 = vmatprep.subr.mxu0 0.0
    %4341 = vmatpush2.msra.mxu0 0.0
    %4342 = vmatprep.subr.mxu0 0.0
    %4343 = vmatpush2.msra.mxu0 0.0
    %4344 = vmatprep.subr.mxu0 0.0
    %4345 = vmatpush2.msra.mxu0 0.0
    %4346 = vmatprep.mubr.f32.mxu0 0.0
    %v4347 = vand.u32 %v4018, 4294901760
    %v4348 = vsub.f32 %v4018, %v4347
    %v4349 = vand.u32 %v4348, 4294901760
    %4350 = vmatmul.mubr.f32.gmra.mxu0 %v4349
    %v4351 = vpop.f32.mrf.mxu0
    %v4352 = vadd.f32 %v4270, %v4351
    %v4353 = vpop.f32.mrf.mxu0
    %4354 = vmatprep.mubr.f32.mxu0 0.0
    %v4355 = vand.u32 %v4021, 4294901760
    %v4356 = vsub.f32 %v4021, %v4355
    %v4357 = vand.u32 %v4356, 4294901760
    %4358 = vmatmul.mubr.f32.gmra.mxu0 %v4357
    %v4359 = vpop.f32.mrf.mxu0
    %v4360 = vadd.f32 %v4277, %v4359
    %v4361 = vpop.f32.mrf.mxu0
    %4362 = vdwg.mxu0
    %4363 = vmatprep.subr.mxu0 0.0
    %4364 = vmatpush1.msra.mxu0 0.0
    %4365 = vmatprep.subr.mxu0 0.0
    %4366 = vmatpush1.msra.mxu0 0.0
    %4367 = vmatprep.subr.mxu0 0.0
    %4368 = vmatpush1.msra.mxu0 0.0
    %4369 = vmatprep.subr.mxu0 0.0
    %4370 = vmatpush1.msra.mxu0 0.0
    %4371 = vmatprep.subr.mxu0 0.0
    %4372 = vmatpush1.msra.mxu0 0.0
    %4373 = vmatprep.subr.mxu0 0.0
    %4374 = vmatpush1.msra.mxu0 0.0
    %4375 = vmatprep.subr.mxu0 0.0
    %4376 = vmatpush1.msra.mxu0 0.0
    %4377 = vmatprep.subr.mxu0 0.0
    %4378 = vmatpush1.msra.mxu0 0.0
    %4379 = vmatprep.subr.mxu0 0.0
    %4380 = vmatpush1.msra.mxu0 0.0
    %4381 = vmatprep.subr.mxu0 0.0
    %4382 = vmatpush1.msra.mxu0 0.0
    %4383 = vmatprep.subr.mxu0 0.0
    %4384 = vmatpush1.msra.mxu0 0.0
    %4385 = vmatprep.subr.mxu0 0.0
    %4386 = vmatpush1.msra.mxu0 0.0
    %4387 = vmatprep.subr.mxu0 0.0
    %4388 = vmatpush1.msra.mxu0 0.0
    %4389 = vmatprep.subr.mxu0 0.0
    %4390 = vmatpush1.msra.mxu0 0.0
    %4391 = vmatprep.subr.mxu0 0.0
    %v4392 = vand.u32 %v2994, 4294901760
    %v4393 = vsub.f32 %v2994, %v4392
    %v4394 = vand.u32 %v4393, 4294901760
    %4395 = vmatpush1.msra.mxu0 %v4394
    %4396 = vmatprep.subr.mxu0 0.0
    %v4397 = vand.u32 %v2992, 4294901760
    %v4398 = vsub.f32 %v2992, %v4397
    %v4399 = vand.u32 %v4398, 4294901760
    %4400 = vmatpush1.msra.mxu0 %v4399
    %4401 = vmatprep.subr.mxu0 0.0
    %4402 = vmatpush2.msra.mxu0 0.0
    %4403 = vmatprep.subr.mxu0 0.0
    %4404 = vmatpush2.msra.mxu0 0.0
    %4405 = vmatprep.subr.mxu0 0.0
    %4406 = vmatpush2.msra.mxu0 0.0
    %4407 = vmatprep.subr.mxu0 0.0
    %4408 = vmatpush2.msra.mxu0 0.0
    %4409 = vmatprep.subr.mxu0 0.0
    %4410 = vmatpush2.msra.mxu0 0.0
    %4411 = vmatprep.subr.mxu0 0.0
    %4412 = vmatpush2.msra.mxu0 0.0
    %4413 = vmatprep.subr.mxu0 0.0
    %4414 = vmatpush2.msra.mxu0 0.0
    %4415 = vmatprep.subr.mxu0 0.0
    %4416 = vmatpush2.msra.mxu0 0.0
    %4417 = vmatprep.subr.mxu0 0.0
    %4418 = vmatpush2.msra.mxu0 0.0
    %4419 = vmatprep.subr.mxu0 0.0
    %4420 = vmatpush2.msra.mxu0 0.0
    %4421 = vmatprep.subr.mxu0 0.0
    %4422 = vmatpush2.msra.mxu0 0.0
    %4423 = vmatprep.subr.mxu0 0.0
    %4424 = vmatpush2.msra.mxu0 0.0
    %4425 = vmatprep.subr.mxu0 0.0
    %4426 = vmatpush2.msra.mxu0 0.0
    %4427 = vmatprep.subr.mxu0 0.0
    %4428 = vmatpush2.msra.mxu0 0.0
    %4429 = vmatprep.subr.mxu0 0.0
    %4430 = vmatpush2.msra.mxu0 0.0
    %4431 = vmatprep.subr.mxu0 0.0
    %4432 = vmatpush2.msra.mxu0 0.0
    %4433 = vmatprep.mubr.f32.mxu0 0.0
    %v4434 = vand.u32 %v4018, 4294901760
    %4435 = vmatmul.mubr.f32.gmra.mxu0 %v4434
    %v4436 = vpop.f32.mrf.mxu0
    %v4437 = vadd.f32 %v4352, %v4436
    %v4438 = vpop.f32.mrf.mxu0
    %4439 = vmatprep.mubr.f32.mxu0 0.0
    %v4440 = vand.u32 %v4021, 4294901760
    %4441 = vmatmul.mubr.f32.gmra.mxu0 %v4440
    %v4442 = vpop.f32.mrf.mxu0
    %v4443 = vadd.f32 %v4360, %v4442
    %v4444 = vpop.f32.mrf.mxu0
    %4445 = vdwg.mxu0
    %4446 = vmatprep.subr.mxu0 0.0
    %4447 = vmatpush1.msra.mxu0 0.0
    %4448 = vmatprep.subr.mxu0 0.0
    %4449 = vmatpush1.msra.mxu0 0.0
    %4450 = vmatprep.subr.mxu0 0.0
    %4451 = vmatpush1.msra.mxu0 0.0
    %4452 = vmatprep.subr.mxu0 0.0
    %4453 = vmatpush1.msra.mxu0 0.0
    %4454 = vmatprep.subr.mxu0 0.0
    %4455 = vmatpush1.msra.mxu0 0.0
    %4456 = vmatprep.subr.mxu0 0.0
    %4457 = vmatpush1.msra.mxu0 0.0
    %4458 = vmatprep.subr.mxu0 0.0
    %4459 = vmatpush1.msra.mxu0 0.0
    %4460 = vmatprep.subr.mxu0 0.0
    %4461 = vmatpush1.msra.mxu0 0.0
    %4462 = vmatprep.subr.mxu0 0.0
    %4463 = vmatpush1.msra.mxu0 0.0
    %4464 = vmatprep.subr.mxu0 0.0
    %4465 = vmatpush1.msra.mxu0 0.0
    %4466 = vmatprep.subr.mxu0 0.0
    %4467 = vmatpush1.msra.mxu0 0.0
    %4468 = vmatprep.subr.mxu0 0.0
    %4469 = vmatpush1.msra.mxu0 0.0
    %4470 = vmatprep.subr.mxu0 0.0
    %4471 = vmatpush1.msra.mxu0 0.0
    %4472 = vmatprep.subr.mxu0 0.0
    %4473 = vmatpush1.msra.mxu0 0.0
    %4474 = vmatprep.subr.mxu0 0.0
    %v4475 = vand.u32 %v2994, 4294901760
    %4476 = vmatpush1.msra.mxu0 %v4475
    %4477 = vmatprep.subr.mxu0 0.0
    %v4478 = vand.u32 %v2992, 4294901760
    %4479 = vmatpush1.msra.mxu0 %v4478
    %4480 = vmatprep.subr.mxu0 0.0
    %4481 = vmatpush2.msra.mxu0 0.0
    %4482 = vmatprep.subr.mxu0 0.0
    %4483 = vmatpush2.msra.mxu0 0.0
    %4484 = vmatprep.subr.mxu0 0.0
    %4485 = vmatpush2.msra.mxu0 0.0
    %4486 = vmatprep.subr.mxu0 0.0
    %4487 = vmatpush2.msra.mxu0 0.0
    %4488 = vmatprep.subr.mxu0 0.0
    %4489 = vmatpush2.msra.mxu0 0.0
    %4490 = vmatprep.subr.mxu0 0.0
    %4491 = vmatpush2.msra.mxu0 0.0
    %4492 = vmatprep.subr.mxu0 0.0
    %4493 = vmatpush2.msra.mxu0 0.0
    %4494 = vmatprep.subr.mxu0 0.0
    %4495 = vmatpush2.msra.mxu0 0.0
    %4496 = vmatprep.subr.mxu0 0.0
    %4497 = vmatpush2.msra.mxu0 0.0
    %4498 = vmatprep.subr.mxu0 0.0
    %4499 = vmatpush2.msra.mxu0 0.0
    %4500 = vmatprep.subr.mxu0 0.0
    %4501 = vmatpush2.msra.mxu0 0.0
    %4502 = vmatprep.subr.mxu0 0.0
    %4503 = vmatpush2.msra.mxu0 0.0
    %4504 = vmatprep.subr.mxu0 0.0
    %4505 = vmatpush2.msra.mxu0 0.0
    %4506 = vmatprep.subr.mxu0 0.0
    %4507 = vmatpush2.msra.mxu0 0.0
    %4508 = vmatprep.subr.mxu0 0.0
    %4509 = vmatpush2.msra.mxu0 0.0
    %4510 = vmatprep.subr.mxu0 0.0
    %4511 = vmatpush2.msra.mxu0 0.0
    %4512 = vmatprep.mubr.f32.mxu0 0.0
    %v4513 = vand.u32 %v4018, 4294901760
    %4514 = vmatmul.mubr.f32.gmra.mxu0 %v4513
    %v4515 = vpop.f32.mrf.mxu0
    %v4516 = vadd.f32 %v4437, %v4515
    %v4517 = vpop.f32.mrf.mxu0
    %4518 = vmatprep.mubr.f32.mxu0 0.0
    %v4519 = vand.u32 %v4021, 4294901760
    %4520 = vmatmul.mubr.f32.gmra.mxu0 %v4519
    %v4521 = vpop.f32.mrf.mxu0
    %v4522 = vadd.f32 %v4443, %v4521
    %v4523 = vpop.f32.mrf.mxu0
    %4524 = vdwg.mxu0
    %v4525 = vmul.f32 %v4005, %v4516
    %v4526 = vmul.f32 %v4011, %v4522
    %v4527 = vadd.f32 %v3507, %v4525
    %v4528 = vadd.f32 %v3508, %v4526
    %s4529 = scalar_lea.vmem [#allocation13], 32
    %v4530 = vld [vmem:[%s4529] sm:$0xff]
    %v4531 = vld [vmem:[%s4529 + $0x8] sm:$0xff]
    %4532 = vmatprep.subr.mxu0 0.0
    %4533 = vmatpush1.msra.mxu0 0.0
    %4534 = vmatprep.subr.mxu0 0.0
    %4535 = vmatpush1.msra.mxu0 0.0
    %4536 = vmatprep.subr.mxu0 0.0
    %4537 = vmatpush1.msra.mxu0 0.0
    %4538 = vmatprep.subr.mxu0 0.0
    %4539 = vmatpush1.msra.mxu0 0.0
    %4540 = vmatprep.subr.mxu0 0.0
    %4541 = vmatpush1.msra.mxu0 0.0
    %4542 = vmatprep.subr.mxu0 0.0
    %4543 = vmatpush1.msra.mxu0 0.0
    %4544 = vmatprep.subr.mxu0 0.0
    %4545 = vmatpush1.msra.mxu0 0.0
    %4546 = vmatprep.subr.mxu0 0.0
    %4547 = vmatpush1.msra.mxu0 0.0
    %4548 = vmatprep.subr.mxu0 0.0
    %4549 = vmatpush1.msra.mxu0 0.0
    %4550 = vmatprep.subr.mxu0 0.0
    %4551 = vmatpush1.msra.mxu0 0.0
    %4552 = vmatprep.subr.mxu0 0.0
    %4553 = vmatpush1.msra.mxu0 0.0
    %4554 = vmatprep.subr.mxu0 0.0
    %4555 = vmatpush1.msra.mxu0 0.0
    %4556 = vmatprep.subr.mxu0 0.0
    %4557 = vmatpush1.msra.mxu0 0.0
    %4558 = vmatprep.subr.mxu0 0.0
    %4559 = vmatpush1.msra.mxu0 0.0
    %4560 = vmatprep.subr.mxu0 0.0
    %v4561 = vand.u32 %v4531, 4294901760
    %4562 = vmatpush1.msra.mxu0 %v4561
    %4563 = vmatprep.subr.mxu0 0.0
    %v4564 = vand.u32 %v4530, 4294901760
    %4565 = vmatpush1.msra.mxu0 %v4564
    %4566 = vmatprep.subr.mxu0 0.0
    %4567 = vmatpush2.msra.mxu0 0.0
    %4568 = vmatprep.subr.mxu0 0.0
    %4569 = vmatpush2.msra.mxu0 0.0
    %4570 = vmatprep.subr.mxu0 0.0
    %4571 = vmatpush2.msra.mxu0 0.0
    %4572 = vmatprep.subr.mxu0 0.0
    %4573 = vmatpush2.msra.mxu0 0.0
    %4574 = vmatprep.subr.mxu0 0.0
    %4575 = vmatpush2.msra.mxu0 0.0
    %4576 = vmatprep.subr.mxu0 0.0
    %4577 = vmatpush2.msra.mxu0 0.0
    %4578 = vmatprep.subr.mxu0 0.0
    %4579 = vmatpush2.msra.mxu0 0.0
    %4580 = vmatprep.subr.mxu0 0.0
    %4581 = vmatpush2.msra.mxu0 0.0
    %4582 = vmatprep.subr.mxu0 0.0
    %4583 = vmatpush2.msra.mxu0 0.0
    %4584 = vmatprep.subr.mxu0 0.0
    %4585 = vmatpush2.msra.mxu0 0.0
    %4586 = vmatprep.subr.mxu0 0.0
    %4587 = vmatpush2.msra.mxu0 0.0
    %4588 = vmatprep.subr.mxu0 0.0
    %4589 = vmatpush2.msra.mxu0 0.0
    %4590 = vmatprep.subr.mxu0 0.0
    %4591 = vmatpush2.msra.mxu0 0.0
    %4592 = vmatprep.subr.mxu0 0.0
    %4593 = vmatpush2.msra.mxu0 0.0
    %4594 = vmatprep.subr.mxu0 0.0
    %4595 = vmatpush2.msra.mxu0 0.0
    %4596 = vmatprep.subr.mxu0 0.0
    %4597 = vmatpush2.msra.mxu0 0.0
    %4598 = vmatprep.mubr.f32.mxu0 0.0
    %v4599 = vand.u32 %v2482, 4294901760
    %v4600 = vsub.f32 %v2482, %v4599
    %v4601 = vand.u32 %v4600, 4294901760
    %v4602 = vsub.f32 %v4600, %v4601
    %v4603 = vand.u32 %v4602, 4294901760
    %4604 = vmatmul.mubr.f32.gmra.mxu0 %v4603
    %v4605 = vpop.f32.mrf.mxu0
    %v4606 = vadd.f32 0.0, %v4605
    %v4607 = vpop.f32.mrf.mxu0
    %4608 = vmatprep.mubr.f32.mxu0 0.0
    %v4609 = vand.u32 %v2485, 4294901760
    %v4610 = vsub.f32 %v2485, %v4609
    %v4611 = vand.u32 %v4610, 4294901760
    %v4612 = vsub.f32 %v4610, %v4611
    %v4613 = vand.u32 %v4612, 4294901760
    %4614 = vmatmul.mubr.f32.gmra.mxu0 %v4613
    %v4615 = vpop.f32.mrf.mxu0
    %v4616 = vadd.f32 0.0, %v4615
    %v4617 = vpop.f32.mrf.mxu0
    %4618 = vdwg.mxu0
    %4619 = vmatprep.subr.mxu0 0.0
    %4620 = vmatpush1.msra.mxu0 0.0
    %4621 = vmatprep.subr.mxu0 0.0
    %4622 = vmatpush1.msra.mxu0 0.0
    %4623 = vmatprep.subr.mxu0 0.0
    %4624 = vmatpush1.msra.mxu0 0.0
    %4625 = vmatprep.subr.mxu0 0.0
    %4626 = vmatpush1.msra.mxu0 0.0
    %4627 = vmatprep.subr.mxu0 0.0
    %4628 = vmatpush1.msra.mxu0 0.0
    %4629 = vmatprep.subr.mxu0 0.0
    %4630 = vmatpush1.msra.mxu0 0.0
    %4631 = vmatprep.subr.mxu0 0.0
    %4632 = vmatpush1.msra.mxu0 0.0
    %4633 = vmatprep.subr.mxu0 0.0
    %4634 = vmatpush1.msra.mxu0 0.0
    %4635 = vmatprep.subr.mxu0 0.0
    %4636 = vmatpush1.msra.mxu0 0.0
    %4637 = vmatprep.subr.mxu0 0.0
    %4638 = vmatpush1.msra.mxu0 0.0
    %4639 = vmatprep.subr.mxu0 0.0
    %4640 = vmatpush1.msra.mxu0 0.0
    %4641 = vmatprep.subr.mxu0 0.0
    %4642 = vmatpush1.msra.mxu0 0.0
    %4643 = vmatprep.subr.mxu0 0.0
    %4644 = vmatpush1.msra.mxu0 0.0
    %4645 = vmatprep.subr.mxu0 0.0
    %4646 = vmatpush1.msra.mxu0 0.0
    %4647 = vmatprep.subr.mxu0 0.0
    %v4648 = vand.u32 %v4531, 4294901760
    %v4649 = vsub.f32 %v4531, %v4648
    %v4650 = vand.u32 %v4649, 4294901760
    %v4651 = vsub.f32 %v4649, %v4650
    %v4652 = vand.u32 %v4651, 4294901760
    %4653 = vmatpush1.msra.mxu0 %v4652
    %4654 = vmatprep.subr.mxu0 0.0
    %v4655 = vand.u32 %v4530, 4294901760
    %v4656 = vsub.f32 %v4530, %v4655
    %v4657 = vand.u32 %v4656, 4294901760
    %v4658 = vsub.f32 %v4656, %v4657
    %v4659 = vand.u32 %v4658, 4294901760
    %4660 = vmatpush1.msra.mxu0 %v4659
    %4661 = vmatprep.subr.mxu0 0.0
    %4662 = vmatpush2.msra.mxu0 0.0
    %4663 = vmatprep.subr.mxu0 0.0
    %4664 = vmatpush2.msra.mxu0 0.0
    %4665 = vmatprep.subr.mxu0 0.0
    %4666 = vmatpush2.msra.mxu0 0.0
    %4667 = vmatprep.subr.mxu0 0.0
    %4668 = vmatpush2.msra.mxu0 0.0
    %4669 = vmatprep.subr.mxu0 0.0
    %4670 = vmatpush2.msra.mxu0 0.0
    %4671 = vmatprep.subr.mxu0 0.0
    %4672 = vmatpush2.msra.mxu0 0.0
    %4673 = vmatprep.subr.mxu0 0.0
    %4674 = vmatpush2.msra.mxu0 0.0
    %4675 = vmatprep.subr.mxu0 0.0
    %4676 = vmatpush2.msra.mxu0 0.0
    %4677 = vmatprep.subr.mxu0 0.0
    %4678 = vmatpush2.msra.mxu0 0.0
    %4679 = vmatprep.subr.mxu0 0.0
    %4680 = vmatpush2.msra.mxu0 0.0
    %4681 = vmatprep.subr.mxu0 0.0
    %4682 = vmatpush2.msra.mxu0 0.0
    %4683 = vmatprep.subr.mxu0 0.0
    %4684 = vmatpush2.msra.mxu0 0.0
    %4685 = vmatprep.subr.mxu0 0.0
    %4686 = vmatpush2.msra.mxu0 0.0
    %4687 = vmatprep.subr.mxu0 0.0
    %4688 = vmatpush2.msra.mxu0 0.0
    %4689 = vmatprep.subr.mxu0 0.0
    %4690 = vmatpush2.msra.mxu0 0.0
    %4691 = vmatprep.subr.mxu0 0.0
    %4692 = vmatpush2.msra.mxu0 0.0
    %4693 = vmatprep.mubr.f32.mxu0 0.0
    %v4694 = vand.u32 %v2482, 4294901760
    %4695 = vmatmul.mubr.f32.gmra.mxu0 %v4694
    %v4696 = vpop.f32.mrf.mxu0
    %v4697 = vadd.f32 %v4606, %v4696
    %v4698 = vpop.f32.mrf.mxu0
    %4699 = vmatprep.mubr.f32.mxu0 0.0
    %v4700 = vand.u32 %v2485, 4294901760
    %4701 = vmatmul.mubr.f32.gmra.mxu0 %v4700
    %v4702 = vpop.f32.mrf.mxu0
    %v4703 = vadd.f32 %v4616, %v4702
    %v4704 = vpop.f32.mrf.mxu0
    %4705 = vdwg.mxu0
    %4706 = vmatprep.subr.mxu0 0.0
    %4707 = vmatpush1.msra.mxu0 0.0
    %4708 = vmatprep.subr.mxu0 0.0
    %4709 = vmatpush1.msra.mxu0 0.0
    %4710 = vmatprep.subr.mxu0 0.0
    %4711 = vmatpush1.msra.mxu0 0.0
    %4712 = vmatprep.subr.mxu0 0.0
    %4713 = vmatpush1.msra.mxu0 0.0
    %4714 = vmatprep.subr.mxu0 0.0
    %4715 = vmatpush1.msra.mxu0 0.0
    %4716 = vmatprep.subr.mxu0 0.0
    %4717 = vmatpush1.msra.mxu0 0.0
    %4718 = vmatprep.subr.mxu0 0.0
    %4719 = vmatpush1.msra.mxu0 0.0
    %4720 = vmatprep.subr.mxu0 0.0
    %4721 = vmatpush1.msra.mxu0 0.0
    %4722 = vmatprep.subr.mxu0 0.0
    %4723 = vmatpush1.msra.mxu0 0.0
    %4724 = vmatprep.subr.mxu0 0.0
    %4725 = vmatpush1.msra.mxu0 0.0
    %4726 = vmatprep.subr.mxu0 0.0
    %4727 = vmatpush1.msra.mxu0 0.0
    %4728 = vmatprep.subr.mxu0 0.0
    %4729 = vmatpush1.msra.mxu0 0.0
    %4730 = vmatprep.subr.mxu0 0.0
    %4731 = vmatpush1.msra.mxu0 0.0
    %4732 = vmatprep.subr.mxu0 0.0
    %4733 = vmatpush1.msra.mxu0 0.0
    %4734 = vmatprep.subr.mxu0 0.0
    %v4735 = vand.u32 %v4531, 4294901760
    %v4736 = vsub.f32 %v4531, %v4735
    %4737 = vmatpush1.msra.mxu0 %v4736
    %4738 = vmatprep.subr.mxu0 0.0
    %v4739 = vand.u32 %v4530, 4294901760
    %v4740 = vsub.f32 %v4530, %v4739
    %4741 = vmatpush1.msra.mxu0 %v4740
    %4742 = vmatprep.subr.mxu0 0.0
    %4743 = vmatpush2.msra.mxu0 0.0
    %4744 = vmatprep.subr.mxu0 0.0
    %4745 = vmatpush2.msra.mxu0 0.0
    %4746 = vmatprep.subr.mxu0 0.0
    %4747 = vmatpush2.msra.mxu0 0.0
    %4748 = vmatprep.subr.mxu0 0.0
    %4749 = vmatpush2.msra.mxu0 0.0
    %4750 = vmatprep.subr.mxu0 0.0
    %4751 = vmatpush2.msra.mxu0 0.0
    %4752 = vmatprep.subr.mxu0 0.0
    %4753 = vmatpush2.msra.mxu0 0.0
    %4754 = vmatprep.subr.mxu0 0.0
    %4755 = vmatpush2.msra.mxu0 0.0
    %4756 = vmatprep.subr.mxu0 0.0
    %4757 = vmatpush2.msra.mxu0 0.0
    %4758 = vmatprep.subr.mxu0 0.0
    %4759 = vmatpush2.msra.mxu0 0.0
    %4760 = vmatprep.subr.mxu0 0.0
    %4761 = vmatpush2.msra.mxu0 0.0
    %4762 = vmatprep.subr.mxu0 0.0
    %4763 = vmatpush2.msra.mxu0 0.0
    %4764 = vmatprep.subr.mxu0 0.0
    %4765 = vmatpush2.msra.mxu0 0.0
    %4766 = vmatprep.subr.mxu0 0.0
    %4767 = vmatpush2.msra.mxu0 0.0
    %4768 = vmatprep.subr.mxu0 0.0
    %4769 = vmatpush2.msra.mxu0 0.0
    %4770 = vmatprep.subr.mxu0 0.0
    %4771 = vmatpush2.msra.mxu0 0.0
    %4772 = vmatprep.subr.mxu0 0.0
    %4773 = vmatpush2.msra.mxu0 0.0
    %4774 = vmatprep.mubr.f32.mxu0 0.0
    %v4775 = vand.u32 %v2482, 4294901760
    %v4776 = vsub.f32 %v2482, %v4775
    %4777 = vmatmul.mubr.f32.gmra.mxu0 %v4776
    %v4778 = vpop.f32.mrf.mxu0
    %v4779 = vadd.f32 %v4697, %v4778
    %v4780 = vpop.f32.mrf.mxu0
    %4781 = vmatprep.mubr.f32.mxu0 0.0
    %v4782 = vand.u32 %v2485, 4294901760
    %v4783 = vsub.f32 %v2485, %v4782
    %4784 = vmatmul.mubr.f32.gmra.mxu0 %v4783
    %v4785 = vpop.f32.mrf.mxu0
    %v4786 = vadd.f32 %v4703, %v4785
    %v4787 = vpop.f32.mrf.mxu0
    %4788 = vdwg.mxu0
    %4789 = vmatprep.subr.mxu0 0.0
    %4790 = vmatpush1.msra.mxu0 0.0
    %4791 = vmatprep.subr.mxu0 0.0
    %4792 = vmatpush1.msra.mxu0 0.0
    %4793 = vmatprep.subr.mxu0 0.0
    %4794 = vmatpush1.msra.mxu0 0.0
    %4795 = vmatprep.subr.mxu0 0.0
    %4796 = vmatpush1.msra.mxu0 0.0
    %4797 = vmatprep.subr.mxu0 0.0
    %4798 = vmatpush1.msra.mxu0 0.0
    %4799 = vmatprep.subr.mxu0 0.0
    %4800 = vmatpush1.msra.mxu0 0.0
    %4801 = vmatprep.subr.mxu0 0.0
    %4802 = vmatpush1.msra.mxu0 0.0
    %4803 = vmatprep.subr.mxu0 0.0
    %4804 = vmatpush1.msra.mxu0 0.0
    %4805 = vmatprep.subr.mxu0 0.0
    %4806 = vmatpush1.msra.mxu0 0.0
    %4807 = vmatprep.subr.mxu0 0.0
    %4808 = vmatpush1.msra.mxu0 0.0
    %4809 = vmatprep.subr.mxu0 0.0
    %4810 = vmatpush1.msra.mxu0 0.0
    %4811 = vmatprep.subr.mxu0 0.0
    %4812 = vmatpush1.msra.mxu0 0.0
    %4813 = vmatprep.subr.mxu0 0.0
    %4814 = vmatpush1.msra.mxu0 0.0
    %4815 = vmatprep.subr.mxu0 0.0
    %4816 = vmatpush1.msra.mxu0 0.0
    %4817 = vmatprep.subr.mxu0 0.0
    %v4818 = vand.u32 %v4531, 4294901760
    %4819 = vmatpush1.msra.mxu0 %v4818
    %4820 = vmatprep.subr.mxu0 0.0
    %v4821 = vand.u32 %v4530, 4294901760
    %4822 = vmatpush1.msra.mxu0 %v4821
    %4823 = vmatprep.subr.mxu0 0.0
    %4824 = vmatpush2.msra.mxu0 0.0
    %4825 = vmatprep.subr.mxu0 0.0
    %4826 = vmatpush2.msra.mxu0 0.0
    %4827 = vmatprep.subr.mxu0 0.0
    %4828 = vmatpush2.msra.mxu0 0.0
    %4829 = vmatprep.subr.mxu0 0.0
    %4830 = vmatpush2.msra.mxu0 0.0
    %4831 = vmatprep.subr.mxu0 0.0
    %4832 = vmatpush2.msra.mxu0 0.0
    %4833 = vmatprep.subr.mxu0 0.0
    %4834 = vmatpush2.msra.mxu0 0.0
    %4835 = vmatprep.subr.mxu0 0.0
    %4836 = vmatpush2.msra.mxu0 0.0
    %4837 = vmatprep.subr.mxu0 0.0
    %4838 = vmatpush2.msra.mxu0 0.0
    %4839 = vmatprep.subr.mxu0 0.0
    %4840 = vmatpush2.msra.mxu0 0.0
    %4841 = vmatprep.subr.mxu0 0.0
    %4842 = vmatpush2.msra.mxu0 0.0
    %4843 = vmatprep.subr.mxu0 0.0
    %4844 = vmatpush2.msra.mxu0 0.0
    %4845 = vmatprep.subr.mxu0 0.0
    %4846 = vmatpush2.msra.mxu0 0.0
    %4847 = vmatprep.subr.mxu0 0.0
    %4848 = vmatpush2.msra.mxu0 0.0
    %4849 = vmatprep.subr.mxu0 0.0
    %4850 = vmatpush2.msra.mxu0 0.0
    %4851 = vmatprep.subr.mxu0 0.0
    %4852 = vmatpush2.msra.mxu0 0.0
    %4853 = vmatprep.subr.mxu0 0.0
    %4854 = vmatpush2.msra.mxu0 0.0
    %4855 = vmatprep.mubr.f32.mxu0 0.0
    %v4856 = vand.u32 %v2482, 4294901760
    %v4857 = vsub.f32 %v2482, %v4856
    %v4858 = vand.u32 %v4857, 4294901760
    %4859 = vmatmul.mubr.f32.gmra.mxu0 %v4858
    %v4860 = vpop.f32.mrf.mxu0
    %v4861 = vadd.f32 %v4779, %v4860
    %v4862 = vpop.f32.mrf.mxu0
    %4863 = vmatprep.mubr.f32.mxu0 0.0
    %v4864 = vand.u32 %v2485, 4294901760
    %v4865 = vsub.f32 %v2485, %v4864
    %v4866 = vand.u32 %v4865, 4294901760
    %4867 = vmatmul.mubr.f32.gmra.mxu0 %v4866
    %v4868 = vpop.f32.mrf.mxu0
    %v4869 = vadd.f32 %v4786, %v4868
    %v4870 = vpop.f32.mrf.mxu0
    %4871 = vdwg.mxu0
    %4872 = vmatprep.subr.mxu0 0.0
    %4873 = vmatpush1.msra.mxu0 0.0
    %4874 = vmatprep.subr.mxu0 0.0
    %4875 = vmatpush1.msra.mxu0 0.0
    %4876 = vmatprep.subr.mxu0 0.0
    %4877 = vmatpush1.msra.mxu0 0.0
    %4878 = vmatprep.subr.mxu0 0.0
    %4879 = vmatpush1.msra.mxu0 0.0
    %4880 = vmatprep.subr.mxu0 0.0
    %4881 = vmatpush1.msra.mxu0 0.0
    %4882 = vmatprep.subr.mxu0 0.0
    %4883 = vmatpush1.msra.mxu0 0.0
    %4884 = vmatprep.subr.mxu0 0.0
    %4885 = vmatpush1.msra.mxu0 0.0
    %4886 = vmatprep.subr.mxu0 0.0
    %4887 = vmatpush1.msra.mxu0 0.0
    %4888 = vmatprep.subr.mxu0 0.0
    %4889 = vmatpush1.msra.mxu0 0.0
    %4890 = vmatprep.subr.mxu0 0.0
    %4891 = vmatpush1.msra.mxu0 0.0
    %4892 = vmatprep.subr.mxu0 0.0
    %4893 = vmatpush1.msra.mxu0 0.0
    %4894 = vmatprep.subr.mxu0 0.0
    %4895 = vmatpush1.msra.mxu0 0.0
    %4896 = vmatprep.subr.mxu0 0.0
    %4897 = vmatpush1.msra.mxu0 0.0
    %4898 = vmatprep.subr.mxu0 0.0
    %4899 = vmatpush1.msra.mxu0 0.0
    %4900 = vmatprep.subr.mxu0 0.0
    %v4901 = vand.u32 %v4531, 4294901760
    %v4902 = vsub.f32 %v4531, %v4901
    %v4903 = vand.u32 %v4902, 4294901760
    %4904 = vmatpush1.msra.mxu0 %v4903
    %4905 = vmatprep.subr.mxu0 0.0
    %v4906 = vand.u32 %v4530, 4294901760
    %v4907 = vsub.f32 %v4530, %v4906
    %v4908 = vand.u32 %v4907, 4294901760
    %4909 = vmatpush1.msra.mxu0 %v4908
    %4910 = vmatprep.subr.mxu0 0.0
    %4911 = vmatpush2.msra.mxu0 0.0
    %4912 = vmatprep.subr.mxu0 0.0
    %4913 = vmatpush2.msra.mxu0 0.0
    %4914 = vmatprep.subr.mxu0 0.0
    %4915 = vmatpush2.msra.mxu0 0.0
    %4916 = vmatprep.subr.mxu0 0.0
    %4917 = vmatpush2.msra.mxu0 0.0
    %4918 = vmatprep.subr.mxu0 0.0
    %4919 = vmatpush2.msra.mxu0 0.0
    %4920 = vmatprep.subr.mxu0 0.0
    %4921 = vmatpush2.msra.mxu0 0.0
    %4922 = vmatprep.subr.mxu0 0.0
    %4923 = vmatpush2.msra.mxu0 0.0
    %4924 = vmatprep.subr.mxu0 0.0
    %4925 = vmatpush2.msra.mxu0 0.0
    %4926 = vmatprep.subr.mxu0 0.0
    %4927 = vmatpush2.msra.mxu0 0.0
    %4928 = vmatprep.subr.mxu0 0.0
    %4929 = vmatpush2.msra.mxu0 0.0
    %4930 = vmatprep.subr.mxu0 0.0
    %4931 = vmatpush2.msra.mxu0 0.0
    %4932 = vmatprep.subr.mxu0 0.0
    %4933 = vmatpush2.msra.mxu0 0.0
    %4934 = vmatprep.subr.mxu0 0.0
    %4935 = vmatpush2.msra.mxu0 0.0
    %4936 = vmatprep.subr.mxu0 0.0
    %4937 = vmatpush2.msra.mxu0 0.0
    %4938 = vmatprep.subr.mxu0 0.0
    %4939 = vmatpush2.msra.mxu0 0.0
    %4940 = vmatprep.subr.mxu0 0.0
    %4941 = vmatpush2.msra.mxu0 0.0
    %4942 = vmatprep.mubr.f32.mxu0 0.0
    %v4943 = vand.u32 %v2482, 4294901760
    %4944 = vmatmul.mubr.f32.gmra.mxu0 %v4943
    %v4945 = vpop.f32.mrf.mxu0
    %v4946 = vadd.f32 %v4861, %v4945
    %v4947 = vpop.f32.mrf.mxu0
    %4948 = vmatprep.mubr.f32.mxu0 0.0
    %v4949 = vand.u32 %v2485, 4294901760
    %4950 = vmatmul.mubr.f32.gmra.mxu0 %v4949
    %v4951 = vpop.f32.mrf.mxu0
    %v4952 = vadd.f32 %v4869, %v4951
    %v4953 = vpop.f32.mrf.mxu0
    %4954 = vdwg.mxu0
    %4955 = vmatprep.subr.mxu0 0.0
    %4956 = vmatpush1.msra.mxu0 0.0
    %4957 = vmatprep.subr.mxu0 0.0
    %4958 = vmatpush1.msra.mxu0 0.0
    %4959 = vmatprep.subr.mxu0 0.0
    %4960 = vmatpush1.msra.mxu0 0.0
    %4961 = vmatprep.subr.mxu0 0.0
    %4962 = vmatpush1.msra.mxu0 0.0
    %4963 = vmatprep.subr.mxu0 0.0
    %4964 = vmatpush1.msra.mxu0 0.0
    %4965 = vmatprep.subr.mxu0 0.0
    %4966 = vmatpush1.msra.mxu0 0.0
    %4967 = vmatprep.subr.mxu0 0.0
    %4968 = vmatpush1.msra.mxu0 0.0
    %4969 = vmatprep.subr.mxu0 0.0
    %4970 = vmatpush1.msra.mxu0 0.0
    %4971 = vmatprep.subr.mxu0 0.0
    %4972 = vmatpush1.msra.mxu0 0.0
    %4973 = vmatprep.subr.mxu0 0.0
    %4974 = vmatpush1.msra.mxu0 0.0
    %4975 = vmatprep.subr.mxu0 0.0
    %4976 = vmatpush1.msra.mxu0 0.0
    %4977 = vmatprep.subr.mxu0 0.0
    %4978 = vmatpush1.msra.mxu0 0.0
    %4979 = vmatprep.subr.mxu0 0.0
    %4980 = vmatpush1.msra.mxu0 0.0
    %4981 = vmatprep.subr.mxu0 0.0
    %4982 = vmatpush1.msra.mxu0 0.0
    %4983 = vmatprep.subr.mxu0 0.0
    %v4984 = vand.u32 %v4531, 4294901760
    %4985 = vmatpush1.msra.mxu0 %v4984
    %4986 = vmatprep.subr.mxu0 0.0
    %v4987 = vand.u32 %v4530, 4294901760
    %4988 = vmatpush1.msra.mxu0 %v4987
    %4989 = vmatprep.subr.mxu0 0.0
    %4990 = vmatpush2.msra.mxu0 0.0
    %4991 = vmatprep.subr.mxu0 0.0
    %4992 = vmatpush2.msra.mxu0 0.0
    %4993 = vmatprep.subr.mxu0 0.0
    %4994 = vmatpush2.msra.mxu0 0.0
    %4995 = vmatprep.subr.mxu0 0.0
    %4996 = vmatpush2.msra.mxu0 0.0
    %4997 = vmatprep.subr.mxu0 0.0
    %4998 = vmatpush2.msra.mxu0 0.0
    %4999 = vmatprep.subr.mxu0 0.0
    %5000 = vmatpush2.msra.mxu0 0.0
    %5001 = vmatprep.subr.mxu0 0.0
    %5002 = vmatpush2.msra.mxu0 0.0
    %5003 = vmatprep.subr.mxu0 0.0
    %5004 = vmatpush2.msra.mxu0 0.0
    %5005 = vmatprep.subr.mxu0 0.0
    %5006 = vmatpush2.msra.mxu0 0.0
    %5007 = vmatprep.subr.mxu0 0.0
    %5008 = vmatpush2.msra.mxu0 0.0
    %5009 = vmatprep.subr.mxu0 0.0
    %5010 = vmatpush2.msra.mxu0 0.0
    %5011 = vmatprep.subr.mxu0 0.0
    %5012 = vmatpush2.msra.mxu0 0.0
    %5013 = vmatprep.subr.mxu0 0.0
    %5014 = vmatpush2.msra.mxu0 0.0
    %5015 = vmatprep.subr.mxu0 0.0
    %5016 = vmatpush2.msra.mxu0 0.0
    %5017 = vmatprep.subr.mxu0 0.0
    %5018 = vmatpush2.msra.mxu0 0.0
    %5019 = vmatprep.subr.mxu0 0.0
    %5020 = vmatpush2.msra.mxu0 0.0
    %5021 = vmatprep.mubr.f32.mxu0 0.0
    %v5022 = vand.u32 %v2482, 4294901760
    %5023 = vmatmul.mubr.f32.gmra.mxu0 %v5022
    %v5024 = vpop.f32.mrf.mxu0
    %v5025 = vadd.f32 %v4946, %v5024
    %v5026 = vpop.f32.mrf.mxu0
    %5027 = vmatprep.mubr.f32.mxu0 0.0
    %v5028 = vand.u32 %v2485, 4294901760
    %5029 = vmatmul.mubr.f32.gmra.mxu0 %v5028
    %v5030 = vpop.f32.mrf.mxu0
    %v5031 = vadd.f32 %v4952, %v5030
    %v5032 = vpop.f32.mrf.mxu0
    %5033 = vdwg.mxu0
    %s5034 = scalar_lea.vmem [#allocation14], 32
    %v5035 = vld [vmem:[%s5034] sm:$0xff]
    %v5036 = vld [vmem:[%s5034 + $0x8] sm:$0xff]
    %v5038 = vsel %vm2480, %v5035, 0
    %v5041 = vsel %vm2480, %v5036, 0
    %5043 = vmatprep.subr.mxu0 0.0
    %5044 = vmatpush1.msra.mxu0 0.0
    %5045 = vmatprep.subr.mxu0 0.0
    %5046 = vmatpush1.msra.mxu0 0.0
    %5047 = vmatprep.subr.mxu0 0.0
    %5048 = vmatpush1.msra.mxu0 0.0
    %5049 = vmatprep.subr.mxu0 0.0
    %5050 = vmatpush1.msra.mxu0 0.0
    %5051 = vmatprep.subr.mxu0 0.0
    %5052 = vmatpush1.msra.mxu0 0.0
    %5053 = vmatprep.subr.mxu0 0.0
    %5054 = vmatpush1.msra.mxu0 0.0
    %5055 = vmatprep.subr.mxu0 0.0
    %5056 = vmatpush1.msra.mxu0 0.0
    %5057 = vmatprep.subr.mxu0 0.0
    %5058 = vmatpush1.msra.mxu0 0.0
    %5059 = vmatprep.subr.mxu0 0.0
    %5060 = vmatpush1.msra.mxu0 0.0
    %5061 = vmatprep.subr.mxu0 0.0
    %5062 = vmatpush1.msra.mxu0 0.0
    %5063 = vmatprep.subr.mxu0 0.0
    %5064 = vmatpush1.msra.mxu0 0.0
    %5065 = vmatprep.subr.mxu0 0.0
    %5066 = vmatpush1.msra.mxu0 0.0
    %5067 = vmatprep.subr.mxu0 0.0
    %5068 = vmatpush1.msra.mxu0 0.0
    %5069 = vmatprep.subr.mxu0 0.0
    %5070 = vmatpush1.msra.mxu0 0.0
    %5071 = vmatprep.subr.mxu0 0.0
    %v5072 = vand.u32 %v2994, 4294901760
    %5073 = vmatpush1.msra.mxu0 %v5072
    %5074 = vmatprep.subr.mxu0 0.0
    %v5075 = vand.u32 %v2992, 4294901760
    %5076 = vmatpush1.msra.mxu0 %v5075
    %5077 = vmatprep.subr.mxu0 0.0
    %5078 = vmatpush2.msra.mxu0 0.0
    %5079 = vmatprep.subr.mxu0 0.0
    %5080 = vmatpush2.msra.mxu0 0.0
    %5081 = vmatprep.subr.mxu0 0.0
    %5082 = vmatpush2.msra.mxu0 0.0
    %5083 = vmatprep.subr.mxu0 0.0
    %5084 = vmatpush2.msra.mxu0 0.0
    %5085 = vmatprep.subr.mxu0 0.0
    %5086 = vmatpush2.msra.mxu0 0.0
    %5087 = vmatprep.subr.mxu0 0.0
    %5088 = vmatpush2.msra.mxu0 0.0
    %5089 = vmatprep.subr.mxu0 0.0
    %5090 = vmatpush2.msra.mxu0 0.0
    %5091 = vmatprep.subr.mxu0 0.0
    %5092 = vmatpush2.msra.mxu0 0.0
    %5093 = vmatprep.subr.mxu0 0.0
    %5094 = vmatpush2.msra.mxu0 0.0
    %5095 = vmatprep.subr.mxu0 0.0
    %5096 = vmatpush2.msra.mxu0 0.0
    %5097 = vmatprep.subr.mxu0 0.0
    %5098 = vmatpush2.msra.mxu0 0.0
    %5099 = vmatprep.subr.mxu0 0.0
    %5100 = vmatpush2.msra.mxu0 0.0
    %5101 = vmatprep.subr.mxu0 0.0
    %5102 = vmatpush2.msra.mxu0 0.0
    %5103 = vmatprep.subr.mxu0 0.0
    %5104 = vmatpush2.msra.mxu0 0.0
    %5105 = vmatprep.subr.mxu0 0.0
    %5106 = vmatpush2.msra.mxu0 0.0
    %5107 = vmatprep.subr.mxu0 0.0
    %5108 = vmatpush2.msra.mxu0 0.0
    %5109 = vmatprep.mubr.f32.mxu0 0.0
    %v5110 = vand.u32 %v5038, 4294901760
    %v5111 = vsub.f32 %v5038, %v5110
    %v5112 = vand.u32 %v5111, 4294901760
    %v5113 = vsub.f32 %v5111, %v5112
    %v5114 = vand.u32 %v5113, 4294901760
    %5115 = vmatmul.mubr.f32.gmra.mxu0 %v5114
    %v5116 = vpop.f32.mrf.mxu0
    %v5117 = vadd.f32 0.0, %v5116
    %v5118 = vpop.f32.mrf.mxu0
    %5119 = vmatprep.mubr.f32.mxu0 0.0
    %v5120 = vand.u32 %v5041, 4294901760
    %v5121 = vsub.f32 %v5041, %v5120
    %v5122 = vand.u32 %v5121, 4294901760
    %v5123 = vsub.f32 %v5121, %v5122
    %v5124 = vand.u32 %v5123, 4294901760
    %5125 = vmatmul.mubr.f32.gmra.mxu0 %v5124
    %v5126 = vpop.f32.mrf.mxu0
    %v5127 = vadd.f32 0.0, %v5126
    %v5128 = vpop.f32.mrf.mxu0
    %5129 = vdwg.mxu0
    %5130 = vmatprep.subr.mxu0 0.0
    %5131 = vmatpush1.msra.mxu0 0.0
    %5132 = vmatprep.subr.mxu0 0.0
    %5133 = vmatpush1.msra.mxu0 0.0
    %5134 = vmatprep.subr.mxu0 0.0
    %5135 = vmatpush1.msra.mxu0 0.0
    %5136 = vmatprep.subr.mxu0 0.0
    %5137 = vmatpush1.msra.mxu0 0.0
    %5138 = vmatprep.subr.mxu0 0.0
    %5139 = vmatpush1.msra.mxu0 0.0
    %5140 = vmatprep.subr.mxu0 0.0
    %5141 = vmatpush1.msra.mxu0 0.0
    %5142 = vmatprep.subr.mxu0 0.0
    %5143 = vmatpush1.msra.mxu0 0.0
    %5144 = vmatprep.subr.mxu0 0.0
    %5145 = vmatpush1.msra.mxu0 0.0
    %5146 = vmatprep.subr.mxu0 0.0
    %5147 = vmatpush1.msra.mxu0 0.0
    %5148 = vmatprep.subr.mxu0 0.0
    %5149 = vmatpush1.msra.mxu0 0.0
    %5150 = vmatprep.subr.mxu0 0.0
    %5151 = vmatpush1.msra.mxu0 0.0
    %5152 = vmatprep.subr.mxu0 0.0
    %5153 = vmatpush1.msra.mxu0 0.0
    %5154 = vmatprep.subr.mxu0 0.0
    %5155 = vmatpush1.msra.mxu0 0.0
    %5156 = vmatprep.subr.mxu0 0.0
    %5157 = vmatpush1.msra.mxu0 0.0
    %5158 = vmatprep.subr.mxu0 0.0
    %v5159 = vand.u32 %v2994, 4294901760
    %v5160 = vsub.f32 %v2994, %v5159
    %v5161 = vand.u32 %v5160, 4294901760
    %v5162 = vsub.f32 %v5160, %v5161
    %v5163 = vand.u32 %v5162, 4294901760
    %5164 = vmatpush1.msra.mxu0 %v5163
    %5165 = vmatprep.subr.mxu0 0.0
    %v5166 = vand.u32 %v2992, 4294901760
    %v5167 = vsub.f32 %v2992, %v5166
    %v5168 = vand.u32 %v5167, 4294901760
    %v5169 = vsub.f32 %v5167, %v5168
    %v5170 = vand.u32 %v5169, 4294901760
    %5171 = vmatpush1.msra.mxu0 %v5170
    %5172 = vmatprep.subr.mxu0 0.0
    %5173 = vmatpush2.msra.mxu0 0.0
    %5174 = vmatprep.subr.mxu0 0.0
    %5175 = vmatpush2.msra.mxu0 0.0
    %5176 = vmatprep.subr.mxu0 0.0
    %5177 = vmatpush2.msra.mxu0 0.0
    %5178 = vmatprep.subr.mxu0 0.0
    %5179 = vmatpush2.msra.mxu0 0.0
    %5180 = vmatprep.subr.mxu0 0.0
    %5181 = vmatpush2.msra.mxu0 0.0
    %5182 = vmatprep.subr.mxu0 0.0
    %5183 = vmatpush2.msra.mxu0 0.0
    %5184 = vmatprep.subr.mxu0 0.0
    %5185 = vmatpush2.msra.mxu0 0.0
    %5186 = vmatprep.subr.mxu0 0.0
    %5187 = vmatpush2.msra.mxu0 0.0
    %5188 = vmatprep.subr.mxu0 0.0
    %5189 = vmatpush2.msra.mxu0 0.0
    %5190 = vmatprep.subr.mxu0 0.0
    %5191 = vmatpush2.msra.mxu0 0.0
    %5192 = vmatprep.subr.mxu0 0.0
    %5193 = vmatpush2.msra.mxu0 0.0
    %5194 = vmatprep.subr.mxu0 0.0
    %5195 = vmatpush2.msra.mxu0 0.0
    %5196 = vmatprep.subr.mxu0 0.0
    %5197 = vmatpush2.msra.mxu0 0.0
    %5198 = vmatprep.subr.mxu0 0.0
    %5199 = vmatpush2.msra.mxu0 0.0
    %5200 = vmatprep.subr.mxu0 0.0
    %5201 = vmatpush2.msra.mxu0 0.0
    %5202 = vmatprep.subr.mxu0 0.0
    %5203 = vmatpush2.msra.mxu0 0.0
    %5204 = vmatprep.mubr.f32.mxu0 0.0
    %v5205 = vand.u32 %v5038, 4294901760
    %5206 = vmatmul.mubr.f32.gmra.mxu0 %v5205
    %v5207 = vpop.f32.mrf.mxu0
    %v5208 = vadd.f32 %v5117, %v5207
    %v5209 = vpop.f32.mrf.mxu0
    %5210 = vmatprep.mubr.f32.mxu0 0.0
    %v5211 = vand.u32 %v5041, 4294901760
    %5212 = vmatmul.mubr.f32.gmra.mxu0 %v5211
    %v5213 = vpop.f32.mrf.mxu0
    %v5214 = vadd.f32 %v5127, %v5213
    %v5215 = vpop.f32.mrf.mxu0
    %5216 = vdwg.mxu0
    %5217 = vmatprep.subr.mxu0 0.0
    %5218 = vmatpush1.msra.mxu0 0.0
    %5219 = vmatprep.subr.mxu0 0.0
    %5220 = vmatpush1.msra.mxu0 0.0
    %5221 = vmatprep.subr.mxu0 0.0
    %5222 = vmatpush1.msra.mxu0 0.0
    %5223 = vmatprep.subr.mxu0 0.0
    %5224 = vmatpush1.msra.mxu0 0.0
    %5225 = vmatprep.subr.mxu0 0.0
    %5226 = vmatpush1.msra.mxu0 0.0
    %5227 = vmatprep.subr.mxu0 0.0
    %5228 = vmatpush1.msra.mxu0 0.0
    %5229 = vmatprep.subr.mxu0 0.0
    %5230 = vmatpush1.msra.mxu0 0.0
    %5231 = vmatprep.subr.mxu0 0.0
    %5232 = vmatpush1.msra.mxu0 0.0
    %5233 = vmatprep.subr.mxu0 0.0
    %5234 = vmatpush1.msra.mxu0 0.0
    %5235 = vmatprep.subr.mxu0 0.0
    %5236 = vmatpush1.msra.mxu0 0.0
    %5237 = vmatprep.subr.mxu0 0.0
    %5238 = vmatpush1.msra.mxu0 0.0
    %5239 = vmatprep.subr.mxu0 0.0
    %5240 = vmatpush1.msra.mxu0 0.0
    %5241 = vmatprep.subr.mxu0 0.0
    %5242 = vmatpush1.msra.mxu0 0.0
    %5243 = vmatprep.subr.mxu0 0.0
    %5244 = vmatpush1.msra.mxu0 0.0
    %5245 = vmatprep.subr.mxu0 0.0
    %v5246 = vand.u32 %v2994, 4294901760
    %v5247 = vsub.f32 %v2994, %v5246
    %5248 = vmatpush1.msra.mxu0 %v5247
    %5249 = vmatprep.subr.mxu0 0.0
    %v5250 = vand.u32 %v2992, 4294901760
    %v5251 = vsub.f32 %v2992, %v5250
    %5252 = vmatpush1.msra.mxu0 %v5251
    %5253 = vmatprep.subr.mxu0 0.0
    %5254 = vmatpush2.msra.mxu0 0.0
    %5255 = vmatprep.subr.mxu0 0.0
    %5256 = vmatpush2.msra.mxu0 0.0
    %5257 = vmatprep.subr.mxu0 0.0
    %5258 = vmatpush2.msra.mxu0 0.0
    %5259 = vmatprep.subr.mxu0 0.0
    %5260 = vmatpush2.msra.mxu0 0.0
    %5261 = vmatprep.subr.mxu0 0.0
    %5262 = vmatpush2.msra.mxu0 0.0
    %5263 = vmatprep.subr.mxu0 0.0
    %5264 = vmatpush2.msra.mxu0 0.0
    %5265 = vmatprep.subr.mxu0 0.0
    %5266 = vmatpush2.msra.mxu0 0.0
    %5267 = vmatprep.subr.mxu0 0.0
    %5268 = vmatpush2.msra.mxu0 0.0
    %5269 = vmatprep.subr.mxu0 0.0
    %5270 = vmatpush2.msra.mxu0 0.0
    %5271 = vmatprep.subr.mxu0 0.0
    %5272 = vmatpush2.msra.mxu0 0.0
    %5273 = vmatprep.subr.mxu0 0.0
    %5274 = vmatpush2.msra.mxu0 0.0
    %5275 = vmatprep.subr.mxu0 0.0
    %5276 = vmatpush2.msra.mxu0 0.0
    %5277 = vmatprep.subr.mxu0 0.0
    %5278 = vmatpush2.msra.mxu0 0.0
    %5279 = vmatprep.subr.mxu0 0.0
    %5280 = vmatpush2.msra.mxu0 0.0
    %5281 = vmatprep.subr.mxu0 0.0
    %5282 = vmatpush2.msra.mxu0 0.0
    %5283 = vmatprep.subr.mxu0 0.0
    %5284 = vmatpush2.msra.mxu0 0.0
    %5285 = vmatprep.mubr.f32.mxu0 0.0
    %v5286 = vand.u32 %v5038, 4294901760
    %v5287 = vsub.f32 %v5038, %v5286
    %5288 = vmatmul.mubr.f32.gmra.mxu0 %v5287
    %v5289 = vpop.f32.mrf.mxu0
    %v5290 = vadd.f32 %v5208, %v5289
    %v5291 = vpop.f32.mrf.mxu0
    %5292 = vmatprep.mubr.f32.mxu0 0.0
    %v5293 = vand.u32 %v5041, 4294901760
    %v5294 = vsub.f32 %v5041, %v5293
    %5295 = vmatmul.mubr.f32.gmra.mxu0 %v5294
    %v5296 = vpop.f32.mrf.mxu0
    %v5297 = vadd.f32 %v5214, %v5296
    %v5298 = vpop.f32.mrf.mxu0
    %5299 = vdwg.mxu0
    %5300 = vmatprep.subr.mxu0 0.0
    %5301 = vmatpush1.msra.mxu0 0.0
    %5302 = vmatprep.subr.mxu0 0.0
    %5303 = vmatpush1.msra.mxu0 0.0
    %5304 = vmatprep.subr.mxu0 0.0
    %5305 = vmatpush1.msra.mxu0 0.0
    %5306 = vmatprep.subr.mxu0 0.0
    %5307 = vmatpush1.msra.mxu0 0.0
    %5308 = vmatprep.subr.mxu0 0.0
    %5309 = vmatpush1.msra.mxu0 0.0
    %5310 = vmatprep.subr.mxu0 0.0
    %5311 = vmatpush1.msra.mxu0 0.0
    %5312 = vmatprep.subr.mxu0 0.0
    %5313 = vmatpush1.msra.mxu0 0.0
    %5314 = vmatprep.subr.mxu0 0.0
    %5315 = vmatpush1.msra.mxu0 0.0
    %5316 = vmatprep.subr.mxu0 0.0
    %5317 = vmatpush1.msra.mxu0 0.0
    %5318 = vmatprep.subr.mxu0 0.0
    %5319 = vmatpush1.msra.mxu0 0.0
    %5320 = vmatprep.subr.mxu0 0.0
    %5321 = vmatpush1.msra.mxu0 0.0
    %5322 = vmatprep.subr.mxu0 0.0
    %5323 = vmatpush1.msra.mxu0 0.0
    %5324 = vmatprep.subr.mxu0 0.0
    %5325 = vmatpush1.msra.mxu0 0.0
    %5326 = vmatprep.subr.mxu0 0.0
    %5327 = vmatpush1.msra.mxu0 0.0
    %5328 = vmatprep.subr.mxu0 0.0
    %v5329 = vand.u32 %v2994, 4294901760
    %5330 = vmatpush1.msra.mxu0 %v5329
    %5331 = vmatprep.subr.mxu0 0.0
    %v5332 = vand.u32 %v2992, 4294901760
    %5333 = vmatpush1.msra.mxu0 %v5332
    %5334 = vmatprep.subr.mxu0 0.0
    %5335 = vmatpush2.msra.mxu0 0.0
    %5336 = vmatprep.subr.mxu0 0.0
    %5337 = vmatpush2.msra.mxu0 0.0
    %5338 = vmatprep.subr.mxu0 0.0
    %5339 = vmatpush2.msra.mxu0 0.0
    %5340 = vmatprep.subr.mxu0 0.0
    %5341 = vmatpush2.msra.mxu0 0.0
    %5342 = vmatprep.subr.mxu0 0.0
    %5343 = vmatpush2.msra.mxu0 0.0
    %5344 = vmatprep.subr.mxu0 0.0
    %5345 = vmatpush2.msra.mxu0 0.0
    %5346 = vmatprep.subr.mxu0 0.0
    %5347 = vmatpush2.msra.mxu0 0.0
    %5348 = vmatprep.subr.mxu0 0.0
    %5349 = vmatpush2.msra.mxu0 0.0
    %5350 = vmatprep.subr.mxu0 0.0
    %5351 = vmatpush2.msra.mxu0 0.0
    %5352 = vmatprep.subr.mxu0 0.0
    %5353 = vmatpush2.msra.mxu0 0.0
    %5354 = vmatprep.subr.mxu0 0.0
    %5355 = vmatpush2.msra.mxu0 0.0
    %5356 = vmatprep.subr.mxu0 0.0
    %5357 = vmatpush2.msra.mxu0 0.0
    %5358 = vmatprep.subr.mxu0 0.0
    %5359 = vmatpush2.msra.mxu0 0.0
    %5360 = vmatprep.subr.mxu0 0.0
    %5361 = vmatpush2.msra.mxu0 0.0
    %5362 = vmatprep.subr.mxu0 0.0
    %5363 = vmatpush2.msra.mxu0 0.0
    %5364 = vmatprep.subr.mxu0 0.0
    %5365 = vmatpush2.msra.mxu0 0.0
    %5366 = vmatprep.mubr.f32.mxu0 0.0
    %v5367 = vand.u32 %v5038, 4294901760
    %v5368 = vsub.f32 %v5038, %v5367
    %v5369 = vand.u32 %v5368, 4294901760
    %5370 = vmatmul.mubr.f32.gmra.mxu0 %v5369
    %v5371 = vpop.f32.mrf.mxu0
    %v5372 = vadd.f32 %v5290, %v5371
    %v5373 = vpop.f32.mrf.mxu0
    %5374 = vmatprep.mubr.f32.mxu0 0.0
    %v5375 = vand.u32 %v5041, 4294901760
    %v5376 = vsub.f32 %v5041, %v5375
    %v5377 = vand.u32 %v5376, 4294901760
    %5378 = vmatmul.mubr.f32.gmra.mxu0 %v5377
    %v5379 = vpop.f32.mrf.mxu0
    %v5380 = vadd.f32 %v5297, %v5379
    %v5381 = vpop.f32.mrf.mxu0
    %5382 = vdwg.mxu0
    %5383 = vmatprep.subr.mxu0 0.0
    %5384 = vmatpush1.msra.mxu0 0.0
    %5385 = vmatprep.subr.mxu0 0.0
    %5386 = vmatpush1.msra.mxu0 0.0
    %5387 = vmatprep.subr.mxu0 0.0
    %5388 = vmatpush1.msra.mxu0 0.0
    %5389 = vmatprep.subr.mxu0 0.0
    %5390 = vmatpush1.msra.mxu0 0.0
    %5391 = vmatprep.subr.mxu0 0.0
    %5392 = vmatpush1.msra.mxu0 0.0
    %5393 = vmatprep.subr.mxu0 0.0
    %5394 = vmatpush1.msra.mxu0 0.0
    %5395 = vmatprep.subr.mxu0 0.0
    %5396 = vmatpush1.msra.mxu0 0.0
    %5397 = vmatprep.subr.mxu0 0.0
    %5398 = vmatpush1.msra.mxu0 0.0
    %5399 = vmatprep.subr.mxu0 0.0
    %5400 = vmatpush1.msra.mxu0 0.0
    %5401 = vmatprep.subr.mxu0 0.0
    %5402 = vmatpush1.msra.mxu0 0.0
    %5403 = vmatprep.subr.mxu0 0.0
    %5404 = vmatpush1.msra.mxu0 0.0
    %5405 = vmatprep.subr.mxu0 0.0
    %5406 = vmatpush1.msra.mxu0 0.0
    %5407 = vmatprep.subr.mxu0 0.0
    %5408 = vmatpush1.msra.mxu0 0.0
    %5409 = vmatprep.subr.mxu0 0.0
    %5410 = vmatpush1.msra.mxu0 0.0
    %5411 = vmatprep.subr.mxu0 0.0
    %v5412 = vand.u32 %v2994, 4294901760
    %v5413 = vsub.f32 %v2994, %v5412
    %v5414 = vand.u32 %v5413, 4294901760
    %5415 = vmatpush1.msra.mxu0 %v5414
    %5416 = vmatprep.subr.mxu0 0.0
    %v5417 = vand.u32 %v2992, 4294901760
    %v5418 = vsub.f32 %v2992, %v5417
    %v5419 = vand.u32 %v5418, 4294901760
    %5420 = vmatpush1.msra.mxu0 %v5419
    %5421 = vmatprep.subr.mxu0 0.0
    %5422 = vmatpush2.msra.mxu0 0.0
    %5423 = vmatprep.subr.mxu0 0.0
    %5424 = vmatpush2.msra.mxu0 0.0
    %5425 = vmatprep.subr.mxu0 0.0
    %5426 = vmatpush2.msra.mxu0 0.0
    %5427 = vmatprep.subr.mxu0 0.0
    %5428 = vmatpush2.msra.mxu0 0.0
    %5429 = vmatprep.subr.mxu0 0.0
    %5430 = vmatpush2.msra.mxu0 0.0
    %5431 = vmatprep.subr.mxu0 0.0
    %5432 = vmatpush2.msra.mxu0 0.0
    %5433 = vmatprep.subr.mxu0 0.0
    %5434 = vmatpush2.msra.mxu0 0.0
    %5435 = vmatprep.subr.mxu0 0.0
    %5436 = vmatpush2.msra.mxu0 0.0
    %5437 = vmatprep.subr.mxu0 0.0
    %5438 = vmatpush2.msra.mxu0 0.0
    %5439 = vmatprep.subr.mxu0 0.0
    %5440 = vmatpush2.msra.mxu0 0.0
    %5441 = vmatprep.subr.mxu0 0.0
    %5442 = vmatpush2.msra.mxu0 0.0
    %5443 = vmatprep.subr.mxu0 0.0
    %5444 = vmatpush2.msra.mxu0 0.0
    %5445 = vmatprep.subr.mxu0 0.0
    %5446 = vmatpush2.msra.mxu0 0.0
    %5447 = vmatprep.subr.mxu0 0.0
    %5448 = vmatpush2.msra.mxu0 0.0
    %5449 = vmatprep.subr.mxu0 0.0
    %5450 = vmatpush2.msra.mxu0 0.0
    %5451 = vmatprep.subr.mxu0 0.0
    %5452 = vmatpush2.msra.mxu0 0.0
    %5453 = vmatprep.mubr.f32.mxu0 0.0
    %v5454 = vand.u32 %v5038, 4294901760
    %5455 = vmatmul.mubr.f32.gmra.mxu0 %v5454
    %v5456 = vpop.f32.mrf.mxu0
    %v5457 = vadd.f32 %v5372, %v5456
    %v5458 = vpop.f32.mrf.mxu0
    %5459 = vmatprep.mubr.f32.mxu0 0.0
    %v5460 = vand.u32 %v5041, 4294901760
    %5461 = vmatmul.mubr.f32.gmra.mxu0 %v5460
    %v5462 = vpop.f32.mrf.mxu0
    %v5463 = vadd.f32 %v5380, %v5462
    %v5464 = vpop.f32.mrf.mxu0
    %5465 = vdwg.mxu0
    %5466 = vmatprep.subr.mxu0 0.0
    %5467 = vmatpush1.msra.mxu0 0.0
    %5468 = vmatprep.subr.mxu0 0.0
    %5469 = vmatpush1.msra.mxu0 0.0
    %5470 = vmatprep.subr.mxu0 0.0
    %5471 = vmatpush1.msra.mxu0 0.0
    %5472 = vmatprep.subr.mxu0 0.0
    %5473 = vmatpush1.msra.mxu0 0.0
    %5474 = vmatprep.subr.mxu0 0.0
    %5475 = vmatpush1.msra.mxu0 0.0
    %5476 = vmatprep.subr.mxu0 0.0
    %5477 = vmatpush1.msra.mxu0 0.0
    %5478 = vmatprep.subr.mxu0 0.0
    %5479 = vmatpush1.msra.mxu0 0.0
    %5480 = vmatprep.subr.mxu0 0.0
    %5481 = vmatpush1.msra.mxu0 0.0
    %5482 = vmatprep.subr.mxu0 0.0
    %5483 = vmatpush1.msra.mxu0 0.0
    %5484 = vmatprep.subr.mxu0 0.0
    %5485 = vmatpush1.msra.mxu0 0.0
    %5486 = vmatprep.subr.mxu0 0.0
    %5487 = vmatpush1.msra.mxu0 0.0
    %5488 = vmatprep.subr.mxu0 0.0
    %5489 = vmatpush1.msra.mxu0 0.0
    %5490 = vmatprep.subr.mxu0 0.0
    %5491 = vmatpush1.msra.mxu0 0.0
    %5492 = vmatprep.subr.mxu0 0.0
    %5493 = vmatpush1.msra.mxu0 0.0
    %5494 = vmatprep.subr.mxu0 0.0
    %v5495 = vand.u32 %v2994, 4294901760
    %5496 = vmatpush1.msra.mxu0 %v5495
    %5497 = vmatprep.subr.mxu0 0.0
    %v5498 = vand.u32 %v2992, 4294901760
    %5499 = vmatpush1.msra.mxu0 %v5498
    %5500 = vmatprep.subr.mxu0 0.0
    %5501 = vmatpush2.msra.mxu0 0.0
    %5502 = vmatprep.subr.mxu0 0.0
    %5503 = vmatpush2.msra.mxu0 0.0
    %5504 = vmatprep.subr.mxu0 0.0
    %5505 = vmatpush2.msra.mxu0 0.0
    %5506 = vmatprep.subr.mxu0 0.0
    %5507 = vmatpush2.msra.mxu0 0.0
    %5508 = vmatprep.subr.mxu0 0.0
    %5509 = vmatpush2.msra.mxu0 0.0
    %5510 = vmatprep.subr.mxu0 0.0
    %5511 = vmatpush2.msra.mxu0 0.0
    %5512 = vmatprep.subr.mxu0 0.0
    %5513 = vmatpush2.msra.mxu0 0.0
    %5514 = vmatprep.subr.mxu0 0.0
    %5515 = vmatpush2.msra.mxu0 0.0
    %5516 = vmatprep.subr.mxu0 0.0
    %5517 = vmatpush2.msra.mxu0 0.0
    %5518 = vmatprep.subr.mxu0 0.0
    %5519 = vmatpush2.msra.mxu0 0.0
    %5520 = vmatprep.subr.mxu0 0.0
    %5521 = vmatpush2.msra.mxu0 0.0
    %5522 = vmatprep.subr.mxu0 0.0
    %5523 = vmatpush2.msra.mxu0 0.0
    %5524 = vmatprep.subr.mxu0 0.0
    %5525 = vmatpush2.msra.mxu0 0.0
    %5526 = vmatprep.subr.mxu0 0.0
    %5527 = vmatpush2.msra.mxu0 0.0
    %5528 = vmatprep.subr.mxu0 0.0
    %5529 = vmatpush2.msra.mxu0 0.0
    %5530 = vmatprep.subr.mxu0 0.0
    %5531 = vmatpush2.msra.mxu0 0.0
    %5532 = vmatprep.mubr.f32.mxu0 0.0
    %v5533 = vand.u32 %v5038, 4294901760
    %5534 = vmatmul.mubr.f32.gmra.mxu0 %v5533
    %v5535 = vpop.f32.mrf.mxu0
    %v5536 = vadd.f32 %v5457, %v5535
    %v5537 = vpop.f32.mrf.mxu0
    %5538 = vmatprep.mubr.f32.mxu0 0.0
    %v5539 = vand.u32 %v5041, 4294901760
    %5540 = vmatmul.mubr.f32.gmra.mxu0 %v5539
    %v5541 = vpop.f32.mrf.mxu0
    %v5542 = vadd.f32 %v5463, %v5541
    %v5543 = vpop.f32.mrf.mxu0
    %5544 = vdwg.mxu0
    %v5545 = vmul.f32 %v5025, %v5536
    %v5546 = vmul.f32 %v5031, %v5542
    %v5547 = vadd.f32 %v4527, %v5545
    %v5548 = vadd.f32 %v4528, %v5546
    %s5549 = scalar_lea.vmem [#allocation13], 48
    %v5550 = vld [vmem:[%s5549] sm:$0xff]
    %v5551 = vld [vmem:[%s5549 + $0x8] sm:$0xff]
    %5552 = vmatprep.subr.mxu0 0.0
    %5553 = vmatpush1.msra.mxu0 0.0
    %5554 = vmatprep.subr.mxu0 0.0
    %5555 = vmatpush1.msra.mxu0 0.0
    %5556 = vmatprep.subr.mxu0 0.0
    %5557 = vmatpush1.msra.mxu0 0.0
    %5558 = vmatprep.subr.mxu0 0.0
    %5559 = vmatpush1.msra.mxu0 0.0
    %5560 = vmatprep.subr.mxu0 0.0
    %5561 = vmatpush1.msra.mxu0 0.0
    %5562 = vmatprep.subr.mxu0 0.0
    %5563 = vmatpush1.msra.mxu0 0.0
    %5564 = vmatprep.subr.mxu0 0.0
    %5565 = vmatpush1.msra.mxu0 0.0
    %5566 = vmatprep.subr.mxu0 0.0
    %5567 = vmatpush1.msra.mxu0 0.0
    %5568 = vmatprep.subr.mxu0 0.0
    %5569 = vmatpush1.msra.mxu0 0.0
    %5570 = vmatprep.subr.mxu0 0.0
    %5571 = vmatpush1.msra.mxu0 0.0
    %5572 = vmatprep.subr.mxu0 0.0
    %5573 = vmatpush1.msra.mxu0 0.0
    %5574 = vmatprep.subr.mxu0 0.0
    %5575 = vmatpush1.msra.mxu0 0.0
    %5576 = vmatprep.subr.mxu0 0.0
    %5577 = vmatpush1.msra.mxu0 0.0
    %5578 = vmatprep.subr.mxu0 0.0
    %5579 = vmatpush1.msra.mxu0 0.0
    %5580 = vmatprep.subr.mxu0 0.0
    %v5581 = vand.u32 %v5551, 4294901760
    %5582 = vmatpush1.msra.mxu0 %v5581
    %5583 = vmatprep.subr.mxu0 0.0
    %v5584 = vand.u32 %v5550, 4294901760
    %5585 = vmatpush1.msra.mxu0 %v5584
    %5586 = vmatprep.subr.mxu0 0.0
    %5587 = vmatpush2.msra.mxu0 0.0
    %5588 = vmatprep.subr.mxu0 0.0
    %5589 = vmatpush2.msra.mxu0 0.0
    %5590 = vmatprep.subr.mxu0 0.0
    %5591 = vmatpush2.msra.mxu0 0.0
    %5592 = vmatprep.subr.mxu0 0.0
    %5593 = vmatpush2.msra.mxu0 0.0
    %5594 = vmatprep.subr.mxu0 0.0
    %5595 = vmatpush2.msra.mxu0 0.0
    %5596 = vmatprep.subr.mxu0 0.0
    %5597 = vmatpush2.msra.mxu0 0.0
    %5598 = vmatprep.subr.mxu0 0.0
    %5599 = vmatpush2.msra.mxu0 0.0
    %5600 = vmatprep.subr.mxu0 0.0
    %5601 = vmatpush2.msra.mxu0 0.0
    %5602 = vmatprep.subr.mxu0 0.0
    %5603 = vmatpush2.msra.mxu0 0.0
    %5604 = vmatprep.subr.mxu0 0.0
    %5605 = vmatpush2.msra.mxu0 0.0
    %5606 = vmatprep.subr.mxu0 0.0
    %5607 = vmatpush2.msra.mxu0 0.0
    %5608 = vmatprep.subr.mxu0 0.0
    %5609 = vmatpush2.msra.mxu0 0.0
    %5610 = vmatprep.subr.mxu0 0.0
    %5611 = vmatpush2.msra.mxu0 0.0
    %5612 = vmatprep.subr.mxu0 0.0
    %5613 = vmatpush2.msra.mxu0 0.0
    %5614 = vmatprep.subr.mxu0 0.0
    %5615 = vmatpush2.msra.mxu0 0.0
    %5616 = vmatprep.subr.mxu0 0.0
    %5617 = vmatpush2.msra.mxu0 0.0
    %5618 = vmatprep.mubr.f32.mxu0 0.0
    %v5619 = vand.u32 %v2482, 4294901760
    %v5620 = vsub.f32 %v2482, %v5619
    %v5621 = vand.u32 %v5620, 4294901760
    %v5622 = vsub.f32 %v5620, %v5621
    %v5623 = vand.u32 %v5622, 4294901760
    %5624 = vmatmul.mubr.f32.gmra.mxu0 %v5623
    %v5625 = vpop.f32.mrf.mxu0
    %v5626 = vadd.f32 0.0, %v5625
    %v5627 = vpop.f32.mrf.mxu0
    %5628 = vmatprep.mubr.f32.mxu0 0.0
    %v5629 = vand.u32 %v2485, 4294901760
    %v5630 = vsub.f32 %v2485, %v5629
    %v5631 = vand.u32 %v5630, 4294901760
    %v5632 = vsub.f32 %v5630, %v5631
    %v5633 = vand.u32 %v5632, 4294901760
    %5634 = vmatmul.mubr.f32.gmra.mxu0 %v5633
    %v5635 = vpop.f32.mrf.mxu0
    %v5636 = vadd.f32 0.0, %v5635
    %v5637 = vpop.f32.mrf.mxu0
    %5638 = vdwg.mxu0
    %5639 = vmatprep.subr.mxu0 0.0
    %5640 = vmatpush1.msra.mxu0 0.0
    %5641 = vmatprep.subr.mxu0 0.0
    %5642 = vmatpush1.msra.mxu0 0.0
    %5643 = vmatprep.subr.mxu0 0.0
    %5644 = vmatpush1.msra.mxu0 0.0
    %5645 = vmatprep.subr.mxu0 0.0
    %5646 = vmatpush1.msra.mxu0 0.0
    %5647 = vmatprep.subr.mxu0 0.0
    %5648 = vmatpush1.msra.mxu0 0.0
    %5649 = vmatprep.subr.mxu0 0.0
    %5650 = vmatpush1.msra.mxu0 0.0
    %5651 = vmatprep.subr.mxu0 0.0
    %5652 = vmatpush1.msra.mxu0 0.0
    %5653 = vmatprep.subr.mxu0 0.0
    %5654 = vmatpush1.msra.mxu0 0.0
    %5655 = vmatprep.subr.mxu0 0.0
    %5656 = vmatpush1.msra.mxu0 0.0
    %5657 = vmatprep.subr.mxu0 0.0
    %5658 = vmatpush1.msra.mxu0 0.0
    %5659 = vmatprep.subr.mxu0 0.0
    %5660 = vmatpush1.msra.mxu0 0.0
    %5661 = vmatprep.subr.mxu0 0.0
    %5662 = vmatpush1.msra.mxu0 0.0
    %5663 = vmatprep.subr.mxu0 0.0
    %5664 = vmatpush1.msra.mxu0 0.0
    %5665 = vmatprep.subr.mxu0 0.0
    %5666 = vmatpush1.msra.mxu0 0.0
    %5667 = vmatprep.subr.mxu0 0.0
    %v5668 = vand.u32 %v5551, 4294901760
    %v5669 = vsub.f32 %v5551, %v5668
    %v5670 = vand.u32 %v5669, 4294901760
    %v5671 = vsub.f32 %v5669, %v5670
    %v5672 = vand.u32 %v5671, 4294901760
    %5673 = vmatpush1.msra.mxu0 %v5672
    %5674 = vmatprep.subr.mxu0 0.0
    %v5675 = vand.u32 %v5550, 4294901760
    %v5676 = vsub.f32 %v5550, %v5675
    %v5677 = vand.u32 %v5676, 4294901760
    %v5678 = vsub.f32 %v5676, %v5677
    %v5679 = vand.u32 %v5678, 4294901760
    %5680 = vmatpush1.msra.mxu0 %v5679
    %5681 = vmatprep.subr.mxu0 0.0
    %5682 = vmatpush2.msra.mxu0 0.0
    %5683 = vmatprep.subr.mxu0 0.0
    %5684 = vmatpush2.msra.mxu0 0.0
    %5685 = vmatprep.subr.mxu0 0.0
    %5686 = vmatpush2.msra.mxu0 0.0
    %5687 = vmatprep.subr.mxu0 0.0
    %5688 = vmatpush2.msra.mxu0 0.0
    %5689 = vmatprep.subr.mxu0 0.0
    %5690 = vmatpush2.msra.mxu0 0.0
    %5691 = vmatprep.subr.mxu0 0.0
    %5692 = vmatpush2.msra.mxu0 0.0
    %5693 = vmatprep.subr.mxu0 0.0
    %5694 = vmatpush2.msra.mxu0 0.0
    %5695 = vmatprep.subr.mxu0 0.0
    %5696 = vmatpush2.msra.mxu0 0.0
    %5697 = vmatprep.subr.mxu0 0.0
    %5698 = vmatpush2.msra.mxu0 0.0
    %5699 = vmatprep.subr.mxu0 0.0
    %5700 = vmatpush2.msra.mxu0 0.0
    %5701 = vmatprep.subr.mxu0 0.0
    %5702 = vmatpush2.msra.mxu0 0.0
    %5703 = vmatprep.subr.mxu0 0.0
    %5704 = vmatpush2.msra.mxu0 0.0
    %5705 = vmatprep.subr.mxu0 0.0
    %5706 = vmatpush2.msra.mxu0 0.0
    %5707 = vmatprep.subr.mxu0 0.0
    %5708 = vmatpush2.msra.mxu0 0.0
    %5709 = vmatprep.subr.mxu0 0.0
    %5710 = vmatpush2.msra.mxu0 0.0
    %5711 = vmatprep.subr.mxu0 0.0
    %5712 = vmatpush2.msra.mxu0 0.0
    %5713 = vmatprep.mubr.f32.mxu0 0.0
    %v5714 = vand.u32 %v2482, 4294901760
    %5715 = vmatmul.mubr.f32.gmra.mxu0 %v5714
    %v5716 = vpop.f32.mrf.mxu0
    %v5717 = vadd.f32 %v5626, %v5716
    %v5718 = vpop.f32.mrf.mxu0
    %5719 = vmatprep.mubr.f32.mxu0 0.0
    %v5720 = vand.u32 %v2485, 4294901760
    %5721 = vmatmul.mubr.f32.gmra.mxu0 %v5720
    %v5722 = vpop.f32.mrf.mxu0
    %v5723 = vadd.f32 %v5636, %v5722
    %v5724 = vpop.f32.mrf.mxu0
    %5725 = vdwg.mxu0
    %5726 = vmatprep.subr.mxu0 0.0
    %5727 = vmatpush1.msra.mxu0 0.0
    %5728 = vmatprep.subr.mxu0 0.0
    %5729 = vmatpush1.msra.mxu0 0.0
    %5730 = vmatprep.subr.mxu0 0.0
    %5731 = vmatpush1.msra.mxu0 0.0
    %5732 = vmatprep.subr.mxu0 0.0
    %5733 = vmatpush1.msra.mxu0 0.0
    %5734 = vmatprep.subr.mxu0 0.0
    %5735 = vmatpush1.msra.mxu0 0.0
    %5736 = vmatprep.subr.mxu0 0.0
    %5737 = vmatpush1.msra.mxu0 0.0
    %5738 = vmatprep.subr.mxu0 0.0
    %5739 = vmatpush1.msra.mxu0 0.0
    %5740 = vmatprep.subr.mxu0 0.0
    %5741 = vmatpush1.msra.mxu0 0.0
    %5742 = vmatprep.subr.mxu0 0.0
    %5743 = vmatpush1.msra.mxu0 0.0
    %5744 = vmatprep.subr.mxu0 0.0
    %5745 = vmatpush1.msra.mxu0 0.0
    %5746 = vmatprep.subr.mxu0 0.0
    %5747 = vmatpush1.msra.mxu0 0.0
    %5748 = vmatprep.subr.mxu0 0.0
    %5749 = vmatpush1.msra.mxu0 0.0
    %5750 = vmatprep.subr.mxu0 0.0
    %5751 = vmatpush1.msra.mxu0 0.0
    %5752 = vmatprep.subr.mxu0 0.0
    %5753 = vmatpush1.msra.mxu0 0.0
    %5754 = vmatprep.subr.mxu0 0.0
    %v5755 = vand.u32 %v5551, 4294901760
    %v5756 = vsub.f32 %v5551, %v5755
    %5757 = vmatpush1.msra.mxu0 %v5756
    %5758 = vmatprep.subr.mxu0 0.0
    %v5759 = vand.u32 %v5550, 4294901760
    %v5760 = vsub.f32 %v5550, %v5759
    %5761 = vmatpush1.msra.mxu0 %v5760
    %5762 = vmatprep.subr.mxu0 0.0
    %5763 = vmatpush2.msra.mxu0 0.0
    %5764 = vmatprep.subr.mxu0 0.0
    %5765 = vmatpush2.msra.mxu0 0.0
    %5766 = vmatprep.subr.mxu0 0.0
    %5767 = vmatpush2.msra.mxu0 0.0
    %5768 = vmatprep.subr.mxu0 0.0
    %5769 = vmatpush2.msra.mxu0 0.0
    %5770 = vmatprep.subr.mxu0 0.0
    %5771 = vmatpush2.msra.mxu0 0.0
    %5772 = vmatprep.subr.mxu0 0.0
    %5773 = vmatpush2.msra.mxu0 0.0
    %5774 = vmatprep.subr.mxu0 0.0
    %5775 = vmatpush2.msra.mxu0 0.0
    %5776 = vmatprep.subr.mxu0 0.0
    %5777 = vmatpush2.msra.mxu0 0.0
    %5778 = vmatprep.subr.mxu0 0.0
    %5779 = vmatpush2.msra.mxu0 0.0
    %5780 = vmatprep.subr.mxu0 0.0
    %5781 = vmatpush2.msra.mxu0 0.0
    %5782 = vmatprep.subr.mxu0 0.0
    %5783 = vmatpush2.msra.mxu0 0.0
    %5784 = vmatprep.subr.mxu0 0.0
    %5785 = vmatpush2.msra.mxu0 0.0
    %5786 = vmatprep.subr.mxu0 0.0
    %5787 = vmatpush2.msra.mxu0 0.0
    %5788 = vmatprep.subr.mxu0 0.0
    %5789 = vmatpush2.msra.mxu0 0.0
    %5790 = vmatprep.subr.mxu0 0.0
    %5791 = vmatpush2.msra.mxu0 0.0
    %5792 = vmatprep.subr.mxu0 0.0
    %5793 = vmatpush2.msra.mxu0 0.0
    %5794 = vmatprep.mubr.f32.mxu0 0.0
    %v5795 = vand.u32 %v2482, 4294901760
    %v5796 = vsub.f32 %v2482, %v5795
    %5797 = vmatmul.mubr.f32.gmra.mxu0 %v5796
    %v5798 = vpop.f32.mrf.mxu0
    %v5799 = vadd.f32 %v5717, %v5798
    %v5800 = vpop.f32.mrf.mxu0
    %5801 = vmatprep.mubr.f32.mxu0 0.0
    %v5802 = vand.u32 %v2485, 4294901760
    %v5803 = vsub.f32 %v2485, %v5802
    %5804 = vmatmul.mubr.f32.gmra.mxu0 %v5803
    %v5805 = vpop.f32.mrf.mxu0
    %v5806 = vadd.f32 %v5723, %v5805
    %v5807 = vpop.f32.mrf.mxu0
    %5808 = vdwg.mxu0
    %5809 = vmatprep.subr.mxu0 0.0
    %5810 = vmatpush1.msra.mxu0 0.0
    %5811 = vmatprep.subr.mxu0 0.0
    %5812 = vmatpush1.msra.mxu0 0.0
    %5813 = vmatprep.subr.mxu0 0.0
    %5814 = vmatpush1.msra.mxu0 0.0
    %5815 = vmatprep.subr.mxu0 0.0
    %5816 = vmatpush1.msra.mxu0 0.0
    %5817 = vmatprep.subr.mxu0 0.0
    %5818 = vmatpush1.msra.mxu0 0.0
    %5819 = vmatprep.subr.mxu0 0.0
    %5820 = vmatpush1.msra.mxu0 0.0
    %5821 = vmatprep.subr.mxu0 0.0
    %5822 = vmatpush1.msra.mxu0 0.0
    %5823 = vmatprep.subr.mxu0 0.0
    %5824 = vmatpush1.msra.mxu0 0.0
    %5825 = vmatprep.subr.mxu0 0.0
    %5826 = vmatpush1.msra.mxu0 0.0
    %5827 = vmatprep.subr.mxu0 0.0
    %5828 = vmatpush1.msra.mxu0 0.0
    %5829 = vmatprep.subr.mxu0 0.0
    %5830 = vmatpush1.msra.mxu0 0.0
    %5831 = vmatprep.subr.mxu0 0.0
    %5832 = vmatpush1.msra.mxu0 0.0
    %5833 = vmatprep.subr.mxu0 0.0
    %5834 = vmatpush1.msra.mxu0 0.0
    %5835 = vmatprep.subr.mxu0 0.0
    %5836 = vmatpush1.msra.mxu0 0.0
    %5837 = vmatprep.subr.mxu0 0.0
    %v5838 = vand.u32 %v5551, 4294901760
    %5839 = vmatpush1.msra.mxu0 %v5838
    %5840 = vmatprep.subr.mxu0 0.0
    %v5841 = vand.u32 %v5550, 4294901760
    %5842 = vmatpush1.msra.mxu0 %v5841
    %5843 = vmatprep.subr.mxu0 0.0
    %5844 = vmatpush2.msra.mxu0 0.0
    %5845 = vmatprep.subr.mxu0 0.0
    %5846 = vmatpush2.msra.mxu0 0.0
    %5847 = vmatprep.subr.mxu0 0.0
    %5848 = vmatpush2.msra.mxu0 0.0
    %5849 = vmatprep.subr.mxu0 0.0
    %5850 = vmatpush2.msra.mxu0 0.0
    %5851 = vmatprep.subr.mxu0 0.0
    %5852 = vmatpush2.msra.mxu0 0.0
    %5853 = vmatprep.subr.mxu0 0.0
    %5854 = vmatpush2.msra.mxu0 0.0
    %5855 = vmatprep.subr.mxu0 0.0
    %5856 = vmatpush2.msra.mxu0 0.0
    %5857 = vmatprep.subr.mxu0 0.0
    %5858 = vmatpush2.msra.mxu0 0.0
    %5859 = vmatprep.subr.mxu0 0.0
    %5860 = vmatpush2.msra.mxu0 0.0
    %5861 = vmatprep.subr.mxu0 0.0
    %5862 = vmatpush2.msra.mxu0 0.0
    %5863 = vmatprep.subr.mxu0 0.0
    %5864 = vmatpush2.msra.mxu0 0.0
    %5865 = vmatprep.subr.mxu0 0.0
    %5866 = vmatpush2.msra.mxu0 0.0
    %5867 = vmatprep.subr.mxu0 0.0
    %5868 = vmatpush2.msra.mxu0 0.0
    %5869 = vmatprep.subr.mxu0 0.0
    %5870 = vmatpush2.msra.mxu0 0.0
    %5871 = vmatprep.subr.mxu0 0.0
    %5872 = vmatpush2.msra.mxu0 0.0
    %5873 = vmatprep.subr.mxu0 0.0
    %5874 = vmatpush2.msra.mxu0 0.0
    %5875 = vmatprep.mubr.f32.mxu0 0.0
    %v5876 = vand.u32 %v2482, 4294901760
    %v5877 = vsub.f32 %v2482, %v5876
    %v5878 = vand.u32 %v5877, 4294901760
    %5879 = vmatmul.mubr.f32.gmra.mxu0 %v5878
    %v5880 = vpop.f32.mrf.mxu0
    %v5881 = vadd.f32 %v5799, %v5880
    %v5882 = vpop.f32.mrf.mxu0
    %5883 = vmatprep.mubr.f32.mxu0 0.0
    %v5884 = vand.u32 %v2485, 4294901760
    %v5885 = vsub.f32 %v2485, %v5884
    %v5886 = vand.u32 %v5885, 4294901760
    %5887 = vmatmul.mubr.f32.gmra.mxu0 %v5886
    %v5888 = vpop.f32.mrf.mxu0
    %v5889 = vadd.f32 %v5806, %v5888
    %v5890 = vpop.f32.mrf.mxu0
    %5891 = vdwg.mxu0
    %5892 = vmatprep.subr.mxu0 0.0
    %5893 = vmatpush1.msra.mxu0 0.0
    %5894 = vmatprep.subr.mxu0 0.0
    %5895 = vmatpush1.msra.mxu0 0.0
    %5896 = vmatprep.subr.mxu0 0.0
    %5897 = vmatpush1.msra.mxu0 0.0
    %5898 = vmatprep.subr.mxu0 0.0
    %5899 = vmatpush1.msra.mxu0 0.0
    %5900 = vmatprep.subr.mxu0 0.0
    %5901 = vmatpush1.msra.mxu0 0.0
    %5902 = vmatprep.subr.mxu0 0.0
    %5903 = vmatpush1.msra.mxu0 0.0
    %5904 = vmatprep.subr.mxu0 0.0
    %5905 = vmatpush1.msra.mxu0 0.0
    %5906 = vmatprep.subr.mxu0 0.0
    %5907 = vmatpush1.msra.mxu0 0.0
    %5908 = vmatprep.subr.mxu0 0.0
    %5909 = vmatpush1.msra.mxu0 0.0
    %5910 = vmatprep.subr.mxu0 0.0
    %5911 = vmatpush1.msra.mxu0 0.0
    %5912 = vmatprep.subr.mxu0 0.0
    %5913 = vmatpush1.msra.mxu0 0.0
    %5914 = vmatprep.subr.mxu0 0.0
    %5915 = vmatpush1.msra.mxu0 0.0
    %5916 = vmatprep.subr.mxu0 0.0
    %5917 = vmatpush1.msra.mxu0 0.0
    %5918 = vmatprep.subr.mxu0 0.0
    %5919 = vmatpush1.msra.mxu0 0.0
    %5920 = vmatprep.subr.mxu0 0.0
    %v5921 = vand.u32 %v5551, 4294901760
    %v5922 = vsub.f32 %v5551, %v5921
    %v5923 = vand.u32 %v5922, 4294901760
    %5924 = vmatpush1.msra.mxu0 %v5923
    %5925 = vmatprep.subr.mxu0 0.0
    %v5926 = vand.u32 %v5550, 4294901760
    %v5927 = vsub.f32 %v5550, %v5926
    %v5928 = vand.u32 %v5927, 4294901760
    %5929 = vmatpush1.msra.mxu0 %v5928
    %5930 = vmatprep.subr.mxu0 0.0
    %5931 = vmatpush2.msra.mxu0 0.0
    %5932 = vmatprep.subr.mxu0 0.0
    %5933 = vmatpush2.msra.mxu0 0.0
    %5934 = vmatprep.subr.mxu0 0.0
    %5935 = vmatpush2.msra.mxu0 0.0
    %5936 = vmatprep.subr.mxu0 0.0
    %5937 = vmatpush2.msra.mxu0 0.0
    %5938 = vmatprep.subr.mxu0 0.0
    %5939 = vmatpush2.msra.mxu0 0.0
    %5940 = vmatprep.subr.mxu0 0.0
    %5941 = vmatpush2.msra.mxu0 0.0
    %5942 = vmatprep.subr.mxu0 0.0
    %5943 = vmatpush2.msra.mxu0 0.0
    %5944 = vmatprep.subr.mxu0 0.0
    %5945 = vmatpush2.msra.mxu0 0.0
    %5946 = vmatprep.subr.mxu0 0.0
    %5947 = vmatpush2.msra.mxu0 0.0
    %5948 = vmatprep.subr.mxu0 0.0
    %5949 = vmatpush2.msra.mxu0 0.0
    %5950 = vmatprep.subr.mxu0 0.0
    %5951 = vmatpush2.msra.mxu0 0.0
    %5952 = vmatprep.subr.mxu0 0.0
    %5953 = vmatpush2.msra.mxu0 0.0
    %5954 = vmatprep.subr.mxu0 0.0
    %5955 = vmatpush2.msra.mxu0 0.0
    %5956 = vmatprep.subr.mxu0 0.0
    %5957 = vmatpush2.msra.mxu0 0.0
    %5958 = vmatprep.subr.mxu0 0.0
    %5959 = vmatpush2.msra.mxu0 0.0
    %5960 = vmatprep.subr.mxu0 0.0
    %5961 = vmatpush2.msra.mxu0 0.0
    %5962 = vmatprep.mubr.f32.mxu0 0.0
    %v5963 = vand.u32 %v2482, 4294901760
    %5964 = vmatmul.mubr.f32.gmra.mxu0 %v5963
    %v5965 = vpop.f32.mrf.mxu0
    %v5966 = vadd.f32 %v5881, %v5965
    %v5967 = vpop.f32.mrf.mxu0
    %5968 = vmatprep.mubr.f32.mxu0 0.0
    %v5969 = vand.u32 %v2485, 4294901760
    %5970 = vmatmul.mubr.f32.gmra.mxu0 %v5969
    %v5971 = vpop.f32.mrf.mxu0
    %v5972 = vadd.f32 %v5889, %v5971
    %v5973 = vpop.f32.mrf.mxu0
    %5974 = vdwg.mxu0
    %5975 = vmatprep.subr.mxu0 0.0
    %5976 = vmatpush1.msra.mxu0 0.0
    %5977 = vmatprep.subr.mxu0 0.0
    %5978 = vmatpush1.msra.mxu0 0.0
    %5979 = vmatprep.subr.mxu0 0.0
    %5980 = vmatpush1.msra.mxu0 0.0
    %5981 = vmatprep.subr.mxu0 0.0
    %5982 = vmatpush1.msra.mxu0 0.0
    %5983 = vmatprep.subr.mxu0 0.0
    %5984 = vmatpush1.msra.mxu0 0.0
    %5985 = vmatprep.subr.mxu0 0.0
    %5986 = vmatpush1.msra.mxu0 0.0
    %5987 = vmatprep.subr.mxu0 0.0
    %5988 = vmatpush1.msra.mxu0 0.0
    %5989 = vmatprep.subr.mxu0 0.0
    %5990 = vmatpush1.msra.mxu0 0.0
    %5991 = vmatprep.subr.mxu0 0.0
    %5992 = vmatpush1.msra.mxu0 0.0
    %5993 = vmatprep.subr.mxu0 0.0
    %5994 = vmatpush1.msra.mxu0 0.0
    %5995 = vmatprep.subr.mxu0 0.0
    %5996 = vmatpush1.msra.mxu0 0.0
    %5997 = vmatprep.subr.mxu0 0.0
    %5998 = vmatpush1.msra.mxu0 0.0
    %5999 = vmatprep.subr.mxu0 0.0
    %6000 = vmatpush1.msra.mxu0 0.0
    %6001 = vmatprep.subr.mxu0 0.0
    %6002 = vmatpush1.msra.mxu0 0.0
    %6003 = vmatprep.subr.mxu0 0.0
    %v6004 = vand.u32 %v5551, 4294901760
    %6005 = vmatpush1.msra.mxu0 %v6004
    %6006 = vmatprep.subr.mxu0 0.0
    %v6007 = vand.u32 %v5550, 4294901760
    %6008 = vmatpush1.msra.mxu0 %v6007
    %6009 = vmatprep.subr.mxu0 0.0
    %6010 = vmatpush2.msra.mxu0 0.0
    %6011 = vmatprep.subr.mxu0 0.0
    %6012 = vmatpush2.msra.mxu0 0.0
    %6013 = vmatprep.subr.mxu0 0.0
    %6014 = vmatpush2.msra.mxu0 0.0
    %6015 = vmatprep.subr.mxu0 0.0
    %6016 = vmatpush2.msra.mxu0 0.0
    %6017 = vmatprep.subr.mxu0 0.0
    %6018 = vmatpush2.msra.mxu0 0.0
    %6019 = vmatprep.subr.mxu0 0.0
    %6020 = vmatpush2.msra.mxu0 0.0
    %6021 = vmatprep.subr.mxu0 0.0
    %6022 = vmatpush2.msra.mxu0 0.0
    %6023 = vmatprep.subr.mxu0 0.0
    %6024 = vmatpush2.msra.mxu0 0.0
    %6025 = vmatprep.subr.mxu0 0.0
    %6026 = vmatpush2.msra.mxu0 0.0
    %6027 = vmatprep.subr.mxu0 0.0
    %6028 = vmatpush2.msra.mxu0 0.0
    %6029 = vmatprep.subr.mxu0 0.0
    %6030 = vmatpush2.msra.mxu0 0.0
    %6031 = vmatprep.subr.mxu0 0.0
    %6032 = vmatpush2.msra.mxu0 0.0
    %6033 = vmatprep.subr.mxu0 0.0
    %6034 = vmatpush2.msra.mxu0 0.0
    %6035 = vmatprep.subr.mxu0 0.0
    %6036 = vmatpush2.msra.mxu0 0.0
    %6037 = vmatprep.subr.mxu0 0.0
    %6038 = vmatpush2.msra.mxu0 0.0
    %6039 = vmatprep.subr.mxu0 0.0
    %6040 = vmatpush2.msra.mxu0 0.0
    %6041 = vmatprep.mubr.f32.mxu0 0.0
    %v6042 = vand.u32 %v2482, 4294901760
    %6043 = vmatmul.mubr.f32.gmra.mxu0 %v6042
    %v6044 = vpop.f32.mrf.mxu0
    %v6045 = vadd.f32 %v5966, %v6044
    %v6046 = vpop.f32.mrf.mxu0
    %6047 = vmatprep.mubr.f32.mxu0 0.0
    %v6048 = vand.u32 %v2485, 4294901760
    %6049 = vmatmul.mubr.f32.gmra.mxu0 %v6048
    %v6050 = vpop.f32.mrf.mxu0
    %v6051 = vadd.f32 %v5972, %v6050
    %v6052 = vpop.f32.mrf.mxu0
    %6053 = vdwg.mxu0
    %s6054 = scalar_lea.vmem [#allocation14], 48
    %v6055 = vld [vmem:[%s6054] sm:$0xff]
    %v6056 = vld [vmem:[%s6054 + $0x8] sm:$0xff]
    %v6058 = vsel %vm2480, %v6055, 0
    %v6061 = vsel %vm2480, %v6056, 0
    %6063 = vmatprep.subr.mxu0 0.0
    %6064 = vmatpush1.msra.mxu0 0.0
    %6065 = vmatprep.subr.mxu0 0.0
    %6066 = vmatpush1.msra.mxu0 0.0
    %6067 = vmatprep.subr.mxu0 0.0
    %6068 = vmatpush1.msra.mxu0 0.0
    %6069 = vmatprep.subr.mxu0 0.0
    %6070 = vmatpush1.msra.mxu0 0.0
    %6071 = vmatprep.subr.mxu0 0.0
    %6072 = vmatpush1.msra.mxu0 0.0
    %6073 = vmatprep.subr.mxu0 0.0
    %6074 = vmatpush1.msra.mxu0 0.0
    %6075 = vmatprep.subr.mxu0 0.0
    %6076 = vmatpush1.msra.mxu0 0.0
    %6077 = vmatprep.subr.mxu0 0.0
    %6078 = vmatpush1.msra.mxu0 0.0
    %6079 = vmatprep.subr.mxu0 0.0
    %6080 = vmatpush1.msra.mxu0 0.0
    %6081 = vmatprep.subr.mxu0 0.0
    %6082 = vmatpush1.msra.mxu0 0.0
    %6083 = vmatprep.subr.mxu0 0.0
    %6084 = vmatpush1.msra.mxu0 0.0
    %6085 = vmatprep.subr.mxu0 0.0
    %6086 = vmatpush1.msra.mxu0 0.0
    %6087 = vmatprep.subr.mxu0 0.0
    %6088 = vmatpush1.msra.mxu0 0.0
    %6089 = vmatprep.subr.mxu0 0.0
    %6090 = vmatpush1.msra.mxu0 0.0
    %6091 = vmatprep.subr.mxu0 0.0
    %v6092 = vand.u32 %v2994, 4294901760
    %6093 = vmatpush1.msra.mxu0 %v6092
    %6094 = vmatprep.subr.mxu0 0.0
    %v6095 = vand.u32 %v2992, 4294901760
    %6096 = vmatpush1.msra.mxu0 %v6095
    %6097 = vmatprep.subr.mxu0 0.0
    %6098 = vmatpush2.msra.mxu0 0.0
    %6099 = vmatprep.subr.mxu0 0.0
    %6100 = vmatpush2.msra.mxu0 0.0
    %6101 = vmatprep.subr.mxu0 0.0
    %6102 = vmatpush2.msra.mxu0 0.0
    %6103 = vmatprep.subr.mxu0 0.0
    %6104 = vmatpush2.msra.mxu0 0.0
    %6105 = vmatprep.subr.mxu0 0.0
    %6106 = vmatpush2.msra.mxu0 0.0
    %6107 = vmatprep.subr.mxu0 0.0
    %6108 = vmatpush2.msra.mxu0 0.0
    %6109 = vmatprep.subr.mxu0 0.0
    %6110 = vmatpush2.msra.mxu0 0.0
    %6111 = vmatprep.subr.mxu0 0.0
    %6112 = vmatpush2.msra.mxu0 0.0
    %6113 = vmatprep.subr.mxu0 0.0
    %6114 = vmatpush2.msra.mxu0 0.0
    %6115 = vmatprep.subr.mxu0 0.0
    %6116 = vmatpush2.msra.mxu0 0.0
    %6117 = vmatprep.subr.mxu0 0.0
    %6118 = vmatpush2.msra.mxu0 0.0
    %6119 = vmatprep.subr.mxu0 0.0
    %6120 = vmatpush2.msra.mxu0 0.0
    %6121 = vmatprep.subr.mxu0 0.0
    %6122 = vmatpush2.msra.mxu0 0.0
    %6123 = vmatprep.subr.mxu0 0.0
    %6124 = vmatpush2.msra.mxu0 0.0
    %6125 = vmatprep.subr.mxu0 0.0
    %6126 = vmatpush2.msra.mxu0 0.0
    %6127 = vmatprep.subr.mxu0 0.0
    %6128 = vmatpush2.msra.mxu0 0.0
    %6129 = vmatprep.mubr.f32.mxu0 0.0
    %v6130 = vand.u32 %v6058, 4294901760
    %v6131 = vsub.f32 %v6058, %v6130
    %v6132 = vand.u32 %v6131, 4294901760
    %v6133 = vsub.f32 %v6131, %v6132
    %v6134 = vand.u32 %v6133, 4294901760
    %6135 = vmatmul.mubr.f32.gmra.mxu0 %v6134
    %v6136 = vpop.f32.mrf.mxu0
    %v6137 = vadd.f32 0.0, %v6136
    %v6138 = vpop.f32.mrf.mxu0
    %6139 = vmatprep.mubr.f32.mxu0 0.0
    %v6140 = vand.u32 %v6061, 4294901760
    %v6141 = vsub.f32 %v6061, %v6140
    %v6142 = vand.u32 %v6141, 4294901760
    %v6143 = vsub.f32 %v6141, %v6142
    %v6144 = vand.u32 %v6143, 4294901760
    %6145 = vmatmul.mubr.f32.gmra.mxu0 %v6144
    %v6146 = vpop.f32.mrf.mxu0
    %v6147 = vadd.f32 0.0, %v6146
    %v6148 = vpop.f32.mrf.mxu0
    %6149 = vdwg.mxu0
    %6150 = vmatprep.subr.mxu0 0.0
    %6151 = vmatpush1.msra.mxu0 0.0
    %6152 = vmatprep.subr.mxu0 0.0
    %6153 = vmatpush1.msra.mxu0 0.0
    %6154 = vmatprep.subr.mxu0 0.0
    %6155 = vmatpush1.msra.mxu0 0.0
    %6156 = vmatprep.subr.mxu0 0.0
    %6157 = vmatpush1.msra.mxu0 0.0
    %6158 = vmatprep.subr.mxu0 0.0
    %6159 = vmatpush1.msra.mxu0 0.0
    %6160 = vmatprep.subr.mxu0 0.0
    %6161 = vmatpush1.msra.mxu0 0.0
    %6162 = vmatprep.subr.mxu0 0.0
    %6163 = vmatpush1.msra.mxu0 0.0
    %6164 = vmatprep.subr.mxu0 0.0
    %6165 = vmatpush1.msra.mxu0 0.0
    %6166 = vmatprep.subr.mxu0 0.0
    %6167 = vmatpush1.msra.mxu0 0.0
    %6168 = vmatprep.subr.mxu0 0.0
    %6169 = vmatpush1.msra.mxu0 0.0
    %6170 = vmatprep.subr.mxu0 0.0
    %6171 = vmatpush1.msra.mxu0 0.0
    %6172 = vmatprep.subr.mxu0 0.0
    %6173 = vmatpush1.msra.mxu0 0.0
    %6174 = vmatprep.subr.mxu0 0.0
    %6175 = vmatpush1.msra.mxu0 0.0
    %6176 = vmatprep.subr.mxu0 0.0
    %6177 = vmatpush1.msra.mxu0 0.0
    %6178 = vmatprep.subr.mxu0 0.0
    %v6179 = vand.u32 %v2994, 4294901760
    %v6180 = vsub.f32 %v2994, %v6179
    %v6181 = vand.u32 %v6180, 4294901760
    %v6182 = vsub.f32 %v6180, %v6181
    %v6183 = vand.u32 %v6182, 4294901760
    %6184 = vmatpush1.msra.mxu0 %v6183
    %6185 = vmatprep.subr.mxu0 0.0
    %v6186 = vand.u32 %v2992, 4294901760
    %v6187 = vsub.f32 %v2992, %v6186
    %v6188 = vand.u32 %v6187, 4294901760
    %v6189 = vsub.f32 %v6187, %v6188
    %v6190 = vand.u32 %v6189, 4294901760
    %6191 = vmatpush1.msra.mxu0 %v6190
    %6192 = vmatprep.subr.mxu0 0.0
    %6193 = vmatpush2.msra.mxu0 0.0
    %6194 = vmatprep.subr.mxu0 0.0
    %6195 = vmatpush2.msra.mxu0 0.0
    %6196 = vmatprep.subr.mxu0 0.0
    %6197 = vmatpush2.msra.mxu0 0.0
    %6198 = vmatprep.subr.mxu0 0.0
    %6199 = vmatpush2.msra.mxu0 0.0
    %6200 = vmatprep.subr.mxu0 0.0
    %6201 = vmatpush2.msra.mxu0 0.0
    %6202 = vmatprep.subr.mxu0 0.0
    %6203 = vmatpush2.msra.mxu0 0.0
    %6204 = vmatprep.subr.mxu0 0.0
    %6205 = vmatpush2.msra.mxu0 0.0
    %6206 = vmatprep.subr.mxu0 0.0
    %6207 = vmatpush2.msra.mxu0 0.0
    %6208 = vmatprep.subr.mxu0 0.0
    %6209 = vmatpush2.msra.mxu0 0.0
    %6210 = vmatprep.subr.mxu0 0.0
    %6211 = vmatpush2.msra.mxu0 0.0
    %6212 = vmatprep.subr.mxu0 0.0
    %6213 = vmatpush2.msra.mxu0 0.0
    %6214 = vmatprep.subr.mxu0 0.0
    %6215 = vmatpush2.msra.mxu0 0.0
    %6216 = vmatprep.subr.mxu0 0.0
    %6217 = vmatpush2.msra.mxu0 0.0
    %6218 = vmatprep.subr.mxu0 0.0
    %6219 = vmatpush2.msra.mxu0 0.0
    %6220 = vmatprep.subr.mxu0 0.0
    %6221 = vmatpush2.msra.mxu0 0.0
    %6222 = vmatprep.subr.mxu0 0.0
    %6223 = vmatpush2.msra.mxu0 0.0
    %6224 = vmatprep.mubr.f32.mxu0 0.0
    %v6225 = vand.u32 %v6058, 4294901760
    %6226 = vmatmul.mubr.f32.gmra.mxu0 %v6225
    %v6227 = vpop.f32.mrf.mxu0
    %v6228 = vadd.f32 %v6137, %v6227
    %v6229 = vpop.f32.mrf.mxu0
    %6230 = vmatprep.mubr.f32.mxu0 0.0
    %v6231 = vand.u32 %v6061, 4294901760
    %6232 = vmatmul.mubr.f32.gmra.mxu0 %v6231
    %v6233 = vpop.f32.mrf.mxu0
    %v6234 = vadd.f32 %v6147, %v6233
    %v6235 = vpop.f32.mrf.mxu0
    %6236 = vdwg.mxu0
    %6237 = vmatprep.subr.mxu0 0.0
    %6238 = vmatpush1.msra.mxu0 0.0
    %6239 = vmatprep.subr.mxu0 0.0
    %6240 = vmatpush1.msra.mxu0 0.0
    %6241 = vmatprep.subr.mxu0 0.0
    %6242 = vmatpush1.msra.mxu0 0.0
    %6243 = vmatprep.subr.mxu0 0.0
    %6244 = vmatpush1.msra.mxu0 0.0
    %6245 = vmatprep.subr.mxu0 0.0
    %6246 = vmatpush1.msra.mxu0 0.0
    %6247 = vmatprep.subr.mxu0 0.0
    %6248 = vmatpush1.msra.mxu0 0.0
    %6249 = vmatprep.subr.mxu0 0.0
    %6250 = vmatpush1.msra.mxu0 0.0
    %6251 = vmatprep.subr.mxu0 0.0
    %6252 = vmatpush1.msra.mxu0 0.0
    %6253 = vmatprep.subr.mxu0 0.0
    %6254 = vmatpush1.msra.mxu0 0.0
    %6255 = vmatprep.subr.mxu0 0.0
    %6256 = vmatpush1.msra.mxu0 0.0
    %6257 = vmatprep.subr.mxu0 0.0
    %6258 = vmatpush1.msra.mxu0 0.0
    %6259 = vmatprep.subr.mxu0 0.0
    %6260 = vmatpush1.msra.mxu0 0.0
    %6261 = vmatprep.subr.mxu0 0.0
    %6262 = vmatpush1.msra.mxu0 0.0
    %6263 = vmatprep.subr.mxu0 0.0
    %6264 = vmatpush1.msra.mxu0 0.0
    %6265 = vmatprep.subr.mxu0 0.0
    %v6266 = vand.u32 %v2994, 4294901760
    %v6267 = vsub.f32 %v2994, %v6266
    %6268 = vmatpush1.msra.mxu0 %v6267
    %6269 = vmatprep.subr.mxu0 0.0
    %v6270 = vand.u32 %v2992, 4294901760
    %v6271 = vsub.f32 %v2992, %v6270
    %6272 = vmatpush1.msra.mxu0 %v6271
    %6273 = vmatprep.subr.mxu0 0.0
    %6274 = vmatpush2.msra.mxu0 0.0
    %6275 = vmatprep.subr.mxu0 0.0
    %6276 = vmatpush2.msra.mxu0 0.0
    %6277 = vmatprep.subr.mxu0 0.0
    %6278 = vmatpush2.msra.mxu0 0.0
    %6279 = vmatprep.subr.mxu0 0.0
    %6280 = vmatpush2.msra.mxu0 0.0
    %6281 = vmatprep.subr.mxu0 0.0
    %6282 = vmatpush2.msra.mxu0 0.0
    %6283 = vmatprep.subr.mxu0 0.0
    %6284 = vmatpush2.msra.mxu0 0.0
    %6285 = vmatprep.subr.mxu0 0.0
    %6286 = vmatpush2.msra.mxu0 0.0
    %6287 = vmatprep.subr.mxu0 0.0
    %6288 = vmatpush2.msra.mxu0 0.0
    %6289 = vmatprep.subr.mxu0 0.0
    %6290 = vmatpush2.msra.mxu0 0.0
    %6291 = vmatprep.subr.mxu0 0.0
    %6292 = vmatpush2.msra.mxu0 0.0
    %6293 = vmatprep.subr.mxu0 0.0
    %6294 = vmatpush2.msra.mxu0 0.0
    %6295 = vmatprep.subr.mxu0 0.0
    %6296 = vmatpush2.msra.mxu0 0.0
    %6297 = vmatprep.subr.mxu0 0.0
    %6298 = vmatpush2.msra.mxu0 0.0
    %6299 = vmatprep.subr.mxu0 0.0
    %6300 = vmatpush2.msra.mxu0 0.0
    %6301 = vmatprep.subr.mxu0 0.0
    %6302 = vmatpush2.msra.mxu0 0.0
    %6303 = vmatprep.subr.mxu0 0.0
    %6304 = vmatpush2.msra.mxu0 0.0
    %6305 = vmatprep.mubr.f32.mxu0 0.0
    %v6306 = vand.u32 %v6058, 4294901760
    %v6307 = vsub.f32 %v6058, %v6306
    %6308 = vmatmul.mubr.f32.gmra.mxu0 %v6307
    %v6309 = vpop.f32.mrf.mxu0
    %v6310 = vadd.f32 %v6228, %v6309
    %v6311 = vpop.f32.mrf.mxu0
    %6312 = vmatprep.mubr.f32.mxu0 0.0
    %v6313 = vand.u32 %v6061, 4294901760
    %v6314 = vsub.f32 %v6061, %v6313
    %6315 = vmatmul.mubr.f32.gmra.mxu0 %v6314
    %v6316 = vpop.f32.mrf.mxu0
    %v6317 = vadd.f32 %v6234, %v6316
    %v6318 = vpop.f32.mrf.mxu0
    %6319 = vdwg.mxu0
    %6320 = vmatprep.subr.mxu0 0.0
    %6321 = vmatpush1.msra.mxu0 0.0
    %6322 = vmatprep.subr.mxu0 0.0
    %6323 = vmatpush1.msra.mxu0 0.0
    %6324 = vmatprep.subr.mxu0 0.0
    %6325 = vmatpush1.msra.mxu0 0.0
    %6326 = vmatprep.subr.mxu0 0.0
    %6327 = vmatpush1.msra.mxu0 0.0
    %6328 = vmatprep.subr.mxu0 0.0
    %6329 = vmatpush1.msra.mxu0 0.0
    %6330 = vmatprep.subr.mxu0 0.0
    %6331 = vmatpush1.msra.mxu0 0.0
    %6332 = vmatprep.subr.mxu0 0.0
    %6333 = vmatpush1.msra.mxu0 0.0
    %6334 = vmatprep.subr.mxu0 0.0
    %6335 = vmatpush1.msra.mxu0 0.0
    %6336 = vmatprep.subr.mxu0 0.0
    %6337 = vmatpush1.msra.mxu0 0.0
    %6338 = vmatprep.subr.mxu0 0.0
    %6339 = vmatpush1.msra.mxu0 0.0
    %6340 = vmatprep.subr.mxu0 0.0
    %6341 = vmatpush1.msra.mxu0 0.0
    %6342 = vmatprep.subr.mxu0 0.0
    %6343 = vmatpush1.msra.mxu0 0.0
    %6344 = vmatprep.subr.mxu0 0.0
    %6345 = vmatpush1.msra.mxu0 0.0
    %6346 = vmatprep.subr.mxu0 0.0
    %6347 = vmatpush1.msra.mxu0 0.0
    %6348 = vmatprep.subr.mxu0 0.0
    %v6349 = vand.u32 %v2994, 4294901760
    %6350 = vmatpush1.msra.mxu0 %v6349
    %6351 = vmatprep.subr.mxu0 0.0
    %v6352 = vand.u32 %v2992, 4294901760
    %6353 = vmatpush1.msra.mxu0 %v6352
    %6354 = vmatprep.subr.mxu0 0.0
    %6355 = vmatpush2.msra.mxu0 0.0
    %6356 = vmatprep.subr.mxu0 0.0
    %6357 = vmatpush2.msra.mxu0 0.0
    %6358 = vmatprep.subr.mxu0 0.0
    %6359 = vmatpush2.msra.mxu0 0.0
    %6360 = vmatprep.subr.mxu0 0.0
    %6361 = vmatpush2.msra.mxu0 0.0
    %6362 = vmatprep.subr.mxu0 0.0
    %6363 = vmatpush2.msra.mxu0 0.0
    %6364 = vmatprep.subr.mxu0 0.0
    %6365 = vmatpush2.msra.mxu0 0.0
    %6366 = vmatprep.subr.mxu0 0.0
    %6367 = vmatpush2.msra.mxu0 0.0
    %6368 = vmatprep.subr.mxu0 0.0
    %6369 = vmatpush2.msra.mxu0 0.0
    %6370 = vmatprep.subr.mxu0 0.0
    %6371 = vmatpush2.msra.mxu0 0.0
    %6372 = vmatprep.subr.mxu0 0.0
    %6373 = vmatpush2.msra.mxu0 0.0
    %6374 = vmatprep.subr.mxu0 0.0
    %6375 = vmatpush2.msra.mxu0 0.0
    %6376 = vmatprep.subr.mxu0 0.0
    %6377 = vmatpush2.msra.mxu0 0.0
    %6378 = vmatprep.subr.mxu0 0.0
    %6379 = vmatpush2.msra.mxu0 0.0
    %6380 = vmatprep.subr.mxu0 0.0
    %6381 = vmatpush2.msra.mxu0 0.0
    %6382 = vmatprep.subr.mxu0 0.0
    %6383 = vmatpush2.msra.mxu0 0.0
    %6384 = vmatprep.subr.mxu0 0.0
    %6385 = vmatpush2.msra.mxu0 0.0
    %6386 = vmatprep.mubr.f32.mxu0 0.0
    %v6387 = vand.u32 %v6058, 4294901760
    %v6388 = vsub.f32 %v6058, %v6387
    %v6389 = vand.u32 %v6388, 4294901760
    %6390 = vmatmul.mubr.f32.gmra.mxu0 %v6389
    %v6391 = vpop.f32.mrf.mxu0
    %v6392 = vadd.f32 %v6310, %v6391
    %v6393 = vpop.f32.mrf.mxu0
    %6394 = vmatprep.mubr.f32.mxu0 0.0
    %v6395 = vand.u32 %v6061, 4294901760
    %v6396 = vsub.f32 %v6061, %v6395
    %v6397 = vand.u32 %v6396, 4294901760
    %6398 = vmatmul.mubr.f32.gmra.mxu0 %v6397
    %v6399 = vpop.f32.mrf.mxu0
    %v6400 = vadd.f32 %v6317, %v6399
    %v6401 = vpop.f32.mrf.mxu0
    %6402 = vdwg.mxu0
    %6403 = vmatprep.subr.mxu0 0.0
    %6404 = vmatpush1.msra.mxu0 0.0
    %6405 = vmatprep.subr.mxu0 0.0
    %6406 = vmatpush1.msra.mxu0 0.0
    %6407 = vmatprep.subr.mxu0 0.0
    %6408 = vmatpush1.msra.mxu0 0.0
    %6409 = vmatprep.subr.mxu0 0.0
    %6410 = vmatpush1.msra.mxu0 0.0
    %6411 = vmatprep.subr.mxu0 0.0
    %6412 = vmatpush1.msra.mxu0 0.0
    %6413 = vmatprep.subr.mxu0 0.0
    %6414 = vmatpush1.msra.mxu0 0.0
    %6415 = vmatprep.subr.mxu0 0.0
    %6416 = vmatpush1.msra.mxu0 0.0
    %6417 = vmatprep.subr.mxu0 0.0
    %6418 = vmatpush1.msra.mxu0 0.0
    %6419 = vmatprep.subr.mxu0 0.0
    %6420 = vmatpush1.msra.mxu0 0.0
    %6421 = vmatprep.subr.mxu0 0.0
    %6422 = vmatpush1.msra.mxu0 0.0
    %6423 = vmatprep.subr.mxu0 0.0
    %6424 = vmatpush1.msra.mxu0 0.0
    %6425 = vmatprep.subr.mxu0 0.0
    %6426 = vmatpush1.msra.mxu0 0.0
    %6427 = vmatprep.subr.mxu0 0.0
    %6428 = vmatpush1.msra.mxu0 0.0
    %6429 = vmatprep.subr.mxu0 0.0
    %6430 = vmatpush1.msra.mxu0 0.0
    %6431 = vmatprep.subr.mxu0 0.0
    %v6432 = vand.u32 %v2994, 4294901760
    %v6433 = vsub.f32 %v2994, %v6432
    %v6434 = vand.u32 %v6433, 4294901760
    %6435 = vmatpush1.msra.mxu0 %v6434
    %6436 = vmatprep.subr.mxu0 0.0
    %v6437 = vand.u32 %v2992, 4294901760
    %v6438 = vsub.f32 %v2992, %v6437
    %v6439 = vand.u32 %v6438, 4294901760
    %6440 = vmatpush1.msra.mxu0 %v6439
    %6441 = vmatprep.subr.mxu0 0.0
    %6442 = vmatpush2.msra.mxu0 0.0
    %6443 = vmatprep.subr.mxu0 0.0
    %6444 = vmatpush2.msra.mxu0 0.0
    %6445 = vmatprep.subr.mxu0 0.0
    %6446 = vmatpush2.msra.mxu0 0.0
    %6447 = vmatprep.subr.mxu0 0.0
    %6448 = vmatpush2.msra.mxu0 0.0
    %6449 = vmatprep.subr.mxu0 0.0
    %6450 = vmatpush2.msra.mxu0 0.0
    %6451 = vmatprep.subr.mxu0 0.0
    %6452 = vmatpush2.msra.mxu0 0.0
    %6453 = vmatprep.subr.mxu0 0.0
    %6454 = vmatpush2.msra.mxu0 0.0
    %6455 = vmatprep.subr.mxu0 0.0
    %6456 = vmatpush2.msra.mxu0 0.0
    %6457 = vmatprep.subr.mxu0 0.0
    %6458 = vmatpush2.msra.mxu0 0.0
    %6459 = vmatprep.subr.mxu0 0.0
    %6460 = vmatpush2.msra.mxu0 0.0
    %6461 = vmatprep.subr.mxu0 0.0
    %6462 = vmatpush2.msra.mxu0 0.0
    %6463 = vmatprep.subr.mxu0 0.0
    %6464 = vmatpush2.msra.mxu0 0.0
    %6465 = vmatprep.subr.mxu0 0.0
    %6466 = vmatpush2.msra.mxu0 0.0
    %6467 = vmatprep.subr.mxu0 0.0
    %6468 = vmatpush2.msra.mxu0 0.0
    %6469 = vmatprep.subr.mxu0 0.0
    %6470 = vmatpush2.msra.mxu0 0.0
    %6471 = vmatprep.subr.mxu0 0.0
    %6472 = vmatpush2.msra.mxu0 0.0
    %6473 = vmatprep.mubr.f32.mxu0 0.0
    %v6474 = vand.u32 %v6058, 4294901760
    %6475 = vmatmul.mubr.f32.gmra.mxu0 %v6474
    %v6476 = vpop.f32.mrf.mxu0
    %v6477 = vadd.f32 %v6392, %v6476
    %v6478 = vpop.f32.mrf.mxu0
    %6479 = vmatprep.mubr.f32.mxu0 0.0
    %v6480 = vand.u32 %v6061, 4294901760
    %6481 = vmatmul.mubr.f32.gmra.mxu0 %v6480
    %v6482 = vpop.f32.mrf.mxu0
    %v6483 = vadd.f32 %v6400, %v6482
    %v6484 = vpop.f32.mrf.mxu0
    %6485 = vdwg.mxu0
    %6486 = vmatprep.subr.mxu0 0.0
    %6487 = vmatpush1.msra.mxu0 0.0
    %6488 = vmatprep.subr.mxu0 0.0
    %6489 = vmatpush1.msra.mxu0 0.0
    %6490 = vmatprep.subr.mxu0 0.0
    %6491 = vmatpush1.msra.mxu0 0.0
    %6492 = vmatprep.subr.mxu0 0.0
    %6493 = vmatpush1.msra.mxu0 0.0
    %6494 = vmatprep.subr.mxu0 0.0
    %6495 = vmatpush1.msra.mxu0 0.0
    %6496 = vmatprep.subr.mxu0 0.0
    %6497 = vmatpush1.msra.mxu0 0.0
    %6498 = vmatprep.subr.mxu0 0.0
    %6499 = vmatpush1.msra.mxu0 0.0
    %6500 = vmatprep.subr.mxu0 0.0
    %6501 = vmatpush1.msra.mxu0 0.0
    %6502 = vmatprep.subr.mxu0 0.0
    %6503 = vmatpush1.msra.mxu0 0.0
    %6504 = vmatprep.subr.mxu0 0.0
    %6505 = vmatpush1.msra.mxu0 0.0
    %6506 = vmatprep.subr.mxu0 0.0
    %6507 = vmatpush1.msra.mxu0 0.0
    %6508 = vmatprep.subr.mxu0 0.0
    %6509 = vmatpush1.msra.mxu0 0.0
    %6510 = vmatprep.subr.mxu0 0.0
    %6511 = vmatpush1.msra.mxu0 0.0
    %6512 = vmatprep.subr.mxu0 0.0
    %6513 = vmatpush1.msra.mxu0 0.0
    %6514 = vmatprep.subr.mxu0 0.0
    %v6515 = vand.u32 %v2994, 4294901760
    %6516 = vmatpush1.msra.mxu0 %v6515
    %6517 = vmatprep.subr.mxu0 0.0
    %v6518 = vand.u32 %v2992, 4294901760
    %6519 = vmatpush1.msra.mxu0 %v6518
    %6520 = vmatprep.subr.mxu0 0.0
    %6521 = vmatpush2.msra.mxu0 0.0
    %6522 = vmatprep.subr.mxu0 0.0
    %6523 = vmatpush2.msra.mxu0 0.0
    %6524 = vmatprep.subr.mxu0 0.0
    %6525 = vmatpush2.msra.mxu0 0.0
    %6526 = vmatprep.subr.mxu0 0.0
    %6527 = vmatpush2.msra.mxu0 0.0
    %6528 = vmatprep.subr.mxu0 0.0
    %6529 = vmatpush2.msra.mxu0 0.0
    %6530 = vmatprep.subr.mxu0 0.0
    %6531 = vmatpush2.msra.mxu0 0.0
    %6532 = vmatprep.subr.mxu0 0.0
    %6533 = vmatpush2.msra.mxu0 0.0
    %6534 = vmatprep.subr.mxu0 0.0
    %6535 = vmatpush2.msra.mxu0 0.0
    %6536 = vmatprep.subr.mxu0 0.0
    %6537 = vmatpush2.msra.mxu0 0.0
    %6538 = vmatprep.subr.mxu0 0.0
    %6539 = vmatpush2.msra.mxu0 0.0
    %6540 = vmatprep.subr.mxu0 0.0
    %6541 = vmatpush2.msra.mxu0 0.0
    %6542 = vmatprep.subr.mxu0 0.0
    %6543 = vmatpush2.msra.mxu0 0.0
    %6544 = vmatprep.subr.mxu0 0.0
    %6545 = vmatpush2.msra.mxu0 0.0
    %6546 = vmatprep.subr.mxu0 0.0
    %6547 = vmatpush2.msra.mxu0 0.0
    %6548 = vmatprep.subr.mxu0 0.0
    %6549 = vmatpush2.msra.mxu0 0.0
    %6550 = vmatprep.subr.mxu0 0.0
    %6551 = vmatpush2.msra.mxu0 0.0
    %6552 = vmatprep.mubr.f32.mxu0 0.0
    %v6553 = vand.u32 %v6058, 4294901760
    %6554 = vmatmul.mubr.f32.gmra.mxu0 %v6553
    %v6555 = vpop.f32.mrf.mxu0
    %v6556 = vadd.f32 %v6477, %v6555
    %v6557 = vpop.f32.mrf.mxu0
    %6558 = vmatprep.mubr.f32.mxu0 0.0
    %v6559 = vand.u32 %v6061, 4294901760
    %6560 = vmatmul.mubr.f32.gmra.mxu0 %v6559
    %v6561 = vpop.f32.mrf.mxu0
    %v6562 = vadd.f32 %v6483, %v6561
    %v6563 = vpop.f32.mrf.mxu0
    %6564 = vdwg.mxu0
    %v6565 = vmul.f32 %v6045, %v6556
    %v6566 = vmul.f32 %v6051, %v6562
    %v6567 = vadd.f32 %v5547, %v6565
    %v6568 = vadd.f32 %v5548, %v6566
    %v6569 = vld [vmem:[#allocation16] sm:$0xff]
    %v6570 = vld [vmem:[#allocation16 + $0x8] sm:$0xff]
    %v6571 = vmul.f32 %v6567, %v6569
    %v6572 = vmul.f32 %v6568, %v6570
    %v6573 = vsel %vm2480, %v6571, -inf
    %6574 = vmax.xlane.f32.xlu0 %v6573
    %v6575 = vpop.xlane.xlu0 %6574
    %v6576 = vsel %vm2480, %v6572, -inf
    %6577 = vmax.xlane.f32.xlu0 %v6576
    %v6578 = vpop.xlane.xlu0 %6577
    %v6579 = vsub.f32 %v6571, %v6575
    %v6580 = vsub.f32 %v6572, %v6578
    %v6581 = vmul.f32 %v6579, 1.442695
    %v6582 = vpow.pop %v6581
    %v6583 = vmul.f32 %v6580, 1.442695
    %v6584 = vpow.pop %v6583
    %v6585 = vld [vmem:[%s10] sm:$0xff]
    %v6586 = vld [vmem:[%s10 + $0x8] sm:$0xff]
    %v6588 = vsel %vm2480, %v6582, 0
    %v6591 = vsel %vm2480, %v6584, 0
    %6593 = vmatprep.subr.mxu0 0.0
    %6594 = vmatpush1.msra.mxu0 0.0
    %6595 = vmatprep.subr.mxu0 0.0
    %6596 = vmatpush1.msra.mxu0 0.0
    %6597 = vmatprep.subr.mxu0 0.0
    %6598 = vmatpush1.msra.mxu0 0.0
    %6599 = vmatprep.subr.mxu0 0.0
    %6600 = vmatpush1.msra.mxu0 0.0
    %6601 = vmatprep.subr.mxu0 0.0
    %6602 = vmatpush1.msra.mxu0 0.0
    %6603 = vmatprep.subr.mxu0 0.0
    %6604 = vmatpush1.msra.mxu0 0.0
    %6605 = vmatprep.subr.mxu0 0.0
    %6606 = vmatpush1.msra.mxu0 0.0
    %6607 = vmatprep.subr.mxu0 0.0
    %6608 = vmatpush1.msra.mxu0 0.0
    %6609 = vmatprep.subr.mxu0 0.0
    %6610 = vmatpush1.msra.mxu0 0.0
    %6611 = vmatprep.subr.mxu0 0.0
    %6612 = vmatpush1.msra.mxu0 0.0
    %6613 = vmatprep.subr.mxu0 0.0
    %6614 = vmatpush1.msra.mxu0 0.0
    %6615 = vmatprep.subr.mxu0 0.0
    %6616 = vmatpush1.msra.mxu0 0.0
    %6617 = vmatprep.subr.mxu0 0.0
    %6618 = vmatpush1.msra.mxu0 0.0
    %6619 = vmatprep.subr.mxu0 0.0
    %6620 = vmatpush1.msra.mxu0 0.0
    %6621 = vmatprep.subr.mxu0 0.0
    %v6622 = vand.u32 %v6586, 4294901760
    %6623 = vmatpush1.msra.mxu0 %v6622
    %6624 = vmatprep.subr.mxu0 0.0
    %v6625 = vand.u32 %v6585, 4294901760
    %6626 = vmatpush1.msra.mxu0 %v6625
    %6627 = vmatprep.subr.mxu0 0.0
    %6628 = vmatpush2.msra.mxu0 0.0
    %6629 = vmatprep.subr.mxu0 0.0
    %6630 = vmatpush2.msra.mxu0 0.0
    %6631 = vmatprep.subr.mxu0 0.0
    %6632 = vmatpush2.msra.mxu0 0.0
    %6633 = vmatprep.subr.mxu0 0.0
    %6634 = vmatpush2.msra.mxu0 0.0
    %6635 = vmatprep.subr.mxu0 0.0
    %6636 = vmatpush2.msra.mxu0 0.0
    %6637 = vmatprep.subr.mxu0 0.0
    %6638 = vmatpush2.msra.mxu0 0.0
    %6639 = vmatprep.subr.mxu0 0.0
    %6640 = vmatpush2.msra.mxu0 0.0
    %6641 = vmatprep.subr.mxu0 0.0
    %6642 = vmatpush2.msra.mxu0 0.0
    %6643 = vmatprep.subr.mxu0 0.0
    %6644 = vmatpush2.msra.mxu0 0.0
    %6645 = vmatprep.subr.mxu0 0.0
    %6646 = vmatpush2.msra.mxu0 0.0
    %6647 = vmatprep.subr.mxu0 0.0
    %6648 = vmatpush2.msra.mxu0 0.0
    %6649 = vmatprep.subr.mxu0 0.0
    %6650 = vmatpush2.msra.mxu0 0.0
    %6651 = vmatprep.subr.mxu0 0.0
    %6652 = vmatpush2.msra.mxu0 0.0
    %6653 = vmatprep.subr.mxu0 0.0
    %6654 = vmatpush2.msra.mxu0 0.0
    %6655 = vmatprep.subr.mxu0 0.0
    %6656 = vmatpush2.msra.mxu0 0.0
    %6657 = vmatprep.subr.mxu0 0.0
    %6658 = vmatpush2.msra.mxu0 0.0
    %6659 = vmatprep.mubr.f32.mxu0 0.0
    %v6660 = vand.u32 %v6588, 4294901760
    %v6661 = vsub.f32 %v6588, %v6660
    %v6662 = vand.u32 %v6661, 4294901760
    %v6663 = vsub.f32 %v6661, %v6662
    %v6664 = vand.u32 %v6663, 4294901760
    %6665 = vmatmul.mubr.f32.gmra.mxu0 %v6664
    %v6666 = vpop.f32.mrf.mxu0
    %v6667 = vadd.f32 0.0, %v6666
    %v6668 = vpop.f32.mrf.mxu0
    %6669 = vmatprep.mubr.f32.mxu0 0.0
    %v6670 = vand.u32 %v6591, 4294901760
    %v6671 = vsub.f32 %v6591, %v6670
    %v6672 = vand.u32 %v6671, 4294901760
    %v6673 = vsub.f32 %v6671, %v6672
    %v6674 = vand.u32 %v6673, 4294901760
    %6675 = vmatmul.mubr.f32.gmra.mxu0 %v6674
    %v6676 = vpop.f32.mrf.mxu0
    %v6677 = vadd.f32 0.0, %v6676
    %v6678 = vpop.f32.mrf.mxu0
    %6679 = vdwg.mxu0
    %6680 = vmatprep.subr.mxu0 0.0
    %6681 = vmatpush1.msra.mxu0 0.0
    %6682 = vmatprep.subr.mxu0 0.0
    %6683 = vmatpush1.msra.mxu0 0.0
    %6684 = vmatprep.subr.mxu0 0.0
    %6685 = vmatpush1.msra.mxu0 0.0
    %6686 = vmatprep.subr.mxu0 0.0
    %6687 = vmatpush1.msra.mxu0 0.0
    %6688 = vmatprep.subr.mxu0 0.0
    %6689 = vmatpush1.msra.mxu0 0.0
    %6690 = vmatprep.subr.mxu0 0.0
    %6691 = vmatpush1.msra.mxu0 0.0
    %6692 = vmatprep.subr.mxu0 0.0
    %6693 = vmatpush1.msra.mxu0 0.0
    %6694 = vmatprep.subr.mxu0 0.0
    %6695 = vmatpush1.msra.mxu0 0.0
    %6696 = vmatprep.subr.mxu0 0.0
    %6697 = vmatpush1.msra.mxu0 0.0
    %6698 = vmatprep.subr.mxu0 0.0
    %6699 = vmatpush1.msra.mxu0 0.0
    %6700 = vmatprep.subr.mxu0 0.0
    %6701 = vmatpush1.msra.mxu0 0.0
    %6702 = vmatprep.subr.mxu0 0.0
    %6703 = vmatpush1.msra.mxu0 0.0
    %6704 = vmatprep.subr.mxu0 0.0
    %6705 = vmatpush1.msra.mxu0 0.0
    %6706 = vmatprep.subr.mxu0 0.0
    %6707 = vmatpush1.msra.mxu0 0.0
    %6708 = vmatprep.subr.mxu0 0.0
    %v6709 = vand.u32 %v6586, 4294901760
    %v6710 = vsub.f32 %v6586, %v6709
    %v6711 = vand.u32 %v6710, 4294901760
    %v6712 = vsub.f32 %v6710, %v6711
    %v6713 = vand.u32 %v6712, 4294901760
    %6714 = vmatpush1.msra.mxu0 %v6713
    %6715 = vmatprep.subr.mxu0 0.0
    %v6716 = vand.u32 %v6585, 4294901760
    %v6717 = vsub.f32 %v6585, %v6716
    %v6718 = vand.u32 %v6717, 4294901760
    %v6719 = vsub.f32 %v6717, %v6718
    %v6720 = vand.u32 %v6719, 4294901760
    %6721 = vmatpush1.msra.mxu0 %v6720
    %6722 = vmatprep.subr.mxu0 0.0
    %6723 = vmatpush2.msra.mxu0 0.0
    %6724 = vmatprep.subr.mxu0 0.0
    %6725 = vmatpush2.msra.mxu0 0.0
    %6726 = vmatprep.subr.mxu0 0.0
    %6727 = vmatpush2.msra.mxu0 0.0
    %6728 = vmatprep.subr.mxu0 0.0
    %6729 = vmatpush2.msra.mxu0 0.0
    %6730 = vmatprep.subr.mxu0 0.0
    %6731 = vmatpush2.msra.mxu0 0.0
    %6732 = vmatprep.subr.mxu0 0.0
    %6733 = vmatpush2.msra.mxu0 0.0
    %6734 = vmatprep.subr.mxu0 0.0
    %6735 = vmatpush2.msra.mxu0 0.0
    %6736 = vmatprep.subr.mxu0 0.0
    %6737 = vmatpush2.msra.mxu0 0.0
    %6738 = vmatprep.subr.mxu0 0.0
    %6739 = vmatpush2.msra.mxu0 0.0
    %6740 = vmatprep.subr.mxu0 0.0
    %6741 = vmatpush2.msra.mxu0 0.0
    %6742 = vmatprep.subr.mxu0 0.0
    %6743 = vmatpush2.msra.mxu0 0.0
    %6744 = vmatprep.subr.mxu0 0.0
    %6745 = vmatpush2.msra.mxu0 0.0
    %6746 = vmatprep.subr.mxu0 0.0
    %6747 = vmatpush2.msra.mxu0 0.0
    %6748 = vmatprep.subr.mxu0 0.0
    %6749 = vmatpush2.msra.mxu0 0.0
    %6750 = vmatprep.subr.mxu0 0.0
    %6751 = vmatpush2.msra.mxu0 0.0
    %6752 = vmatprep.subr.mxu0 0.0
    %6753 = vmatpush2.msra.mxu0 0.0
    %6754 = vmatprep.mubr.f32.mxu0 0.0
    %v6755 = vand.u32 %v6588, 4294901760
    %6756 = vmatmul.mubr.f32.gmra.mxu0 %v6755
    %v6757 = vpop.f32.mrf.mxu0
    %v6758 = vadd.f32 %v6667, %v6757
    %v6759 = vpop.f32.mrf.mxu0
    %6760 = vmatprep.mubr.f32.mxu0 0.0
    %v6761 = vand.u32 %v6591, 4294901760
    %6762 = vmatmul.mubr.f32.gmra.mxu0 %v6761
    %v6763 = vpop.f32.mrf.mxu0
    %v6764 = vadd.f32 %v6677, %v6763
    %v6765 = vpop.f32.mrf.mxu0
    %6766 = vdwg.mxu0
    %6767 = vmatprep.subr.mxu0 0.0
    %6768 = vmatpush1.msra.mxu0 0.0
    %6769 = vmatprep.subr.mxu0 0.0
    %6770 = vmatpush1.msra.mxu0 0.0
    %6771 = vmatprep.subr.mxu0 0.0
    %6772 = vmatpush1.msra.mxu0 0.0
    %6773 = vmatprep.subr.mxu0 0.0
    %6774 = vmatpush1.msra.mxu0 0.0
    %6775 = vmatprep.subr.mxu0 0.0
    %6776 = vmatpush1.msra.mxu0 0.0
    %6777 = vmatprep.subr.mxu0 0.0
    %6778 = vmatpush1.msra.mxu0 0.0
    %6779 = vmatprep.subr.mxu0 0.0
    %6780 = vmatpush1.msra.mxu0 0.0
    %6781 = vmatprep.subr.mxu0 0.0
    %6782 = vmatpush1.msra.mxu0 0.0
    %6783 = vmatprep.subr.mxu0 0.0
    %6784 = vmatpush1.msra.mxu0 0.0
    %6785 = vmatprep.subr.mxu0 0.0
    %6786 = vmatpush1.msra.mxu0 0.0
    %6787 = vmatprep.subr.mxu0 0.0
    %6788 = vmatpush1.msra.mxu0 0.0
    %6789 = vmatprep.subr.mxu0 0.0
    %6790 = vmatpush1.msra.mxu0 0.0
    %6791 = vmatprep.subr.mxu0 0.0
    %6792 = vmatpush1.msra.mxu0 0.0
    %6793 = vmatprep.subr.mxu0 0.0
    %6794 = vmatpush1.msra.mxu0 0.0
    %6795 = vmatprep.subr.mxu0 0.0
    %v6796 = vand.u32 %v6586, 4294901760
    %v6797 = vsub.f32 %v6586, %v6796
    %6798 = vmatpush1.msra.mxu0 %v6797
    %6799 = vmatprep.subr.mxu0 0.0
    %v6800 = vand.u32 %v6585, 4294901760
    %v6801 = vsub.f32 %v6585, %v6800
    %6802 = vmatpush1.msra.mxu0 %v6801
    %6803 = vmatprep.subr.mxu0 0.0
    %6804 = vmatpush2.msra.mxu0 0.0
    %6805 = vmatprep.subr.mxu0 0.0
    %6806 = vmatpush2.msra.mxu0 0.0
    %6807 = vmatprep.subr.mxu0 0.0
    %6808 = vmatpush2.msra.mxu0 0.0
    %6809 = vmatprep.subr.mxu0 0.0
    %6810 = vmatpush2.msra.mxu0 0.0
    %6811 = vmatprep.subr.mxu0 0.0
    %6812 = vmatpush2.msra.mxu0 0.0
    %6813 = vmatprep.subr.mxu0 0.0
    %6814 = vmatpush2.msra.mxu0 0.0
    %6815 = vmatprep.subr.mxu0 0.0
    %6816 = vmatpush2.msra.mxu0 0.0
    %6817 = vmatprep.subr.mxu0 0.0
    %6818 = vmatpush2.msra.mxu0 0.0
    %6819 = vmatprep.subr.mxu0 0.0
    %6820 = vmatpush2.msra.mxu0 0.0
    %6821 = vmatprep.subr.mxu0 0.0
    %6822 = vmatpush2.msra.mxu0 0.0
    %6823 = vmatprep.subr.mxu0 0.0
    %6824 = vmatpush2.msra.mxu0 0.0
    %6825 = vmatprep.subr.mxu0 0.0
    %6826 = vmatpush2.msra.mxu0 0.0
    %6827 = vmatprep.subr.mxu0 0.0
    %6828 = vmatpush2.msra.mxu0 0.0
    %6829 = vmatprep.subr.mxu0 0.0
    %6830 = vmatpush2.msra.mxu0 0.0
    %6831 = vmatprep.subr.mxu0 0.0
    %6832 = vmatpush2.msra.mxu0 0.0
    %6833 = vmatprep.subr.mxu0 0.0
    %6834 = vmatpush2.msra.mxu0 0.0
    %6835 = vmatprep.mubr.f32.mxu0 0.0
    %v6836 = vand.u32 %v6588, 4294901760
    %v6837 = vsub.f32 %v6588, %v6836
    %6838 = vmatmul.mubr.f32.gmra.mxu0 %v6837
    %v6839 = vpop.f32.mrf.mxu0
    %v6840 = vadd.f32 %v6758, %v6839
    %v6841 = vpop.f32.mrf.mxu0
    %6842 = vmatprep.mubr.f32.mxu0 0.0
    %v6843 = vand.u32 %v6591, 4294901760
    %v6844 = vsub.f32 %v6591, %v6843
    %6845 = vmatmul.mubr.f32.gmra.mxu0 %v6844
    %v6846 = vpop.f32.mrf.mxu0
    %v6847 = vadd.f32 %v6764, %v6846
    %v6848 = vpop.f32.mrf.mxu0
    %6849 = vdwg.mxu0
    %6850 = vmatprep.subr.mxu0 0.0
    %6851 = vmatpush1.msra.mxu0 0.0
    %6852 = vmatprep.subr.mxu0 0.0
    %6853 = vmatpush1.msra.mxu0 0.0
    %6854 = vmatprep.subr.mxu0 0.0
    %6855 = vmatpush1.msra.mxu0 0.0
    %6856 = vmatprep.subr.mxu0 0.0
    %6857 = vmatpush1.msra.mxu0 0.0
    %6858 = vmatprep.subr.mxu0 0.0
    %6859 = vmatpush1.msra.mxu0 0.0
    %6860 = vmatprep.subr.mxu0 0.0
    %6861 = vmatpush1.msra.mxu0 0.0
    %6862 = vmatprep.subr.mxu0 0.0
    %6863 = vmatpush1.msra.mxu0 0.0
    %6864 = vmatprep.subr.mxu0 0.0
    %6865 = vmatpush1.msra.mxu0 0.0
    %6866 = vmatprep.subr.mxu0 0.0
    %6867 = vmatpush1.msra.mxu0 0.0
    %6868 = vmatprep.subr.mxu0 0.0
    %6869 = vmatpush1.msra.mxu0 0.0
    %6870 = vmatprep.subr.mxu0 0.0
    %6871 = vmatpush1.msra.mxu0 0.0
    %6872 = vmatprep.subr.mxu0 0.0
    %6873 = vmatpush1.msra.mxu0 0.0
    %6874 = vmatprep.subr.mxu0 0.0
    %6875 = vmatpush1.msra.mxu0 0.0
    %6876 = vmatprep.subr.mxu0 0.0
    %6877 = vmatpush1.msra.mxu0 0.0
    %6878 = vmatprep.subr.mxu0 0.0
    %v6879 = vand.u32 %v6586, 4294901760
    %6880 = vmatpush1.msra.mxu0 %v6879
    %6881 = vmatprep.subr.mxu0 0.0
    %v6882 = vand.u32 %v6585, 4294901760
    %6883 = vmatpush1.msra.mxu0 %v6882
    %6884 = vmatprep.subr.mxu0 0.0
    %6885 = vmatpush2.msra.mxu0 0.0
    %6886 = vmatprep.subr.mxu0 0.0
    %6887 = vmatpush2.msra.mxu0 0.0
    %6888 = vmatprep.subr.mxu0 0.0
    %6889 = vmatpush2.msra.mxu0 0.0
    %6890 = vmatprep.subr.mxu0 0.0
    %6891 = vmatpush2.msra.mxu0 0.0
    %6892 = vmatprep.subr.mxu0 0.0
    %6893 = vmatpush2.msra.mxu0 0.0
    %6894 = vmatprep.subr.mxu0 0.0
    %6895 = vmatpush2.msra.mxu0 0.0
    %6896 = vmatprep.subr.mxu0 0.0
    %6897 = vmatpush2.msra.mxu0 0.0
    %6898 = vmatprep.subr.mxu0 0.0
    %6899 = vmatpush2.msra.mxu0 0.0
    %6900 = vmatprep.subr.mxu0 0.0
    %6901 = vmatpush2.msra.mxu0 0.0
    %6902 = vmatprep.subr.mxu0 0.0
    %6903 = vmatpush2.msra.mxu0 0.0
    %6904 = vmatprep.subr.mxu0 0.0
    %6905 = vmatpush2.msra.mxu0 0.0
    %6906 = vmatprep.subr.mxu0 0.0
    %6907 = vmatpush2.msra.mxu0 0.0
    %6908 = vmatprep.subr.mxu0 0.0
    %6909 = vmatpush2.msra.mxu0 0.0
    %6910 = vmatprep.subr.mxu0 0.0
    %6911 = vmatpush2.msra.mxu0 0.0
    %6912 = vmatprep.subr.mxu0 0.0
    %6913 = vmatpush2.msra.mxu0 0.0
    %6914 = vmatprep.subr.mxu0 0.0
    %6915 = vmatpush2.msra.mxu0 0.0
    %6916 = vmatprep.mubr.f32.mxu0 0.0
    %v6917 = vand.u32 %v6588, 4294901760
    %v6918 = vsub.f32 %v6588, %v6917
    %v6919 = vand.u32 %v6918, 4294901760
    %6920 = vmatmul.mubr.f32.gmra.mxu0 %v6919
    %v6921 = vpop.f32.mrf.mxu0
    %v6922 = vadd.f32 %v6840, %v6921
    %v6923 = vpop.f32.mrf.mxu0
    %6924 = vmatprep.mubr.f32.mxu0 0.0
    %v6925 = vand.u32 %v6591, 4294901760
    %v6926 = vsub.f32 %v6591, %v6925
    %v6927 = vand.u32 %v6926, 4294901760
    %6928 = vmatmul.mubr.f32.gmra.mxu0 %v6927
    %v6929 = vpop.f32.mrf.mxu0
    %v6930 = vadd.f32 %v6847, %v6929
    %v6931 = vpop.f32.mrf.mxu0
    %6932 = vdwg.mxu0
    %6933 = vmatprep.subr.mxu0 0.0
    %6934 = vmatpush1.msra.mxu0 0.0
    %6935 = vmatprep.subr.mxu0 0.0
    %6936 = vmatpush1.msra.mxu0 0.0
    %6937 = vmatprep.subr.mxu0 0.0
    %6938 = vmatpush1.msra.mxu0 0.0
    %6939 = vmatprep.subr.mxu0 0.0
    %6940 = vmatpush1.msra.mxu0 0.0
    %6941 = vmatprep.subr.mxu0 0.0
    %6942 = vmatpush1.msra.mxu0 0.0
    %6943 = vmatprep.subr.mxu0 0.0
    %6944 = vmatpush1.msra.mxu0 0.0
    %6945 = vmatprep.subr.mxu0 0.0
    %6946 = vmatpush1.msra.mxu0 0.0
    %6947 = vmatprep.subr.mxu0 0.0
    %6948 = vmatpush1.msra.mxu0 0.0
    %6949 = vmatprep.subr.mxu0 0.0
    %6950 = vmatpush1.msra.mxu0 0.0
    %6951 = vmatprep.subr.mxu0 0.0
    %6952 = vmatpush1.msra.mxu0 0.0
    %6953 = vmatprep.subr.mxu0 0.0
    %6954 = vmatpush1.msra.mxu0 0.0
    %6955 = vmatprep.subr.mxu0 0.0
    %6956 = vmatpush1.msra.mxu0 0.0
    %6957 = vmatprep.subr.mxu0 0.0
    %6958 = vmatpush1.msra.mxu0 0.0
    %6959 = vmatprep.subr.mxu0 0.0
    %6960 = vmatpush1.msra.mxu0 0.0
    %6961 = vmatprep.subr.mxu0 0.0
    %v6962 = vand.u32 %v6586, 4294901760
    %v6963 = vsub.f32 %v6586, %v6962
    %v6964 = vand.u32 %v6963, 4294901760
    %6965 = vmatpush1.msra.mxu0 %v6964
    %6966 = vmatprep.subr.mxu0 0.0
    %v6967 = vand.u32 %v6585, 4294901760
    %v6968 = vsub.f32 %v6585, %v6967
    %v6969 = vand.u32 %v6968, 4294901760
    %6970 = vmatpush1.msra.mxu0 %v6969
    %6971 = vmatprep.subr.mxu0 0.0
    %6972 = vmatpush2.msra.mxu0 0.0
    %6973 = vmatprep.subr.mxu0 0.0
    %6974 = vmatpush2.msra.mxu0 0.0
    %6975 = vmatprep.subr.mxu0 0.0
    %6976 = vmatpush2.msra.mxu0 0.0
    %6977 = vmatprep.subr.mxu0 0.0
    %6978 = vmatpush2.msra.mxu0 0.0
    %6979 = vmatprep.subr.mxu0 0.0
    %6980 = vmatpush2.msra.mxu0 0.0
    %6981 = vmatprep.subr.mxu0 0.0
    %6982 = vmatpush2.msra.mxu0 0.0
    %6983 = vmatprep.subr.mxu0 0.0
    %6984 = vmatpush2.msra.mxu0 0.0
    %6985 = vmatprep.subr.mxu0 0.0
    %6986 = vmatpush2.msra.mxu0 0.0
    %6987 = vmatprep.subr.mxu0 0.0
    %6988 = vmatpush2.msra.mxu0 0.0
    %6989 = vmatprep.subr.mxu0 0.0
    %6990 = vmatpush2.msra.mxu0 0.0
    %6991 = vmatprep.subr.mxu0 0.0
    %6992 = vmatpush2.msra.mxu0 0.0
    %6993 = vmatprep.subr.mxu0 0.0
    %6994 = vmatpush2.msra.mxu0 0.0
    %6995 = vmatprep.subr.mxu0 0.0
    %6996 = vmatpush2.msra.mxu0 0.0
    %6997 = vmatprep.subr.mxu0 0.0
    %6998 = vmatpush2.msra.mxu0 0.0
    %6999 = vmatprep.subr.mxu0 0.0
    %7000 = vmatpush2.msra.mxu0 0.0
    %7001 = vmatprep.subr.mxu0 0.0
    %7002 = vmatpush2.msra.mxu0 0.0
    %7003 = vmatprep.mubr.f32.mxu0 0.0
    %v7004 = vand.u32 %v6588, 4294901760
    %7005 = vmatmul.mubr.f32.gmra.mxu0 %v7004
    %v7006 = vpop.f32.mrf.mxu0
    %v7007 = vadd.f32 %v6922, %v7006
    %v7008 = vpop.f32.mrf.mxu0
    %7009 = vmatprep.mubr.f32.mxu0 0.0
    %v7010 = vand.u32 %v6591, 4294901760
    %7011 = vmatmul.mubr.f32.gmra.mxu0 %v7010
    %v7012 = vpop.f32.mrf.mxu0
    %v7013 = vadd.f32 %v6930, %v7012
    %v7014 = vpop.f32.mrf.mxu0
    %7015 = vdwg.mxu0
    %7016 = vmatprep.subr.mxu0 0.0
    %7017 = vmatpush1.msra.mxu0 0.0
    %7018 = vmatprep.subr.mxu0 0.0
    %7019 = vmatpush1.msra.mxu0 0.0
    %7020 = vmatprep.subr.mxu0 0.0
    %7021 = vmatpush1.msra.mxu0 0.0
    %7022 = vmatprep.subr.mxu0 0.0
    %7023 = vmatpush1.msra.mxu0 0.0
    %7024 = vmatprep.subr.mxu0 0.0
    %7025 = vmatpush1.msra.mxu0 0.0
    %7026 = vmatprep.subr.mxu0 0.0
    %7027 = vmatpush1.msra.mxu0 0.0
    %7028 = vmatprep.subr.mxu0 0.0
    %7029 = vmatpush1.msra.mxu0 0.0
    %7030 = vmatprep.subr.mxu0 0.0
    %7031 = vmatpush1.msra.mxu0 0.0
    %7032 = vmatprep.subr.mxu0 0.0
    %7033 = vmatpush1.msra.mxu0 0.0
    %7034 = vmatprep.subr.mxu0 0.0
    %7035 = vmatpush1.msra.mxu0 0.0
    %7036 = vmatprep.subr.mxu0 0.0
    %7037 = vmatpush1.msra.mxu0 0.0
    %7038 = vmatprep.subr.mxu0 0.0
    %7039 = vmatpush1.msra.mxu0 0.0
    %7040 = vmatprep.subr.mxu0 0.0
    %7041 = vmatpush1.msra.mxu0 0.0
    %7042 = vmatprep.subr.mxu0 0.0
    %7043 = vmatpush1.msra.mxu0 0.0
    %7044 = vmatprep.subr.mxu0 0.0
    %v7045 = vand.u32 %v6586, 4294901760
    %7046 = vmatpush1.msra.mxu0 %v7045
    %7047 = vmatprep.subr.mxu0 0.0
    %v7048 = vand.u32 %v6585, 4294901760
    %7049 = vmatpush1.msra.mxu0 %v7048
    %7050 = vmatprep.subr.mxu0 0.0
    %7051 = vmatpush2.msra.mxu0 0.0
    %7052 = vmatprep.subr.mxu0 0.0
    %7053 = vmatpush2.msra.mxu0 0.0
    %7054 = vmatprep.subr.mxu0 0.0
    %7055 = vmatpush2.msra.mxu0 0.0
    %7056 = vmatprep.subr.mxu0 0.0
    %7057 = vmatpush2.msra.mxu0 0.0
    %7058 = vmatprep.subr.mxu0 0.0
    %7059 = vmatpush2.msra.mxu0 0.0
    %7060 = vmatprep.subr.mxu0 0.0
    %7061 = vmatpush2.msra.mxu0 0.0
    %7062 = vmatprep.subr.mxu0 0.0
    %7063 = vmatpush2.msra.mxu0 0.0
    %7064 = vmatprep.subr.mxu0 0.0
    %7065 = vmatpush2.msra.mxu0 0.0
    %7066 = vmatprep.subr.mxu0 0.0
    %7067 = vmatpush2.msra.mxu0 0.0
    %7068 = vmatprep.subr.mxu0 0.0
    %7069 = vmatpush2.msra.mxu0 0.0
    %7070 = vmatprep.subr.mxu0 0.0
    %7071 = vmatpush2.msra.mxu0 0.0
    %7072 = vmatprep.subr.mxu0 0.0
    %7073 = vmatpush2.msra.mxu0 0.0
    %7074 = vmatprep.subr.mxu0 0.0
    %7075 = vmatpush2.msra.mxu0 0.0
    %7076 = vmatprep.subr.mxu0 0.0
    %7077 = vmatpush2.msra.mxu0 0.0
    %7078 = vmatprep.subr.mxu0 0.0
    %7079 = vmatpush2.msra.mxu0 0.0
    %7080 = vmatprep.subr.mxu0 0.0
    %7081 = vmatpush2.msra.mxu0 0.0
    %7082 = vmatprep.mubr.f32.mxu0 0.0
    %v7083 = vand.u32 %v6588, 4294901760
    %7084 = vmatmul.mubr.f32.gmra.mxu0 %v7083
    %v7085 = vpop.f32.mrf.mxu0
    %v7086 = vadd.f32 %v7007, %v7085
    %v7087 = vpop.f32.mrf.mxu0
    %7088 = vmatprep.mubr.f32.mxu0 0.0
    %v7089 = vand.u32 %v6591, 4294901760
    %7090 = vmatmul.mubr.f32.gmra.mxu0 %v7089
    %v7091 = vpop.f32.mrf.mxu0
    %v7092 = vadd.f32 %v7013, %v7091
    %v7093 = vpop.f32.mrf.mxu0
    %7094 = vdwg.mxu0
    %v7095 = vrcp.pop %v7086
    %v7096 = vmul.f32 %v6582, %v7095
    %v7097 = vrcp.pop %v7092
    %v7098 = vmul.f32 %v6584, %v7097
    %v7099 = vld [vmem:[#allocation17] sm:$0xff]
    %v7100 = vld [vmem:[#allocation17 + $0x8] sm:$0xff]
    %v7101 = vmul.f32 %v7096, %v7099
    %v7102 = vmul.f32 %v7098, %v7100
    %v7104 = vsel %vm2480, %v7101, 0
    %v7107 = vsel %vm2480, %v7102, 0
    %7109 = vmatprep.subr.mxu0 0.0
    %7110 = vmatpush1.msra.mxu0 0.0
    %7111 = vmatprep.subr.mxu0 0.0
    %7112 = vmatpush1.msra.mxu0 0.0
    %7113 = vmatprep.subr.mxu0 0.0
    %7114 = vmatpush1.msra.mxu0 0.0
    %7115 = vmatprep.subr.mxu0 0.0
    %7116 = vmatpush1.msra.mxu0 0.0
    %7117 = vmatprep.subr.mxu0 0.0
    %7118 = vmatpush1.msra.mxu0 0.0
    %7119 = vmatprep.subr.mxu0 0.0
    %7120 = vmatpush1.msra.mxu0 0.0
    %7121 = vmatprep.subr.mxu0 0.0
    %7122 = vmatpush1.msra.mxu0 0.0
    %7123 = vmatprep.subr.mxu0 0.0
    %7124 = vmatpush1.msra.mxu0 0.0
    %7125 = vmatprep.subr.mxu0 0.0
    %7126 = vmatpush1.msra.mxu0 0.0
    %7127 = vmatprep.subr.mxu0 0.0
    %7128 = vmatpush1.msra.mxu0 0.0
    %7129 = vmatprep.subr.mxu0 0.0
    %7130 = vmatpush1.msra.mxu0 0.0
    %7131 = vmatprep.subr.mxu0 0.0
    %7132 = vmatpush1.msra.mxu0 0.0
    %7133 = vmatprep.subr.mxu0 0.0
    %7134 = vmatpush1.msra.mxu0 0.0
    %7135 = vmatprep.subr.mxu0 0.0
    %7136 = vmatpush1.msra.mxu0 0.0
    %7137 = vmatprep.subr.mxu0 0.0
    %v7138 = vand.u32 %v2479, 4294901760
    %7139 = vmatpush1.msra.mxu0 %v7138
    %7140 = vmatprep.subr.mxu0 0.0
    %v7141 = vand.u32 %v2478, 4294901760
    %7142 = vmatpush1.msra.mxu0 %v7141
    %7143 = vmatprep.subr.mxu0 0.0
    %7144 = vmatpush2.msra.mxu0 0.0
    %7145 = vmatprep.subr.mxu0 0.0
    %7146 = vmatpush2.msra.mxu0 0.0
    %7147 = vmatprep.subr.mxu0 0.0
    %7148 = vmatpush2.msra.mxu0 0.0
    %7149 = vmatprep.subr.mxu0 0.0
    %7150 = vmatpush2.msra.mxu0 0.0
    %7151 = vmatprep.subr.mxu0 0.0
    %7152 = vmatpush2.msra.mxu0 0.0
    %7153 = vmatprep.subr.mxu0 0.0
    %7154 = vmatpush2.msra.mxu0 0.0
    %7155 = vmatprep.subr.mxu0 0.0
    %7156 = vmatpush2.msra.mxu0 0.0
    %7157 = vmatprep.subr.mxu0 0.0
    %7158 = vmatpush2.msra.mxu0 0.0
    %7159 = vmatprep.subr.mxu0 0.0
    %7160 = vmatpush2.msra.mxu0 0.0
    %7161 = vmatprep.subr.mxu0 0.0
    %7162 = vmatpush2.msra.mxu0 0.0
    %7163 = vmatprep.subr.mxu0 0.0
    %7164 = vmatpush2.msra.mxu0 0.0
    %7165 = vmatprep.subr.mxu0 0.0
    %7166 = vmatpush2.msra.mxu0 0.0
    %7167 = vmatprep.subr.mxu0 0.0
    %7168 = vmatpush2.msra.mxu0 0.0
    %7169 = vmatprep.subr.mxu0 0.0
    %7170 = vmatpush2.msra.mxu0 0.0
    %7171 = vmatprep.subr.mxu0 0.0
    %7172 = vmatpush2.msra.mxu0 0.0
    %7173 = vmatprep.subr.mxu0 0.0
    %7174 = vmatpush2.msra.mxu0 0.0
    %7175 = vmatprep.mubr.f32.mxu0 0.0
    %v7176 = vand.u32 %v7104, 4294901760
    %v7177 = vsub.f32 %v7104, %v7176
    %v7178 = vand.u32 %v7177, 4294901760
    %v7179 = vsub.f32 %v7177, %v7178
    %v7180 = vand.u32 %v7179, 4294901760
    %7181 = vmatmul.mubr.f32.gmra.mxu0 %v7180
    %v7182 = vpop.f32.mrf.mxu0
    %v7183 = vadd.f32 0.0, %v7182
    %v7184 = vpop.f32.mrf.mxu0
    %7185 = vmatprep.mubr.f32.mxu0 0.0
    %v7186 = vand.u32 %v7107, 4294901760
    %v7187 = vsub.f32 %v7107, %v7186
    %v7188 = vand.u32 %v7187, 4294901760
    %v7189 = vsub.f32 %v7187, %v7188
    %v7190 = vand.u32 %v7189, 4294901760
    %7191 = vmatmul.mubr.f32.gmra.mxu0 %v7190
    %v7192 = vpop.f32.mrf.mxu0
    %v7193 = vadd.f32 0.0, %v7192
    %v7194 = vpop.f32.mrf.mxu0
    %7195 = vdwg.mxu0
    %7196 = vmatprep.subr.mxu0 0.0
    %7197 = vmatpush1.msra.mxu0 0.0
    %7198 = vmatprep.subr.mxu0 0.0
    %7199 = vmatpush1.msra.mxu0 0.0
    %7200 = vmatprep.subr.mxu0 0.0
    %7201 = vmatpush1.msra.mxu0 0.0
    %7202 = vmatprep.subr.mxu0 0.0
    %7203 = vmatpush1.msra.mxu0 0.0
    %7204 = vmatprep.subr.mxu0 0.0
    %7205 = vmatpush1.msra.mxu0 0.0
    %7206 = vmatprep.subr.mxu0 0.0
    %7207 = vmatpush1.msra.mxu0 0.0
    %7208 = vmatprep.subr.mxu0 0.0
    %7209 = vmatpush1.msra.mxu0 0.0
    %7210 = vmatprep.subr.mxu0 0.0
    %7211 = vmatpush1.msra.mxu0 0.0
    %7212 = vmatprep.subr.mxu0 0.0
    %7213 = vmatpush1.msra.mxu0 0.0
    %7214 = vmatprep.subr.mxu0 0.0
    %7215 = vmatpush1.msra.mxu0 0.0
    %7216 = vmatprep.subr.mxu0 0.0
    %7217 = vmatpush1.msra.mxu0 0.0
    %7218 = vmatprep.subr.mxu0 0.0
    %7219 = vmatpush1.msra.mxu0 0.0
    %7220 = vmatprep.subr.mxu0 0.0
    %7221 = vmatpush1.msra.mxu0 0.0
    %7222 = vmatprep.subr.mxu0 0.0
    %7223 = vmatpush1.msra.mxu0 0.0
    %7224 = vmatprep.subr.mxu0 0.0
    %v7225 = vand.u32 %v2479, 4294901760
    %v7226 = vsub.f32 %v2479, %v7225
    %v7227 = vand.u32 %v7226, 4294901760
    %v7228 = vsub.f32 %v7226, %v7227
    %v7229 = vand.u32 %v7228, 4294901760
    %7230 = vmatpush1.msra.mxu0 %v7229
    %7231 = vmatprep.subr.mxu0 0.0
    %v7232 = vand.u32 %v2478, 4294901760
    %v7233 = vsub.f32 %v2478, %v7232
    %v7234 = vand.u32 %v7233, 4294901760
    %v7235 = vsub.f32 %v7233, %v7234
    %v7236 = vand.u32 %v7235, 4294901760
    %7237 = vmatpush1.msra.mxu0 %v7236
    %7238 = vmatprep.subr.mxu0 0.0
    %7239 = vmatpush2.msra.mxu0 0.0
    %7240 = vmatprep.subr.mxu0 0.0
    %7241 = vmatpush2.msra.mxu0 0.0
    %7242 = vmatprep.subr.mxu0 0.0
    %7243 = vmatpush2.msra.mxu0 0.0
    %7244 = vmatprep.subr.mxu0 0.0
    %7245 = vmatpush2.msra.mxu0 0.0
    %7246 = vmatprep.subr.mxu0 0.0
    %7247 = vmatpush2.msra.mxu0 0.0
    %7248 = vmatprep.subr.mxu0 0.0
    %7249 = vmatpush2.msra.mxu0 0.0
    %7250 = vmatprep.subr.mxu0 0.0
    %7251 = vmatpush2.msra.mxu0 0.0
    %7252 = vmatprep.subr.mxu0 0.0
    %7253 = vmatpush2.msra.mxu0 0.0
    %7254 = vmatprep.subr.mxu0 0.0
    %7255 = vmatpush2.msra.mxu0 0.0
    %7256 = vmatprep.subr.mxu0 0.0
    %7257 = vmatpush2.msra.mxu0 0.0
    %7258 = vmatprep.subr.mxu0 0.0
    %7259 = vmatpush2.msra.mxu0 0.0
    %7260 = vmatprep.subr.mxu0 0.0
    %7261 = vmatpush2.msra.mxu0 0.0
    %7262 = vmatprep.subr.mxu0 0.0
    %7263 = vmatpush2.msra.mxu0 0.0
    %7264 = vmatprep.subr.mxu0 0.0
    %7265 = vmatpush2.msra.mxu0 0.0
    %7266 = vmatprep.subr.mxu0 0.0
    %7267 = vmatpush2.msra.mxu0 0.0
    %7268 = vmatprep.subr.mxu0 0.0
    %7269 = vmatpush2.msra.mxu0 0.0
    %7270 = vmatprep.mubr.f32.mxu0 0.0
    %v7271 = vand.u32 %v7104, 4294901760
    %7272 = vmatmul.mubr.f32.gmra.mxu0 %v7271
    %v7273 = vpop.f32.mrf.mxu0
    %v7274 = vadd.f32 %v7183, %v7273
    %v7275 = vpop.f32.mrf.mxu0
    %7276 = vmatprep.mubr.f32.mxu0 0.0
    %v7277 = vand.u32 %v7107, 4294901760
    %7278 = vmatmul.mubr.f32.gmra.mxu0 %v7277
    %v7279 = vpop.f32.mrf.mxu0
    %v7280 = vadd.f32 %v7193, %v7279
    %v7281 = vpop.f32.mrf.mxu0
    %7282 = vdwg.mxu0
    %7283 = vmatprep.subr.mxu0 0.0
    %7284 = vmatpush1.msra.mxu0 0.0
    %7285 = vmatprep.subr.mxu0 0.0
    %7286 = vmatpush1.msra.mxu0 0.0
    %7287 = vmatprep.subr.mxu0 0.0
    %7288 = vmatpush1.msra.mxu0 0.0
    %7289 = vmatprep.subr.mxu0 0.0
    %7290 = vmatpush1.msra.mxu0 0.0
    %7291 = vmatprep.subr.mxu0 0.0
    %7292 = vmatpush1.msra.mxu0 0.0
    %7293 = vmatprep.subr.mxu0 0.0
    %7294 = vmatpush1.msra.mxu0 0.0
    %7295 = vmatprep.subr.mxu0 0.0
    %7296 = vmatpush1.msra.mxu0 0.0
    %7297 = vmatprep.subr.mxu0 0.0
    %7298 = vmatpush1.msra.mxu0 0.0
    %7299 = vmatprep.subr.mxu0 0.0
    %7300 = vmatpush1.msra.mxu0 0.0
    %7301 = vmatprep.subr.mxu0 0.0
    %7302 = vmatpush1.msra.mxu0 0.0
    %7303 = vmatprep.subr.mxu0 0.0
    %7304 = vmatpush1.msra.mxu0 0.0
    %7305 = vmatprep.subr.mxu0 0.0
    %7306 = vmatpush1.msra.mxu0 0.0
    %7307 = vmatprep.subr.mxu0 0.0
    %7308 = vmatpush1.msra.mxu0 0.0
    %7309 = vmatprep.subr.mxu0 0.0
    %7310 = vmatpush1.msra.mxu0 0.0
    %7311 = vmatprep.subr.mxu0 0.0
    %v7312 = vand.u32 %v2479, 4294901760
    %v7313 = vsub.f32 %v2479, %v7312
    %7314 = vmatpush1.msra.mxu0 %v7313
    %7315 = vmatprep.subr.mxu0 0.0
    %v7316 = vand.u32 %v2478, 4294901760
    %v7317 = vsub.f32 %v2478, %v7316
    %7318 = vmatpush1.msra.mxu0 %v7317
    %7319 = vmatprep.subr.mxu0 0.0
    %7320 = vmatpush2.msra.mxu0 0.0
    %7321 = vmatprep.subr.mxu0 0.0
    %7322 = vmatpush2.msra.mxu0 0.0
    %7323 = vmatprep.subr.mxu0 0.0
    %7324 = vmatpush2.msra.mxu0 0.0
    %7325 = vmatprep.subr.mxu0 0.0
    %7326 = vmatpush2.msra.mxu0 0.0
    %7327 = vmatprep.subr.mxu0 0.0
    %7328 = vmatpush2.msra.mxu0 0.0
    %7329 = vmatprep.subr.mxu0 0.0
    %7330 = vmatpush2.msra.mxu0 0.0
    %7331 = vmatprep.subr.mxu0 0.0
    %7332 = vmatpush2.msra.mxu0 0.0
    %7333 = vmatprep.subr.mxu0 0.0
    %7334 = vmatpush2.msra.mxu0 0.0
    %7335 = vmatprep.subr.mxu0 0.0
    %7336 = vmatpush2.msra.mxu0 0.0
    %7337 = vmatprep.subr.mxu0 0.0
    %7338 = vmatpush2.msra.mxu0 0.0
    %7339 = vmatprep.subr.mxu0 0.0
    %7340 = vmatpush2.msra.mxu0 0.0
    %7341 = vmatprep.subr.mxu0 0.0
    %7342 = vmatpush2.msra.mxu0 0.0
    %7343 = vmatprep.subr.mxu0 0.0
    %7344 = vmatpush2.msra.mxu0 0.0
    %7345 = vmatprep.subr.mxu0 0.0
    %7346 = vmatpush2.msra.mxu0 0.0
    %7347 = vmatprep.subr.mxu0 0.0
    %7348 = vmatpush2.msra.mxu0 0.0
    %7349 = vmatprep.subr.mxu0 0.0
    %7350 = vmatpush2.msra.mxu0 0.0
    %7351 = vmatprep.mubr.f32.mxu0 0.0
    %v7352 = vand.u32 %v7104, 4294901760
    %v7353 = vsub.f32 %v7104, %v7352
    %7354 = vmatmul.mubr.f32.gmra.mxu0 %v7353
    %v7355 = vpop.f32.mrf.mxu0
    %v7356 = vadd.f32 %v7274, %v7355
    %v7357 = vpop.f32.mrf.mxu0
    %7358 = vmatprep.mubr.f32.mxu0 0.0
    %v7359 = vand.u32 %v7107, 4294901760
    %v7360 = vsub.f32 %v7107, %v7359
    %7361 = vmatmul.mubr.f32.gmra.mxu0 %v7360
    %v7362 = vpop.f32.mrf.mxu0
    %v7363 = vadd.f32 %v7280, %v7362
    %v7364 = vpop.f32.mrf.mxu0
    %7365 = vdwg.mxu0
    %7366 = vmatprep.subr.mxu0 0.0
    %7367 = vmatpush1.msra.mxu0 0.0
    %7368 = vmatprep.subr.mxu0 0.0
    %7369 = vmatpush1.msra.mxu0 0.0
    %7370 = vmatprep.subr.mxu0 0.0
    %7371 = vmatpush1.msra.mxu0 0.0
    %7372 = vmatprep.subr.mxu0 0.0
    %7373 = vmatpush1.msra.mxu0 0.0
    %7374 = vmatprep.subr.mxu0 0.0
    %7375 = vmatpush1.msra.mxu0 0.0
    %7376 = vmatprep.subr.mxu0 0.0
    %7377 = vmatpush1.msra.mxu0 0.0
    %7378 = vmatprep.subr.mxu0 0.0
    %7379 = vmatpush1.msra.mxu0 0.0
    %7380 = vmatprep.subr.mxu0 0.0
    %7381 = vmatpush1.msra.mxu0 0.0
    %7382 = vmatprep.subr.mxu0 0.0
    %7383 = vmatpush1.msra.mxu0 0.0
    %7384 = vmatprep.subr.mxu0 0.0
    %7385 = vmatpush1.msra.mxu0 0.0
    %7386 = vmatprep.subr.mxu0 0.0
    %7387 = vmatpush1.msra.mxu0 0.0
    %7388 = vmatprep.subr.mxu0 0.0
    %7389 = vmatpush1.msra.mxu0 0.0
    %7390 = vmatprep.subr.mxu0 0.0
    %7391 = vmatpush1.msra.mxu0 0.0
    %7392 = vmatprep.subr.mxu0 0.0
    %7393 = vmatpush1.msra.mxu0 0.0
    %7394 = vmatprep.subr.mxu0 0.0
    %v7395 = vand.u32 %v2479, 4294901760
    %7396 = vmatpush1.msra.mxu0 %v7395
    %7397 = vmatprep.subr.mxu0 0.0
    %v7398 = vand.u32 %v2478, 4294901760
    %7399 = vmatpush1.msra.mxu0 %v7398
    %7400 = vmatprep.subr.mxu0 0.0
    %7401 = vmatpush2.msra.mxu0 0.0
    %7402 = vmatprep.subr.mxu0 0.0
    %7403 = vmatpush2.msra.mxu0 0.0
    %7404 = vmatprep.subr.mxu0 0.0
    %7405 = vmatpush2.msra.mxu0 0.0
    %7406 = vmatprep.subr.mxu0 0.0
    %7407 = vmatpush2.msra.mxu0 0.0
    %7408 = vmatprep.subr.mxu0 0.0
    %7409 = vmatpush2.msra.mxu0 0.0
    %7410 = vmatprep.subr.mxu0 0.0
    %7411 = vmatpush2.msra.mxu0 0.0
    %7412 = vmatprep.subr.mxu0 0.0
    %7413 = vmatpush2.msra.mxu0 0.0
    %7414 = vmatprep.subr.mxu0 0.0
    %7415 = vmatpush2.msra.mxu0 0.0
    %7416 = vmatprep.subr.mxu0 0.0
    %7417 = vmatpush2.msra.mxu0 0.0
    %7418 = vmatprep.subr.mxu0 0.0
    %7419 = vmatpush2.msra.mxu0 0.0
    %7420 = vmatprep.subr.mxu0 0.0
    %7421 = vmatpush2.msra.mxu0 0.0
    %7422 = vmatprep.subr.mxu0 0.0
    %7423 = vmatpush2.msra.mxu0 0.0
    %7424 = vmatprep.subr.mxu0 0.0
    %7425 = vmatpush2.msra.mxu0 0.0
    %7426 = vmatprep.subr.mxu0 0.0
    %7427 = vmatpush2.msra.mxu0 0.0
    %7428 = vmatprep.subr.mxu0 0.0
    %7429 = vmatpush2.msra.mxu0 0.0
    %7430 = vmatprep.subr.mxu0 0.0
    %7431 = vmatpush2.msra.mxu0 0.0
    %7432 = vmatprep.mubr.f32.mxu0 0.0
    %v7433 = vand.u32 %v7104, 4294901760
    %v7434 = vsub.f32 %v7104, %v7433
    %v7435 = vand.u32 %v7434, 4294901760
    %7436 = vmatmul.mubr.f32.gmra.mxu0 %v7435
    %v7437 = vpop.f32.mrf.mxu0
    %v7438 = vadd.f32 %v7356, %v7437
    %v7439 = vpop.f32.mrf.mxu0
    %7440 = vmatprep.mubr.f32.mxu0 0.0
    %v7441 = vand.u32 %v7107, 4294901760
    %v7442 = vsub.f32 %v7107, %v7441
    %v7443 = vand.u32 %v7442, 4294901760
    %7444 = vmatmul.mubr.f32.gmra.mxu0 %v7443
    %v7445 = vpop.f32.mrf.mxu0
    %v7446 = vadd.f32 %v7363, %v7445
    %v7447 = vpop.f32.mrf.mxu0
    %7448 = vdwg.mxu0
    %7449 = vmatprep.subr.mxu0 0.0
    %7450 = vmatpush1.msra.mxu0 0.0
    %7451 = vmatprep.subr.mxu0 0.0
    %7452 = vmatpush1.msra.mxu0 0.0
    %7453 = vmatprep.subr.mxu0 0.0
    %7454 = vmatpush1.msra.mxu0 0.0
    %7455 = vmatprep.subr.mxu0 0.0
    %7456 = vmatpush1.msra.mxu0 0.0
    %7457 = vmatprep.subr.mxu0 0.0
    %7458 = vmatpush1.msra.mxu0 0.0
    %7459 = vmatprep.subr.mxu0 0.0
    %7460 = vmatpush1.msra.mxu0 0.0
    %7461 = vmatprep.subr.mxu0 0.0
    %7462 = vmatpush1.msra.mxu0 0.0
    %7463 = vmatprep.subr.mxu0 0.0
    %7464 = vmatpush1.msra.mxu0 0.0
    %7465 = vmatprep.subr.mxu0 0.0
    %7466 = vmatpush1.msra.mxu0 0.0
    %7467 = vmatprep.subr.mxu0 0.0
    %7468 = vmatpush1.msra.mxu0 0.0
    %7469 = vmatprep.subr.mxu0 0.0
    %7470 = vmatpush1.msra.mxu0 0.0
    %7471 = vmatprep.subr.mxu0 0.0
    %7472 = vmatpush1.msra.mxu0 0.0
    %7473 = vmatprep.subr.mxu0 0.0
    %7474 = vmatpush1.msra.mxu0 0.0
    %7475 = vmatprep.subr.mxu0 0.0
    %7476 = vmatpush1.msra.mxu0 0.0
    %7477 = vmatprep.subr.mxu0 0.0
    %v7478 = vand.u32 %v2479, 4294901760
    %v7479 = vsub.f32 %v2479, %v7478
    %v7480 = vand.u32 %v7479, 4294901760
    %7481 = vmatpush1.msra.mxu0 %v7480
    %7482 = vmatprep.subr.mxu0 0.0
    %v7483 = vand.u32 %v2478, 4294901760
    %v7484 = vsub.f32 %v2478, %v7483
    %v7485 = vand.u32 %v7484, 4294901760
    %7486 = vmatpush1.msra.mxu0 %v7485
    %7487 = vmatprep.subr.mxu0 0.0
    %7488 = vmatpush2.msra.mxu0 0.0
    %7489 = vmatprep.subr.mxu0 0.0
    %7490 = vmatpush2.msra.mxu0 0.0
    %7491 = vmatprep.subr.mxu0 0.0
    %7492 = vmatpush2.msra.mxu0 0.0
    %7493 = vmatprep.subr.mxu0 0.0
    %7494 = vmatpush2.msra.mxu0 0.0
    %7495 = vmatprep.subr.mxu0 0.0
    %7496 = vmatpush2.msra.mxu0 0.0
    %7497 = vmatprep.subr.mxu0 0.0
    %7498 = vmatpush2.msra.mxu0 0.0
    %7499 = vmatprep.subr.mxu0 0.0
    %7500 = vmatpush2.msra.mxu0 0.0
    %7501 = vmatprep.subr.mxu0 0.0
    %7502 = vmatpush2.msra.mxu0 0.0
    %7503 = vmatprep.subr.mxu0 0.0
    %7504 = vmatpush2.msra.mxu0 0.0
    %7505 = vmatprep.subr.mxu0 0.0
    %7506 = vmatpush2.msra.mxu0 0.0
    %7507 = vmatprep.subr.mxu0 0.0
    %7508 = vmatpush2.msra.mxu0 0.0
    %7509 = vmatprep.subr.mxu0 0.0
    %7510 = vmatpush2.msra.mxu0 0.0
    %7511 = vmatprep.subr.mxu0 0.0
    %7512 = vmatpush2.msra.mxu0 0.0
    %7513 = vmatprep.subr.mxu0 0.0
    %7514 = vmatpush2.msra.mxu0 0.0
    %7515 = vmatprep.subr.mxu0 0.0
    %7516 = vmatpush2.msra.mxu0 0.0
    %7517 = vmatprep.subr.mxu0 0.0
    %7518 = vmatpush2.msra.mxu0 0.0
    %7519 = vmatprep.mubr.f32.mxu0 0.0
    %v7520 = vand.u32 %v7104, 4294901760
    %7521 = vmatmul.mubr.f32.gmra.mxu0 %v7520
    %v7522 = vpop.f32.mrf.mxu0
    %v7523 = vadd.f32 %v7438, %v7522
    %v7524 = vpop.f32.mrf.mxu0
    %7525 = vmatprep.mubr.f32.mxu0 0.0
    %v7526 = vand.u32 %v7107, 4294901760
    %7527 = vmatmul.mubr.f32.gmra.mxu0 %v7526
    %v7528 = vpop.f32.mrf.mxu0
    %v7529 = vadd.f32 %v7446, %v7528
    %v7530 = vpop.f32.mrf.mxu0
    %7531 = vdwg.mxu0
    %7532 = vmatprep.subr.mxu0 0.0
    %7533 = vmatpush1.msra.mxu0 0.0
    %7534 = vmatprep.subr.mxu0 0.0
    %7535 = vmatpush1.msra.mxu0 0.0
    %7536 = vmatprep.subr.mxu0 0.0
    %7537 = vmatpush1.msra.mxu0 0.0
    %7538 = vmatprep.subr.mxu0 0.0
    %7539 = vmatpush1.msra.mxu0 0.0
    %7540 = vmatprep.subr.mxu0 0.0
    %7541 = vmatpush1.msra.mxu0 0.0
    %7542 = vmatprep.subr.mxu0 0.0
    %7543 = vmatpush1.msra.mxu0 0.0
    %7544 = vmatprep.subr.mxu0 0.0
    %7545 = vmatpush1.msra.mxu0 0.0
    %7546 = vmatprep.subr.mxu0 0.0
    %7547 = vmatpush1.msra.mxu0 0.0
    %7548 = vmatprep.subr.mxu0 0.0
    %7549 = vmatpush1.msra.mxu0 0.0
    %7550 = vmatprep.subr.mxu0 0.0
    %7551 = vmatpush1.msra.mxu0 0.0
    %7552 = vmatprep.subr.mxu0 0.0
    %7553 = vmatpush1.msra.mxu0 0.0
    %7554 = vmatprep.subr.mxu0 0.0
    %7555 = vmatpush1.msra.mxu0 0.0
    %7556 = vmatprep.subr.mxu0 0.0
    %7557 = vmatpush1.msra.mxu0 0.0
    %7558 = vmatprep.subr.mxu0 0.0
    %7559 = vmatpush1.msra.mxu0 0.0
    %7560 = vmatprep.subr.mxu0 0.0
    %v7561 = vand.u32 %v2479, 4294901760
    %7562 = vmatpush1.msra.mxu0 %v7561
    %7563 = vmatprep.subr.mxu0 0.0
    %v7564 = vand.u32 %v2478, 4294901760
    %7565 = vmatpush1.msra.mxu0 %v7564
    %7566 = vmatprep.subr.mxu0 0.0
    %7567 = vmatpush2.msra.mxu0 0.0
    %7568 = vmatprep.subr.mxu0 0.0
    %7569 = vmatpush2.msra.mxu0 0.0
    %7570 = vmatprep.subr.mxu0 0.0
    %7571 = vmatpush2.msra.mxu0 0.0
    %7572 = vmatprep.subr.mxu0 0.0
    %7573 = vmatpush2.msra.mxu0 0.0
    %7574 = vmatprep.subr.mxu0 0.0
    %7575 = vmatpush2.msra.mxu0 0.0
    %7576 = vmatprep.subr.mxu0 0.0
    %7577 = vmatpush2.msra.mxu0 0.0
    %7578 = vmatprep.subr.mxu0 0.0
    %7579 = vmatpush2.msra.mxu0 0.0
    %7580 = vmatprep.subr.mxu0 0.0
    %7581 = vmatpush2.msra.mxu0 0.0
    %7582 = vmatprep.subr.mxu0 0.0
    %7583 = vmatpush2.msra.mxu0 0.0
    %7584 = vmatprep.subr.mxu0 0.0
    %7585 = vmatpush2.msra.mxu0 0.0
    %7586 = vmatprep.subr.mxu0 0.0
    %7587 = vmatpush2.msra.mxu0 0.0
    %7588 = vmatprep.subr.mxu0 0.0
    %7589 = vmatpush2.msra.mxu0 0.0
    %7590 = vmatprep.subr.mxu0 0.0
    %7591 = vmatpush2.msra.mxu0 0.0
    %7592 = vmatprep.subr.mxu0 0.0
    %7593 = vmatpush2.msra.mxu0 0.0
    %7594 = vmatprep.subr.mxu0 0.0
    %7595 = vmatpush2.msra.mxu0 0.0
    %7596 = vmatprep.subr.mxu0 0.0
    %7597 = vmatpush2.msra.mxu0 0.0
    %7598 = vmatprep.mubr.f32.mxu0 0.0
    %v7599 = vand.u32 %v7104, 4294901760
    %7600 = vmatmul.mubr.f32.gmra.mxu0 %v7599
    %v7601 = vpop.f32.mrf.mxu0
    %v7602 = vadd.f32 %v7523, %v7601
    %v7603 = vpop.f32.mrf.mxu0
    %7604 = vmatprep.mubr.f32.mxu0 0.0
    %v7605 = vand.u32 %v7107, 4294901760
    %7606 = vmatmul.mubr.f32.gmra.mxu0 %v7605
    %v7607 = vpop.f32.mrf.mxu0
    %v7608 = vadd.f32 %v7529, %v7607
    %v7609 = vpop.f32.mrf.mxu0
    %7610 = vdwg.mxu0
    %7611 = vrot.lane.b32.xlu0 %v2469, 96
    %v7612 = vpop.permute.xlu0 %7611
    %7613 = vrot.lane.b32.xlu0 %v2475, 96
    %v7614 = vpop.permute.xlu0 %7613
    %7617 = vmatprep.subr.mxu0 0.0
    %7618 = vmatpush1.msra.mxu0 0.0
    %7619 = vmatprep.subr.mxu0 0.0
    %7620 = vmatpush1.msra.mxu0 0.0
    %7621 = vmatprep.subr.mxu0 0.0
    %7622 = vmatpush1.msra.mxu0 0.0
    %7623 = vmatprep.subr.mxu0 0.0
    %7624 = vmatpush1.msra.mxu0 0.0
    %7625 = vmatprep.subr.mxu0 0.0
    %7626 = vmatpush1.msra.mxu0 0.0
    %7627 = vmatprep.subr.mxu0 0.0
    %7628 = vmatpush1.msra.mxu0 0.0
    %7629 = vmatprep.subr.mxu0 0.0
    %7630 = vmatpush1.msra.mxu0 0.0
    %7631 = vmatprep.subr.mxu0 0.0
    %7632 = vmatpush1.msra.mxu0 0.0
    %7633 = vmatprep.subr.mxu0 0.0
    %7634 = vmatpush1.msra.mxu0 0.0
    %7635 = vmatprep.subr.mxu0 0.0
    %7636 = vmatpush1.msra.mxu0 0.0
    %7637 = vmatprep.subr.mxu0 0.0
    %7638 = vmatpush1.msra.mxu0 0.0
    %7639 = vmatprep.subr.mxu0 0.0
    %7640 = vmatpush1.msra.mxu0 0.0
    %7641 = vmatprep.subr.mxu0 0.0
    %7642 = vmatpush1.msra.mxu0 0.0
    %7643 = vmatprep.subr.mxu0 0.0
    %7644 = vmatpush1.msra.mxu0 0.0
    %7645 = vmatprep.subr.mxu0 0.0
    %v7646 = vand.u32 %v7614, 4294901760
    %7647 = vmatpush1.msra.mxu0 %v7646
    %7648 = vmatprep.subr.mxu0 0.0
    %v7649 = vand.u32 %v7612, 4294901760
    %7650 = vmatpush1.msra.mxu0 %v7649
    %7651 = vmatprep.subr.mxu0 0.0
    %7652 = vmatpush2.msra.mxu0 0.0
    %7653 = vmatprep.subr.mxu0 0.0
    %7654 = vmatpush2.msra.mxu0 0.0
    %7655 = vmatprep.subr.mxu0 0.0
    %7656 = vmatpush2.msra.mxu0 0.0
    %7657 = vmatprep.subr.mxu0 0.0
    %7658 = vmatpush2.msra.mxu0 0.0
    %7659 = vmatprep.subr.mxu0 0.0
    %7660 = vmatpush2.msra.mxu0 0.0
    %7661 = vmatprep.subr.mxu0 0.0
    %7662 = vmatpush2.msra.mxu0 0.0
    %7663 = vmatprep.subr.mxu0 0.0
    %7664 = vmatpush2.msra.mxu0 0.0
    %7665 = vmatprep.subr.mxu0 0.0
    %7666 = vmatpush2.msra.mxu0 0.0
    %7667 = vmatprep.subr.mxu0 0.0
    %7668 = vmatpush2.msra.mxu0 0.0
    %7669 = vmatprep.subr.mxu0 0.0
    %7670 = vmatpush2.msra.mxu0 0.0
    %7671 = vmatprep.subr.mxu0 0.0
    %7672 = vmatpush2.msra.mxu0 0.0
    %7673 = vmatprep.subr.mxu0 0.0
    %7674 = vmatpush2.msra.mxu0 0.0
    %7675 = vmatprep.subr.mxu0 0.0
    %7676 = vmatpush2.msra.mxu0 0.0
    %7677 = vmatprep.subr.mxu0 0.0
    %7678 = vmatpush2.msra.mxu0 0.0
    %7679 = vmatprep.subr.mxu0 0.0
    %7680 = vmatpush2.msra.mxu0 0.0
    %7681 = vmatprep.subr.mxu0 0.0
    %7682 = vmatpush2.msra.mxu0 0.0
    %7683 = vmatprep.mubr.f32.mxu0 0.0
    %v7684 = vand.u32 %v2998, 4294901760
    %v7685 = vsub.f32 %v2998, %v7684
    %v7686 = vand.u32 %v7685, 4294901760
    %v7687 = vsub.f32 %v7685, %v7686
    %v7688 = vand.u32 %v7687, 4294901760
    %7689 = vmatmul.mubr.f32.gmra.mxu0 %v7688
    %v7690 = vpop.f32.mrf.mxu0
    %v7691 = vadd.f32 0.0, %v7690
    %v7692 = vpop.f32.mrf.mxu0
    %7693 = vmatprep.mubr.f32.mxu0 0.0
    %v7694 = vand.u32 %v3001, 4294901760
    %v7695 = vsub.f32 %v3001, %v7694
    %v7696 = vand.u32 %v7695, 4294901760
    %v7697 = vsub.f32 %v7695, %v7696
    %v7698 = vand.u32 %v7697, 4294901760
    %7699 = vmatmul.mubr.f32.gmra.mxu0 %v7698
    %v7700 = vpop.f32.mrf.mxu0
    %v7701 = vadd.f32 0.0, %v7700
    %v7702 = vpop.f32.mrf.mxu0
    %7703 = vdwg.mxu0
    %7704 = vmatprep.subr.mxu0 0.0
    %7705 = vmatpush1.msra.mxu0 0.0
    %7706 = vmatprep.subr.mxu0 0.0
    %7707 = vmatpush1.msra.mxu0 0.0
    %7708 = vmatprep.subr.mxu0 0.0
    %7709 = vmatpush1.msra.mxu0 0.0
    %7710 = vmatprep.subr.mxu0 0.0
    %7711 = vmatpush1.msra.mxu0 0.0
    %7712 = vmatprep.subr.mxu0 0.0
    %7713 = vmatpush1.msra.mxu0 0.0
    %7714 = vmatprep.subr.mxu0 0.0
    %7715 = vmatpush1.msra.mxu0 0.0
    %7716 = vmatprep.subr.mxu0 0.0
    %7717 = vmatpush1.msra.mxu0 0.0
    %7718 = vmatprep.subr.mxu0 0.0
    %7719 = vmatpush1.msra.mxu0 0.0
    %7720 = vmatprep.subr.mxu0 0.0
    %7721 = vmatpush1.msra.mxu0 0.0
    %7722 = vmatprep.subr.mxu0 0.0
    %7723 = vmatpush1.msra.mxu0 0.0
    %7724 = vmatprep.subr.mxu0 0.0
    %7725 = vmatpush1.msra.mxu0 0.0
    %7726 = vmatprep.subr.mxu0 0.0
    %7727 = vmatpush1.msra.mxu0 0.0
    %7728 = vmatprep.subr.mxu0 0.0
    %7729 = vmatpush1.msra.mxu0 0.0
    %7730 = vmatprep.subr.mxu0 0.0
    %7731 = vmatpush1.msra.mxu0 0.0
    %7732 = vmatprep.subr.mxu0 0.0
    %v7733 = vand.u32 %v7614, 4294901760
    %v7734 = vsub.f32 %v7614, %v7733
    %v7735 = vand.u32 %v7734, 4294901760
    %v7736 = vsub.f32 %v7734, %v7735
    %v7737 = vand.u32 %v7736, 4294901760
    %7738 = vmatpush1.msra.mxu0 %v7737
    %7739 = vmatprep.subr.mxu0 0.0
    %v7740 = vand.u32 %v7612, 4294901760
    %v7741 = vsub.f32 %v7612, %v7740
    %v7742 = vand.u32 %v7741, 4294901760
    %v7743 = vsub.f32 %v7741, %v7742
    %v7744 = vand.u32 %v7743, 4294901760
    %7745 = vmatpush1.msra.mxu0 %v7744
    %7746 = vmatprep.subr.mxu0 0.0
    %7747 = vmatpush2.msra.mxu0 0.0
    %7748 = vmatprep.subr.mxu0 0.0
    %7749 = vmatpush2.msra.mxu0 0.0
    %7750 = vmatprep.subr.mxu0 0.0
    %7751 = vmatpush2.msra.mxu0 0.0
    %7752 = vmatprep.subr.mxu0 0.0
    %7753 = vmatpush2.msra.mxu0 0.0
    %7754 = vmatprep.subr.mxu0 0.0
    %7755 = vmatpush2.msra.mxu0 0.0
    %7756 = vmatprep.subr.mxu0 0.0
    %7757 = vmatpush2.msra.mxu0 0.0
    %7758 = vmatprep.subr.mxu0 0.0
    %7759 = vmatpush2.msra.mxu0 0.0
    %7760 = vmatprep.subr.mxu0 0.0
    %7761 = vmatpush2.msra.mxu0 0.0
    %7762 = vmatprep.subr.mxu0 0.0
    %7763 = vmatpush2.msra.mxu0 0.0
    %7764 = vmatprep.subr.mxu0 0.0
    %7765 = vmatpush2.msra.mxu0 0.0
    %7766 = vmatprep.subr.mxu0 0.0
    %7767 = vmatpush2.msra.mxu0 0.0
    %7768 = vmatprep.subr.mxu0 0.0
    %7769 = vmatpush2.msra.mxu0 0.0
    %7770 = vmatprep.subr.mxu0 0.0
    %7771 = vmatpush2.msra.mxu0 0.0
    %7772 = vmatprep.subr.mxu0 0.0
    %7773 = vmatpush2.msra.mxu0 0.0
    %7774 = vmatprep.subr.mxu0 0.0
    %7775 = vmatpush2.msra.mxu0 0.0
    %7776 = vmatprep.subr.mxu0 0.0
    %7777 = vmatpush2.msra.mxu0 0.0
    %7778 = vmatprep.mubr.f32.mxu0 0.0
    %v7779 = vand.u32 %v2998, 4294901760
    %7780 = vmatmul.mubr.f32.gmra.mxu0 %v7779
    %v7781 = vpop.f32.mrf.mxu0
    %v7782 = vadd.f32 %v7691, %v7781
    %v7783 = vpop.f32.mrf.mxu0
    %7784 = vmatprep.mubr.f32.mxu0 0.0
    %v7785 = vand.u32 %v3001, 4294901760
    %7786 = vmatmul.mubr.f32.gmra.mxu0 %v7785
    %v7787 = vpop.f32.mrf.mxu0
    %v7788 = vadd.f32 %v7701, %v7787
    %v7789 = vpop.f32.mrf.mxu0
    %7790 = vdwg.mxu0
    %7791 = vmatprep.subr.mxu0 0.0
    %7792 = vmatpush1.msra.mxu0 0.0
    %7793 = vmatprep.subr.mxu0 0.0
    %7794 = vmatpush1.msra.mxu0 0.0
    %7795 = vmatprep.subr.mxu0 0.0
    %7796 = vmatpush1.msra.mxu0 0.0
    %7797 = vmatprep.subr.mxu0 0.0
    %7798 = vmatpush1.msra.mxu0 0.0
    %7799 = vmatprep.subr.mxu0 0.0
    %7800 = vmatpush1.msra.mxu0 0.0
    %7801 = vmatprep.subr.mxu0 0.0
    %7802 = vmatpush1.msra.mxu0 0.0
    %7803 = vmatprep.subr.mxu0 0.0
    %7804 = vmatpush1.msra.mxu0 0.0
    %7805 = vmatprep.subr.mxu0 0.0
    %7806 = vmatpush1.msra.mxu0 0.0
    %7807 = vmatprep.subr.mxu0 0.0
    %7808 = vmatpush1.msra.mxu0 0.0
    %7809 = vmatprep.subr.mxu0 0.0
    %7810 = vmatpush1.msra.mxu0 0.0
    %7811 = vmatprep.subr.mxu0 0.0
    %7812 = vmatpush1.msra.mxu0 0.0
    %7813 = vmatprep.subr.mxu0 0.0
    %7814 = vmatpush1.msra.mxu0 0.0
    %7815 = vmatprep.subr.mxu0 0.0
    %7816 = vmatpush1.msra.mxu0 0.0
    %7817 = vmatprep.subr.mxu0 0.0
    %7818 = vmatpush1.msra.mxu0 0.0
    %7819 = vmatprep.subr.mxu0 0.0
    %v7820 = vand.u32 %v7614, 4294901760
    %v7821 = vsub.f32 %v7614, %v7820
    %7822 = vmatpush1.msra.mxu0 %v7821
    %7823 = vmatprep.subr.mxu0 0.0
    %v7824 = vand.u32 %v7612, 4294901760
    %v7825 = vsub.f32 %v7612, %v7824
    %7826 = vmatpush1.msra.mxu0 %v7825
    %7827 = vmatprep.subr.mxu0 0.0
    %7828 = vmatpush2.msra.mxu0 0.0
    %7829 = vmatprep.subr.mxu0 0.0
    %7830 = vmatpush2.msra.mxu0 0.0
    %7831 = vmatprep.subr.mxu0 0.0
    %7832 = vmatpush2.msra.mxu0 0.0
    %7833 = vmatprep.subr.mxu0 0.0
    %7834 = vmatpush2.msra.mxu0 0.0
    %7835 = vmatprep.subr.mxu0 0.0
    %7836 = vmatpush2.msra.mxu0 0.0
    %7837 = vmatprep.subr.mxu0 0.0
    %7838 = vmatpush2.msra.mxu0 0.0
    %7839 = vmatprep.subr.mxu0 0.0
    %7840 = vmatpush2.msra.mxu0 0.0
    %7841 = vmatprep.subr.mxu0 0.0
    %7842 = vmatpush2.msra.mxu0 0.0
    %7843 = vmatprep.subr.mxu0 0.0
    %7844 = vmatpush2.msra.mxu0 0.0
    %7845 = vmatprep.subr.mxu0 0.0
    %7846 = vmatpush2.msra.mxu0 0.0
    %7847 = vmatprep.subr.mxu0 0.0
    %7848 = vmatpush2.msra.mxu0 0.0
    %7849 = vmatprep.subr.mxu0 0.0
    %7850 = vmatpush2.msra.mxu0 0.0
    %7851 = vmatprep.subr.mxu0 0.0
    %7852 = vmatpush2.msra.mxu0 0.0
    %7853 = vmatprep.subr.mxu0 0.0
    %7854 = vmatpush2.msra.mxu0 0.0
    %7855 = vmatprep.subr.mxu0 0.0
    %7856 = vmatpush2.msra.mxu0 0.0
    %7857 = vmatprep.subr.mxu0 0.0
    %7858 = vmatpush2.msra.mxu0 0.0
    %7859 = vmatprep.mubr.f32.mxu0 0.0
    %v7860 = vand.u32 %v2998, 4294901760
    %v7861 = vsub.f32 %v2998, %v7860
    %7862 = vmatmul.mubr.f32.gmra.mxu0 %v7861
    %v7863 = vpop.f32.mrf.mxu0
    %v7864 = vadd.f32 %v7782, %v7863
    %v7865 = vpop.f32.mrf.mxu0
    %7866 = vmatprep.mubr.f32.mxu0 0.0
    %v7867 = vand.u32 %v3001, 4294901760
    %v7868 = vsub.f32 %v3001, %v7867
    %7869 = vmatmul.mubr.f32.gmra.mxu0 %v7868
    %v7870 = vpop.f32.mrf.mxu0
    %v7871 = vadd.f32 %v7788, %v7870
    %v7872 = vpop.f32.mrf.mxu0
    %7873 = vdwg.mxu0
    %7874 = vmatprep.subr.mxu0 0.0
    %7875 = vmatpush1.msra.mxu0 0.0
    %7876 = vmatprep.subr.mxu0 0.0
    %7877 = vmatpush1.msra.mxu0 0.0
    %7878 = vmatprep.subr.mxu0 0.0
    %7879 = vmatpush1.msra.mxu0 0.0
    %7880 = vmatprep.subr.mxu0 0.0
    %7881 = vmatpush1.msra.mxu0 0.0
    %7882 = vmatprep.subr.mxu0 0.0
    %7883 = vmatpush1.msra.mxu0 0.0
    %7884 = vmatprep.subr.mxu0 0.0
    %7885 = vmatpush1.msra.mxu0 0.0
    %7886 = vmatprep.subr.mxu0 0.0
    %7887 = vmatpush1.msra.mxu0 0.0
    %7888 = vmatprep.subr.mxu0 0.0
    %7889 = vmatpush1.msra.mxu0 0.0
    %7890 = vmatprep.subr.mxu0 0.0
    %7891 = vmatpush1.msra.mxu0 0.0
    %7892 = vmatprep.subr.mxu0 0.0
    %7893 = vmatpush1.msra.mxu0 0.0
    %7894 = vmatprep.subr.mxu0 0.0
    %7895 = vmatpush1.msra.mxu0 0.0
    %7896 = vmatprep.subr.mxu0 0.0
    %7897 = vmatpush1.msra.mxu0 0.0
    %7898 = vmatprep.subr.mxu0 0.0
    %7899 = vmatpush1.msra.mxu0 0.0
    %7900 = vmatprep.subr.mxu0 0.0
    %7901 = vmatpush1.msra.mxu0 0.0
    %7902 = vmatprep.subr.mxu0 0.0
    %v7903 = vand.u32 %v7614, 4294901760
    %7904 = vmatpush1.msra.mxu0 %v7903
    %7905 = vmatprep.subr.mxu0 0.0
    %v7906 = vand.u32 %v7612, 4294901760
    %7907 = vmatpush1.msra.mxu0 %v7906
    %7908 = vmatprep.subr.mxu0 0.0
    %7909 = vmatpush2.msra.mxu0 0.0
    %7910 = vmatprep.subr.mxu0 0.0
    %7911 = vmatpush2.msra.mxu0 0.0
    %7912 = vmatprep.subr.mxu0 0.0
    %7913 = vmatpush2.msra.mxu0 0.0
    %7914 = vmatprep.subr.mxu0 0.0
    %7915 = vmatpush2.msra.mxu0 0.0
    %7916 = vmatprep.subr.mxu0 0.0
    %7917 = vmatpush2.msra.mxu0 0.0
    %7918 = vmatprep.subr.mxu0 0.0
    %7919 = vmatpush2.msra.mxu0 0.0
    %7920 = vmatprep.subr.mxu0 0.0
    %7921 = vmatpush2.msra.mxu0 0.0
    %7922 = vmatprep.subr.mxu0 0.0
    %7923 = vmatpush2.msra.mxu0 0.0
    %7924 = vmatprep.subr.mxu0 0.0
    %7925 = vmatpush2.msra.mxu0 0.0
    %7926 = vmatprep.subr.mxu0 0.0
    %7927 = vmatpush2.msra.mxu0 0.0
    %7928 = vmatprep.subr.mxu0 0.0
    %7929 = vmatpush2.msra.mxu0 0.0
    %7930 = vmatprep.subr.mxu0 0.0
    %7931 = vmatpush2.msra.mxu0 0.0
    %7932 = vmatprep.subr.mxu0 0.0
    %7933 = vmatpush2.msra.mxu0 0.0
    %7934 = vmatprep.subr.mxu0 0.0
    %7935 = vmatpush2.msra.mxu0 0.0
    %7936 = vmatprep.subr.mxu0 0.0
    %7937 = vmatpush2.msra.mxu0 0.0
    %7938 = vmatprep.subr.mxu0 0.0
    %7939 = vmatpush2.msra.mxu0 0.0
    %7940 = vmatprep.mubr.f32.mxu0 0.0
    %v7941 = vand.u32 %v2998, 4294901760
    %v7942 = vsub.f32 %v2998, %v7941
    %v7943 = vand.u32 %v7942, 4294901760
    %7944 = vmatmul.mubr.f32.gmra.mxu0 %v7943
    %v7945 = vpop.f32.mrf.mxu0
    %v7946 = vadd.f32 %v7864, %v7945
    %v7947 = vpop.f32.mrf.mxu0
    %7948 = vmatprep.mubr.f32.mxu0 0.0
    %v7949 = vand.u32 %v3001, 4294901760
    %v7950 = vsub.f32 %v3001, %v7949
    %v7951 = vand.u32 %v7950, 4294901760
    %7952 = vmatmul.mubr.f32.gmra.mxu0 %v7951
    %v7953 = vpop.f32.mrf.mxu0
    %v7954 = vadd.f32 %v7871, %v7953
    %v7955 = vpop.f32.mrf.mxu0
    %7956 = vdwg.mxu0
    %7957 = vmatprep.subr.mxu0 0.0
    %7958 = vmatpush1.msra.mxu0 0.0
    %7959 = vmatprep.subr.mxu0 0.0
    %7960 = vmatpush1.msra.mxu0 0.0
    %7961 = vmatprep.subr.mxu0 0.0
    %7962 = vmatpush1.msra.mxu0 0.0
    %7963 = vmatprep.subr.mxu0 0.0
    %7964 = vmatpush1.msra.mxu0 0.0
    %7965 = vmatprep.subr.mxu0 0.0
    %7966 = vmatpush1.msra.mxu0 0.0
    %7967 = vmatprep.subr.mxu0 0.0
    %7968 = vmatpush1.msra.mxu0 0.0
    %7969 = vmatprep.subr.mxu0 0.0
    %7970 = vmatpush1.msra.mxu0 0.0
    %7971 = vmatprep.subr.mxu0 0.0
    %7972 = vmatpush1.msra.mxu0 0.0
    %7973 = vmatprep.subr.mxu0 0.0
    %7974 = vmatpush1.msra.mxu0 0.0
    %7975 = vmatprep.subr.mxu0 0.0
    %7976 = vmatpush1.msra.mxu0 0.0
    %7977 = vmatprep.subr.mxu0 0.0
    %7978 = vmatpush1.msra.mxu0 0.0
    %7979 = vmatprep.subr.mxu0 0.0
    %7980 = vmatpush1.msra.mxu0 0.0
    %7981 = vmatprep.subr.mxu0 0.0
    %7982 = vmatpush1.msra.mxu0 0.0
    %7983 = vmatprep.subr.mxu0 0.0
    %7984 = vmatpush1.msra.mxu0 0.0
    %7985 = vmatprep.subr.mxu0 0.0
    %v7986 = vand.u32 %v7614, 4294901760
    %v7987 = vsub.f32 %v7614, %v7986
    %v7988 = vand.u32 %v7987, 4294901760
    %7989 = vmatpush1.msra.mxu0 %v7988
    %7990 = vmatprep.subr.mxu0 0.0
    %v7991 = vand.u32 %v7612, 4294901760
    %v7992 = vsub.f32 %v7612, %v7991
    %v7993 = vand.u32 %v7992, 4294901760
    %7994 = vmatpush1.msra.mxu0 %v7993
    %7995 = vmatprep.subr.mxu0 0.0
    %7996 = vmatpush2.msra.mxu0 0.0
    %7997 = vmatprep.subr.mxu0 0.0
    %7998 = vmatpush2.msra.mxu0 0.0
    %7999 = vmatprep.subr.mxu0 0.0
    %8000 = vmatpush2.msra.mxu0 0.0
    %8001 = vmatprep.subr.mxu0 0.0
    %8002 = vmatpush2.msra.mxu0 0.0
    %8003 = vmatprep.subr.mxu0 0.0
    %8004 = vmatpush2.msra.mxu0 0.0
    %8005 = vmatprep.subr.mxu0 0.0
    %8006 = vmatpush2.msra.mxu0 0.0
    %8007 = vmatprep.subr.mxu0 0.0
    %8008 = vmatpush2.msra.mxu0 0.0
    %8009 = vmatprep.subr.mxu0 0.0
    %8010 = vmatpush2.msra.mxu0 0.0
    %8011 = vmatprep.subr.mxu0 0.0
    %8012 = vmatpush2.msra.mxu0 0.0
    %8013 = vmatprep.subr.mxu0 0.0
    %8014 = vmatpush2.msra.mxu0 0.0
    %8015 = vmatprep.subr.mxu0 0.0
    %8016 = vmatpush2.msra.mxu0 0.0
    %8017 = vmatprep.subr.mxu0 0.0
    %8018 = vmatpush2.msra.mxu0 0.0
    %8019 = vmatprep.subr.mxu0 0.0
    %8020 = vmatpush2.msra.mxu0 0.0
    %8021 = vmatprep.subr.mxu0 0.0
    %8022 = vmatpush2.msra.mxu0 0.0
    %8023 = vmatprep.subr.mxu0 0.0
    %8024 = vmatpush2.msra.mxu0 0.0
    %8025 = vmatprep.subr.mxu0 0.0
    %8026 = vmatpush2.msra.mxu0 0.0
    %8027 = vmatprep.mubr.f32.mxu0 0.0
    %v8028 = vand.u32 %v2998, 4294901760
    %8029 = vmatmul.mubr.f32.gmra.mxu0 %v8028
    %v8030 = vpop.f32.mrf.mxu0
    %v8031 = vadd.f32 %v7946, %v8030
    %v8032 = vpop.f32.mrf.mxu0
    %8033 = vmatprep.mubr.f32.mxu0 0.0
    %v8034 = vand.u32 %v3001, 4294901760
    %8035 = vmatmul.mubr.f32.gmra.mxu0 %v8034
    %v8036 = vpop.f32.mrf.mxu0
    %v8037 = vadd.f32 %v7954, %v8036
    %v8038 = vpop.f32.mrf.mxu0
    %8039 = vdwg.mxu0
    %8040 = vmatprep.subr.mxu0 0.0
    %8041 = vmatpush1.msra.mxu0 0.0
    %8042 = vmatprep.subr.mxu0 0.0
    %8043 = vmatpush1.msra.mxu0 0.0
    %8044 = vmatprep.subr.mxu0 0.0
    %8045 = vmatpush1.msra.mxu0 0.0
    %8046 = vmatprep.subr.mxu0 0.0
    %8047 = vmatpush1.msra.mxu0 0.0
    %8048 = vmatprep.subr.mxu0 0.0
    %8049 = vmatpush1.msra.mxu0 0.0
    %8050 = vmatprep.subr.mxu0 0.0
    %8051 = vmatpush1.msra.mxu0 0.0
    %8052 = vmatprep.subr.mxu0 0.0
    %8053 = vmatpush1.msra.mxu0 0.0
    %8054 = vmatprep.subr.mxu0 0.0
    %8055 = vmatpush1.msra.mxu0 0.0
    %8056 = vmatprep.subr.mxu0 0.0
    %8057 = vmatpush1.msra.mxu0 0.0
    %8058 = vmatprep.subr.mxu0 0.0
    %8059 = vmatpush1.msra.mxu0 0.0
    %8060 = vmatprep.subr.mxu0 0.0
    %8061 = vmatpush1.msra.mxu0 0.0
    %8062 = vmatprep.subr.mxu0 0.0
    %8063 = vmatpush1.msra.mxu0 0.0
    %8064 = vmatprep.subr.mxu0 0.0
    %8065 = vmatpush1.msra.mxu0 0.0
    %8066 = vmatprep.subr.mxu0 0.0
    %8067 = vmatpush1.msra.mxu0 0.0
    %8068 = vmatprep.subr.mxu0 0.0
    %v8069 = vand.u32 %v7614, 4294901760
    %8070 = vmatpush1.msra.mxu0 %v8069
    %8071 = vmatprep.subr.mxu0 0.0
    %v8072 = vand.u32 %v7612, 4294901760
    %8073 = vmatpush1.msra.mxu0 %v8072
    %8074 = vmatprep.subr.mxu0 0.0
    %8075 = vmatpush2.msra.mxu0 0.0
    %8076 = vmatprep.subr.mxu0 0.0
    %8077 = vmatpush2.msra.mxu0 0.0
    %8078 = vmatprep.subr.mxu0 0.0
    %8079 = vmatpush2.msra.mxu0 0.0
    %8080 = vmatprep.subr.mxu0 0.0
    %8081 = vmatpush2.msra.mxu0 0.0
    %8082 = vmatprep.subr.mxu0 0.0
    %8083 = vmatpush2.msra.mxu0 0.0
    %8084 = vmatprep.subr.mxu0 0.0
    %8085 = vmatpush2.msra.mxu0 0.0
    %8086 = vmatprep.subr.mxu0 0.0
    %8087 = vmatpush2.msra.mxu0 0.0
    %8088 = vmatprep.subr.mxu0 0.0
    %8089 = vmatpush2.msra.mxu0 0.0
    %8090 = vmatprep.subr.mxu0 0.0
    %8091 = vmatpush2.msra.mxu0 0.0
    %8092 = vmatprep.subr.mxu0 0.0
    %8093 = vmatpush2.msra.mxu0 0.0
    %8094 = vmatprep.subr.mxu0 0.0
    %8095 = vmatpush2.msra.mxu0 0.0
    %8096 = vmatprep.subr.mxu0 0.0
    %8097 = vmatpush2.msra.mxu0 0.0
    %8098 = vmatprep.subr.mxu0 0.0
    %8099 = vmatpush2.msra.mxu0 0.0
    %8100 = vmatprep.subr.mxu0 0.0
    %8101 = vmatpush2.msra.mxu0 0.0
    %8102 = vmatprep.subr.mxu0 0.0
    %8103 = vmatpush2.msra.mxu0 0.0
    %8104 = vmatprep.subr.mxu0 0.0
    %8105 = vmatpush2.msra.mxu0 0.0
    %8106 = vmatprep.mubr.f32.mxu0 0.0
    %v8107 = vand.u32 %v2998, 4294901760
    %8108 = vmatmul.mubr.f32.gmra.mxu0 %v8107
    %v8109 = vpop.f32.mrf.mxu0
    %v8110 = vadd.f32 %v8031, %v8109
    %v8111 = vpop.f32.mrf.mxu0
    %8112 = vmatprep.mubr.f32.mxu0 0.0
    %v8113 = vand.u32 %v3001, 4294901760
    %8114 = vmatmul.mubr.f32.gmra.mxu0 %v8113
    %v8115 = vpop.f32.mrf.mxu0
    %v8116 = vadd.f32 %v8037, %v8115
    %v8117 = vpop.f32.mrf.mxu0
    %8118 = vdwg.mxu0
    %v8119 = vmul.f32 %v7602, %v8110
    %v8120 = vmul.f32 %v7608, %v8116
    %v8121 = vadd.f32 %v8119, 0.0
    %v8122 = vadd.f32 %v8120, 0.0
    %8123 = vmatprep.subr.mxu0 0.0
    %8124 = vmatpush1.msra.mxu0 0.0
    %8125 = vmatprep.subr.mxu0 0.0
    %8126 = vmatpush1.msra.mxu0 0.0
    %8127 = vmatprep.subr.mxu0 0.0
    %8128 = vmatpush1.msra.mxu0 0.0
    %8129 = vmatprep.subr.mxu0 0.0
    %8130 = vmatpush1.msra.mxu0 0.0
    %8131 = vmatprep.subr.mxu0 0.0
    %8132 = vmatpush1.msra.mxu0 0.0
    %8133 = vmatprep.subr.mxu0 0.0
    %8134 = vmatpush1.msra.mxu0 0.0
    %8135 = vmatprep.subr.mxu0 0.0
    %8136 = vmatpush1.msra.mxu0 0.0
    %8137 = vmatprep.subr.mxu0 0.0
    %8138 = vmatpush1.msra.mxu0 0.0
    %8139 = vmatprep.subr.mxu0 0.0
    %8140 = vmatpush1.msra.mxu0 0.0
    %8141 = vmatprep.subr.mxu0 0.0
    %8142 = vmatpush1.msra.mxu0 0.0
    %8143 = vmatprep.subr.mxu0 0.0
    %8144 = vmatpush1.msra.mxu0 0.0
    %8145 = vmatprep.subr.mxu0 0.0
    %8146 = vmatpush1.msra.mxu0 0.0
    %8147 = vmatprep.subr.mxu0 0.0
    %8148 = vmatpush1.msra.mxu0 0.0
    %8149 = vmatprep.subr.mxu0 0.0
    %8150 = vmatpush1.msra.mxu0 0.0
    %8151 = vmatprep.subr.mxu0 0.0
    %v8152 = vand.u32 %v3511, 4294901760
    %8153 = vmatpush1.msra.mxu0 %v8152
    %8154 = vmatprep.subr.mxu0 0.0
    %v8155 = vand.u32 %v3510, 4294901760
    %8156 = vmatpush1.msra.mxu0 %v8155
    %8157 = vmatprep.subr.mxu0 0.0
    %8158 = vmatpush2.msra.mxu0 0.0
    %8159 = vmatprep.subr.mxu0 0.0
    %8160 = vmatpush2.msra.mxu0 0.0
    %8161 = vmatprep.subr.mxu0 0.0
    %8162 = vmatpush2.msra.mxu0 0.0
    %8163 = vmatprep.subr.mxu0 0.0
    %8164 = vmatpush2.msra.mxu0 0.0
    %8165 = vmatprep.subr.mxu0 0.0
    %8166 = vmatpush2.msra.mxu0 0.0
    %8167 = vmatprep.subr.mxu0 0.0
    %8168 = vmatpush2.msra.mxu0 0.0
    %8169 = vmatprep.subr.mxu0 0.0
    %8170 = vmatpush2.msra.mxu0 0.0
    %8171 = vmatprep.subr.mxu0 0.0
    %8172 = vmatpush2.msra.mxu0 0.0
    %8173 = vmatprep.subr.mxu0 0.0
    %8174 = vmatpush2.msra.mxu0 0.0
    %8175 = vmatprep.subr.mxu0 0.0
    %8176 = vmatpush2.msra.mxu0 0.0
    %8177 = vmatprep.subr.mxu0 0.0
    %8178 = vmatpush2.msra.mxu0 0.0
    %8179 = vmatprep.subr.mxu0 0.0
    %8180 = vmatpush2.msra.mxu0 0.0
    %8181 = vmatprep.subr.mxu0 0.0
    %8182 = vmatpush2.msra.mxu0 0.0
    %8183 = vmatprep.subr.mxu0 0.0
    %8184 = vmatpush2.msra.mxu0 0.0
    %8185 = vmatprep.subr.mxu0 0.0
    %8186 = vmatpush2.msra.mxu0 0.0
    %8187 = vmatprep.subr.mxu0 0.0
    %8188 = vmatpush2.msra.mxu0 0.0
    %8189 = vmatprep.mubr.f32.mxu0 0.0
    %v8190 = vand.u32 %v7104, 4294901760
    %v8191 = vsub.f32 %v7104, %v8190
    %v8192 = vand.u32 %v8191, 4294901760
    %v8193 = vsub.f32 %v8191, %v8192
    %v8194 = vand.u32 %v8193, 4294901760
    %8195 = vmatmul.mubr.f32.gmra.mxu0 %v8194
    %v8196 = vpop.f32.mrf.mxu0
    %v8197 = vadd.f32 0.0, %v8196
    %v8198 = vpop.f32.mrf.mxu0
    %8199 = vmatprep.mubr.f32.mxu0 0.0
    %v8200 = vand.u32 %v7107, 4294901760
    %v8201 = vsub.f32 %v7107, %v8200
    %v8202 = vand.u32 %v8201, 4294901760
    %v8203 = vsub.f32 %v8201, %v8202
    %v8204 = vand.u32 %v8203, 4294901760
    %8205 = vmatmul.mubr.f32.gmra.mxu0 %v8204
    %v8206 = vpop.f32.mrf.mxu0
    %v8207 = vadd.f32 0.0, %v8206
    %v8208 = vpop.f32.mrf.mxu0
    %8209 = vdwg.mxu0
    %8210 = vmatprep.subr.mxu0 0.0
    %8211 = vmatpush1.msra.mxu0 0.0
    %8212 = vmatprep.subr.mxu0 0.0
    %8213 = vmatpush1.msra.mxu0 0.0
    %8214 = vmatprep.subr.mxu0 0.0
    %8215 = vmatpush1.msra.mxu0 0.0
    %8216 = vmatprep.subr.mxu0 0.0
    %8217 = vmatpush1.msra.mxu0 0.0
    %8218 = vmatprep.subr.mxu0 0.0
    %8219 = vmatpush1.msra.mxu0 0.0
    %8220 = vmatprep.subr.mxu0 0.0
    %8221 = vmatpush1.msra.mxu0 0.0
    %8222 = vmatprep.subr.mxu0 0.0
    %8223 = vmatpush1.msra.mxu0 0.0
    %8224 = vmatprep.subr.mxu0 0.0
    %8225 = vmatpush1.msra.mxu0 0.0
    %8226 = vmatprep.subr.mxu0 0.0
    %8227 = vmatpush1.msra.mxu0 0.0
    %8228 = vmatprep.subr.mxu0 0.0
    %8229 = vmatpush1.msra.mxu0 0.0
    %8230 = vmatprep.subr.mxu0 0.0
    %8231 = vmatpush1.msra.mxu0 0.0
    %8232 = vmatprep.subr.mxu0 0.0
    %8233 = vmatpush1.msra.mxu0 0.0
    %8234 = vmatprep.subr.mxu0 0.0
    %8235 = vmatpush1.msra.mxu0 0.0
    %8236 = vmatprep.subr.mxu0 0.0
    %8237 = vmatpush1.msra.mxu0 0.0
    %8238 = vmatprep.subr.mxu0 0.0
    %v8239 = vand.u32 %v3511, 4294901760
    %v8240 = vsub.f32 %v3511, %v8239
    %v8241 = vand.u32 %v8240, 4294901760
    %v8242 = vsub.f32 %v8240, %v8241
    %v8243 = vand.u32 %v8242, 4294901760
    %8244 = vmatpush1.msra.mxu0 %v8243
    %8245 = vmatprep.subr.mxu0 0.0
    %v8246 = vand.u32 %v3510, 4294901760
    %v8247 = vsub.f32 %v3510, %v8246
    %v8248 = vand.u32 %v8247, 4294901760
    %v8249 = vsub.f32 %v8247, %v8248
    %v8250 = vand.u32 %v8249, 4294901760
    %8251 = vmatpush1.msra.mxu0 %v8250
    %8252 = vmatprep.subr.mxu0 0.0
    %8253 = vmatpush2.msra.mxu0 0.0
    %8254 = vmatprep.subr.mxu0 0.0
    %8255 = vmatpush2.msra.mxu0 0.0
    %8256 = vmatprep.subr.mxu0 0.0
    %8257 = vmatpush2.msra.mxu0 0.0
    %8258 = vmatprep.subr.mxu0 0.0
    %8259 = vmatpush2.msra.mxu0 0.0
    %8260 = vmatprep.subr.mxu0 0.0
    %8261 = vmatpush2.msra.mxu0 0.0
    %8262 = vmatprep.subr.mxu0 0.0
    %8263 = vmatpush2.msra.mxu0 0.0
    %8264 = vmatprep.subr.mxu0 0.0
    %8265 = vmatpush2.msra.mxu0 0.0
    %8266 = vmatprep.subr.mxu0 0.0
    %8267 = vmatpush2.msra.mxu0 0.0
    %8268 = vmatprep.subr.mxu0 0.0
    %8269 = vmatpush2.msra.mxu0 0.0
    %8270 = vmatprep.subr.mxu0 0.0
    %8271 = vmatpush2.msra.mxu0 0.0
    %8272 = vmatprep.subr.mxu0 0.0
    %8273 = vmatpush2.msra.mxu0 0.0
    %8274 = vmatprep.subr.mxu0 0.0
    %8275 = vmatpush2.msra.mxu0 0.0
    %8276 = vmatprep.subr.mxu0 0.0
    %8277 = vmatpush2.msra.mxu0 0.0
    %8278 = vmatprep.subr.mxu0 0.0
    %8279 = vmatpush2.msra.mxu0 0.0
    %8280 = vmatprep.subr.mxu0 0.0
    %8281 = vmatpush2.msra.mxu0 0.0
    %8282 = vmatprep.subr.mxu0 0.0
    %8283 = vmatpush2.msra.mxu0 0.0
    %8284 = vmatprep.mubr.f32.mxu0 0.0
    %v8285 = vand.u32 %v7104, 4294901760
    %8286 = vmatmul.mubr.f32.gmra.mxu0 %v8285
    %v8287 = vpop.f32.mrf.mxu0
    %v8288 = vadd.f32 %v8197, %v8287
    %v8289 = vpop.f32.mrf.mxu0
    %8290 = vmatprep.mubr.f32.mxu0 0.0
    %v8291 = vand.u32 %v7107, 4294901760
    %8292 = vmatmul.mubr.f32.gmra.mxu0 %v8291
    %v8293 = vpop.f32.mrf.mxu0
    %v8294 = vadd.f32 %v8207, %v8293
    %v8295 = vpop.f32.mrf.mxu0
    %8296 = vdwg.mxu0
    %8297 = vmatprep.subr.mxu0 0.0
    %8298 = vmatpush1.msra.mxu0 0.0
    %8299 = vmatprep.subr.mxu0 0.0
    %8300 = vmatpush1.msra.mxu0 0.0
    %8301 = vmatprep.subr.mxu0 0.0
    %8302 = vmatpush1.msra.mxu0 0.0
    %8303 = vmatprep.subr.mxu0 0.0
    %8304 = vmatpush1.msra.mxu0 0.0
    %8305 = vmatprep.subr.mxu0 0.0
    %8306 = vmatpush1.msra.mxu0 0.0
    %8307 = vmatprep.subr.mxu0 0.0
    %8308 = vmatpush1.msra.mxu0 0.0
    %8309 = vmatprep.subr.mxu0 0.0
    %8310 = vmatpush1.msra.mxu0 0.0
    %8311 = vmatprep.subr.mxu0 0.0
    %8312 = vmatpush1.msra.mxu0 0.0
    %8313 = vmatprep.subr.mxu0 0.0
    %8314 = vmatpush1.msra.mxu0 0.0
    %8315 = vmatprep.subr.mxu0 0.0
    %8316 = vmatpush1.msra.mxu0 0.0
    %8317 = vmatprep.subr.mxu0 0.0
    %8318 = vmatpush1.msra.mxu0 0.0
    %8319 = vmatprep.subr.mxu0 0.0
    %8320 = vmatpush1.msra.mxu0 0.0
    %8321 = vmatprep.subr.mxu0 0.0
    %8322 = vmatpush1.msra.mxu0 0.0
    %8323 = vmatprep.subr.mxu0 0.0
    %8324 = vmatpush1.msra.mxu0 0.0
    %8325 = vmatprep.subr.mxu0 0.0
    %v8326 = vand.u32 %v3511, 4294901760
    %v8327 = vsub.f32 %v3511, %v8326
    %8328 = vmatpush1.msra.mxu0 %v8327
    %8329 = vmatprep.subr.mxu0 0.0
    %v8330 = vand.u32 %v3510, 4294901760
    %v8331 = vsub.f32 %v3510, %v8330
    %8332 = vmatpush1.msra.mxu0 %v8331
    %8333 = vmatprep.subr.mxu0 0.0
    %8334 = vmatpush2.msra.mxu0 0.0
    %8335 = vmatprep.subr.mxu0 0.0
    %8336 = vmatpush2.msra.mxu0 0.0
    %8337 = vmatprep.subr.mxu0 0.0
    %8338 = vmatpush2.msra.mxu0 0.0
    %8339 = vmatprep.subr.mxu0 0.0
    %8340 = vmatpush2.msra.mxu0 0.0
    %8341 = vmatprep.subr.mxu0 0.0
    %8342 = vmatpush2.msra.mxu0 0.0
    %8343 = vmatprep.subr.mxu0 0.0
    %8344 = vmatpush2.msra.mxu0 0.0
    %8345 = vmatprep.subr.mxu0 0.0
    %8346 = vmatpush2.msra.mxu0 0.0
    %8347 = vmatprep.subr.mxu0 0.0
    %8348 = vmatpush2.msra.mxu0 0.0
    %8349 = vmatprep.subr.mxu0 0.0
    %8350 = vmatpush2.msra.mxu0 0.0
    %8351 = vmatprep.subr.mxu0 0.0
    %8352 = vmatpush2.msra.mxu0 0.0
    %8353 = vmatprep.subr.mxu0 0.0
    %8354 = vmatpush2.msra.mxu0 0.0
    %8355 = vmatprep.subr.mxu0 0.0
    %8356 = vmatpush2.msra.mxu0 0.0
    %8357 = vmatprep.subr.mxu0 0.0
    %8358 = vmatpush2.msra.mxu0 0.0
    %8359 = vmatprep.subr.mxu0 0.0
    %8360 = vmatpush2.msra.mxu0 0.0
    %8361 = vmatprep.subr.mxu0 0.0
    %8362 = vmatpush2.msra.mxu0 0.0
    %8363 = vmatprep.subr.mxu0 0.0
    %8364 = vmatpush2.msra.mxu0 0.0
    %8365 = vmatprep.mubr.f32.mxu0 0.0
    %v8366 = vand.u32 %v7104, 4294901760
    %v8367 = vsub.f32 %v7104, %v8366
    %8368 = vmatmul.mubr.f32.gmra.mxu0 %v8367
    %v8369 = vpop.f32.mrf.mxu0
    %v8370 = vadd.f32 %v8288, %v8369
    %v8371 = vpop.f32.mrf.mxu0
    %8372 = vmatprep.mubr.f32.mxu0 0.0
    %v8373 = vand.u32 %v7107, 4294901760
    %v8374 = vsub.f32 %v7107, %v8373
    %8375 = vmatmul.mubr.f32.gmra.mxu0 %v8374
    %v8376 = vpop.f32.mrf.mxu0
    %v8377 = vadd.f32 %v8294, %v8376
    %v8378 = vpop.f32.mrf.mxu0
    %8379 = vdwg.mxu0
    %8380 = vmatprep.subr.mxu0 0.0
    %8381 = vmatpush1.msra.mxu0 0.0
    %8382 = vmatprep.subr.mxu0 0.0
    %8383 = vmatpush1.msra.mxu0 0.0
    %8384 = vmatprep.subr.mxu0 0.0
    %8385 = vmatpush1.msra.mxu0 0.0
    %8386 = vmatprep.subr.mxu0 0.0
    %8387 = vmatpush1.msra.mxu0 0.0
    %8388 = vmatprep.subr.mxu0 0.0
    %8389 = vmatpush1.msra.mxu0 0.0
    %8390 = vmatprep.subr.mxu0 0.0
    %8391 = vmatpush1.msra.mxu0 0.0
    %8392 = vmatprep.subr.mxu0 0.0
    %8393 = vmatpush1.msra.mxu0 0.0
    %8394 = vmatprep.subr.mxu0 0.0
    %8395 = vmatpush1.msra.mxu0 0.0
    %8396 = vmatprep.subr.mxu0 0.0
    %8397 = vmatpush1.msra.mxu0 0.0
    %8398 = vmatprep.subr.mxu0 0.0
    %8399 = vmatpush1.msra.mxu0 0.0
    %8400 = vmatprep.subr.mxu0 0.0
    %8401 = vmatpush1.msra.mxu0 0.0
    %8402 = vmatprep.subr.mxu0 0.0
    %8403 = vmatpush1.msra.mxu0 0.0
    %8404 = vmatprep.subr.mxu0 0.0
    %8405 = vmatpush1.msra.mxu0 0.0
    %8406 = vmatprep.subr.mxu0 0.0
    %8407 = vmatpush1.msra.mxu0 0.0
    %8408 = vmatprep.subr.mxu0 0.0
    %v8409 = vand.u32 %v3511, 4294901760
    %8410 = vmatpush1.msra.mxu0 %v8409
    %8411 = vmatprep.subr.mxu0 0.0
    %v8412 = vand.u32 %v3510, 4294901760
    %8413 = vmatpush1.msra.mxu0 %v8412
    %8414 = vmatprep.subr.mxu0 0.0
    %8415 = vmatpush2.msra.mxu0 0.0
    %8416 = vmatprep.subr.mxu0 0.0
    %8417 = vmatpush2.msra.mxu0 0.0
    %8418 = vmatprep.subr.mxu0 0.0
    %8419 = vmatpush2.msra.mxu0 0.0
    %8420 = vmatprep.subr.mxu0 0.0
    %8421 = vmatpush2.msra.mxu0 0.0
    %8422 = vmatprep.subr.mxu0 0.0
    %8423 = vmatpush2.msra.mxu0 0.0
    %8424 = vmatprep.subr.mxu0 0.0
    %8425 = vmatpush2.msra.mxu0 0.0
    %8426 = vmatprep.subr.mxu0 0.0
    %8427 = vmatpush2.msra.mxu0 0.0
    %8428 = vmatprep.subr.mxu0 0.0
    %8429 = vmatpush2.msra.mxu0 0.0
    %8430 = vmatprep.subr.mxu0 0.0
    %8431 = vmatpush2.msra.mxu0 0.0
    %8432 = vmatprep.subr.mxu0 0.0
    %8433 = vmatpush2.msra.mxu0 0.0
    %8434 = vmatprep.subr.mxu0 0.0
    %8435 = vmatpush2.msra.mxu0 0.0
    %8436 = vmatprep.subr.mxu0 0.0
    %8437 = vmatpush2.msra.mxu0 0.0
    %8438 = vmatprep.subr.mxu0 0.0
    %8439 = vmatpush2.msra.mxu0 0.0
    %8440 = vmatprep.subr.mxu0 0.0
    %8441 = vmatpush2.msra.mxu0 0.0
    %8442 = vmatprep.subr.mxu0 0.0
    %8443 = vmatpush2.msra.mxu0 0.0
    %8444 = vmatprep.subr.mxu0 0.0
    %8445 = vmatpush2.msra.mxu0 0.0
    %8446 = vmatprep.mubr.f32.mxu0 0.0
    %v8447 = vand.u32 %v7104, 4294901760
    %v8448 = vsub.f32 %v7104, %v8447
    %v8449 = vand.u32 %v8448, 4294901760
    %8450 = vmatmul.mubr.f32.gmra.mxu0 %v8449
    %v8451 = vpop.f32.mrf.mxu0
    %v8452 = vadd.f32 %v8370, %v8451
    %v8453 = vpop.f32.mrf.mxu0
    %8454 = vmatprep.mubr.f32.mxu0 0.0
    %v8455 = vand.u32 %v7107, 4294901760
    %v8456 = vsub.f32 %v7107, %v8455
    %v8457 = vand.u32 %v8456, 4294901760
    %8458 = vmatmul.mubr.f32.gmra.mxu0 %v8457
    %v8459 = vpop.f32.mrf.mxu0
    %v8460 = vadd.f32 %v8377, %v8459
    %v8461 = vpop.f32.mrf.mxu0
    %8462 = vdwg.mxu0
    %8463 = vmatprep.subr.mxu0 0.0
    %8464 = vmatpush1.msra.mxu0 0.0
    %8465 = vmatprep.subr.mxu0 0.0
    %8466 = vmatpush1.msra.mxu0 0.0
    %8467 = vmatprep.subr.mxu0 0.0
    %8468 = vmatpush1.msra.mxu0 0.0
    %8469 = vmatprep.subr.mxu0 0.0
    %8470 = vmatpush1.msra.mxu0 0.0
    %8471 = vmatprep.subr.mxu0 0.0
    %8472 = vmatpush1.msra.mxu0 0.0
    %8473 = vmatprep.subr.mxu0 0.0
    %8474 = vmatpush1.msra.mxu0 0.0
    %8475 = vmatprep.subr.mxu0 0.0
    %8476 = vmatpush1.msra.mxu0 0.0
    %8477 = vmatprep.subr.mxu0 0.0
    %8478 = vmatpush1.msra.mxu0 0.0
    %8479 = vmatprep.subr.mxu0 0.0
    %8480 = vmatpush1.msra.mxu0 0.0
    %8481 = vmatprep.subr.mxu0 0.0
    %8482 = vmatpush1.msra.mxu0 0.0
    %8483 = vmatprep.subr.mxu0 0.0
    %8484 = vmatpush1.msra.mxu0 0.0
    %8485 = vmatprep.subr.mxu0 0.0
    %8486 = vmatpush1.msra.mxu0 0.0
    %8487 = vmatprep.subr.mxu0 0.0
    %8488 = vmatpush1.msra.mxu0 0.0
    %8489 = vmatprep.subr.mxu0 0.0
    %8490 = vmatpush1.msra.mxu0 0.0
    %8491 = vmatprep.subr.mxu0 0.0
    %v8492 = vand.u32 %v3511, 4294901760
    %v8493 = vsub.f32 %v3511, %v8492
    %v8494 = vand.u32 %v8493, 4294901760
    %8495 = vmatpush1.msra.mxu0 %v8494
    %8496 = vmatprep.subr.mxu0 0.0
    %v8497 = vand.u32 %v3510, 4294901760
    %v8498 = vsub.f32 %v3510, %v8497
    %v8499 = vand.u32 %v8498, 4294901760
    %8500 = vmatpush1.msra.mxu0 %v8499
    %8501 = vmatprep.subr.mxu0 0.0
    %8502 = vmatpush2.msra.mxu0 0.0
    %8503 = vmatprep.subr.mxu0 0.0
    %8504 = vmatpush2.msra.mxu0 0.0
    %8505 = vmatprep.subr.mxu0 0.0
    %8506 = vmatpush2.msra.mxu0 0.0
    %8507 = vmatprep.subr.mxu0 0.0
    %8508 = vmatpush2.msra.mxu0 0.0
    %8509 = vmatprep.subr.mxu0 0.0
    %8510 = vmatpush2.msra.mxu0 0.0
    %8511 = vmatprep.subr.mxu0 0.0
    %8512 = vmatpush2.msra.mxu0 0.0
    %8513 = vmatprep.subr.mxu0 0.0
    %8514 = vmatpush2.msra.mxu0 0.0
    %8515 = vmatprep.subr.mxu0 0.0
    %8516 = vmatpush2.msra.mxu0 0.0
    %8517 = vmatprep.subr.mxu0 0.0
    %8518 = vmatpush2.msra.mxu0 0.0
    %8519 = vmatprep.subr.mxu0 0.0
    %8520 = vmatpush2.msra.mxu0 0.0
    %8521 = vmatprep.subr.mxu0 0.0
    %8522 = vmatpush2.msra.mxu0 0.0
    %8523 = vmatprep.subr.mxu0 0.0
    %8524 = vmatpush2.msra.mxu0 0.0
    %8525 = vmatprep.subr.mxu0 0.0
    %8526 = vmatpush2.msra.mxu0 0.0
    %8527 = vmatprep.subr.mxu0 0.0
    %8528 = vmatpush2.msra.mxu0 0.0
    %8529 = vmatprep.subr.mxu0 0.0
    %8530 = vmatpush2.msra.mxu0 0.0
    %8531 = vmatprep.subr.mxu0 0.0
    %8532 = vmatpush2.msra.mxu0 0.0
    %8533 = vmatprep.mubr.f32.mxu0 0.0
    %v8534 = vand.u32 %v7104, 4294901760
    %8535 = vmatmul.mubr.f32.gmra.mxu0 %v8534
    %v8536 = vpop.f32.mrf.mxu0
    %v8537 = vadd.f32 %v8452, %v8536
    %v8538 = vpop.f32.mrf.mxu0
    %8539 = vmatprep.mubr.f32.mxu0 0.0
    %v8540 = vand.u32 %v7107, 4294901760
    %8541 = vmatmul.mubr.f32.gmra.mxu0 %v8540
    %v8542 = vpop.f32.mrf.mxu0
    %v8543 = vadd.f32 %v8460, %v8542
    %v8544 = vpop.f32.mrf.mxu0
    %8545 = vdwg.mxu0
    %8546 = vmatprep.subr.mxu0 0.0
    %8547 = vmatpush1.msra.mxu0 0.0
    %8548 = vmatprep.subr.mxu0 0.0
    %8549 = vmatpush1.msra.mxu0 0.0
    %8550 = vmatprep.subr.mxu0 0.0
    %8551 = vmatpush1.msra.mxu0 0.0
    %8552 = vmatprep.subr.mxu0 0.0
    %8553 = vmatpush1.msra.mxu0 0.0
    %8554 = vmatprep.subr.mxu0 0.0
    %8555 = vmatpush1.msra.mxu0 0.0
    %8556 = vmatprep.subr.mxu0 0.0
    %8557 = vmatpush1.msra.mxu0 0.0
    %8558 = vmatprep.subr.mxu0 0.0
    %8559 = vmatpush1.msra.mxu0 0.0
    %8560 = vmatprep.subr.mxu0 0.0
    %8561 = vmatpush1.msra.mxu0 0.0
    %8562 = vmatprep.subr.mxu0 0.0
    %8563 = vmatpush1.msra.mxu0 0.0
    %8564 = vmatprep.subr.mxu0 0.0
    %8565 = vmatpush1.msra.mxu0 0.0
    %8566 = vmatprep.subr.mxu0 0.0
    %8567 = vmatpush1.msra.mxu0 0.0
    %8568 = vmatprep.subr.mxu0 0.0
    %8569 = vmatpush1.msra.mxu0 0.0
    %8570 = vmatprep.subr.mxu0 0.0
    %8571 = vmatpush1.msra.mxu0 0.0
    %8572 = vmatprep.subr.mxu0 0.0
    %8573 = vmatpush1.msra.mxu0 0.0
    %8574 = vmatprep.subr.mxu0 0.0
    %v8575 = vand.u32 %v3511, 4294901760
    %8576 = vmatpush1.msra.mxu0 %v8575
    %8577 = vmatprep.subr.mxu0 0.0
    %v8578 = vand.u32 %v3510, 4294901760
    %8579 = vmatpush1.msra.mxu0 %v8578
    %8580 = vmatprep.subr.mxu0 0.0
    %8581 = vmatpush2.msra.mxu0 0.0
    %8582 = vmatprep.subr.mxu0 0.0
    %8583 = vmatpush2.msra.mxu0 0.0
    %8584 = vmatprep.subr.mxu0 0.0
    %8585 = vmatpush2.msra.mxu0 0.0
    %8586 = vmatprep.subr.mxu0 0.0
    %8587 = vmatpush2.msra.mxu0 0.0
    %8588 = vmatprep.subr.mxu0 0.0
    %8589 = vmatpush2.msra.mxu0 0.0
    %8590 = vmatprep.subr.mxu0 0.0
    %8591 = vmatpush2.msra.mxu0 0.0
    %8592 = vmatprep.subr.mxu0 0.0
    %8593 = vmatpush2.msra.mxu0 0.0
    %8594 = vmatprep.subr.mxu0 0.0
    %8595 = vmatpush2.msra.mxu0 0.0
    %8596 = vmatprep.subr.mxu0 0.0
    %8597 = vmatpush2.msra.mxu0 0.0
    %8598 = vmatprep.subr.mxu0 0.0
    %8599 = vmatpush2.msra.mxu0 0.0
    %8600 = vmatprep.subr.mxu0 0.0
    %8601 = vmatpush2.msra.mxu0 0.0
    %8602 = vmatprep.subr.mxu0 0.0
    %8603 = vmatpush2.msra.mxu0 0.0
    %8604 = vmatprep.subr.mxu0 0.0
    %8605 = vmatpush2.msra.mxu0 0.0
    %8606 = vmatprep.subr.mxu0 0.0
    %8607 = vmatpush2.msra.mxu0 0.0
    %8608 = vmatprep.subr.mxu0 0.0
    %8609 = vmatpush2.msra.mxu0 0.0
    %8610 = vmatprep.subr.mxu0 0.0
    %8611 = vmatpush2.msra.mxu0 0.0
    %8612 = vmatprep.mubr.f32.mxu0 0.0
    %v8613 = vand.u32 %v7104, 4294901760
    %8614 = vmatmul.mubr.f32.gmra.mxu0 %v8613
    %v8615 = vpop.f32.mrf.mxu0
    %v8616 = vadd.f32 %v8537, %v8615
    %v8617 = vpop.f32.mrf.mxu0
    %8618 = vmatprep.mubr.f32.mxu0 0.0
    %v8619 = vand.u32 %v7107, 4294901760
    %8620 = vmatmul.mubr.f32.gmra.mxu0 %v8619
    %v8621 = vpop.f32.mrf.mxu0
    %v8622 = vadd.f32 %v8543, %v8621
    %v8623 = vpop.f32.mrf.mxu0
    %8624 = vdwg.mxu0
    %8625 = vmatprep.subr.mxu0 0.0
    %8626 = vmatpush1.msra.mxu0 0.0
    %8627 = vmatprep.subr.mxu0 0.0
    %8628 = vmatpush1.msra.mxu0 0.0
    %8629 = vmatprep.subr.mxu0 0.0
    %8630 = vmatpush1.msra.mxu0 0.0
    %8631 = vmatprep.subr.mxu0 0.0
    %8632 = vmatpush1.msra.mxu0 0.0
    %8633 = vmatprep.subr.mxu0 0.0
    %8634 = vmatpush1.msra.mxu0 0.0
    %8635 = vmatprep.subr.mxu0 0.0
    %8636 = vmatpush1.msra.mxu0 0.0
    %8637 = vmatprep.subr.mxu0 0.0
    %8638 = vmatpush1.msra.mxu0 0.0
    %8639 = vmatprep.subr.mxu0 0.0
    %8640 = vmatpush1.msra.mxu0 0.0
    %8641 = vmatprep.subr.mxu0 0.0
    %8642 = vmatpush1.msra.mxu0 0.0
    %8643 = vmatprep.subr.mxu0 0.0
    %8644 = vmatpush1.msra.mxu0 0.0
    %8645 = vmatprep.subr.mxu0 0.0
    %8646 = vmatpush1.msra.mxu0 0.0
    %8647 = vmatprep.subr.mxu0 0.0
    %8648 = vmatpush1.msra.mxu0 0.0
    %8649 = vmatprep.subr.mxu0 0.0
    %8650 = vmatpush1.msra.mxu0 0.0
    %8651 = vmatprep.subr.mxu0 0.0
    %8652 = vmatpush1.msra.mxu0 0.0
    %8653 = vmatprep.subr.mxu0 0.0
    %v8654 = vand.u32 %v7614, 4294901760
    %8655 = vmatpush1.msra.mxu0 %v8654
    %8656 = vmatprep.subr.mxu0 0.0
    %v8657 = vand.u32 %v7612, 4294901760
    %8658 = vmatpush1.msra.mxu0 %v8657
    %8659 = vmatprep.subr.mxu0 0.0
    %8660 = vmatpush2.msra.mxu0 0.0
    %8661 = vmatprep.subr.mxu0 0.0
    %8662 = vmatpush2.msra.mxu0 0.0
    %8663 = vmatprep.subr.mxu0 0.0
    %8664 = vmatpush2.msra.mxu0 0.0
    %8665 = vmatprep.subr.mxu0 0.0
    %8666 = vmatpush2.msra.mxu0 0.0
    %8667 = vmatprep.subr.mxu0 0.0
    %8668 = vmatpush2.msra.mxu0 0.0
    %8669 = vmatprep.subr.mxu0 0.0
    %8670 = vmatpush2.msra.mxu0 0.0
    %8671 = vmatprep.subr.mxu0 0.0
    %8672 = vmatpush2.msra.mxu0 0.0
    %8673 = vmatprep.subr.mxu0 0.0
    %8674 = vmatpush2.msra.mxu0 0.0
    %8675 = vmatprep.subr.mxu0 0.0
    %8676 = vmatpush2.msra.mxu0 0.0
    %8677 = vmatprep.subr.mxu0 0.0
    %8678 = vmatpush2.msra.mxu0 0.0
    %8679 = vmatprep.subr.mxu0 0.0
    %8680 = vmatpush2.msra.mxu0 0.0
    %8681 = vmatprep.subr.mxu0 0.0
    %8682 = vmatpush2.msra.mxu0 0.0
    %8683 = vmatprep.subr.mxu0 0.0
    %8684 = vmatpush2.msra.mxu0 0.0
    %8685 = vmatprep.subr.mxu0 0.0
    %8686 = vmatpush2.msra.mxu0 0.0
    %8687 = vmatprep.subr.mxu0 0.0
    %8688 = vmatpush2.msra.mxu0 0.0
    %8689 = vmatprep.subr.mxu0 0.0
    %8690 = vmatpush2.msra.mxu0 0.0
    %8691 = vmatprep.mubr.f32.mxu0 0.0
    %v8692 = vand.u32 %v4018, 4294901760
    %v8693 = vsub.f32 %v4018, %v8692
    %v8694 = vand.u32 %v8693, 4294901760
    %v8695 = vsub.f32 %v8693, %v8694
    %v8696 = vand.u32 %v8695, 4294901760
    %8697 = vmatmul.mubr.f32.gmra.mxu0 %v8696
    %v8698 = vpop.f32.mrf.mxu0
    %v8699 = vadd.f32 0.0, %v8698
    %v8700 = vpop.f32.mrf.mxu0
    %8701 = vmatprep.mubr.f32.mxu0 0.0
    %v8702 = vand.u32 %v4021, 4294901760
    %v8703 = vsub.f32 %v4021, %v8702
    %v8704 = vand.u32 %v8703, 4294901760
    %v8705 = vsub.f32 %v8703, %v8704
    %v8706 = vand.u32 %v8705, 4294901760
    %8707 = vmatmul.mubr.f32.gmra.mxu0 %v8706
    %v8708 = vpop.f32.mrf.mxu0
    %v8709 = vadd.f32 0.0, %v8708
    %v8710 = vpop.f32.mrf.mxu0
    %8711 = vdwg.mxu0
    %8712 = vmatprep.subr.mxu0 0.0
    %8713 = vmatpush1.msra.mxu0 0.0
    %8714 = vmatprep.subr.mxu0 0.0
    %8715 = vmatpush1.msra.mxu0 0.0
    %8716 = vmatprep.subr.mxu0 0.0
    %8717 = vmatpush1.msra.mxu0 0.0
    %8718 = vmatprep.subr.mxu0 0.0
    %8719 = vmatpush1.msra.mxu0 0.0
    %8720 = vmatprep.subr.mxu0 0.0
    %8721 = vmatpush1.msra.mxu0 0.0
    %8722 = vmatprep.subr.mxu0 0.0
    %8723 = vmatpush1.msra.mxu0 0.0
    %8724 = vmatprep.subr.mxu0 0.0
    %8725 = vmatpush1.msra.mxu0 0.0
    %8726 = vmatprep.subr.mxu0 0.0
    %8727 = vmatpush1.msra.mxu0 0.0
    %8728 = vmatprep.subr.mxu0 0.0
    %8729 = vmatpush1.msra.mxu0 0.0
    %8730 = vmatprep.subr.mxu0 0.0
    %8731 = vmatpush1.msra.mxu0 0.0
    %8732 = vmatprep.subr.mxu0 0.0
    %8733 = vmatpush1.msra.mxu0 0.0
    %8734 = vmatprep.subr.mxu0 0.0
    %8735 = vmatpush1.msra.mxu0 0.0
    %8736 = vmatprep.subr.mxu0 0.0
    %8737 = vmatpush1.msra.mxu0 0.0
    %8738 = vmatprep.subr.mxu0 0.0
    %8739 = vmatpush1.msra.mxu0 0.0
    %8740 = vmatprep.subr.mxu0 0.0
    %v8741 = vand.u32 %v7614, 4294901760
    %v8742 = vsub.f32 %v7614, %v8741
    %v8743 = vand.u32 %v8742, 4294901760
    %v8744 = vsub.f32 %v8742, %v8743
    %v8745 = vand.u32 %v8744, 4294901760
    %8746 = vmatpush1.msra.mxu0 %v8745
    %8747 = vmatprep.subr.mxu0 0.0
    %v8748 = vand.u32 %v7612, 4294901760
    %v8749 = vsub.f32 %v7612, %v8748
    %v8750 = vand.u32 %v8749, 4294901760
    %v8751 = vsub.f32 %v8749, %v8750
    %v8752 = vand.u32 %v8751, 4294901760
    %8753 = vmatpush1.msra.mxu0 %v8752
    %8754 = vmatprep.subr.mxu0 0.0
    %8755 = vmatpush2.msra.mxu0 0.0
    %8756 = vmatprep.subr.mxu0 0.0
    %8757 = vmatpush2.msra.mxu0 0.0
    %8758 = vmatprep.subr.mxu0 0.0
    %8759 = vmatpush2.msra.mxu0 0.0
    %8760 = vmatprep.subr.mxu0 0.0
    %8761 = vmatpush2.msra.mxu0 0.0
    %8762 = vmatprep.subr.mxu0 0.0
    %8763 = vmatpush2.msra.mxu0 0.0
    %8764 = vmatprep.subr.mxu0 0.0
    %8765 = vmatpush2.msra.mxu0 0.0
    %8766 = vmatprep.subr.mxu0 0.0
    %8767 = vmatpush2.msra.mxu0 0.0
    %8768 = vmatprep.subr.mxu0 0.0
    %8769 = vmatpush2.msra.mxu0 0.0
    %8770 = vmatprep.subr.mxu0 0.0
    %8771 = vmatpush2.msra.mxu0 0.0
    %8772 = vmatprep.subr.mxu0 0.0
    %8773 = vmatpush2.msra.mxu0 0.0
    %8774 = vmatprep.subr.mxu0 0.0
    %8775 = vmatpush2.msra.mxu0 0.0
    %8776 = vmatprep.subr.mxu0 0.0
    %8777 = vmatpush2.msra.mxu0 0.0
    %8778 = vmatprep.subr.mxu0 0.0
    %8779 = vmatpush2.msra.mxu0 0.0
    %8780 = vmatprep.subr.mxu0 0.0
    %8781 = vmatpush2.msra.mxu0 0.0
    %8782 = vmatprep.subr.mxu0 0.0
    %8783 = vmatpush2.msra.mxu0 0.0
    %8784 = vmatprep.subr.mxu0 0.0
    %8785 = vmatpush2.msra.mxu0 0.0
    %8786 = vmatprep.mubr.f32.mxu0 0.0
    %v8787 = vand.u32 %v4018, 4294901760
    %8788 = vmatmul.mubr.f32.gmra.mxu0 %v8787
    %v8789 = vpop.f32.mrf.mxu0
    %v8790 = vadd.f32 %v8699, %v8789
    %v8791 = vpop.f32.mrf.mxu0
    %8792 = vmatprep.mubr.f32.mxu0 0.0
    %v8793 = vand.u32 %v4021, 4294901760
    %8794 = vmatmul.mubr.f32.gmra.mxu0 %v8793
    %v8795 = vpop.f32.mrf.mxu0
    %v8796 = vadd.f32 %v8709, %v8795
    %v8797 = vpop.f32.mrf.mxu0
    %8798 = vdwg.mxu0
    %8799 = vmatprep.subr.mxu0 0.0
    %8800 = vmatpush1.msra.mxu0 0.0
    %8801 = vmatprep.subr.mxu0 0.0
    %8802 = vmatpush1.msra.mxu0 0.0
    %8803 = vmatprep.subr.mxu0 0.0
    %8804 = vmatpush1.msra.mxu0 0.0
    %8805 = vmatprep.subr.mxu0 0.0
    %8806 = vmatpush1.msra.mxu0 0.0
    %8807 = vmatprep.subr.mxu0 0.0
    %8808 = vmatpush1.msra.mxu0 0.0
    %8809 = vmatprep.subr.mxu0 0.0
    %8810 = vmatpush1.msra.mxu0 0.0
    %8811 = vmatprep.subr.mxu0 0.0
    %8812 = vmatpush1.msra.mxu0 0.0
    %8813 = vmatprep.subr.mxu0 0.0
    %8814 = vmatpush1.msra.mxu0 0.0
    %8815 = vmatprep.subr.mxu0 0.0
    %8816 = vmatpush1.msra.mxu0 0.0
    %8817 = vmatprep.subr.mxu0 0.0
    %8818 = vmatpush1.msra.mxu0 0.0
    %8819 = vmatprep.subr.mxu0 0.0
    %8820 = vmatpush1.msra.mxu0 0.0
    %8821 = vmatprep.subr.mxu0 0.0
    %8822 = vmatpush1.msra.mxu0 0.0
    %8823 = vmatprep.subr.mxu0 0.0
    %8824 = vmatpush1.msra.mxu0 0.0
    %8825 = vmatprep.subr.mxu0 0.0
    %8826 = vmatpush1.msra.mxu0 0.0
    %8827 = vmatprep.subr.mxu0 0.0
    %v8828 = vand.u32 %v7614, 4294901760
    %v8829 = vsub.f32 %v7614, %v8828
    %8830 = vmatpush1.msra.mxu0 %v8829
    %8831 = vmatprep.subr.mxu0 0.0
    %v8832 = vand.u32 %v7612, 4294901760
    %v8833 = vsub.f32 %v7612, %v8832
    %8834 = vmatpush1.msra.mxu0 %v8833
    %8835 = vmatprep.subr.mxu0 0.0
    %8836 = vmatpush2.msra.mxu0 0.0
    %8837 = vmatprep.subr.mxu0 0.0
    %8838 = vmatpush2.msra.mxu0 0.0
    %8839 = vmatprep.subr.mxu0 0.0
    %8840 = vmatpush2.msra.mxu0 0.0
    %8841 = vmatprep.subr.mxu0 0.0
    %8842 = vmatpush2.msra.mxu0 0.0
    %8843 = vmatprep.subr.mxu0 0.0
    %8844 = vmatpush2.msra.mxu0 0.0
    %8845 = vmatprep.subr.mxu0 0.0
    %8846 = vmatpush2.msra.mxu0 0.0
    %8847 = vmatprep.subr.mxu0 0.0
    %8848 = vmatpush2.msra.mxu0 0.0
    %8849 = vmatprep.subr.mxu0 0.0
    %8850 = vmatpush2.msra.mxu0 0.0
    %8851 = vmatprep.subr.mxu0 0.0
    %8852 = vmatpush2.msra.mxu0 0.0
    %8853 = vmatprep.subr.mxu0 0.0
    %8854 = vmatpush2.msra.mxu0 0.0
    %8855 = vmatprep.subr.mxu0 0.0
    %8856 = vmatpush2.msra.mxu0 0.0
    %8857 = vmatprep.subr.mxu0 0.0
    %8858 = vmatpush2.msra.mxu0 0.0
    %8859 = vmatprep.subr.mxu0 0.0
    %8860 = vmatpush2.msra.mxu0 0.0
    %8861 = vmatprep.subr.mxu0 0.0
    %8862 = vmatpush2.msra.mxu0 0.0
    %8863 = vmatprep.subr.mxu0 0.0
    %8864 = vmatpush2.msra.mxu0 0.0
    %8865 = vmatprep.subr.mxu0 0.0
    %8866 = vmatpush2.msra.mxu0 0.0
    %8867 = vmatprep.mubr.f32.mxu0 0.0
    %v8868 = vand.u32 %v4018, 4294901760
    %v8869 = vsub.f32 %v4018, %v8868
    %8870 = vmatmul.mubr.f32.gmra.mxu0 %v8869
    %v8871 = vpop.f32.mrf.mxu0
    %v8872 = vadd.f32 %v8790, %v8871
    %v8873 = vpop.f32.mrf.mxu0
    %8874 = vmatprep.mubr.f32.mxu0 0.0
    %v8875 = vand.u32 %v4021, 4294901760
    %v8876 = vsub.f32 %v4021, %v8875
    %8877 = vmatmul.mubr.f32.gmra.mxu0 %v8876
    %v8878 = vpop.f32.mrf.mxu0
    %v8879 = vadd.f32 %v8796, %v8878
    %v8880 = vpop.f32.mrf.mxu0
    %8881 = vdwg.mxu0
    %8882 = vmatprep.subr.mxu0 0.0
    %8883 = vmatpush1.msra.mxu0 0.0
    %8884 = vmatprep.subr.mxu0 0.0
    %8885 = vmatpush1.msra.mxu0 0.0
    %8886 = vmatprep.subr.mxu0 0.0
    %8887 = vmatpush1.msra.mxu0 0.0
    %8888 = vmatprep.subr.mxu0 0.0
    %8889 = vmatpush1.msra.mxu0 0.0
    %8890 = vmatprep.subr.mxu0 0.0
    %8891 = vmatpush1.msra.mxu0 0.0
    %8892 = vmatprep.subr.mxu0 0.0
    %8893 = vmatpush1.msra.mxu0 0.0
    %8894 = vmatprep.subr.mxu0 0.0
    %8895 = vmatpush1.msra.mxu0 0.0
    %8896 = vmatprep.subr.mxu0 0.0
    %8897 = vmatpush1.msra.mxu0 0.0
    %8898 = vmatprep.subr.mxu0 0.0
    %8899 = vmatpush1.msra.mxu0 0.0
    %8900 = vmatprep.subr.mxu0 0.0
    %8901 = vmatpush1.msra.mxu0 0.0
    %8902 = vmatprep.subr.mxu0 0.0
    %8903 = vmatpush1.msra.mxu0 0.0
    %8904 = vmatprep.subr.mxu0 0.0
    %8905 = vmatpush1.msra.mxu0 0.0
    %8906 = vmatprep.subr.mxu0 0.0
    %8907 = vmatpush1.msra.mxu0 0.0
    %8908 = vmatprep.subr.mxu0 0.0
    %8909 = vmatpush1.msra.mxu0 0.0
    %8910 = vmatprep.subr.mxu0 0.0
    %v8911 = vand.u32 %v7614, 4294901760
    %8912 = vmatpush1.msra.mxu0 %v8911
    %8913 = vmatprep.subr.mxu0 0.0
    %v8914 = vand.u32 %v7612, 4294901760
    %8915 = vmatpush1.msra.mxu0 %v8914
    %8916 = vmatprep.subr.mxu0 0.0
    %8917 = vmatpush2.msra.mxu0 0.0
    %8918 = vmatprep.subr.mxu0 0.0
    %8919 = vmatpush2.msra.mxu0 0.0
    %8920 = vmatprep.subr.mxu0 0.0
    %8921 = vmatpush2.msra.mxu0 0.0
    %8922 = vmatprep.subr.mxu0 0.0
    %8923 = vmatpush2.msra.mxu0 0.0
    %8924 = vmatprep.subr.mxu0 0.0
    %8925 = vmatpush2.msra.mxu0 0.0
    %8926 = vmatprep.subr.mxu0 0.0
    %8927 = vmatpush2.msra.mxu0 0.0
    %8928 = vmatprep.subr.mxu0 0.0
    %8929 = vmatpush2.msra.mxu0 0.0
    %8930 = vmatprep.subr.mxu0 0.0
    %8931 = vmatpush2.msra.mxu0 0.0
    %8932 = vmatprep.subr.mxu0 0.0
    %8933 = vmatpush2.msra.mxu0 0.0
    %8934 = vmatprep.subr.mxu0 0.0
    %8935 = vmatpush2.msra.mxu0 0.0
    %8936 = vmatprep.subr.mxu0 0.0
    %8937 = vmatpush2.msra.mxu0 0.0
    %8938 = vmatprep.subr.mxu0 0.0
    %8939 = vmatpush2.msra.mxu0 0.0
    %8940 = vmatprep.subr.mxu0 0.0
    %8941 = vmatpush2.msra.mxu0 0.0
    %8942 = vmatprep.subr.mxu0 0.0
    %8943 = vmatpush2.msra.mxu0 0.0
    %8944 = vmatprep.subr.mxu0 0.0
    %8945 = vmatpush2.msra.mxu0 0.0
    %8946 = vmatprep.subr.mxu0 0.0
    %8947 = vmatpush2.msra.mxu0 0.0
    %8948 = vmatprep.mubr.f32.mxu0 0.0
    %v8949 = vand.u32 %v4018, 4294901760
    %v8950 = vsub.f32 %v4018, %v8949
    %v8951 = vand.u32 %v8950, 4294901760
    %8952 = vmatmul.mubr.f32.gmra.mxu0 %v8951
    %v8953 = vpop.f32.mrf.mxu0
    %v8954 = vadd.f32 %v8872, %v8953
    %v8955 = vpop.f32.mrf.mxu0
    %8956 = vmatprep.mubr.f32.mxu0 0.0
    %v8957 = vand.u32 %v4021, 4294901760
    %v8958 = vsub.f32 %v4021, %v8957
    %v8959 = vand.u32 %v8958, 4294901760
    %8960 = vmatmul.mubr.f32.gmra.mxu0 %v8959
    %v8961 = vpop.f32.mrf.mxu0
    %v8962 = vadd.f32 %v8879, %v8961
    %v8963 = vpop.f32.mrf.mxu0
    %8964 = vdwg.mxu0
    %8965 = vmatprep.subr.mxu0 0.0
    %8966 = vmatpush1.msra.mxu0 0.0
    %8967 = vmatprep.subr.mxu0 0.0
    %8968 = vmatpush1.msra.mxu0 0.0
    %8969 = vmatprep.subr.mxu0 0.0
    %8970 = vmatpush1.msra.mxu0 0.0
    %8971 = vmatprep.subr.mxu0 0.0
    %8972 = vmatpush1.msra.mxu0 0.0
    %8973 = vmatprep.subr.mxu0 0.0
    %8974 = vmatpush1.msra.mxu0 0.0
    %8975 = vmatprep.subr.mxu0 0.0
    %8976 = vmatpush1.msra.mxu0 0.0
    %8977 = vmatprep.subr.mxu0 0.0
    %8978 = vmatpush1.msra.mxu0 0.0
    %8979 = vmatprep.subr.mxu0 0.0
    %8980 = vmatpush1.msra.mxu0 0.0
    %8981 = vmatprep.subr.mxu0 0.0
    %8982 = vmatpush1.msra.mxu0 0.0
    %8983 = vmatprep.subr.mxu0 0.0
    %8984 = vmatpush1.msra.mxu0 0.0
    %8985 = vmatprep.subr.mxu0 0.0
    %8986 = vmatpush1.msra.mxu0 0.0
    %8987 = vmatprep.subr.mxu0 0.0
    %8988 = vmatpush1.msra.mxu0 0.0
    %8989 = vmatprep.subr.mxu0 0.0
    %8990 = vmatpush1.msra.mxu0 0.0
    %8991 = vmatprep.subr.mxu0 0.0
    %8992 = vmatpush1.msra.mxu0 0.0
    %8993 = vmatprep.subr.mxu0 0.0
    %v8994 = vand.u32 %v7614, 4294901760
    %v8995 = vsub.f32 %v7614, %v8994
    %v8996 = vand.u32 %v8995, 4294901760
    %8997 = vmatpush1.msra.mxu0 %v8996
    %8998 = vmatprep.subr.mxu0 0.0
    %v8999 = vand.u32 %v7612, 4294901760
    %v9000 = vsub.f32 %v7612, %v8999
    %v9001 = vand.u32 %v9000, 4294901760
    %9002 = vmatpush1.msra.mxu0 %v9001
    %9003 = vmatprep.subr.mxu0 0.0
    %9004 = vmatpush2.msra.mxu0 0.0
    %9005 = vmatprep.subr.mxu0 0.0
    %9006 = vmatpush2.msra.mxu0 0.0
    %9007 = vmatprep.subr.mxu0 0.0
    %9008 = vmatpush2.msra.mxu0 0.0
    %9009 = vmatprep.subr.mxu0 0.0
    %9010 = vmatpush2.msra.mxu0 0.0
    %9011 = vmatprep.subr.mxu0 0.0
    %9012 = vmatpush2.msra.mxu0 0.0
    %9013 = vmatprep.subr.mxu0 0.0
    %9014 = vmatpush2.msra.mxu0 0.0
    %9015 = vmatprep.subr.mxu0 0.0
    %9016 = vmatpush2.msra.mxu0 0.0
    %9017 = vmatprep.subr.mxu0 0.0
    %9018 = vmatpush2.msra.mxu0 0.0
    %9019 = vmatprep.subr.mxu0 0.0
    %9020 = vmatpush2.msra.mxu0 0.0
    %9021 = vmatprep.subr.mxu0 0.0
    %9022 = vmatpush2.msra.mxu0 0.0
    %9023 = vmatprep.subr.mxu0 0.0
    %9024 = vmatpush2.msra.mxu0 0.0
    %9025 = vmatprep.subr.mxu0 0.0
    %9026 = vmatpush2.msra.mxu0 0.0
    %9027 = vmatprep.subr.mxu0 0.0
    %9028 = vmatpush2.msra.mxu0 0.0
    %9029 = vmatprep.subr.mxu0 0.0
    %9030 = vmatpush2.msra.mxu0 0.0
    %9031 = vmatprep.subr.mxu0 0.0
    %9032 = vmatpush2.msra.mxu0 0.0
    %9033 = vmatprep.subr.mxu0 0.0
    %9034 = vmatpush2.msra.mxu0 0.0
    %9035 = vmatprep.mubr.f32.mxu0 0.0
    %v9036 = vand.u32 %v4018, 4294901760
    %9037 = vmatmul.mubr.f32.gmra.mxu0 %v9036
    %v9038 = vpop.f32.mrf.mxu0
    %v9039 = vadd.f32 %v8954, %v9038
    %v9040 = vpop.f32.mrf.mxu0
    %9041 = vmatprep.mubr.f32.mxu0 0.0
    %v9042 = vand.u32 %v4021, 4294901760
    %9043 = vmatmul.mubr.f32.gmra.mxu0 %v9042
    %v9044 = vpop.f32.mrf.mxu0
    %v9045 = vadd.f32 %v8962, %v9044
    %v9046 = vpop.f32.mrf.mxu0
    %9047 = vdwg.mxu0
    %9048 = vmatprep.subr.mxu0 0.0
    %9049 = vmatpush1.msra.mxu0 0.0
    %9050 = vmatprep.subr.mxu0 0.0
    %9051 = vmatpush1.msra.mxu0 0.0
    %9052 = vmatprep.subr.mxu0 0.0
    %9053 = vmatpush1.msra.mxu0 0.0
    %9054 = vmatprep.subr.mxu0 0.0
    %9055 = vmatpush1.msra.mxu0 0.0
    %9056 = vmatprep.subr.mxu0 0.0
    %9057 = vmatpush1.msra.mxu0 0.0
    %9058 = vmatprep.subr.mxu0 0.0
    %9059 = vmatpush1.msra.mxu0 0.0
    %9060 = vmatprep.subr.mxu0 0.0
    %9061 = vmatpush1.msra.mxu0 0.0
    %9062 = vmatprep.subr.mxu0 0.0
    %9063 = vmatpush1.msra.mxu0 0.0
    %9064 = vmatprep.subr.mxu0 0.0
    %9065 = vmatpush1.msra.mxu0 0.0
    %9066 = vmatprep.subr.mxu0 0.0
    %9067 = vmatpush1.msra.mxu0 0.0
    %9068 = vmatprep.subr.mxu0 0.0
    %9069 = vmatpush1.msra.mxu0 0.0
    %9070 = vmatprep.subr.mxu0 0.0
    %9071 = vmatpush1.msra.mxu0 0.0
    %9072 = vmatprep.subr.mxu0 0.0
    %9073 = vmatpush1.msra.mxu0 0.0
    %9074 = vmatprep.subr.mxu0 0.0
    %9075 = vmatpush1.msra.mxu0 0.0
    %9076 = vmatprep.subr.mxu0 0.0
    %v9077 = vand.u32 %v7614, 4294901760
    %9078 = vmatpush1.msra.mxu0 %v9077
    %9079 = vmatprep.subr.mxu0 0.0
    %v9080 = vand.u32 %v7612, 4294901760
    %9081 = vmatpush1.msra.mxu0 %v9080
    %9082 = vmatprep.subr.mxu0 0.0
    %9083 = vmatpush2.msra.mxu0 0.0
    %9084 = vmatprep.subr.mxu0 0.0
    %9085 = vmatpush2.msra.mxu0 0.0
    %9086 = vmatprep.subr.mxu0 0.0
    %9087 = vmatpush2.msra.mxu0 0.0
    %9088 = vmatprep.subr.mxu0 0.0
    %9089 = vmatpush2.msra.mxu0 0.0
    %9090 = vmatprep.subr.mxu0 0.0
    %9091 = vmatpush2.msra.mxu0 0.0
    %9092 = vmatprep.subr.mxu0 0.0
    %9093 = vmatpush2.msra.mxu0 0.0
    %9094 = vmatprep.subr.mxu0 0.0
    %9095 = vmatpush2.msra.mxu0 0.0
    %9096 = vmatprep.subr.mxu0 0.0
    %9097 = vmatpush2.msra.mxu0 0.0
    %9098 = vmatprep.subr.mxu0 0.0
    %9099 = vmatpush2.msra.mxu0 0.0
    %9100 = vmatprep.subr.mxu0 0.0
    %9101 = vmatpush2.msra.mxu0 0.0
    %9102 = vmatprep.subr.mxu0 0.0
    %9103 = vmatpush2.msra.mxu0 0.0
    %9104 = vmatprep.subr.mxu0 0.0
    %9105 = vmatpush2.msra.mxu0 0.0
    %9106 = vmatprep.subr.mxu0 0.0
    %9107 = vmatpush2.msra.mxu0 0.0
    %9108 = vmatprep.subr.mxu0 0.0
    %9109 = vmatpush2.msra.mxu0 0.0
    %9110 = vmatprep.subr.mxu0 0.0
    %9111 = vmatpush2.msra.mxu0 0.0
    %9112 = vmatprep.subr.mxu0 0.0
    %9113 = vmatpush2.msra.mxu0 0.0
    %9114 = vmatprep.mubr.f32.mxu0 0.0
    %v9115 = vand.u32 %v4018, 4294901760
    %9116 = vmatmul.mubr.f32.gmra.mxu0 %v9115
    %v9117 = vpop.f32.mrf.mxu0
    %v9118 = vadd.f32 %v9039, %v9117
    %v9119 = vpop.f32.mrf.mxu0
    %9120 = vmatprep.mubr.f32.mxu0 0.0
    %v9121 = vand.u32 %v4021, 4294901760
    %9122 = vmatmul.mubr.f32.gmra.mxu0 %v9121
    %v9123 = vpop.f32.mrf.mxu0
    %v9124 = vadd.f32 %v9045, %v9123
    %v9125 = vpop.f32.mrf.mxu0
    %9126 = vdwg.mxu0
    %v9127 = vmul.f32 %v8616, %v9118
    %v9128 = vmul.f32 %v8622, %v9124
    %v9129 = vadd.f32 %v8121, %v9127
    %v9130 = vadd.f32 %v8122, %v9128
    %9131 = vmatprep.subr.mxu0 0.0
    %9132 = vmatpush1.msra.mxu0 0.0
    %9133 = vmatprep.subr.mxu0 0.0
    %9134 = vmatpush1.msra.mxu0 0.0
    %9135 = vmatprep.subr.mxu0 0.0
    %9136 = vmatpush1.msra.mxu0 0.0
    %9137 = vmatprep.subr.mxu0 0.0
    %9138 = vmatpush1.msra.mxu0 0.0
    %9139 = vmatprep.subr.mxu0 0.0
    %9140 = vmatpush1.msra.mxu0 0.0
    %9141 = vmatprep.subr.mxu0 0.0
    %9142 = vmatpush1.msra.mxu0 0.0
    %9143 = vmatprep.subr.mxu0 0.0
    %9144 = vmatpush1.msra.mxu0 0.0
    %9145 = vmatprep.subr.mxu0 0.0
    %9146 = vmatpush1.msra.mxu0 0.0
    %9147 = vmatprep.subr.mxu0 0.0
    %9148 = vmatpush1.msra.mxu0 0.0
    %9149 = vmatprep.subr.mxu0 0.0
    %9150 = vmatpush1.msra.mxu0 0.0
    %9151 = vmatprep.subr.mxu0 0.0
    %9152 = vmatpush1.msra.mxu0 0.0
    %9153 = vmatprep.subr.mxu0 0.0
    %9154 = vmatpush1.msra.mxu0 0.0
    %9155 = vmatprep.subr.mxu0 0.0
    %9156 = vmatpush1.msra.mxu0 0.0
    %9157 = vmatprep.subr.mxu0 0.0
    %9158 = vmatpush1.msra.mxu0 0.0
    %9159 = vmatprep.subr.mxu0 0.0
    %v9160 = vand.u32 %v4531, 4294901760
    %9161 = vmatpush1.msra.mxu0 %v9160
    %9162 = vmatprep.subr.mxu0 0.0
    %v9163 = vand.u32 %v4530, 4294901760
    %9164 = vmatpush1.msra.mxu0 %v9163
    %9165 = vmatprep.subr.mxu0 0.0
    %9166 = vmatpush2.msra.mxu0 0.0
    %9167 = vmatprep.subr.mxu0 0.0
    %9168 = vmatpush2.msra.mxu0 0.0
    %9169 = vmatprep.subr.mxu0 0.0
    %9170 = vmatpush2.msra.mxu0 0.0
    %9171 = vmatprep.subr.mxu0 0.0
    %9172 = vmatpush2.msra.mxu0 0.0
    %9173 = vmatprep.subr.mxu0 0.0
    %9174 = vmatpush2.msra.mxu0 0.0
    %9175 = vmatprep.subr.mxu0 0.0
    %9176 = vmatpush2.msra.mxu0 0.0
    %9177 = vmatprep.subr.mxu0 0.0
    %9178 = vmatpush2.msra.mxu0 0.0
    %9179 = vmatprep.subr.mxu0 0.0
    %9180 = vmatpush2.msra.mxu0 0.0
    %9181 = vmatprep.subr.mxu0 0.0
    %9182 = vmatpush2.msra.mxu0 0.0
    %9183 = vmatprep.subr.mxu0 0.0
    %9184 = vmatpush2.msra.mxu0 0.0
    %9185 = vmatprep.subr.mxu0 0.0
    %9186 = vmatpush2.msra.mxu0 0.0
    %9187 = vmatprep.subr.mxu0 0.0
    %9188 = vmatpush2.msra.mxu0 0.0
    %9189 = vmatprep.subr.mxu0 0.0
    %9190 = vmatpush2.msra.mxu0 0.0
    %9191 = vmatprep.subr.mxu0 0.0
    %9192 = vmatpush2.msra.mxu0 0.0
    %9193 = vmatprep.subr.mxu0 0.0
    %9194 = vmatpush2.msra.mxu0 0.0
    %9195 = vmatprep.subr.mxu0 0.0
    %9196 = vmatpush2.msra.mxu0 0.0
    %9197 = vmatprep.mubr.f32.mxu0 0.0
    %v9198 = vand.u32 %v7104, 4294901760
    %v9199 = vsub.f32 %v7104, %v9198
    %v9200 = vand.u32 %v9199, 4294901760
    %v9201 = vsub.f32 %v9199, %v9200
    %v9202 = vand.u32 %v9201, 4294901760
    %9203 = vmatmul.mubr.f32.gmra.mxu0 %v9202
    %v9204 = vpop.f32.mrf.mxu0
    %v9205 = vadd.f32 0.0, %v9204
    %v9206 = vpop.f32.mrf.mxu0
    %9207 = vmatprep.mubr.f32.mxu0 0.0
    %v9208 = vand.u32 %v7107, 4294901760
    %v9209 = vsub.f32 %v7107, %v9208
    %v9210 = vand.u32 %v9209, 4294901760
    %v9211 = vsub.f32 %v9209, %v9210
    %v9212 = vand.u32 %v9211, 4294901760
    %9213 = vmatmul.mubr.f32.gmra.mxu0 %v9212
    %v9214 = vpop.f32.mrf.mxu0
    %v9215 = vadd.f32 0.0, %v9214
    %v9216 = vpop.f32.mrf.mxu0
    %9217 = vdwg.mxu0
    %9218 = vmatprep.subr.mxu0 0.0
    %9219 = vmatpush1.msra.mxu0 0.0
    %9220 = vmatprep.subr.mxu0 0.0
    %9221 = vmatpush1.msra.mxu0 0.0
    %9222 = vmatprep.subr.mxu0 0.0
    %9223 = vmatpush1.msra.mxu0 0.0
    %9224 = vmatprep.subr.mxu0 0.0
    %9225 = vmatpush1.msra.mxu0 0.0
    %9226 = vmatprep.subr.mxu0 0.0
    %9227 = vmatpush1.msra.mxu0 0.0
    %9228 = vmatprep.subr.mxu0 0.0
    %9229 = vmatpush1.msra.mxu0 0.0
    %9230 = vmatprep.subr.mxu0 0.0
    %9231 = vmatpush1.msra.mxu0 0.0
    %9232 = vmatprep.subr.mxu0 0.0
    %9233 = vmatpush1.msra.mxu0 0.0
    %9234 = vmatprep.subr.mxu0 0.0
    %9235 = vmatpush1.msra.mxu0 0.0
    %9236 = vmatprep.subr.mxu0 0.0
    %9237 = vmatpush1.msra.mxu0 0.0
    %9238 = vmatprep.subr.mxu0 0.0
    %9239 = vmatpush1.msra.mxu0 0.0
    %9240 = vmatprep.subr.mxu0 0.0
    %9241 = vmatpush1.msra.mxu0 0.0
    %9242 = vmatprep.subr.mxu0 0.0
    %9243 = vmatpush1.msra.mxu0 0.0
    %9244 = vmatprep.subr.mxu0 0.0
    %9245 = vmatpush1.msra.mxu0 0.0
    %9246 = vmatprep.subr.mxu0 0.0
    %v9247 = vand.u32 %v4531, 4294901760
    %v9248 = vsub.f32 %v4531, %v9247
    %v9249 = vand.u32 %v9248, 4294901760
    %v9250 = vsub.f32 %v9248, %v9249
    %v9251 = vand.u32 %v9250, 4294901760
    %9252 = vmatpush1.msra.mxu0 %v9251
    %9253 = vmatprep.subr.mxu0 0.0
    %v9254 = vand.u32 %v4530, 4294901760
    %v9255 = vsub.f32 %v4530, %v9254
    %v9256 = vand.u32 %v9255, 4294901760
    %v9257 = vsub.f32 %v9255, %v9256
    %v9258 = vand.u32 %v9257, 4294901760
    %9259 = vmatpush1.msra.mxu0 %v9258
    %9260 = vmatprep.subr.mxu0 0.0
    %9261 = vmatpush2.msra.mxu0 0.0
    %9262 = vmatprep.subr.mxu0 0.0
    %9263 = vmatpush2.msra.mxu0 0.0
    %9264 = vmatprep.subr.mxu0 0.0
    %9265 = vmatpush2.msra.mxu0 0.0
    %9266 = vmatprep.subr.mxu0 0.0
    %9267 = vmatpush2.msra.mxu0 0.0
    %9268 = vmatprep.subr.mxu0 0.0
    %9269 = vmatpush2.msra.mxu0 0.0
    %9270 = vmatprep.subr.mxu0 0.0
    %9271 = vmatpush2.msra.mxu0 0.0
    %9272 = vmatprep.subr.mxu0 0.0
    %9273 = vmatpush2.msra.mxu0 0.0
    %9274 = vmatprep.subr.mxu0 0.0
    %9275 = vmatpush2.msra.mxu0 0.0
    %9276 = vmatprep.subr.mxu0 0.0
    %9277 = vmatpush2.msra.mxu0 0.0
    %9278 = vmatprep.subr.mxu0 0.0
    %9279 = vmatpush2.msra.mxu0 0.0
    %9280 = vmatprep.subr.mxu0 0.0
    %9281 = vmatpush2.msra.mxu0 0.0
    %9282 = vmatprep.subr.mxu0 0.0
    %9283 = vmatpush2.msra.mxu0 0.0
    %9284 = vmatprep.subr.mxu0 0.0
    %9285 = vmatpush2.msra.mxu0 0.0
    %9286 = vmatprep.subr.mxu0 0.0
    %9287 = vmatpush2.msra.mxu0 0.0
    %9288 = vmatprep.subr.mxu0 0.0
    %9289 = vmatpush2.msra.mxu0 0.0
    %9290 = vmatprep.subr.mxu0 0.0
    %9291 = vmatpush2.msra.mxu0 0.0
    %9292 = vmatprep.mubr.f32.mxu0 0.0
    %v9293 = vand.u32 %v7104, 4294901760
    %9294 = vmatmul.mubr.f32.gmra.mxu0 %v9293
    %v9295 = vpop.f32.mrf.mxu0
    %v9296 = vadd.f32 %v9205, %v9295
    %v9297 = vpop.f32.mrf.mxu0
    %9298 = vmatprep.mubr.f32.mxu0 0.0
    %v9299 = vand.u32 %v7107, 4294901760
    %9300 = vmatmul.mubr.f32.gmra.mxu0 %v9299
    %v9301 = vpop.f32.mrf.mxu0
    %v9302 = vadd.f32 %v9215, %v9301
    %v9303 = vpop.f32.mrf.mxu0
    %9304 = vdwg.mxu0
    %9305 = vmatprep.subr.mxu0 0.0
    %9306 = vmatpush1.msra.mxu0 0.0
    %9307 = vmatprep.subr.mxu0 0.0
    %9308 = vmatpush1.msra.mxu0 0.0
    %9309 = vmatprep.subr.mxu0 0.0
    %9310 = vmatpush1.msra.mxu0 0.0
    %9311 = vmatprep.subr.mxu0 0.0
    %9312 = vmatpush1.msra.mxu0 0.0
    %9313 = vmatprep.subr.mxu0 0.0
    %9314 = vmatpush1.msra.mxu0 0.0
    %9315 = vmatprep.subr.mxu0 0.0
    %9316 = vmatpush1.msra.mxu0 0.0
    %9317 = vmatprep.subr.mxu0 0.0
    %9318 = vmatpush1.msra.mxu0 0.0
    %9319 = vmatprep.subr.mxu0 0.0
    %9320 = vmatpush1.msra.mxu0 0.0
    %9321 = vmatprep.subr.mxu0 0.0
    %9322 = vmatpush1.msra.mxu0 0.0
    %9323 = vmatprep.subr.mxu0 0.0
    %9324 = vmatpush1.msra.mxu0 0.0
    %9325 = vmatprep.subr.mxu0 0.0
    %9326 = vmatpush1.msra.mxu0 0.0
    %9327 = vmatprep.subr.mxu0 0.0
    %9328 = vmatpush1.msra.mxu0 0.0
    %9329 = vmatprep.subr.mxu0 0.0
    %9330 = vmatpush1.msra.mxu0 0.0
    %9331 = vmatprep.subr.mxu0 0.0
    %9332 = vmatpush1.msra.mxu0 0.0
    %9333 = vmatprep.subr.mxu0 0.0
    %v9334 = vand.u32 %v4531, 4294901760
    %v9335 = vsub.f32 %v4531, %v9334
    %9336 = vmatpush1.msra.mxu0 %v9335
    %9337 = vmatprep.subr.mxu0 0.0
    %v9338 = vand.u32 %v4530, 4294901760
    %v9339 = vsub.f32 %v4530, %v9338
    %9340 = vmatpush1.msra.mxu0 %v9339
    %9341 = vmatprep.subr.mxu0 0.0
    %9342 = vmatpush2.msra.mxu0 0.0
    %9343 = vmatprep.subr.mxu0 0.0
    %9344 = vmatpush2.msra.mxu0 0.0
    %9345 = vmatprep.subr.mxu0 0.0
    %9346 = vmatpush2.msra.mxu0 0.0
    %9347 = vmatprep.subr.mxu0 0.0
    %9348 = vmatpush2.msra.mxu0 0.0
    %9349 = vmatprep.subr.mxu0 0.0
    %9350 = vmatpush2.msra.mxu0 0.0
    %9351 = vmatprep.subr.mxu0 0.0
    %9352 = vmatpush2.msra.mxu0 0.0
    %9353 = vmatprep.subr.mxu0 0.0
    %9354 = vmatpush2.msra.mxu0 0.0
    %9355 = vmatprep.subr.mxu0 0.0
    %9356 = vmatpush2.msra.mxu0 0.0
    %9357 = vmatprep.subr.mxu0 0.0
    %9358 = vmatpush2.msra.mxu0 0.0
    %9359 = vmatprep.subr.mxu0 0.0
    %9360 = vmatpush2.msra.mxu0 0.0
    %9361 = vmatprep.subr.mxu0 0.0
    %9362 = vmatpush2.msra.mxu0 0.0
    %9363 = vmatprep.subr.mxu0 0.0
    %9364 = vmatpush2.msra.mxu0 0.0
    %9365 = vmatprep.subr.mxu0 0.0
    %9366 = vmatpush2.msra.mxu0 0.0
    %9367 = vmatprep.subr.mxu0 0.0
    %9368 = vmatpush2.msra.mxu0 0.0
    %9369 = vmatprep.subr.mxu0 0.0
    %9370 = vmatpush2.msra.mxu0 0.0
    %9371 = vmatprep.subr.mxu0 0.0
    %9372 = vmatpush2.msra.mxu0 0.0
    %9373 = vmatprep.mubr.f32.mxu0 0.0
    %v9374 = vand.u32 %v7104, 4294901760
    %v9375 = vsub.f32 %v7104, %v9374
    %9376 = vmatmul.mubr.f32.gmra.mxu0 %v9375
    %v9377 = vpop.f32.mrf.mxu0
    %v9378 = vadd.f32 %v9296, %v9377
    %v9379 = vpop.f32.mrf.mxu0
    %9380 = vmatprep.mubr.f32.mxu0 0.0
    %v9381 = vand.u32 %v7107, 4294901760
    %v9382 = vsub.f32 %v7107, %v9381
    %9383 = vmatmul.mubr.f32.gmra.mxu0 %v9382
    %v9384 = vpop.f32.mrf.mxu0
    %v9385 = vadd.f32 %v9302, %v9384
    %v9386 = vpop.f32.mrf.mxu0
    %9387 = vdwg.mxu0
    %9388 = vmatprep.subr.mxu0 0.0
    %9389 = vmatpush1.msra.mxu0 0.0
    %9390 = vmatprep.subr.mxu0 0.0
    %9391 = vmatpush1.msra.mxu0 0.0
    %9392 = vmatprep.subr.mxu0 0.0
    %9393 = vmatpush1.msra.mxu0 0.0
    %9394 = vmatprep.subr.mxu0 0.0
    %9395 = vmatpush1.msra.mxu0 0.0
    %9396 = vmatprep.subr.mxu0 0.0
    %9397 = vmatpush1.msra.mxu0 0.0
    %9398 = vmatprep.subr.mxu0 0.0
    %9399 = vmatpush1.msra.mxu0 0.0
    %9400 = vmatprep.subr.mxu0 0.0
    %9401 = vmatpush1.msra.mxu0 0.0
    %9402 = vmatprep.subr.mxu0 0.0
    %9403 = vmatpush1.msra.mxu0 0.0
    %9404 = vmatprep.subr.mxu0 0.0
    %9405 = vmatpush1.msra.mxu0 0.0
    %9406 = vmatprep.subr.mxu0 0.0
    %9407 = vmatpush1.msra.mxu0 0.0
    %9408 = vmatprep.subr.mxu0 0.0
    %9409 = vmatpush1.msra.mxu0 0.0
    %9410 = vmatprep.subr.mxu0 0.0
    %9411 = vmatpush1.msra.mxu0 0.0
    %9412 = vmatprep.subr.mxu0 0.0
    %9413 = vmatpush1.msra.mxu0 0.0
    %9414 = vmatprep.subr.mxu0 0.0
    %9415 = vmatpush1.msra.mxu0 0.0
    %9416 = vmatprep.subr.mxu0 0.0
    %v9417 = vand.u32 %v4531, 4294901760
    %9418 = vmatpush1.msra.mxu0 %v9417
    %9419 = vmatprep.subr.mxu0 0.0
    %v9420 = vand.u32 %v4530, 4294901760
    %9421 = vmatpush1.msra.mxu0 %v9420
    %9422 = vmatprep.subr.mxu0 0.0
    %9423 = vmatpush2.msra.mxu0 0.0
    %9424 = vmatprep.subr.mxu0 0.0
    %9425 = vmatpush2.msra.mxu0 0.0
    %9426 = vmatprep.subr.mxu0 0.0
    %9427 = vmatpush2.msra.mxu0 0.0
    %9428 = vmatprep.subr.mxu0 0.0
    %9429 = vmatpush2.msra.mxu0 0.0
    %9430 = vmatprep.subr.mxu0 0.0
    %9431 = vmatpush2.msra.mxu0 0.0
    %9432 = vmatprep.subr.mxu0 0.0
    %9433 = vmatpush2.msra.mxu0 0.0
    %9434 = vmatprep.subr.mxu0 0.0
    %9435 = vmatpush2.msra.mxu0 0.0
    %9436 = vmatprep.subr.mxu0 0.0
    %9437 = vmatpush2.msra.mxu0 0.0
    %9438 = vmatprep.subr.mxu0 0.0
    %9439 = vmatpush2.msra.mxu0 0.0
    %9440 = vmatprep.subr.mxu0 0.0
    %9441 = vmatpush2.msra.mxu0 0.0
    %9442 = vmatprep.subr.mxu0 0.0
    %9443 = vmatpush2.msra.mxu0 0.0
    %9444 = vmatprep.subr.mxu0 0.0
    %9445 = vmatpush2.msra.mxu0 0.0
    %9446 = vmatprep.subr.mxu0 0.0
    %9447 = vmatpush2.msra.mxu0 0.0
    %9448 = vmatprep.subr.mxu0 0.0
    %9449 = vmatpush2.msra.mxu0 0.0
    %9450 = vmatprep.subr.mxu0 0.0
    %9451 = vmatpush2.msra.mxu0 0.0
    %9452 = vmatprep.subr.mxu0 0.0
    %9453 = vmatpush2.msra.mxu0 0.0
    %9454 = vmatprep.mubr.f32.mxu0 0.0
    %v9455 = vand.u32 %v7104, 4294901760
    %v9456 = vsub.f32 %v7104, %v9455
    %v9457 = vand.u32 %v9456, 4294901760
    %9458 = vmatmul.mubr.f32.gmra.mxu0 %v9457
    %v9459 = vpop.f32.mrf.mxu0
    %v9460 = vadd.f32 %v9378, %v9459
    %v9461 = vpop.f32.mrf.mxu0
    %9462 = vmatprep.mubr.f32.mxu0 0.0
    %v9463 = vand.u32 %v7107, 4294901760
    %v9464 = vsub.f32 %v7107, %v9463
    %v9465 = vand.u32 %v9464, 4294901760
    %9466 = vmatmul.mubr.f32.gmra.mxu0 %v9465
    %v9467 = vpop.f32.mrf.mxu0
    %v9468 = vadd.f32 %v9385, %v9467
    %v9469 = vpop.f32.mrf.mxu0
    %9470 = vdwg.mxu0
    %9471 = vmatprep.subr.mxu0 0.0
    %9472 = vmatpush1.msra.mxu0 0.0
    %9473 = vmatprep.subr.mxu0 0.0
    %9474 = vmatpush1.msra.mxu0 0.0
    %9475 = vmatprep.subr.mxu0 0.0
    %9476 = vmatpush1.msra.mxu0 0.0
    %9477 = vmatprep.subr.mxu0 0.0
    %9478 = vmatpush1.msra.mxu0 0.0
    %9479 = vmatprep.subr.mxu0 0.0
    %9480 = vmatpush1.msra.mxu0 0.0
    %9481 = vmatprep.subr.mxu0 0.0
    %9482 = vmatpush1.msra.mxu0 0.0
    %9483 = vmatprep.subr.mxu0 0.0
    %9484 = vmatpush1.msra.mxu0 0.0
    %9485 = vmatprep.subr.mxu0 0.0
    %9486 = vmatpush1.msra.mxu0 0.0
    %9487 = vmatprep.subr.mxu0 0.0
    %9488 = vmatpush1.msra.mxu0 0.0
    %9489 = vmatprep.subr.mxu0 0.0
    %9490 = vmatpush1.msra.mxu0 0.0
    %9491 = vmatprep.subr.mxu0 0.0
    %9492 = vmatpush1.msra.mxu0 0.0
    %9493 = vmatprep.subr.mxu0 0.0
    %9494 = vmatpush1.msra.mxu0 0.0
    %9495 = vmatprep.subr.mxu0 0.0
    %9496 = vmatpush1.msra.mxu0 0.0
    %9497 = vmatprep.subr.mxu0 0.0
    %9498 = vmatpush1.msra.mxu0 0.0
    %9499 = vmatprep.subr.mxu0 0.0
    %v9500 = vand.u32 %v4531, 4294901760
    %v9501 = vsub.f32 %v4531, %v9500
    %v9502 = vand.u32 %v9501, 4294901760
    %9503 = vmatpush1.msra.mxu0 %v9502
    %9504 = vmatprep.subr.mxu0 0.0
    %v9505 = vand.u32 %v4530, 4294901760
    %v9506 = vsub.f32 %v4530, %v9505
    %v9507 = vand.u32 %v9506, 4294901760
    %9508 = vmatpush1.msra.mxu0 %v9507
    %9509 = vmatprep.subr.mxu0 0.0
    %9510 = vmatpush2.msra.mxu0 0.0
    %9511 = vmatprep.subr.mxu0 0.0
    %9512 = vmatpush2.msra.mxu0 0.0
    %9513 = vmatprep.subr.mxu0 0.0
    %9514 = vmatpush2.msra.mxu0 0.0
    %9515 = vmatprep.subr.mxu0 0.0
    %9516 = vmatpush2.msra.mxu0 0.0
    %9517 = vmatprep.subr.mxu0 0.0
    %9518 = vmatpush2.msra.mxu0 0.0
    %9519 = vmatprep.subr.mxu0 0.0
    %9520 = vmatpush2.msra.mxu0 0.0
    %9521 = vmatprep.subr.mxu0 0.0
    %9522 = vmatpush2.msra.mxu0 0.0
    %9523 = vmatprep.subr.mxu0 0.0
    %9524 = vmatpush2.msra.mxu0 0.0
    %9525 = vmatprep.subr.mxu0 0.0
    %9526 = vmatpush2.msra.mxu0 0.0
    %9527 = vmatprep.subr.mxu0 0.0
    %9528 = vmatpush2.msra.mxu0 0.0
    %9529 = vmatprep.subr.mxu0 0.0
    %9530 = vmatpush2.msra.mxu0 0.0
    %9531 = vmatprep.subr.mxu0 0.0
    %9532 = vmatpush2.msra.mxu0 0.0
    %9533 = vmatprep.subr.mxu0 0.0
    %9534 = vmatpush2.msra.mxu0 0.0
    %9535 = vmatprep.subr.mxu0 0.0
    %9536 = vmatpush2.msra.mxu0 0.0
    %9537 = vmatprep.subr.mxu0 0.0
    %9538 = vmatpush2.msra.mxu0 0.0
    %9539 = vmatprep.subr.mxu0 0.0
    %9540 = vmatpush2.msra.mxu0 0.0
    %9541 = vmatprep.mubr.f32.mxu0 0.0
    %v9542 = vand.u32 %v7104, 4294901760
    %9543 = vmatmul.mubr.f32.gmra.mxu0 %v9542
    %v9544 = vpop.f32.mrf.mxu0
    %v9545 = vadd.f32 %v9460, %v9544
    %v9546 = vpop.f32.mrf.mxu0
    %9547 = vmatprep.mubr.f32.mxu0 0.0
    %v9548 = vand.u32 %v7107, 4294901760
    %9549 = vmatmul.mubr.f32.gmra.mxu0 %v9548
    %v9550 = vpop.f32.mrf.mxu0
    %v9551 = vadd.f32 %v9468, %v9550
    %v9552 = vpop.f32.mrf.mxu0
    %9553 = vdwg.mxu0
    %9554 = vmatprep.subr.mxu0 0.0
    %9555 = vmatpush1.msra.mxu0 0.0
    %9556 = vmatprep.subr.mxu0 0.0
    %9557 = vmatpush1.msra.mxu0 0.0
    %9558 = vmatprep.subr.mxu0 0.0
    %9559 = vmatpush1.msra.mxu0 0.0
    %9560 = vmatprep.subr.mxu0 0.0
    %9561 = vmatpush1.msra.mxu0 0.0
    %9562 = vmatprep.subr.mxu0 0.0
    %9563 = vmatpush1.msra.mxu0 0.0
    %9564 = vmatprep.subr.mxu0 0.0
    %9565 = vmatpush1.msra.mxu0 0.0
    %9566 = vmatprep.subr.mxu0 0.0
    %9567 = vmatpush1.msra.mxu0 0.0
    %9568 = vmatprep.subr.mxu0 0.0
    %9569 = vmatpush1.msra.mxu0 0.0
    %9570 = vmatprep.subr.mxu0 0.0
    %9571 = vmatpush1.msra.mxu0 0.0
    %9572 = vmatprep.subr.mxu0 0.0
    %9573 = vmatpush1.msra.mxu0 0.0
    %9574 = vmatprep.subr.mxu0 0.0
    %9575 = vmatpush1.msra.mxu0 0.0
    %9576 = vmatprep.subr.mxu0 0.0
    %9577 = vmatpush1.msra.mxu0 0.0
    %9578 = vmatprep.subr.mxu0 0.0
    %9579 = vmatpush1.msra.mxu0 0.0
    %9580 = vmatprep.subr.mxu0 0.0
    %9581 = vmatpush1.msra.mxu0 0.0
    %9582 = vmatprep.subr.mxu0 0.0
    %v9583 = vand.u32 %v4531, 4294901760
    %9584 = vmatpush1.msra.mxu0 %v9583
    %9585 = vmatprep.subr.mxu0 0.0
    %v9586 = vand.u32 %v4530, 4294901760
    %9587 = vmatpush1.msra.mxu0 %v9586
    %9588 = vmatprep.subr.mxu0 0.0
    %9589 = vmatpush2.msra.mxu0 0.0
    %9590 = vmatprep.subr.mxu0 0.0
    %9591 = vmatpush2.msra.mxu0 0.0
    %9592 = vmatprep.subr.mxu0 0.0
    %9593 = vmatpush2.msra.mxu0 0.0
    %9594 = vmatprep.subr.mxu0 0.0
    %9595 = vmatpush2.msra.mxu0 0.0
    %9596 = vmatprep.subr.mxu0 0.0
    %9597 = vmatpush2.msra.mxu0 0.0
    %9598 = vmatprep.subr.mxu0 0.0
    %9599 = vmatpush2.msra.mxu0 0.0
    %9600 = vmatprep.subr.mxu0 0.0
    %9601 = vmatpush2.msra.mxu0 0.0
    %9602 = vmatprep.subr.mxu0 0.0
    %9603 = vmatpush2.msra.mxu0 0.0
    %9604 = vmatprep.subr.mxu0 0.0
    %9605 = vmatpush2.msra.mxu0 0.0
    %9606 = vmatprep.subr.mxu0 0.0
    %9607 = vmatpush2.msra.mxu0 0.0
    %9608 = vmatprep.subr.mxu0 0.0
    %9609 = vmatpush2.msra.mxu0 0.0
    %9610 = vmatprep.subr.mxu0 0.0
    %9611 = vmatpush2.msra.mxu0 0.0
    %9612 = vmatprep.subr.mxu0 0.0
    %9613 = vmatpush2.msra.mxu0 0.0
    %9614 = vmatprep.subr.mxu0 0.0
    %9615 = vmatpush2.msra.mxu0 0.0
    %9616 = vmatprep.subr.mxu0 0.0
    %9617 = vmatpush2.msra.mxu0 0.0
    %9618 = vmatprep.subr.mxu0 0.0
    %9619 = vmatpush2.msra.mxu0 0.0
    %9620 = vmatprep.mubr.f32.mxu0 0.0
    %v9621 = vand.u32 %v7104, 4294901760
    %9622 = vmatmul.mubr.f32.gmra.mxu0 %v9621
    %v9623 = vpop.f32.mrf.mxu0
    %v9624 = vadd.f32 %v9545, %v9623
    %v9625 = vpop.f32.mrf.mxu0
    %9626 = vmatprep.mubr.f32.mxu0 0.0
    %v9627 = vand.u32 %v7107, 4294901760
    %9628 = vmatmul.mubr.f32.gmra.mxu0 %v9627
    %v9629 = vpop.f32.mrf.mxu0
    %v9630 = vadd.f32 %v9551, %v9629
    %v9631 = vpop.f32.mrf.mxu0
    %9632 = vdwg.mxu0
    %9633 = vmatprep.subr.mxu0 0.0
    %9634 = vmatpush1.msra.mxu0 0.0
    %9635 = vmatprep.subr.mxu0 0.0
    %9636 = vmatpush1.msra.mxu0 0.0
    %9637 = vmatprep.subr.mxu0 0.0
    %9638 = vmatpush1.msra.mxu0 0.0
    %9639 = vmatprep.subr.mxu0 0.0
    %9640 = vmatpush1.msra.mxu0 0.0
    %9641 = vmatprep.subr.mxu0 0.0
    %9642 = vmatpush1.msra.mxu0 0.0
    %9643 = vmatprep.subr.mxu0 0.0
    %9644 = vmatpush1.msra.mxu0 0.0
    %9645 = vmatprep.subr.mxu0 0.0
    %9646 = vmatpush1.msra.mxu0 0.0
    %9647 = vmatprep.subr.mxu0 0.0
    %9648 = vmatpush1.msra.mxu0 0.0
    %9649 = vmatprep.subr.mxu0 0.0
    %9650 = vmatpush1.msra.mxu0 0.0
    %9651 = vmatprep.subr.mxu0 0.0
    %9652 = vmatpush1.msra.mxu0 0.0
    %9653 = vmatprep.subr.mxu0 0.0
    %9654 = vmatpush1.msra.mxu0 0.0
    %9655 = vmatprep.subr.mxu0 0.0
    %9656 = vmatpush1.msra.mxu0 0.0
    %9657 = vmatprep.subr.mxu0 0.0
    %9658 = vmatpush1.msra.mxu0 0.0
    %9659 = vmatprep.subr.mxu0 0.0
    %9660 = vmatpush1.msra.mxu0 0.0
    %9661 = vmatprep.subr.mxu0 0.0
    %v9662 = vand.u32 %v7614, 4294901760
    %9663 = vmatpush1.msra.mxu0 %v9662
    %9664 = vmatprep.subr.mxu0 0.0
    %v9665 = vand.u32 %v7612, 4294901760
    %9666 = vmatpush1.msra.mxu0 %v9665
    %9667 = vmatprep.subr.mxu0 0.0
    %9668 = vmatpush2.msra.mxu0 0.0
    %9669 = vmatprep.subr.mxu0 0.0
    %9670 = vmatpush2.msra.mxu0 0.0
    %9671 = vmatprep.subr.mxu0 0.0
    %9672 = vmatpush2.msra.mxu0 0.0
    %9673 = vmatprep.subr.mxu0 0.0
    %9674 = vmatpush2.msra.mxu0 0.0
    %9675 = vmatprep.subr.mxu0 0.0
    %9676 = vmatpush2.msra.mxu0 0.0
    %9677 = vmatprep.subr.mxu0 0.0
    %9678 = vmatpush2.msra.mxu0 0.0
    %9679 = vmatprep.subr.mxu0 0.0
    %9680 = vmatpush2.msra.mxu0 0.0
    %9681 = vmatprep.subr.mxu0 0.0
    %9682 = vmatpush2.msra.mxu0 0.0
    %9683 = vmatprep.subr.mxu0 0.0
    %9684 = vmatpush2.msra.mxu0 0.0
    %9685 = vmatprep.subr.mxu0 0.0
    %9686 = vmatpush2.msra.mxu0 0.0
    %9687 = vmatprep.subr.mxu0 0.0
    %9688 = vmatpush2.msra.mxu0 0.0
    %9689 = vmatprep.subr.mxu0 0.0
    %9690 = vmatpush2.msra.mxu0 0.0
    %9691 = vmatprep.subr.mxu0 0.0
    %9692 = vmatpush2.msra.mxu0 0.0
    %9693 = vmatprep.subr.mxu0 0.0
    %9694 = vmatpush2.msra.mxu0 0.0
    %9695 = vmatprep.subr.mxu0 0.0
    %9696 = vmatpush2.msra.mxu0 0.0
    %9697 = vmatprep.subr.mxu0 0.0
    %9698 = vmatpush2.msra.mxu0 0.0
    %9699 = vmatprep.mubr.f32.mxu0 0.0
    %v9700 = vand.u32 %v5038, 4294901760
    %v9701 = vsub.f32 %v5038, %v9700
    %v9702 = vand.u32 %v9701, 4294901760
    %v9703 = vsub.f32 %v9701, %v9702
    %v9704 = vand.u32 %v9703, 4294901760
    %9705 = vmatmul.mubr.f32.gmra.mxu0 %v9704
    %v9706 = vpop.f32.mrf.mxu0
    %v9707 = vadd.f32 0.0, %v9706
    %v9708 = vpop.f32.mrf.mxu0
    %9709 = vmatprep.mubr.f32.mxu0 0.0
    %v9710 = vand.u32 %v5041, 4294901760
    %v9711 = vsub.f32 %v5041, %v9710
    %v9712 = vand.u32 %v9711, 4294901760
    %v9713 = vsub.f32 %v9711, %v9712
    %v9714 = vand.u32 %v9713, 4294901760
    %9715 = vmatmul.mubr.f32.gmra.mxu0 %v9714
    %v9716 = vpop.f32.mrf.mxu0
    %v9717 = vadd.f32 0.0, %v9716
    %v9718 = vpop.f32.mrf.mxu0
    %9719 = vdwg.mxu0
    %9720 = vmatprep.subr.mxu0 0.0
    %9721 = vmatpush1.msra.mxu0 0.0
    %9722 = vmatprep.subr.mxu0 0.0
    %9723 = vmatpush1.msra.mxu0 0.0
    %9724 = vmatprep.subr.mxu0 0.0
    %9725 = vmatpush1.msra.mxu0 0.0
    %9726 = vmatprep.subr.mxu0 0.0
    %9727 = vmatpush1.msra.mxu0 0.0
    %9728 = vmatprep.subr.mxu0 0.0
    %9729 = vmatpush1.msra.mxu0 0.0
    %9730 = vmatprep.subr.mxu0 0.0
    %9731 = vmatpush1.msra.mxu0 0.0
    %9732 = vmatprep.subr.mxu0 0.0
    %9733 = vmatpush1.msra.mxu0 0.0
    %9734 = vmatprep.subr.mxu0 0.0
    %9735 = vmatpush1.msra.mxu0 0.0
    %9736 = vmatprep.subr.mxu0 0.0
    %9737 = vmatpush1.msra.mxu0 0.0
    %9738 = vmatprep.subr.mxu0 0.0
    %9739 = vmatpush1.msra.mxu0 0.0
    %9740 = vmatprep.subr.mxu0 0.0
    %9741 = vmatpush1.msra.mxu0 0.0
    %9742 = vmatprep.subr.mxu0 0.0
    %9743 = vmatpush1.msra.mxu0 0.0
    %9744 = vmatprep.subr.mxu0 0.0
    %9745 = vmatpush1.msra.mxu0 0.0
    %9746 = vmatprep.subr.mxu0 0.0
    %9747 = vmatpush1.msra.mxu0 0.0
    %9748 = vmatprep.subr.mxu0 0.0
    %v9749 = vand.u32 %v7614, 4294901760
    %v9750 = vsub.f32 %v7614, %v9749
    %v9751 = vand.u32 %v9750, 4294901760
    %v9752 = vsub.f32 %v9750, %v9751
    %v9753 = vand.u32 %v9752, 4294901760
    %9754 = vmatpush1.msra.mxu0 %v9753
    %9755 = vmatprep.subr.mxu0 0.0
    %v9756 = vand.u32 %v7612, 4294901760
    %v9757 = vsub.f32 %v7612, %v9756
    %v9758 = vand.u32 %v9757, 4294901760
    %v9759 = vsub.f32 %v9757, %v9758
    %v9760 = vand.u32 %v9759, 4294901760
    %9761 = vmatpush1.msra.mxu0 %v9760
    %9762 = vmatprep.subr.mxu0 0.0
    %9763 = vmatpush2.msra.mxu0 0.0
    %9764 = vmatprep.subr.mxu0 0.0
    %9765 = vmatpush2.msra.mxu0 0.0
    %9766 = vmatprep.subr.mxu0 0.0
    %9767 = vmatpush2.msra.mxu0 0.0
    %9768 = vmatprep.subr.mxu0 0.0
    %9769 = vmatpush2.msra.mxu0 0.0
    %9770 = vmatprep.subr.mxu0 0.0
    %9771 = vmatpush2.msra.mxu0 0.0
    %9772 = vmatprep.subr.mxu0 0.0
    %9773 = vmatpush2.msra.mxu0 0.0
    %9774 = vmatprep.subr.mxu0 0.0
    %9775 = vmatpush2.msra.mxu0 0.0
    %9776 = vmatprep.subr.mxu0 0.0
    %9777 = vmatpush2.msra.mxu0 0.0
    %9778 = vmatprep.subr.mxu0 0.0
    %9779 = vmatpush2.msra.mxu0 0.0
    %9780 = vmatprep.subr.mxu0 0.0
    %9781 = vmatpush2.msra.mxu0 0.0
    %9782 = vmatprep.subr.mxu0 0.0
    %9783 = vmatpush2.msra.mxu0 0.0
    %9784 = vmatprep.subr.mxu0 0.0
    %9785 = vmatpush2.msra.mxu0 0.0
    %9786 = vmatprep.subr.mxu0 0.0
    %9787 = vmatpush2.msra.mxu0 0.0
    %9788 = vmatprep.subr.mxu0 0.0
    %9789 = vmatpush2.msra.mxu0 0.0
    %9790 = vmatprep.subr.mxu0 0.0
    %9791 = vmatpush2.msra.mxu0 0.0
    %9792 = vmatprep.subr.mxu0 0.0
    %9793 = vmatpush2.msra.mxu0 0.0
    %9794 = vmatprep.mubr.f32.mxu0 0.0
    %v9795 = vand.u32 %v5038, 4294901760
    %9796 = vmatmul.mubr.f32.gmra.mxu0 %v9795
    %v9797 = vpop.f32.mrf.mxu0
    %v9798 = vadd.f32 %v9707, %v9797
    %v9799 = vpop.f32.mrf.mxu0
    %9800 = vmatprep.mubr.f32.mxu0 0.0
    %v9801 = vand.u32 %v5041, 4294901760
    %9802 = vmatmul.mubr.f32.gmra.mxu0 %v9801
    %v9803 = vpop.f32.mrf.mxu0
    %v9804 = vadd.f32 %v9717, %v9803
    %v9805 = vpop.f32.mrf.mxu0
    %9806 = vdwg.mxu0
    %9807 = vmatprep.subr.mxu0 0.0
    %9808 = vmatpush1.msra.mxu0 0.0
    %9809 = vmatprep.subr.mxu0 0.0
    %9810 = vmatpush1.msra.mxu0 0.0
    %9811 = vmatprep.subr.mxu0 0.0
    %9812 = vmatpush1.msra.mxu0 0.0
    %9813 = vmatprep.subr.mxu0 0.0
    %9814 = vmatpush1.msra.mxu0 0.0
    %9815 = vmatprep.subr.mxu0 0.0
    %9816 = vmatpush1.msra.mxu0 0.0
    %9817 = vmatprep.subr.mxu0 0.0
    %9818 = vmatpush1.msra.mxu0 0.0
    %9819 = vmatprep.subr.mxu0 0.0
    %9820 = vmatpush1.msra.mxu0 0.0
    %9821 = vmatprep.subr.mxu0 0.0
    %9822 = vmatpush1.msra.mxu0 0.0
    %9823 = vmatprep.subr.mxu0 0.0
    %9824 = vmatpush1.msra.mxu0 0.0
    %9825 = vmatprep.subr.mxu0 0.0
    %9826 = vmatpush1.msra.mxu0 0.0
    %9827 = vmatprep.subr.mxu0 0.0
    %9828 = vmatpush1.msra.mxu0 0.0
    %9829 = vmatprep.subr.mxu0 0.0
    %9830 = vmatpush1.msra.mxu0 0.0
    %9831 = vmatprep.subr.mxu0 0.0
    %9832 = vmatpush1.msra.mxu0 0.0
    %9833 = vmatprep.subr.mxu0 0.0
    %9834 = vmatpush1.msra.mxu0 0.0
    %9835 = vmatprep.subr.mxu0 0.0
    %v9836 = vand.u32 %v7614, 4294901760
    %v9837 = vsub.f32 %v7614, %v9836
    %9838 = vmatpush1.msra.mxu0 %v9837
    %9839 = vmatprep.subr.mxu0 0.0
    %v9840 = vand.u32 %v7612, 4294901760
    %v9841 = vsub.f32 %v7612, %v9840
    %9842 = vmatpush1.msra.mxu0 %v9841
    %9843 = vmatprep.subr.mxu0 0.0
    %9844 = vmatpush2.msra.mxu0 0.0
    %9845 = vmatprep.subr.mxu0 0.0
    %9846 = vmatpush2.msra.mxu0 0.0
    %9847 = vmatprep.subr.mxu0 0.0
    %9848 = vmatpush2.msra.mxu0 0.0
    %9849 = vmatprep.subr.mxu0 0.0
    %9850 = vmatpush2.msra.mxu0 0.0
    %9851 = vmatprep.subr.mxu0 0.0
    %9852 = vmatpush2.msra.mxu0 0.0
    %9853 = vmatprep.subr.mxu0 0.0
    %9854 = vmatpush2.msra.mxu0 0.0
    %9855 = vmatprep.subr.mxu0 0.0
    %9856 = vmatpush2.msra.mxu0 0.0
    %9857 = vmatprep.subr.mxu0 0.0
    %9858 = vmatpush2.msra.mxu0 0.0
    %9859 = vmatprep.subr.mxu0 0.0
    %9860 = vmatpush2.msra.mxu0 0.0
    %9861 = vmatprep.subr.mxu0 0.0
    %9862 = vmatpush2.msra.mxu0 0.0
    %9863 = vmatprep.subr.mxu0 0.0
    %9864 = vmatpush2.msra.mxu0 0.0
    %9865 = vmatprep.subr.mxu0 0.0
    %9866 = vmatpush2.msra.mxu0 0.0
    %9867 = vmatprep.subr.mxu0 0.0
    %9868 = vmatpush2.msra.mxu0 0.0
    %9869 = vmatprep.subr.mxu0 0.0
    %9870 = vmatpush2.msra.mxu0 0.0
    %9871 = vmatprep.subr.mxu0 0.0
    %9872 = vmatpush2.msra.mxu0 0.0
    %9873 = vmatprep.subr.mxu0 0.0
    %9874 = vmatpush2.msra.mxu0 0.0
    %9875 = vmatprep.mubr.f32.mxu0 0.0
    %v9876 = vand.u32 %v5038, 4294901760
    %v9877 = vsub.f32 %v5038, %v9876
    %9878 = vmatmul.mubr.f32.gmra.mxu0 %v9877
    %v9879 = vpop.f32.mrf.mxu0
    %v9880 = vadd.f32 %v9798, %v9879
    %v9881 = vpop.f32.mrf.mxu0
    %9882 = vmatprep.mubr.f32.mxu0 0.0
    %v9883 = vand.u32 %v5041, 4294901760
    %v9884 = vsub.f32 %v5041, %v9883
    %9885 = vmatmul.mubr.f32.gmra.mxu0 %v9884
    %v9886 = vpop.f32.mrf.mxu0
    %v9887 = vadd.f32 %v9804, %v9886
    %v9888 = vpop.f32.mrf.mxu0
    %9889 = vdwg.mxu0
    %9890 = vmatprep.subr.mxu0 0.0
    %9891 = vmatpush1.msra.mxu0 0.0
    %9892 = vmatprep.subr.mxu0 0.0
    %9893 = vmatpush1.msra.mxu0 0.0
    %9894 = vmatprep.subr.mxu0 0.0
    %9895 = vmatpush1.msra.mxu0 0.0
    %9896 = vmatprep.subr.mxu0 0.0
    %9897 = vmatpush1.msra.mxu0 0.0
    %9898 = vmatprep.subr.mxu0 0.0
    %9899 = vmatpush1.msra.mxu0 0.0
    %9900 = vmatprep.subr.mxu0 0.0
    %9901 = vmatpush1.msra.mxu0 0.0
    %9902 = vmatprep.subr.mxu0 0.0
    %9903 = vmatpush1.msra.mxu0 0.0
    %9904 = vmatprep.subr.mxu0 0.0
    %9905 = vmatpush1.msra.mxu0 0.0
    %9906 = vmatprep.subr.mxu0 0.0
    %9907 = vmatpush1.msra.mxu0 0.0
    %9908 = vmatprep.subr.mxu0 0.0
    %9909 = vmatpush1.msra.mxu0 0.0
    %9910 = vmatprep.subr.mxu0 0.0
    %9911 = vmatpush1.msra.mxu0 0.0
    %9912 = vmatprep.subr.mxu0 0.0
    %9913 = vmatpush1.msra.mxu0 0.0
    %9914 = vmatprep.subr.mxu0 0.0
    %9915 = vmatpush1.msra.mxu0 0.0
    %9916 = vmatprep.subr.mxu0 0.0
    %9917 = vmatpush1.msra.mxu0 0.0
    %9918 = vmatprep.subr.mxu0 0.0
    %v9919 = vand.u32 %v7614, 4294901760
    %9920 = vmatpush1.msra.mxu0 %v9919
    %9921 = vmatprep.subr.mxu0 0.0
    %v9922 = vand.u32 %v7612, 4294901760
    %9923 = vmatpush1.msra.mxu0 %v9922
    %9924 = vmatprep.subr.mxu0 0.0
    %9925 = vmatpush2.msra.mxu0 0.0
    %9926 = vmatprep.subr.mxu0 0.0
    %9927 = vmatpush2.msra.mxu0 0.0
    %9928 = vmatprep.subr.mxu0 0.0
    %9929 = vmatpush2.msra.mxu0 0.0
    %9930 = vmatprep.subr.mxu0 0.0
    %9931 = vmatpush2.msra.mxu0 0.0
    %9932 = vmatprep.subr.mxu0 0.0
    %9933 = vmatpush2.msra.mxu0 0.0
    %9934 = vmatprep.subr.mxu0 0.0
    %9935 = vmatpush2.msra.mxu0 0.0
    %9936 = vmatprep.subr.mxu0 0.0
    %9937 = vmatpush2.msra.mxu0 0.0
    %9938 = vmatprep.subr.mxu0 0.0
    %9939 = vmatpush2.msra.mxu0 0.0
    %9940 = vmatprep.subr.mxu0 0.0
    %9941 = vmatpush2.msra.mxu0 0.0
    %9942 = vmatprep.subr.mxu0 0.0
    %9943 = vmatpush2.msra.mxu0 0.0
    %9944 = vmatprep.subr.mxu0 0.0
    %9945 = vmatpush2.msra.mxu0 0.0
    %9946 = vmatprep.subr.mxu0 0.0
    %9947 = vmatpush2.msra.mxu0 0.0
    %9948 = vmatprep.subr.mxu0 0.0
    %9949 = vmatpush2.msra.mxu0 0.0
    %9950 = vmatprep.subr.mxu0 0.0
    %9951 = vmatpush2.msra.mxu0 0.0
    %9952 = vmatprep.subr.mxu0 0.0
    %9953 = vmatpush2.msra.mxu0 0.0
    %9954 = vmatprep.subr.mxu0 0.0
    %9955 = vmatpush2.msra.mxu0 0.0
    %9956 = vmatprep.mubr.f32.mxu0 0.0
    %v9957 = vand.u32 %v5038, 4294901760
    %v9958 = vsub.f32 %v5038, %v9957
    %v9959 = vand.u32 %v9958, 4294901760
    %9960 = vmatmul.mubr.f32.gmra.mxu0 %v9959
    %v9961 = vpop.f32.mrf.mxu0
    %v9962 = vadd.f32 %v9880, %v9961
    %v9963 = vpop.f32.mrf.mxu0
    %9964 = vmatprep.mubr.f32.mxu0 0.0
    %v9965 = vand.u32 %v5041, 4294901760
    %v9966 = vsub.f32 %v5041, %v9965
    %v9967 = vand.u32 %v9966, 4294901760
    %9968 = vmatmul.mubr.f32.gmra.mxu0 %v9967
    %v9969 = vpop.f32.mrf.mxu0
    %v9970 = vadd.f32 %v9887, %v9969
    %v9971 = vpop.f32.mrf.mxu0
    %9972 = vdwg.mxu0
    %9973 = vmatprep.subr.mxu0 0.0
    %9974 = vmatpush1.msra.mxu0 0.0
    %9975 = vmatprep.subr.mxu0 0.0
    %9976 = vmatpush1.msra.mxu0 0.0
    %9977 = vmatprep.subr.mxu0 0.0
    %9978 = vmatpush1.msra.mxu0 0.0
    %9979 = vmatprep.subr.mxu0 0.0
    %9980 = vmatpush1.msra.mxu0 0.0
    %9981 = vmatprep.subr.mxu0 0.0
    %9982 = vmatpush1.msra.mxu0 0.0
    %9983 = vmatprep.subr.mxu0 0.0
    %9984 = vmatpush1.msra.mxu0 0.0
    %9985 = vmatprep.subr.mxu0 0.0
    %9986 = vmatpush1.msra.mxu0 0.0
    %9987 = vmatprep.subr.mxu0 0.0
    %9988 = vmatpush1.msra.mxu0 0.0
    %9989 = vmatprep.subr.mxu0 0.0
    %9990 = vmatpush1.msra.mxu0 0.0
    %9991 = vmatprep.subr.mxu0 0.0
    %9992 = vmatpush1.msra.mxu0 0.0
    %9993 = vmatprep.subr.mxu0 0.0
    %9994 = vmatpush1.msra.mxu0 0.0
    %9995 = vmatprep.subr.mxu0 0.0
    %9996 = vmatpush1.msra.mxu0 0.0
    %9997 = vmatprep.subr.mxu0 0.0
    %9998 = vmatpush1.msra.mxu0 0.0
    %9999 = vmatprep.subr.mxu0 0.0
    %10000 = vmatpush1.msra.mxu0 0.0
    %10001 = vmatprep.subr.mxu0 0.0
    %v10002 = vand.u32 %v7614, 4294901760
    %v10003 = vsub.f32 %v7614, %v10002
    %v10004 = vand.u32 %v10003, 4294901760
    %10005 = vmatpush1.msra.mxu0 %v10004
    %10006 = vmatprep.subr.mxu0 0.0
    %v10007 = vand.u32 %v7612, 4294901760
    %v10008 = vsub.f32 %v7612, %v10007
    %v10009 = vand.u32 %v10008, 4294901760
    %10010 = vmatpush1.msra.mxu0 %v10009
    %10011 = vmatprep.subr.mxu0 0.0
    %10012 = vmatpush2.msra.mxu0 0.0
    %10013 = vmatprep.subr.mxu0 0.0
    %10014 = vmatpush2.msra.mxu0 0.0
    %10015 = vmatprep.subr.mxu0 0.0
    %10016 = vmatpush2.msra.mxu0 0.0
    %10017 = vmatprep.subr.mxu0 0.0
    %10018 = vmatpush2.msra.mxu0 0.0
    %10019 = vmatprep.subr.mxu0 0.0
    %10020 = vmatpush2.msra.mxu0 0.0
    %10021 = vmatprep.subr.mxu0 0.0
    %10022 = vmatpush2.msra.mxu0 0.0
    %10023 = vmatprep.subr.mxu0 0.0
    %10024 = vmatpush2.msra.mxu0 0.0
    %10025 = vmatprep.subr.mxu0 0.0
    %10026 = vmatpush2.msra.mxu0 0.0
    %10027 = vmatprep.subr.mxu0 0.0
    %10028 = vmatpush2.msra.mxu0 0.0
    %10029 = vmatprep.subr.mxu0 0.0
    %10030 = vmatpush2.msra.mxu0 0.0
    %10031 = vmatprep.subr.mxu0 0.0
    %10032 = vmatpush2.msra.mxu0 0.0
    %10033 = vmatprep.subr.mxu0 0.0
    %10034 = vmatpush2.msra.mxu0 0.0
    %10035 = vmatprep.subr.mxu0 0.0
    %10036 = vmatpush2.msra.mxu0 0.0
    %10037 = vmatprep.subr.mxu0 0.0
    %10038 = vmatpush2.msra.mxu0 0.0
    %10039 = vmatprep.subr.mxu0 0.0
    %10040 = vmatpush2.msra.mxu0 0.0
    %10041 = vmatprep.subr.mxu0 0.0
    %10042 = vmatpush2.msra.mxu0 0.0
    %10043 = vmatprep.mubr.f32.mxu0 0.0
    %v10044 = vand.u32 %v5038, 4294901760
    %10045 = vmatmul.mubr.f32.gmra.mxu0 %v10044
    %v10046 = vpop.f32.mrf.mxu0
    %v10047 = vadd.f32 %v9962, %v10046
    %v10048 = vpop.f32.mrf.mxu0
    %10049 = vmatprep.mubr.f32.mxu0 0.0
    %v10050 = vand.u32 %v5041, 4294901760
    %10051 = vmatmul.mubr.f32.gmra.mxu0 %v10050
    %v10052 = vpop.f32.mrf.mxu0
    %v10053 = vadd.f32 %v9970, %v10052
    %v10054 = vpop.f32.mrf.mxu0
    %10055 = vdwg.mxu0
    %10056 = vmatprep.subr.mxu0 0.0
    %10057 = vmatpush1.msra.mxu0 0.0
    %10058 = vmatprep.subr.mxu0 0.0
    %10059 = vmatpush1.msra.mxu0 0.0
    %10060 = vmatprep.subr.mxu0 0.0
    %10061 = vmatpush1.msra.mxu0 0.0
    %10062 = vmatprep.subr.mxu0 0.0
    %10063 = vmatpush1.msra.mxu0 0.0
    %10064 = vmatprep.subr.mxu0 0.0
    %10065 = vmatpush1.msra.mxu0 0.0
    %10066 = vmatprep.subr.mxu0 0.0
    %10067 = vmatpush1.msra.mxu0 0.0
    %10068 = vmatprep.subr.mxu0 0.0
    %10069 = vmatpush1.msra.mxu0 0.0
    %10070 = vmatprep.subr.mxu0 0.0
    %10071 = vmatpush1.msra.mxu0 0.0
    %10072 = vmatprep.subr.mxu0 0.0
    %10073 = vmatpush1.msra.mxu0 0.0
    %10074 = vmatprep.subr.mxu0 0.0
    %10075 = vmatpush1.msra.mxu0 0.0
    %10076 = vmatprep.subr.mxu0 0.0
    %10077 = vmatpush1.msra.mxu0 0.0
    %10078 = vmatprep.subr.mxu0 0.0
    %10079 = vmatpush1.msra.mxu0 0.0
    %10080 = vmatprep.subr.mxu0 0.0
    %10081 = vmatpush1.msra.mxu0 0.0
    %10082 = vmatprep.subr.mxu0 0.0
    %10083 = vmatpush1.msra.mxu0 0.0
    %10084 = vmatprep.subr.mxu0 0.0
    %v10085 = vand.u32 %v7614, 4294901760
    %10086 = vmatpush1.msra.mxu0 %v10085
    %10087 = vmatprep.subr.mxu0 0.0
    %v10088 = vand.u32 %v7612, 4294901760
    %10089 = vmatpush1.msra.mxu0 %v10088
    %10090 = vmatprep.subr.mxu0 0.0
    %10091 = vmatpush2.msra.mxu0 0.0
    %10092 = vmatprep.subr.mxu0 0.0
    %10093 = vmatpush2.msra.mxu0 0.0
    %10094 = vmatprep.subr.mxu0 0.0
    %10095 = vmatpush2.msra.mxu0 0.0
    %10096 = vmatprep.subr.mxu0 0.0
    %10097 = vmatpush2.msra.mxu0 0.0
    %10098 = vmatprep.subr.mxu0 0.0
    %10099 = vmatpush2.msra.mxu0 0.0
    %10100 = vmatprep.subr.mxu0 0.0
    %10101 = vmatpush2.msra.mxu0 0.0
    %10102 = vmatprep.subr.mxu0 0.0
    %10103 = vmatpush2.msra.mxu0 0.0
    %10104 = vmatprep.subr.mxu0 0.0
    %10105 = vmatpush2.msra.mxu0 0.0
    %10106 = vmatprep.subr.mxu0 0.0
    %10107 = vmatpush2.msra.mxu0 0.0
    %10108 = vmatprep.subr.mxu0 0.0
    %10109 = vmatpush2.msra.mxu0 0.0
    %10110 = vmatprep.subr.mxu0 0.0
    %10111 = vmatpush2.msra.mxu0 0.0
    %10112 = vmatprep.subr.mxu0 0.0
    %10113 = vmatpush2.msra.mxu0 0.0
    %10114 = vmatprep.subr.mxu0 0.0
    %10115 = vmatpush2.msra.mxu0 0.0
    %10116 = vmatprep.subr.mxu0 0.0
    %10117 = vmatpush2.msra.mxu0 0.0
    %10118 = vmatprep.subr.mxu0 0.0
    %10119 = vmatpush2.msra.mxu0 0.0
    %10120 = vmatprep.subr.mxu0 0.0
    %10121 = vmatpush2.msra.mxu0 0.0
    %10122 = vmatprep.mubr.f32.mxu0 0.0
    %v10123 = vand.u32 %v5038, 4294901760
    %10124 = vmatmul.mubr.f32.gmra.mxu0 %v10123
    %v10125 = vpop.f32.mrf.mxu0
    %v10126 = vadd.f32 %v10047, %v10125
    %v10127 = vpop.f32.mrf.mxu0
    %10128 = vmatprep.mubr.f32.mxu0 0.0
    %v10129 = vand.u32 %v5041, 4294901760
    %10130 = vmatmul.mubr.f32.gmra.mxu0 %v10129
    %v10131 = vpop.f32.mrf.mxu0
    %v10132 = vadd.f32 %v10053, %v10131
    %v10133 = vpop.f32.mrf.mxu0
    %10134 = vdwg.mxu0
    %v10135 = vmul.f32 %v9624, %v10126
    %v10136 = vmul.f32 %v9630, %v10132
    %v10137 = vadd.f32 %v9129, %v10135
    %v10138 = vadd.f32 %v9130, %v10136
    %10139 = vmatprep.subr.mxu0 0.0
    %10140 = vmatpush1.msra.mxu0 0.0
    %10141 = vmatprep.subr.mxu0 0.0
    %10142 = vmatpush1.msra.mxu0 0.0
    %10143 = vmatprep.subr.mxu0 0.0
    %10144 = vmatpush1.msra.mxu0 0.0
    %10145 = vmatprep.subr.mxu0 0.0
    %10146 = vmatpush1.msra.mxu0 0.0
    %10147 = vmatprep.subr.mxu0 0.0
    %10148 = vmatpush1.msra.mxu0 0.0
    %10149 = vmatprep.subr.mxu0 0.0
    %10150 = vmatpush1.msra.mxu0 0.0
    %10151 = vmatprep.subr.mxu0 0.0
    %10152 = vmatpush1.msra.mxu0 0.0
    %10153 = vmatprep.subr.mxu0 0.0
    %10154 = vmatpush1.msra.mxu0 0.0
    %10155 = vmatprep.subr.mxu0 0.0
    %10156 = vmatpush1.msra.mxu0 0.0
    %10157 = vmatprep.subr.mxu0 0.0
    %10158 = vmatpush1.msra.mxu0 0.0
    %10159 = vmatprep.subr.mxu0 0.0
    %10160 = vmatpush1.msra.mxu0 0.0
    %10161 = vmatprep.subr.mxu0 0.0
    %10162 = vmatpush1.msra.mxu0 0.0
    %10163 = vmatprep.subr.mxu0 0.0
    %10164 = vmatpush1.msra.mxu0 0.0
    %10165 = vmatprep.subr.mxu0 0.0
    %10166 = vmatpush1.msra.mxu0 0.0
    %10167 = vmatprep.subr.mxu0 0.0
    %v10168 = vand.u32 %v5551, 4294901760
    %10169 = vmatpush1.msra.mxu0 %v10168
    %10170 = vmatprep.subr.mxu0 0.0
    %v10171 = vand.u32 %v5550, 4294901760
    %10172 = vmatpush1.msra.mxu0 %v10171
    %10173 = vmatprep.subr.mxu0 0.0
    %10174 = vmatpush2.msra.mxu0 0.0
    %10175 = vmatprep.subr.mxu0 0.0
    %10176 = vmatpush2.msra.mxu0 0.0
    %10177 = vmatprep.subr.mxu0 0.0
    %10178 = vmatpush2.msra.mxu0 0.0
    %10179 = vmatprep.subr.mxu0 0.0
    %10180 = vmatpush2.msra.mxu0 0.0
    %10181 = vmatprep.subr.mxu0 0.0
    %10182 = vmatpush2.msra.mxu0 0.0
    %10183 = vmatprep.subr.mxu0 0.0
    %10184 = vmatpush2.msra.mxu0 0.0
    %10185 = vmatprep.subr.mxu0 0.0
    %10186 = vmatpush2.msra.mxu0 0.0
    %10187 = vmatprep.subr.mxu0 0.0
    %10188 = vmatpush2.msra.mxu0 0.0
    %10189 = vmatprep.subr.mxu0 0.0
    %10190 = vmatpush2.msra.mxu0 0.0
    %10191 = vmatprep.subr.mxu0 0.0
    %10192 = vmatpush2.msra.mxu0 0.0
    %10193 = vmatprep.subr.mxu0 0.0
    %10194 = vmatpush2.msra.mxu0 0.0
    %10195 = vmatprep.subr.mxu0 0.0
    %10196 = vmatpush2.msra.mxu0 0.0
    %10197 = vmatprep.subr.mxu0 0.0
    %10198 = vmatpush2.msra.mxu0 0.0
    %10199 = vmatprep.subr.mxu0 0.0
    %10200 = vmatpush2.msra.mxu0 0.0
    %10201 = vmatprep.subr.mxu0 0.0
    %10202 = vmatpush2.msra.mxu0 0.0
    %10203 = vmatprep.subr.mxu0 0.0
    %10204 = vmatpush2.msra.mxu0 0.0
    %10205 = vmatprep.mubr.f32.mxu0 0.0
    %v10206 = vand.u32 %v7104, 4294901760
    %v10207 = vsub.f32 %v7104, %v10206
    %v10208 = vand.u32 %v10207, 4294901760
    %v10209 = vsub.f32 %v10207, %v10208
    %v10210 = vand.u32 %v10209, 4294901760
    %10211 = vmatmul.mubr.f32.gmra.mxu0 %v10210
    %v10212 = vpop.f32.mrf.mxu0
    %v10213 = vadd.f32 0.0, %v10212
    %v10214 = vpop.f32.mrf.mxu0
    %10215 = vmatprep.mubr.f32.mxu0 0.0
    %v10216 = vand.u32 %v7107, 4294901760
    %v10217 = vsub.f32 %v7107, %v10216
    %v10218 = vand.u32 %v10217, 4294901760
    %v10219 = vsub.f32 %v10217, %v10218
    %v10220 = vand.u32 %v10219, 4294901760
    %10221 = vmatmul.mubr.f32.gmra.mxu0 %v10220
    %v10222 = vpop.f32.mrf.mxu0
    %v10223 = vadd.f32 0.0, %v10222
    %v10224 = vpop.f32.mrf.mxu0
    %10225 = vdwg.mxu0
    %10226 = vmatprep.subr.mxu0 0.0
    %10227 = vmatpush1.msra.mxu0 0.0
    %10228 = vmatprep.subr.mxu0 0.0
    %10229 = vmatpush1.msra.mxu0 0.0
    %10230 = vmatprep.subr.mxu0 0.0
    %10231 = vmatpush1.msra.mxu0 0.0
    %10232 = vmatprep.subr.mxu0 0.0
    %10233 = vmatpush1.msra.mxu0 0.0
    %10234 = vmatprep.subr.mxu0 0.0
    %10235 = vmatpush1.msra.mxu0 0.0
    %10236 = vmatprep.subr.mxu0 0.0
    %10237 = vmatpush1.msra.mxu0 0.0
    %10238 = vmatprep.subr.mxu0 0.0
    %10239 = vmatpush1.msra.mxu0 0.0
    %10240 = vmatprep.subr.mxu0 0.0
    %10241 = vmatpush1.msra.mxu0 0.0
    %10242 = vmatprep.subr.mxu0 0.0
    %10243 = vmatpush1.msra.mxu0 0.0
    %10244 = vmatprep.subr.mxu0 0.0
    %10245 = vmatpush1.msra.mxu0 0.0
    %10246 = vmatprep.subr.mxu0 0.0
    %10247 = vmatpush1.msra.mxu0 0.0
    %10248 = vmatprep.subr.mxu0 0.0
    %10249 = vmatpush1.msra.mxu0 0.0
    %10250 = vmatprep.subr.mxu0 0.0
    %10251 = vmatpush1.msra.mxu0 0.0
    %10252 = vmatprep.subr.mxu0 0.0
    %10253 = vmatpush1.msra.mxu0 0.0
    %10254 = vmatprep.subr.mxu0 0.0
    %v10255 = vand.u32 %v5551, 4294901760
    %v10256 = vsub.f32 %v5551, %v10255
    %v10257 = vand.u32 %v10256, 4294901760
    %v10258 = vsub.f32 %v10256, %v10257
    %v10259 = vand.u32 %v10258, 4294901760
    %10260 = vmatpush1.msra.mxu0 %v10259
    %10261 = vmatprep.subr.mxu0 0.0
    %v10262 = vand.u32 %v5550, 4294901760
    %v10263 = vsub.f32 %v5550, %v10262
    %v10264 = vand.u32 %v10263, 4294901760
    %v10265 = vsub.f32 %v10263, %v10264
    %v10266 = vand.u32 %v10265, 4294901760
    %10267 = vmatpush1.msra.mxu0 %v10266
    %10268 = vmatprep.subr.mxu0 0.0
    %10269 = vmatpush2.msra.mxu0 0.0
    %10270 = vmatprep.subr.mxu0 0.0
    %10271 = vmatpush2.msra.mxu0 0.0
    %10272 = vmatprep.subr.mxu0 0.0
    %10273 = vmatpush2.msra.mxu0 0.0
    %10274 = vmatprep.subr.mxu0 0.0
    %10275 = vmatpush2.msra.mxu0 0.0
    %10276 = vmatprep.subr.mxu0 0.0
    %10277 = vmatpush2.msra.mxu0 0.0
    %10278 = vmatprep.subr.mxu0 0.0
    %10279 = vmatpush2.msra.mxu0 0.0
    %10280 = vmatprep.subr.mxu0 0.0
    %10281 = vmatpush2.msra.mxu0 0.0
    %10282 = vmatprep.subr.mxu0 0.0
    %10283 = vmatpush2.msra.mxu0 0.0
    %10284 = vmatprep.subr.mxu0 0.0
    %10285 = vmatpush2.msra.mxu0 0.0
    %10286 = vmatprep.subr.mxu0 0.0
    %10287 = vmatpush2.msra.mxu0 0.0
    %10288 = vmatprep.subr.mxu0 0.0
    %10289 = vmatpush2.msra.mxu0 0.0
    %10290 = vmatprep.subr.mxu0 0.0
    %10291 = vmatpush2.msra.mxu0 0.0
    %10292 = vmatprep.subr.mxu0 0.0
    %10293 = vmatpush2.msra.mxu0 0.0
    %10294 = vmatprep.subr.mxu0 0.0
    %10295 = vmatpush2.msra.mxu0 0.0
    %10296 = vmatprep.subr.mxu0 0.0
    %10297 = vmatpush2.msra.mxu0 0.0
    %10298 = vmatprep.subr.mxu0 0.0
    %10299 = vmatpush2.msra.mxu0 0.0
    %10300 = vmatprep.mubr.f32.mxu0 0.0
    %v10301 = vand.u32 %v7104, 4294901760
    %10302 = vmatmul.mubr.f32.gmra.mxu0 %v10301
    %v10303 = vpop.f32.mrf.mxu0
    %v10304 = vadd.f32 %v10213, %v10303
    %v10305 = vpop.f32.mrf.mxu0
    %10306 = vmatprep.mubr.f32.mxu0 0.0
    %v10307 = vand.u32 %v7107, 4294901760
    %10308 = vmatmul.mubr.f32.gmra.mxu0 %v10307
    %v10309 = vpop.f32.mrf.mxu0
    %v10310 = vadd.f32 %v10223, %v10309
    %v10311 = vpop.f32.mrf.mxu0
    %10312 = vdwg.mxu0
    %10313 = vmatprep.subr.mxu0 0.0
    %10314 = vmatpush1.msra.mxu0 0.0
    %10315 = vmatprep.subr.mxu0 0.0
    %10316 = vmatpush1.msra.mxu0 0.0
    %10317 = vmatprep.subr.mxu0 0.0
    %10318 = vmatpush1.msra.mxu0 0.0
    %10319 = vmatprep.subr.mxu0 0.0
    %10320 = vmatpush1.msra.mxu0 0.0
    %10321 = vmatprep.subr.mxu0 0.0
    %10322 = vmatpush1.msra.mxu0 0.0
    %10323 = vmatprep.subr.mxu0 0.0
    %10324 = vmatpush1.msra.mxu0 0.0
    %10325 = vmatprep.subr.mxu0 0.0
    %10326 = vmatpush1.msra.mxu0 0.0
    %10327 = vmatprep.subr.mxu0 0.0
    %10328 = vmatpush1.msra.mxu0 0.0
    %10329 = vmatprep.subr.mxu0 0.0
    %10330 = vmatpush1.msra.mxu0 0.0
    %10331 = vmatprep.subr.mxu0 0.0
    %10332 = vmatpush1.msra.mxu0 0.0
    %10333 = vmatprep.subr.mxu0 0.0
    %10334 = vmatpush1.msra.mxu0 0.0
    %10335 = vmatprep.subr.mxu0 0.0
    %10336 = vmatpush1.msra.mxu0 0.0
    %10337 = vmatprep.subr.mxu0 0.0
    %10338 = vmatpush1.msra.mxu0 0.0
    %10339 = vmatprep.subr.mxu0 0.0
    %10340 = vmatpush1.msra.mxu0 0.0
    %10341 = vmatprep.subr.mxu0 0.0
    %v10342 = vand.u32 %v5551, 4294901760
    %v10343 = vsub.f32 %v5551, %v10342
    %10344 = vmatpush1.msra.mxu0 %v10343
    %10345 = vmatprep.subr.mxu0 0.0
    %v10346 = vand.u32 %v5550, 4294901760
    %v10347 = vsub.f32 %v5550, %v10346
    %10348 = vmatpush1.msra.mxu0 %v10347
    %10349 = vmatprep.subr.mxu0 0.0
    %10350 = vmatpush2.msra.mxu0 0.0
    %10351 = vmatprep.subr.mxu0 0.0
    %10352 = vmatpush2.msra.mxu0 0.0
    %10353 = vmatprep.subr.mxu0 0.0
    %10354 = vmatpush2.msra.mxu0 0.0
    %10355 = vmatprep.subr.mxu0 0.0
    %10356 = vmatpush2.msra.mxu0 0.0
    %10357 = vmatprep.subr.mxu0 0.0
    %10358 = vmatpush2.msra.mxu0 0.0
    %10359 = vmatprep.subr.mxu0 0.0
    %10360 = vmatpush2.msra.mxu0 0.0
    %10361 = vmatprep.subr.mxu0 0.0
    %10362 = vmatpush2.msra.mxu0 0.0
    %10363 = vmatprep.subr.mxu0 0.0
    %10364 = vmatpush2.msra.mxu0 0.0
    %10365 = vmatprep.subr.mxu0 0.0
    %10366 = vmatpush2.msra.mxu0 0.0
    %10367 = vmatprep.subr.mxu0 0.0
    %10368 = vmatpush2.msra.mxu0 0.0
    %10369 = vmatprep.subr.mxu0 0.0
    %10370 = vmatpush2.msra.mxu0 0.0
    %10371 = vmatprep.subr.mxu0 0.0
    %10372 = vmatpush2.msra.mxu0 0.0
    %10373 = vmatprep.subr.mxu0 0.0
    %10374 = vmatpush2.msra.mxu0 0.0
    %10375 = vmatprep.subr.mxu0 0.0
    %10376 = vmatpush2.msra.mxu0 0.0
    %10377 = vmatprep.subr.mxu0 0.0
    %10378 = vmatpush2.msra.mxu0 0.0
    %10379 = vmatprep.subr.mxu0 0.0
    %10380 = vmatpush2.msra.mxu0 0.0
    %10381 = vmatprep.mubr.f32.mxu0 0.0
    %v10382 = vand.u32 %v7104, 4294901760
    %v10383 = vsub.f32 %v7104, %v10382
    %10384 = vmatmul.mubr.f32.gmra.mxu0 %v10383
    %v10385 = vpop.f32.mrf.mxu0
    %v10386 = vadd.f32 %v10304, %v10385
    %v10387 = vpop.f32.mrf.mxu0
    %10388 = vmatprep.mubr.f32.mxu0 0.0
    %v10389 = vand.u32 %v7107, 4294901760
    %v10390 = vsub.f32 %v7107, %v10389
    %10391 = vmatmul.mubr.f32.gmra.mxu0 %v10390
    %v10392 = vpop.f32.mrf.mxu0
    %v10393 = vadd.f32 %v10310, %v10392
    %v10394 = vpop.f32.mrf.mxu0
    %10395 = vdwg.mxu0
    %10396 = vmatprep.subr.mxu0 0.0
    %10397 = vmatpush1.msra.mxu0 0.0
    %10398 = vmatprep.subr.mxu0 0.0
    %10399 = vmatpush1.msra.mxu0 0.0
    %10400 = vmatprep.subr.mxu0 0.0
    %10401 = vmatpush1.msra.mxu0 0.0
    %10402 = vmatprep.subr.mxu0 0.0
    %10403 = vmatpush1.msra.mxu0 0.0
    %10404 = vmatprep.subr.mxu0 0.0
    %10405 = vmatpush1.msra.mxu0 0.0
    %10406 = vmatprep.subr.mxu0 0.0
    %10407 = vmatpush1.msra.mxu0 0.0
    %10408 = vmatprep.subr.mxu0 0.0
    %10409 = vmatpush1.msra.mxu0 0.0
    %10410 = vmatprep.subr.mxu0 0.0
    %10411 = vmatpush1.msra.mxu0 0.0
    %10412 = vmatprep.subr.mxu0 0.0
    %10413 = vmatpush1.msra.mxu0 0.0
    %10414 = vmatprep.subr.mxu0 0.0
    %10415 = vmatpush1.msra.mxu0 0.0
    %10416 = vmatprep.subr.mxu0 0.0
    %10417 = vmatpush1.msra.mxu0 0.0
    %10418 = vmatprep.subr.mxu0 0.0
    %10419 = vmatpush1.msra.mxu0 0.0
    %10420 = vmatprep.subr.mxu0 0.0
    %10421 = vmatpush1.msra.mxu0 0.0
    %10422 = vmatprep.subr.mxu0 0.0
    %10423 = vmatpush1.msra.mxu0 0.0
    %10424 = vmatprep.subr.mxu0 0.0
    %v10425 = vand.u32 %v5551, 4294901760
    %10426 = vmatpush1.msra.mxu0 %v10425
    %10427 = vmatprep.subr.mxu0 0.0
    %v10428 = vand.u32 %v5550, 4294901760
    %10429 = vmatpush1.msra.mxu0 %v10428
    %10430 = vmatprep.subr.mxu0 0.0
    %10431 = vmatpush2.msra.mxu0 0.0
    %10432 = vmatprep.subr.mxu0 0.0
    %10433 = vmatpush2.msra.mxu0 0.0
    %10434 = vmatprep.subr.mxu0 0.0
    %10435 = vmatpush2.msra.mxu0 0.0
    %10436 = vmatprep.subr.mxu0 0.0
    %10437 = vmatpush2.msra.mxu0 0.0
    %10438 = vmatprep.subr.mxu0 0.0
    %10439 = vmatpush2.msra.mxu0 0.0
    %10440 = vmatprep.subr.mxu0 0.0
    %10441 = vmatpush2.msra.mxu0 0.0
    %10442 = vmatprep.subr.mxu0 0.0
    %10443 = vmatpush2.msra.mxu0 0.0
    %10444 = vmatprep.subr.mxu0 0.0
    %10445 = vmatpush2.msra.mxu0 0.0
    %10446 = vmatprep.subr.mxu0 0.0
    %10447 = vmatpush2.msra.mxu0 0.0
    %10448 = vmatprep.subr.mxu0 0.0
    %10449 = vmatpush2.msra.mxu0 0.0
    %10450 = vmatprep.subr.mxu0 0.0
    %10451 = vmatpush2.msra.mxu0 0.0
    %10452 = vmatprep.subr.mxu0 0.0
    %10453 = vmatpush2.msra.mxu0 0.0
    %10454 = vmatprep.subr.mxu0 0.0
    %10455 = vmatpush2.msra.mxu0 0.0
    %10456 = vmatprep.subr.mxu0 0.0
    %10457 = vmatpush2.msra.mxu0 0.0
    %10458 = vmatprep.subr.mxu0 0.0
    %10459 = vmatpush2.msra.mxu0 0.0
    %10460 = vmatprep.subr.mxu0 0.0
    %10461 = vmatpush2.msra.mxu0 0.0
    %10462 = vmatprep.mubr.f32.mxu0 0.0
    %v10463 = vand.u32 %v7104, 4294901760
    %v10464 = vsub.f32 %v7104, %v10463
    %v10465 = vand.u32 %v10464, 4294901760
    %10466 = vmatmul.mubr.f32.gmra.mxu0 %v10465
    %v10467 = vpop.f32.mrf.mxu0
    %v10468 = vadd.f32 %v10386, %v10467
    %v10469 = vpop.f32.mrf.mxu0
    %10470 = vmatprep.mubr.f32.mxu0 0.0
    %v10471 = vand.u32 %v7107, 4294901760
    %v10472 = vsub.f32 %v7107, %v10471
    %v10473 = vand.u32 %v10472, 4294901760
    %10474 = vmatmul.mubr.f32.gmra.mxu0 %v10473
    %v10475 = vpop.f32.mrf.mxu0
    %v10476 = vadd.f32 %v10393, %v10475
    %v10477 = vpop.f32.mrf.mxu0
    %10478 = vdwg.mxu0
    %10479 = vmatprep.subr.mxu0 0.0
    %10480 = vmatpush1.msra.mxu0 0.0
    %10481 = vmatprep.subr.mxu0 0.0
    %10482 = vmatpush1.msra.mxu0 0.0
    %10483 = vmatprep.subr.mxu0 0.0
    %10484 = vmatpush1.msra.mxu0 0.0
    %10485 = vmatprep.subr.mxu0 0.0
    %10486 = vmatpush1.msra.mxu0 0.0
    %10487 = vmatprep.subr.mxu0 0.0
    %10488 = vmatpush1.msra.mxu0 0.0
    %10489 = vmatprep.subr.mxu0 0.0
    %10490 = vmatpush1.msra.mxu0 0.0
    %10491 = vmatprep.subr.mxu0 0.0
    %10492 = vmatpush1.msra.mxu0 0.0
    %10493 = vmatprep.subr.mxu0 0.0
    %10494 = vmatpush1.msra.mxu0 0.0
    %10495 = vmatprep.subr.mxu0 0.0
    %10496 = vmatpush1.msra.mxu0 0.0
    %10497 = vmatprep.subr.mxu0 0.0
    %10498 = vmatpush1.msra.mxu0 0.0
    %10499 = vmatprep.subr.mxu0 0.0
    %10500 = vmatpush1.msra.mxu0 0.0
    %10501 = vmatprep.subr.mxu0 0.0
    %10502 = vmatpush1.msra.mxu0 0.0
    %10503 = vmatprep.subr.mxu0 0.0
    %10504 = vmatpush1.msra.mxu0 0.0
    %10505 = vmatprep.subr.mxu0 0.0
    %10506 = vmatpush1.msra.mxu0 0.0
    %10507 = vmatprep.subr.mxu0 0.0
    %v10508 = vand.u32 %v5551, 4294901760
    %v10509 = vsub.f32 %v5551, %v10508
    %v10510 = vand.u32 %v10509, 4294901760
    %10511 = vmatpush1.msra.mxu0 %v10510
    %10512 = vmatprep.subr.mxu0 0.0
    %v10513 = vand.u32 %v5550, 4294901760
    %v10514 = vsub.f32 %v5550, %v10513
    %v10515 = vand.u32 %v10514, 4294901760
    %10516 = vmatpush1.msra.mxu0 %v10515
    %10517 = vmatprep.subr.mxu0 0.0
    %10518 = vmatpush2.msra.mxu0 0.0
    %10519 = vmatprep.subr.mxu0 0.0
    %10520 = vmatpush2.msra.mxu0 0.0
    %10521 = vmatprep.subr.mxu0 0.0
    %10522 = vmatpush2.msra.mxu0 0.0
    %10523 = vmatprep.subr.mxu0 0.0
    %10524 = vmatpush2.msra.mxu0 0.0
    %10525 = vmatprep.subr.mxu0 0.0
    %10526 = vmatpush2.msra.mxu0 0.0
    %10527 = vmatprep.subr.mxu0 0.0
    %10528 = vmatpush2.msra.mxu0 0.0
    %10529 = vmatprep.subr.mxu0 0.0
    %10530 = vmatpush2.msra.mxu0 0.0
    %10531 = vmatprep.subr.mxu0 0.0
    %10532 = vmatpush2.msra.mxu0 0.0
    %10533 = vmatprep.subr.mxu0 0.0
    %10534 = vmatpush2.msra.mxu0 0.0
    %10535 = vmatprep.subr.mxu0 0.0
    %10536 = vmatpush2.msra.mxu0 0.0
    %10537 = vmatprep.subr.mxu0 0.0
    %10538 = vmatpush2.msra.mxu0 0.0
    %10539 = vmatprep.subr.mxu0 0.0
    %10540 = vmatpush2.msra.mxu0 0.0
    %10541 = vmatprep.subr.mxu0 0.0
    %10542 = vmatpush2.msra.mxu0 0.0
    %10543 = vmatprep.subr.mxu0 0.0
    %10544 = vmatpush2.msra.mxu0 0.0
    %10545 = vmatprep.subr.mxu0 0.0
    %10546 = vmatpush2.msra.mxu0 0.0
    %10547 = vmatprep.subr.mxu0 0.0
    %10548 = vmatpush2.msra.mxu0 0.0
    %10549 = vmatprep.mubr.f32.mxu0 0.0
    %v10550 = vand.u32 %v7104, 4294901760
    %10551 = vmatmul.mubr.f32.gmra.mxu0 %v10550
    %v10552 = vpop.f32.mrf.mxu0
    %v10553 = vadd.f32 %v10468, %v10552
    %v10554 = vpop.f32.mrf.mxu0
    %10555 = vmatprep.mubr.f32.mxu0 0.0
    %v10556 = vand.u32 %v7107, 4294901760
    %10557 = vmatmul.mubr.f32.gmra.mxu0 %v10556
    %v10558 = vpop.f32.mrf.mxu0
    %v10559 = vadd.f32 %v10476, %v10558
    %v10560 = vpop.f32.mrf.mxu0
    %10561 = vdwg.mxu0
    %10562 = vmatprep.subr.mxu0 0.0
    %10563 = vmatpush1.msra.mxu0 0.0
    %10564 = vmatprep.subr.mxu0 0.0
    %10565 = vmatpush1.msra.mxu0 0.0
    %10566 = vmatprep.subr.mxu0 0.0
    %10567 = vmatpush1.msra.mxu0 0.0
    %10568 = vmatprep.subr.mxu0 0.0
    %10569 = vmatpush1.msra.mxu0 0.0
    %10570 = vmatprep.subr.mxu0 0.0
    %10571 = vmatpush1.msra.mxu0 0.0
    %10572 = vmatprep.subr.mxu0 0.0
    %10573 = vmatpush1.msra.mxu0 0.0
    %10574 = vmatprep.subr.mxu0 0.0
    %10575 = vmatpush1.msra.mxu0 0.0
    %10576 = vmatprep.subr.mxu0 0.0
    %10577 = vmatpush1.msra.mxu0 0.0
    %10578 = vmatprep.subr.mxu0 0.0
    %10579 = vmatpush1.msra.mxu0 0.0
    %10580 = vmatprep.subr.mxu0 0.0
    %10581 = vmatpush1.msra.mxu0 0.0
    %10582 = vmatprep.subr.mxu0 0.0
    %10583 = vmatpush1.msra.mxu0 0.0
    %10584 = vmatprep.subr.mxu0 0.0
    %10585 = vmatpush1.msra.mxu0 0.0
    %10586 = vmatprep.subr.mxu0 0.0
    %10587 = vmatpush1.msra.mxu0 0.0
    %10588 = vmatprep.subr.mxu0 0.0
    %10589 = vmatpush1.msra.mxu0 0.0
    %10590 = vmatprep.subr.mxu0 0.0
    %v10591 = vand.u32 %v5551, 4294901760
    %10592 = vmatpush1.msra.mxu0 %v10591
    %10593 = vmatprep.subr.mxu0 0.0
    %v10594 = vand.u32 %v5550, 4294901760
    %10595 = vmatpush1.msra.mxu0 %v10594
    %10596 = vmatprep.subr.mxu0 0.0
    %10597 = vmatpush2.msra.mxu0 0.0
    %10598 = vmatprep.subr.mxu0 0.0
    %10599 = vmatpush2.msra.mxu0 0.0
    %10600 = vmatprep.subr.mxu0 0.0
    %10601 = vmatpush2.msra.mxu0 0.0
    %10602 = vmatprep.subr.mxu0 0.0
    %10603 = vmatpush2.msra.mxu0 0.0
    %10604 = vmatprep.subr.mxu0 0.0
    %10605 = vmatpush2.msra.mxu0 0.0
    %10606 = vmatprep.subr.mxu0 0.0
    %10607 = vmatpush2.msra.mxu0 0.0
    %10608 = vmatprep.subr.mxu0 0.0
    %10609 = vmatpush2.msra.mxu0 0.0
    %10610 = vmatprep.subr.mxu0 0.0
    %10611 = vmatpush2.msra.mxu0 0.0
    %10612 = vmatprep.subr.mxu0 0.0
    %10613 = vmatpush2.msra.mxu0 0.0
    %10614 = vmatprep.subr.mxu0 0.0
    %10615 = vmatpush2.msra.mxu0 0.0
    %10616 = vmatprep.subr.mxu0 0.0
    %10617 = vmatpush2.msra.mxu0 0.0
    %10618 = vmatprep.subr.mxu0 0.0
    %10619 = vmatpush2.msra.mxu0 0.0
    %10620 = vmatprep.subr.mxu0 0.0
    %10621 = vmatpush2.msra.mxu0 0.0
    %10622 = vmatprep.subr.mxu0 0.0
    %10623 = vmatpush2.msra.mxu0 0.0
    %10624 = vmatprep.subr.mxu0 0.0
    %10625 = vmatpush2.msra.mxu0 0.0
    %10626 = vmatprep.subr.mxu0 0.0
    %10627 = vmatpush2.msra.mxu0 0.0
    %10628 = vmatprep.mubr.f32.mxu0 0.0
    %v10629 = vand.u32 %v7104, 4294901760
    %10630 = vmatmul.mubr.f32.gmra.mxu0 %v10629
    %v10631 = vpop.f32.mrf.mxu0
    %v10632 = vadd.f32 %v10553, %v10631
    %v10633 = vpop.f32.mrf.mxu0
    %10634 = vmatprep.mubr.f32.mxu0 0.0
    %v10635 = vand.u32 %v7107, 4294901760
    %10636 = vmatmul.mubr.f32.gmra.mxu0 %v10635
    %v10637 = vpop.f32.mrf.mxu0
    %v10638 = vadd.f32 %v10559, %v10637
    %v10639 = vpop.f32.mrf.mxu0
    %10640 = vdwg.mxu0
    %10641 = vmatprep.subr.mxu0 0.0
    %10642 = vmatpush1.msra.mxu0 0.0
    %10643 = vmatprep.subr.mxu0 0.0
    %10644 = vmatpush1.msra.mxu0 0.0
    %10645 = vmatprep.subr.mxu0 0.0
    %10646 = vmatpush1.msra.mxu0 0.0
    %10647 = vmatprep.subr.mxu0 0.0
    %10648 = vmatpush1.msra.mxu0 0.0
    %10649 = vmatprep.subr.mxu0 0.0
    %10650 = vmatpush1.msra.mxu0 0.0
    %10651 = vmatprep.subr.mxu0 0.0
    %10652 = vmatpush1.msra.mxu0 0.0
    %10653 = vmatprep.subr.mxu0 0.0
    %10654 = vmatpush1.msra.mxu0 0.0
    %10655 = vmatprep.subr.mxu0 0.0
    %10656 = vmatpush1.msra.mxu0 0.0
    %10657 = vmatprep.subr.mxu0 0.0
    %10658 = vmatpush1.msra.mxu0 0.0
    %10659 = vmatprep.subr.mxu0 0.0
    %10660 = vmatpush1.msra.mxu0 0.0
    %10661 = vmatprep.subr.mxu0 0.0
    %10662 = vmatpush1.msra.mxu0 0.0
    %10663 = vmatprep.subr.mxu0 0.0
    %10664 = vmatpush1.msra.mxu0 0.0
    %10665 = vmatprep.subr.mxu0 0.0
    %10666 = vmatpush1.msra.mxu0 0.0
    %10667 = vmatprep.subr.mxu0 0.0
    %10668 = vmatpush1.msra.mxu0 0.0
    %10669 = vmatprep.subr.mxu0 0.0
    %v10670 = vand.u32 %v7614, 4294901760
    %10671 = vmatpush1.msra.mxu0 %v10670
    %10672 = vmatprep.subr.mxu0 0.0
    %v10673 = vand.u32 %v7612, 4294901760
    %10674 = vmatpush1.msra.mxu0 %v10673
    %10675 = vmatprep.subr.mxu0 0.0
    %10676 = vmatpush2.msra.mxu0 0.0
    %10677 = vmatprep.subr.mxu0 0.0
    %10678 = vmatpush2.msra.mxu0 0.0
    %10679 = vmatprep.subr.mxu0 0.0
    %10680 = vmatpush2.msra.mxu0 0.0
    %10681 = vmatprep.subr.mxu0 0.0
    %10682 = vmatpush2.msra.mxu0 0.0
    %10683 = vmatprep.subr.mxu0 0.0
    %10684 = vmatpush2.msra.mxu0 0.0
    %10685 = vmatprep.subr.mxu0 0.0
    %10686 = vmatpush2.msra.mxu0 0.0
    %10687 = vmatprep.subr.mxu0 0.0
    %10688 = vmatpush2.msra.mxu0 0.0
    %10689 = vmatprep.subr.mxu0 0.0
    %10690 = vmatpush2.msra.mxu0 0.0
    %10691 = vmatprep.subr.mxu0 0.0
    %10692 = vmatpush2.msra.mxu0 0.0
    %10693 = vmatprep.subr.mxu0 0.0
    %10694 = vmatpush2.msra.mxu0 0.0
    %10695 = vmatprep.subr.mxu0 0.0
    %10696 = vmatpush2.msra.mxu0 0.0
    %10697 = vmatprep.subr.mxu0 0.0
    %10698 = vmatpush2.msra.mxu0 0.0
    %10699 = vmatprep.subr.mxu0 0.0
    %10700 = vmatpush2.msra.mxu0 0.0
    %10701 = vmatprep.subr.mxu0 0.0
    %10702 = vmatpush2.msra.mxu0 0.0
    %10703 = vmatprep.subr.mxu0 0.0
    %10704 = vmatpush2.msra.mxu0 0.0
    %10705 = vmatprep.subr.mxu0 0.0
    %10706 = vmatpush2.msra.mxu0 0.0
    %10707 = vmatprep.mubr.f32.mxu0 0.0
    %v10708 = vand.u32 %v6058, 4294901760
    %v10709 = vsub.f32 %v6058, %v10708
    %v10710 = vand.u32 %v10709, 4294901760
    %v10711 = vsub.f32 %v10709, %v10710
    %v10712 = vand.u32 %v10711, 4294901760
    %10713 = vmatmul.mubr.f32.gmra.mxu0 %v10712
    %v10714 = vpop.f32.mrf.mxu0
    %v10715 = vadd.f32 0.0, %v10714
    %v10716 = vpop.f32.mrf.mxu0
    %10717 = vmatprep.mubr.f32.mxu0 0.0
    %v10718 = vand.u32 %v6061, 4294901760
    %v10719 = vsub.f32 %v6061, %v10718
    %v10720 = vand.u32 %v10719, 4294901760
    %v10721 = vsub.f32 %v10719, %v10720
    %v10722 = vand.u32 %v10721, 4294901760
    %10723 = vmatmul.mubr.f32.gmra.mxu0 %v10722
    %v10724 = vpop.f32.mrf.mxu0
    %v10725 = vadd.f32 0.0, %v10724
    %v10726 = vpop.f32.mrf.mxu0
    %10727 = vdwg.mxu0
    %10728 = vmatprep.subr.mxu0 0.0
    %10729 = vmatpush1.msra.mxu0 0.0
    %10730 = vmatprep.subr.mxu0 0.0
    %10731 = vmatpush1.msra.mxu0 0.0
    %10732 = vmatprep.subr.mxu0 0.0
    %10733 = vmatpush1.msra.mxu0 0.0
    %10734 = vmatprep.subr.mxu0 0.0
    %10735 = vmatpush1.msra.mxu0 0.0
    %10736 = vmatprep.subr.mxu0 0.0
    %10737 = vmatpush1.msra.mxu0 0.0
    %10738 = vmatprep.subr.mxu0 0.0
    %10739 = vmatpush1.msra.mxu0 0.0
    %10740 = vmatprep.subr.mxu0 0.0
    %10741 = vmatpush1.msra.mxu0 0.0
    %10742 = vmatprep.subr.mxu0 0.0
    %10743 = vmatpush1.msra.mxu0 0.0
    %10744 = vmatprep.subr.mxu0 0.0
    %10745 = vmatpush1.msra.mxu0 0.0
    %10746 = vmatprep.subr.mxu0 0.0
    %10747 = vmatpush1.msra.mxu0 0.0
    %10748 = vmatprep.subr.mxu0 0.0
    %10749 = vmatpush1.msra.mxu0 0.0
    %10750 = vmatprep.subr.mxu0 0.0
    %10751 = vmatpush1.msra.mxu0 0.0
    %10752 = vmatprep.subr.mxu0 0.0
    %10753 = vmatpush1.msra.mxu0 0.0
    %10754 = vmatprep.subr.mxu0 0.0
    %10755 = vmatpush1.msra.mxu0 0.0
    %10756 = vmatprep.subr.mxu0 0.0
    %v10757 = vand.u32 %v7614, 4294901760
    %v10758 = vsub.f32 %v7614, %v10757
    %v10759 = vand.u32 %v10758, 4294901760
    %v10760 = vsub.f32 %v10758, %v10759
    %v10761 = vand.u32 %v10760, 4294901760
    %10762 = vmatpush1.msra.mxu0 %v10761
    %10763 = vmatprep.subr.mxu0 0.0
    %v10764 = vand.u32 %v7612, 4294901760
    %v10765 = vsub.f32 %v7612, %v10764
    %v10766 = vand.u32 %v10765, 4294901760
    %v10767 = vsub.f32 %v10765, %v10766
    %v10768 = vand.u32 %v10767, 4294901760
    %10769 = vmatpush1.msra.mxu0 %v10768
    %10770 = vmatprep.subr.mxu0 0.0
    %10771 = vmatpush2.msra.mxu0 0.0
    %10772 = vmatprep.subr.mxu0 0.0
    %10773 = vmatpush2.msra.mxu0 0.0
    %10774 = vmatprep.subr.mxu0 0.0
    %10775 = vmatpush2.msra.mxu0 0.0
    %10776 = vmatprep.subr.mxu0 0.0
    %10777 = vmatpush2.msra.mxu0 0.0
    %10778 = vmatprep.subr.mxu0 0.0
    %10779 = vmatpush2.msra.mxu0 0.0
    %10780 = vmatprep.subr.mxu0 0.0
    %10781 = vmatpush2.msra.mxu0 0.0
    %10782 = vmatprep.subr.mxu0 0.0
    %10783 = vmatpush2.msra.mxu0 0.0
    %10784 = vmatprep.subr.mxu0 0.0
    %10785 = vmatpush2.msra.mxu0 0.0
    %10786 = vmatprep.subr.mxu0 0.0
    %10787 = vmatpush2.msra.mxu0 0.0
    %10788 = vmatprep.subr.mxu0 0.0
    %10789 = vmatpush2.msra.mxu0 0.0
    %10790 = vmatprep.subr.mxu0 0.0
    %10791 = vmatpush2.msra.mxu0 0.0
    %10792 = vmatprep.subr.mxu0 0.0
    %10793 = vmatpush2.msra.mxu0 0.0
    %10794 = vmatprep.subr.mxu0 0.0
    %10795 = vmatpush2.msra.mxu0 0.0
    %10796 = vmatprep.subr.mxu0 0.0
    %10797 = vmatpush2.msra.mxu0 0.0
    %10798 = vmatprep.subr.mxu0 0.0
    %10799 = vmatpush2.msra.mxu0 0.0
    %10800 = vmatprep.subr.mxu0 0.0
    %10801 = vmatpush2.msra.mxu0 0.0
    %10802 = vmatprep.mubr.f32.mxu0 0.0
    %v10803 = vand.u32 %v6058, 4294901760
    %10804 = vmatmul.mubr.f32.gmra.mxu0 %v10803
    %v10805 = vpop.f32.mrf.mxu0
    %v10806 = vadd.f32 %v10715, %v10805
    %v10807 = vpop.f32.mrf.mxu0
    %10808 = vmatprep.mubr.f32.mxu0 0.0
    %v10809 = vand.u32 %v6061, 4294901760
    %10810 = vmatmul.mubr.f32.gmra.mxu0 %v10809
    %v10811 = vpop.f32.mrf.mxu0
    %v10812 = vadd.f32 %v10725, %v10811
    %v10813 = vpop.f32.mrf.mxu0
    %10814 = vdwg.mxu0
    %10815 = vmatprep.subr.mxu0 0.0
    %10816 = vmatpush1.msra.mxu0 0.0
    %10817 = vmatprep.subr.mxu0 0.0
    %10818 = vmatpush1.msra.mxu0 0.0
    %10819 = vmatprep.subr.mxu0 0.0
    %10820 = vmatpush1.msra.mxu0 0.0
    %10821 = vmatprep.subr.mxu0 0.0
    %10822 = vmatpush1.msra.mxu0 0.0
    %10823 = vmatprep.subr.mxu0 0.0
    %10824 = vmatpush1.msra.mxu0 0.0
    %10825 = vmatprep.subr.mxu0 0.0
    %10826 = vmatpush1.msra.mxu0 0.0
    %10827 = vmatprep.subr.mxu0 0.0
    %10828 = vmatpush1.msra.mxu0 0.0
    %10829 = vmatprep.subr.mxu0 0.0
    %10830 = vmatpush1.msra.mxu0 0.0
    %10831 = vmatprep.subr.mxu0 0.0
    %10832 = vmatpush1.msra.mxu0 0.0
    %10833 = vmatprep.subr.mxu0 0.0
    %10834 = vmatpush1.msra.mxu0 0.0
    %10835 = vmatprep.subr.mxu0 0.0
    %10836 = vmatpush1.msra.mxu0 0.0
    %10837 = vmatprep.subr.mxu0 0.0
    %10838 = vmatpush1.msra.mxu0 0.0
    %10839 = vmatprep.subr.mxu0 0.0
    %10840 = vmatpush1.msra.mxu0 0.0
    %10841 = vmatprep.subr.mxu0 0.0
    %10842 = vmatpush1.msra.mxu0 0.0
    %10843 = vmatprep.subr.mxu0 0.0
    %v10844 = vand.u32 %v7614, 4294901760
    %v10845 = vsub.f32 %v7614, %v10844
    %10846 = vmatpush1.msra.mxu0 %v10845
    %10847 = vmatprep.subr.mxu0 0.0
    %v10848 = vand.u32 %v7612, 4294901760
    %v10849 = vsub.f32 %v7612, %v10848
    %10850 = vmatpush1.msra.mxu0 %v10849
    %10851 = vmatprep.subr.mxu0 0.0
    %10852 = vmatpush2.msra.mxu0 0.0
    %10853 = vmatprep.subr.mxu0 0.0
    %10854 = vmatpush2.msra.mxu0 0.0
    %10855 = vmatprep.subr.mxu0 0.0
    %10856 = vmatpush2.msra.mxu0 0.0
    %10857 = vmatprep.subr.mxu0 0.0
    %10858 = vmatpush2.msra.mxu0 0.0
    %10859 = vmatprep.subr.mxu0 0.0
    %10860 = vmatpush2.msra.mxu0 0.0
    %10861 = vmatprep.subr.mxu0 0.0
    %10862 = vmatpush2.msra.mxu0 0.0
    %10863 = vmatprep.subr.mxu0 0.0
    %10864 = vmatpush2.msra.mxu0 0.0
    %10865 = vmatprep.subr.mxu0 0.0
    %10866 = vmatpush2.msra.mxu0 0.0
    %10867 = vmatprep.subr.mxu0 0.0
    %10868 = vmatpush2.msra.mxu0 0.0
    %10869 = vmatprep.subr.mxu0 0.0
    %10870 = vmatpush2.msra.mxu0 0.0
    %10871 = vmatprep.subr.mxu0 0.0
    %10872 = vmatpush2.msra.mxu0 0.0
    %10873 = vmatprep.subr.mxu0 0.0
    %10874 = vmatpush2.msra.mxu0 0.0
    %10875 = vmatprep.subr.mxu0 0.0
    %10876 = vmatpush2.msra.mxu0 0.0
    %10877 = vmatprep.subr.mxu0 0.0
    %10878 = vmatpush2.msra.mxu0 0.0
    %10879 = vmatprep.subr.mxu0 0.0
    %10880 = vmatpush2.msra.mxu0 0.0
    %10881 = vmatprep.subr.mxu0 0.0
    %10882 = vmatpush2.msra.mxu0 0.0
    %10883 = vmatprep.mubr.f32.mxu0 0.0
    %v10884 = vand.u32 %v6058, 4294901760
    %v10885 = vsub.f32 %v6058, %v10884
    %10886 = vmatmul.mubr.f32.gmra.mxu0 %v10885
    %v10887 = vpop.f32.mrf.mxu0
    %v10888 = vadd.f32 %v10806, %v10887
    %v10889 = vpop.f32.mrf.mxu0
    %10890 = vmatprep.mubr.f32.mxu0 0.0
    %v10891 = vand.u32 %v6061, 4294901760
    %v10892 = vsub.f32 %v6061, %v10891
    %10893 = vmatmul.mubr.f32.gmra.mxu0 %v10892
    %v10894 = vpop.f32.mrf.mxu0
    %v10895 = vadd.f32 %v10812, %v10894
    %v10896 = vpop.f32.mrf.mxu0
    %10897 = vdwg.mxu0
    %10898 = vmatprep.subr.mxu0 0.0
    %10899 = vmatpush1.msra.mxu0 0.0
    %10900 = vmatprep.subr.mxu0 0.0
    %10901 = vmatpush1.msra.mxu0 0.0
    %10902 = vmatprep.subr.mxu0 0.0
    %10903 = vmatpush1.msra.mxu0 0.0
    %10904 = vmatprep.subr.mxu0 0.0
    %10905 = vmatpush1.msra.mxu0 0.0
    %10906 = vmatprep.subr.mxu0 0.0
    %10907 = vmatpush1.msra.mxu0 0.0
    %10908 = vmatprep.subr.mxu0 0.0
    %10909 = vmatpush1.msra.mxu0 0.0
    %10910 = vmatprep.subr.mxu0 0.0
    %10911 = vmatpush1.msra.mxu0 0.0
    %10912 = vmatprep.subr.mxu0 0.0
    %10913 = vmatpush1.msra.mxu0 0.0
    %10914 = vmatprep.subr.mxu0 0.0
    %10915 = vmatpush1.msra.mxu0 0.0
    %10916 = vmatprep.subr.mxu0 0.0
    %10917 = vmatpush1.msra.mxu0 0.0
    %10918 = vmatprep.subr.mxu0 0.0
    %10919 = vmatpush1.msra.mxu0 0.0
    %10920 = vmatprep.subr.mxu0 0.0
    %10921 = vmatpush1.msra.mxu0 0.0
    %10922 = vmatprep.subr.mxu0 0.0
    %10923 = vmatpush1.msra.mxu0 0.0
    %10924 = vmatprep.subr.mxu0 0.0
    %10925 = vmatpush1.msra.mxu0 0.0
    %10926 = vmatprep.subr.mxu0 0.0
    %v10927 = vand.u32 %v7614, 4294901760
    %10928 = vmatpush1.msra.mxu0 %v10927
    %10929 = vmatprep.subr.mxu0 0.0
    %v10930 = vand.u32 %v7612, 4294901760
    %10931 = vmatpush1.msra.mxu0 %v10930
    %10932 = vmatprep.subr.mxu0 0.0
    %10933 = vmatpush2.msra.mxu0 0.0
    %10934 = vmatprep.subr.mxu0 0.0
    %10935 = vmatpush2.msra.mxu0 0.0
    %10936 = vmatprep.subr.mxu0 0.0
    %10937 = vmatpush2.msra.mxu0 0.0
    %10938 = vmatprep.subr.mxu0 0.0
    %10939 = vmatpush2.msra.mxu0 0.0
    %10940 = vmatprep.subr.mxu0 0.0
    %10941 = vmatpush2.msra.mxu0 0.0
    %10942 = vmatprep.subr.mxu0 0.0
    %10943 = vmatpush2.msra.mxu0 0.0
    %10944 = vmatprep.subr.mxu0 0.0
    %10945 = vmatpush2.msra.mxu0 0.0
    %10946 = vmatprep.subr.mxu0 0.0
    %10947 = vmatpush2.msra.mxu0 0.0
    %10948 = vmatprep.subr.mxu0 0.0
    %10949 = vmatpush2.msra.mxu0 0.0
    %10950 = vmatprep.subr.mxu0 0.0
    %10951 = vmatpush2.msra.mxu0 0.0
    %10952 = vmatprep.subr.mxu0 0.0
    %10953 = vmatpush2.msra.mxu0 0.0
    %10954 = vmatprep.subr.mxu0 0.0
    %10955 = vmatpush2.msra.mxu0 0.0
    %10956 = vmatprep.subr.mxu0 0.0
    %10957 = vmatpush2.msra.mxu0 0.0
    %10958 = vmatprep.subr.mxu0 0.0
    %10959 = vmatpush2.msra.mxu0 0.0
    %10960 = vmatprep.subr.mxu0 0.0
    %10961 = vmatpush2.msra.mxu0 0.0
    %10962 = vmatprep.subr.mxu0 0.0
    %10963 = vmatpush2.msra.mxu0 0.0
    %10964 = vmatprep.mubr.f32.mxu0 0.0
    %v10965 = vand.u32 %v6058, 4294901760
    %v10966 = vsub.f32 %v6058, %v10965
    %v10967 = vand.u32 %v10966, 4294901760
    %10968 = vmatmul.mubr.f32.gmra.mxu0 %v10967
    %v10969 = vpop.f32.mrf.mxu0
    %v10970 = vadd.f32 %v10888, %v10969
    %v10971 = vpop.f32.mrf.mxu0
    %10972 = vmatprep.mubr.f32.mxu0 0.0
    %v10973 = vand.u32 %v6061, 4294901760
    %v10974 = vsub.f32 %v6061, %v10973
    %v10975 = vand.u32 %v10974, 4294901760
    %10976 = vmatmul.mubr.f32.gmra.mxu0 %v10975
    %v10977 = vpop.f32.mrf.mxu0
    %v10978 = vadd.f32 %v10895, %v10977
    %v10979 = vpop.f32.mrf.mxu0
    %10980 = vdwg.mxu0
    %10981 = vmatprep.subr.mxu0 0.0
    %10982 = vmatpush1.msra.mxu0 0.0
    %10983 = vmatprep.subr.mxu0 0.0
    %10984 = vmatpush1.msra.mxu0 0.0
    %10985 = vmatprep.subr.mxu0 0.0
    %10986 = vmatpush1.msra.mxu0 0.0
    %10987 = vmatprep.subr.mxu0 0.0
    %10988 = vmatpush1.msra.mxu0 0.0
    %10989 = vmatprep.subr.mxu0 0.0
    %10990 = vmatpush1.msra.mxu0 0.0
    %10991 = vmatprep.subr.mxu0 0.0
    %10992 = vmatpush1.msra.mxu0 0.0
    %10993 = vmatprep.subr.mxu0 0.0
    %10994 = vmatpush1.msra.mxu0 0.0
    %10995 = vmatprep.subr.mxu0 0.0
    %10996 = vmatpush1.msra.mxu0 0.0
    %10997 = vmatprep.subr.mxu0 0.0
    %10998 = vmatpush1.msra.mxu0 0.0
    %10999 = vmatprep.subr.mxu0 0.0
    %11000 = vmatpush1.msra.mxu0 0.0
    %11001 = vmatprep.subr.mxu0 0.0
    %11002 = vmatpush1.msra.mxu0 0.0
    %11003 = vmatprep.subr.mxu0 0.0
    %11004 = vmatpush1.msra.mxu0 0.0
    %11005 = vmatprep.subr.mxu0 0.0
    %11006 = vmatpush1.msra.mxu0 0.0
    %11007 = vmatprep.subr.mxu0 0.0
    %11008 = vmatpush1.msra.mxu0 0.0
    %11009 = vmatprep.subr.mxu0 0.0
    %v11010 = vand.u32 %v7614, 4294901760
    %v11011 = vsub.f32 %v7614, %v11010
    %v11012 = vand.u32 %v11011, 4294901760
    %11013 = vmatpush1.msra.mxu0 %v11012
    %11014 = vmatprep.subr.mxu0 0.0
    %v11015 = vand.u32 %v7612, 4294901760
    %v11016 = vsub.f32 %v7612, %v11015
    %v11017 = vand.u32 %v11016, 4294901760
    %11018 = vmatpush1.msra.mxu0 %v11017
    %11019 = vmatprep.subr.mxu0 0.0
    %11020 = vmatpush2.msra.mxu0 0.0
    %11021 = vmatprep.subr.mxu0 0.0
    %11022 = vmatpush2.msra.mxu0 0.0
    %11023 = vmatprep.subr.mxu0 0.0
    %11024 = vmatpush2.msra.mxu0 0.0
    %11025 = vmatprep.subr.mxu0 0.0
    %11026 = vmatpush2.msra.mxu0 0.0
    %11027 = vmatprep.subr.mxu0 0.0
    %11028 = vmatpush2.msra.mxu0 0.0
    %11029 = vmatprep.subr.mxu0 0.0
    %11030 = vmatpush2.msra.mxu0 0.0
    %11031 = vmatprep.subr.mxu0 0.0
    %11032 = vmatpush2.msra.mxu0 0.0
    %11033 = vmatprep.subr.mxu0 0.0
    %11034 = vmatpush2.msra.mxu0 0.0
    %11035 = vmatprep.subr.mxu0 0.0
    %11036 = vmatpush2.msra.mxu0 0.0
    %11037 = vmatprep.subr.mxu0 0.0
    %11038 = vmatpush2.msra.mxu0 0.0
    %11039 = vmatprep.subr.mxu0 0.0
    %11040 = vmatpush2.msra.mxu0 0.0
    %11041 = vmatprep.subr.mxu0 0.0
    %11042 = vmatpush2.msra.mxu0 0.0
    %11043 = vmatprep.subr.mxu0 0.0
    %11044 = vmatpush2.msra.mxu0 0.0
    %11045 = vmatprep.subr.mxu0 0.0
    %11046 = vmatpush2.msra.mxu0 0.0
    %11047 = vmatprep.subr.mxu0 0.0
    %11048 = vmatpush2.msra.mxu0 0.0
    %11049 = vmatprep.subr.mxu0 0.0
    %11050 = vmatpush2.msra.mxu0 0.0
    %11051 = vmatprep.mubr.f32.mxu0 0.0
    %v11052 = vand.u32 %v6058, 4294901760
    %11053 = vmatmul.mubr.f32.gmra.mxu0 %v11052
    %v11054 = vpop.f32.mrf.mxu0
    %v11055 = vadd.f32 %v10970, %v11054
    %v11056 = vpop.f32.mrf.mxu0
    %11057 = vmatprep.mubr.f32.mxu0 0.0
    %v11058 = vand.u32 %v6061, 4294901760
    %11059 = vmatmul.mubr.f32.gmra.mxu0 %v11058
    %v11060 = vpop.f32.mrf.mxu0
    %v11061 = vadd.f32 %v10978, %v11060
    %v11062 = vpop.f32.mrf.mxu0
    %11063 = vdwg.mxu0
    %11064 = vmatprep.subr.mxu0 0.0
    %11065 = vmatpush1.msra.mxu0 0.0
    %11066 = vmatprep.subr.mxu0 0.0
    %11067 = vmatpush1.msra.mxu0 0.0
    %11068 = vmatprep.subr.mxu0 0.0
    %11069 = vmatpush1.msra.mxu0 0.0
    %11070 = vmatprep.subr.mxu0 0.0
    %11071 = vmatpush1.msra.mxu0 0.0
    %11072 = vmatprep.subr.mxu0 0.0
    %11073 = vmatpush1.msra.mxu0 0.0
    %11074 = vmatprep.subr.mxu0 0.0
    %11075 = vmatpush1.msra.mxu0 0.0
    %11076 = vmatprep.subr.mxu0 0.0
    %11077 = vmatpush1.msra.mxu0 0.0
    %11078 = vmatprep.subr.mxu0 0.0
    %11079 = vmatpush1.msra.mxu0 0.0
    %11080 = vmatprep.subr.mxu0 0.0
    %11081 = vmatpush1.msra.mxu0 0.0
    %11082 = vmatprep.subr.mxu0 0.0
    %11083 = vmatpush1.msra.mxu0 0.0
    %11084 = vmatprep.subr.mxu0 0.0
    %11085 = vmatpush1.msra.mxu0 0.0
    %11086 = vmatprep.subr.mxu0 0.0
    %11087 = vmatpush1.msra.mxu0 0.0
    %11088 = vmatprep.subr.mxu0 0.0
    %11089 = vmatpush1.msra.mxu0 0.0
    %11090 = vmatprep.subr.mxu0 0.0
    %11091 = vmatpush1.msra.mxu0 0.0
    %11092 = vmatprep.subr.mxu0 0.0
    %v11093 = vand.u32 %v7614, 4294901760
    %11094 = vmatpush1.msra.mxu0 %v11093
    %11095 = vmatprep.subr.mxu0 0.0
    %v11096 = vand.u32 %v7612, 4294901760
    %11097 = vmatpush1.msra.mxu0 %v11096
    %11098 = vmatprep.subr.mxu0 0.0
    %11099 = vmatpush2.msra.mxu0 0.0
    %11100 = vmatprep.subr.mxu0 0.0
    %11101 = vmatpush2.msra.mxu0 0.0
    %11102 = vmatprep.subr.mxu0 0.0
    %11103 = vmatpush2.msra.mxu0 0.0
    %11104 = vmatprep.subr.mxu0 0.0
    %11105 = vmatpush2.msra.mxu0 0.0
    %11106 = vmatprep.subr.mxu0 0.0
    %11107 = vmatpush2.msra.mxu0 0.0
    %11108 = vmatprep.subr.mxu0 0.0
    %11109 = vmatpush2.msra.mxu0 0.0
    %11110 = vmatprep.subr.mxu0 0.0
    %11111 = vmatpush2.msra.mxu0 0.0
    %11112 = vmatprep.subr.mxu0 0.0
    %11113 = vmatpush2.msra.mxu0 0.0
    %11114 = vmatprep.subr.mxu0 0.0
    %11115 = vmatpush2.msra.mxu0 0.0
    %11116 = vmatprep.subr.mxu0 0.0
    %11117 = vmatpush2.msra.mxu0 0.0
    %11118 = vmatprep.subr.mxu0 0.0
    %11119 = vmatpush2.msra.mxu0 0.0
    %11120 = vmatprep.subr.mxu0 0.0
    %11121 = vmatpush2.msra.mxu0 0.0
    %11122 = vmatprep.subr.mxu0 0.0
    %11123 = vmatpush2.msra.mxu0 0.0
    %11124 = vmatprep.subr.mxu0 0.0
    %11125 = vmatpush2.msra.mxu0 0.0
    %11126 = vmatprep.subr.mxu0 0.0
    %11127 = vmatpush2.msra.mxu0 0.0
    %11128 = vmatprep.subr.mxu0 0.0
    %11129 = vmatpush2.msra.mxu0 0.0
    %11130 = vmatprep.mubr.f32.mxu0 0.0
    %v11131 = vand.u32 %v6058, 4294901760
    %11132 = vmatmul.mubr.f32.gmra.mxu0 %v11131
    %v11133 = vpop.f32.mrf.mxu0
    %v11134 = vadd.f32 %v11055, %v11133
    %v11135 = vpop.f32.mrf.mxu0
    %11136 = vmatprep.mubr.f32.mxu0 0.0
    %v11137 = vand.u32 %v6061, 4294901760
    %11138 = vmatmul.mubr.f32.gmra.mxu0 %v11137
    %v11139 = vpop.f32.mrf.mxu0
    %v11140 = vadd.f32 %v11061, %v11139
    %v11141 = vpop.f32.mrf.mxu0
    %11142 = vdwg.mxu0
    %v11143 = vmul.f32 %v10632, %v11134
    %v11144 = vmul.f32 %v10638, %v11140
    %v11145 = vadd.f32 %v10137, %v11143
    %v11146 = vadd.f32 %v10138, %v11144
    %11147 = vst.msk [vmem:[#allocation19] sm:$0xff] %vm2480, %v11145
    %11148 = vst.msk [vmem:[#allocation19 + $0x8] sm:$0xff] %vm2480, %v11146
    // Predicated region
    $region94: #{tpu_custom_call.1} parent=1 // pred_check
      _
    $region95: #{tpu_custom_call.1} parent=1 // pred_check_branch
      %11150 = sbr.rel (0) target = $region97
    $region96: #{tpu_custom_call.1} parent=1 // pred_region
      %s11152 = ssub.s32 256, 256
      %11153 = vsyncadd [#allocation4], %s11152
      %s11154 = sshll.u32 [#allocation19], 4
      %s11155 = int_to_ptr.vmem [resolvable:$true] %s11154
      %11160 = dma.vmem_to_hbm [thread:$0]  %s11155, 256, %s13, [#allocation4], 128, 128, 8
    $region97: #{tpu_custom_call.1} parent=1 // pred_fallthru
      _
    // Predicated region
    $region98: #{tpu_custom_call.1} parent=1 // pred_check
      _
    $region99: #{tpu_custom_call.1} parent=1 // pred_check_branch
      %11162 = sbr.rel (0) target = $region101
    $region100: #{tpu_custom_call.1} parent=1 // pred_region
      %11163 = dma.done [#allocation4], 256
    $region101: #{tpu_custom_call.1} parent=1 // pred_fallthru
      _
    %11164 = vsyncpa [#allocation3], 1
    %11165 = vsyncpa [#allocation6], 1
    %11166 = vsyncpa [#allocation9], 1
    %11167 = vsyncpa [#allocation12], 1
    %11168 = vsyncpa [#allocation15], 1
    %11169 = vsyncpa [#allocation18], 1
    %11170 = vsyncpa [#allocation4], 1

</llo_original>
